<compile_context>
chip_gen: v7x
topology: tpu7x:2x2x1
jax: 0.10.0
libtpu: 0.0.40
codegen_flags: <defaults>
</compile_context>

<pallas_src>
import numpy as np
import jax
import jax.numpy as jnp
from jax import lax
from jax.experimental import pallas as pl
from jax.experimental.pallas import tpu as pltpu


# ----------------------------- Pallas kernel --------------------------------

def fused_decoder_kernel(dl_ref, enc_ref, emb_ref,
                         w_init_ref, b_init_ref,        # [init_h | init_c]   (E, 2H)
                         w_ea_ref, b_ea_ref,            # encoder_att         (E, A)
                         w_fa_ref, b_fa_ref,            # full_att            (1, A), (1,1)
                         w_hcat_ref, b_hcat_ref,        # [dec_att|beta|hh]   (H, A+E+4H)
                         w_ihcat_ref,                   # [ih_emb; ih_ctx]    (De+E, 4H)
                         w_fc_ref, b_fc_ref,            # fc                  (H, V)
                         preds_ref, alpha_ref,          # outputs (T,B,V) / (T,B,P)
                         enc_att_s, ctxmask_s):         # VMEM scratch
    T = preds_ref.shape[0]
    B, P, E = enc_ref.shape
    A = w_ea_ref.shape[1]
    H = w_fc_ref.shape[0]

    # ---------------- prologue: everything t-invariant, runs once ----------------
    enc = enc_ref[...]                                       # (B, P, E) bf16
    enc2 = enc.reshape(B * P, E)

    # init_h / init_c from the mean encoder feature, one fused matmul
    mean_a = jnp.mean(enc.astype(jnp.float32), axis=1)       # (B, E) f32
    hc0 = (jnp.dot(mean_a.astype(jnp.bfloat16), w_init_ref[...],
                   preferred_element_type=jnp.float32) + b_init_ref[...])   # (B, 2H)
    h0 = hc0[:, :H]
    c0 = hc0[:, H:]

    # hoisted enc @ W_enc_att (reused every step)
    enc_att_s[...] = (jnp.dot(enc2, w_ea_ref[...],
                              preferred_element_type=jnp.float32)
                      + b_ea_ref[...]).reshape(B, P, A)

    # block-diagonal selector: row b keeps only the pixels of batch element b,
    # turning the per-row attention average into one well-shaped MXU matmul.
    col = lax.broadcasted_iota(jnp.int32, (B, B * P), 1)
    row_start = lax.broadcasted_iota(jnp.int32, (B, B * P), 0) * P
    ctxmask_s[...] = ((col >= row_start) & (col < row_start + P)).astype(jnp.float32)

    # ------------------------------ decode loop ----------------------------------
    def step(t, carry):
        h, c = carry                                         # (B, H) f32 each

        # one wide matmul for everything that consumes the old h:
        #   [decoder_att | beta-gate preact | h @ W_hh (+ b_hh + b_ih)]
        hp = (jnp.dot(h.astype(jnp.bfloat16), w_hcat_ref[...],
                      preferred_element_type=jnp.float32) + b_hcat_ref[...])  # (B, A+E+4H)
        dec_att = hp[:, :A]                                  # (B, A)
        gate_pre = hp[:, A:A + E]                            # (B, E)
        hh = hp[:, A + E:]                                   # (B, 4H) incl. b_hh + b_ih

        # attention scores + softmax over pixels (dim=1)
        att = jnp.maximum(enc_att_s[...] + dec_att[:, None, :], 0.0)      # (B, P, A)
        a = jnp.sum(att * w_fa_ref[...], axis=-1) + b_fa_ref[0, 0]        # (B, P)
        a_max = jnp.max(a, axis=1, keepdims=True)
        ex = jnp.exp(a - a_max)
        alpha = ex / jnp.sum(ex, axis=1, keepdims=True)                   # (B, P)

        # context: single block-diagonal matmul instead of B M=1 MXU pushes
        ctx_lhs = (jnp.concatenate([alpha] * B, axis=1)
                   * ctxmask_s[...]).astype(jnp.bfloat16)                 # (B, B*P)
        context = jnp.dot(ctx_lhs, enc_ref[...].reshape(B * P, E),
                          preferred_element_type=jnp.float32)             # (B, E)

        awe = jax.nn.sigmoid(gate_pre) * context                          # gated context

        # LSTMCell (torch gate order i, f, g, o); one wide input matmul
        emb = emb_ref[t]                                                  # (B, De) f32
        x_cat = jnp.concatenate([emb, awe], axis=1).astype(jnp.bfloat16)  # (B, De+E)
        gates = (jnp.dot(x_cat, w_ihcat_ref[...],
                         preferred_element_type=jnp.float32) + hh)        # (B, 4H)
        i_g = jax.nn.sigmoid(gates[:, 0 * H:1 * H])
        f_g = jax.nn.sigmoid(gates[:, 1 * H:2 * H])
        g_g = jnp.tanh(gates[:, 2 * H:3 * H])
        o_g = jax.nn.sigmoid(gates[:, 3 * H:4 * H])
        c_new = f_g * c + i_g * g_g
        h_new = o_g * jnp.tanh(c_new)

        # fc projection (dropout == identity in eval mode)
        preds = (jnp.dot(h_new.astype(jnp.bfloat16), w_fc_ref[...],
                         preferred_element_type=jnp.float32) + b_fc_ref[...])   # (B, V)

        # rows whose caption already ended stay zero (matches [:batch_size_t])
        active = dl_ref[...] > t                                          # (B, 1)
        preds_ref[t] = jnp.where(active, preds, 0.0)
        alpha_ref[t] = jnp.where(active, alpha, 0.0)
        return (h_new, c_new)

    lax.fori_loop(0, T, step, (h0, c0))


# ------------------------------ glue wrappers --------------------------------

def _const_index_map(ndim):
    return lambda i: (0,) * ndim


def _full_spec(shape):
    return pl.BlockSpec(tuple(shape), _const_index_map(len(shape)))


def _nbytes(shape, dtype):
    return int(np.prod(shape)) * np.dtype(dtype).itemsize


def _prepare_fused_params(params):
    """Concatenate the module's weights into the fused blocks the kernel uses."""
    bf16, f32 = jnp.bfloat16, jnp.float32
    w_init = jnp.concatenate([params["w_init_h"], params["w_init_c"]], axis=1).astype(bf16)
    b_init = jnp.concatenate([params["b_init_h"], params["b_init_c"]], axis=1).astype(f32)
    # everything multiplied by the old h: [decoder_att | beta | lstm W_hh]
    w_hcat = jnp.concatenate([params["w_dec_att"], params["w_beta"], params["w_hh"]],
                             axis=1).astype(bf16)
    b_hcat = jnp.concatenate([params["b_dec_att"], params["b_beta"],
                              params["b_hh"] + params["b_ih"]], axis=1).astype(f32)
    # LSTM input weight over [embedding | gated context] (column order preserved)
    w_ihcat = jnp.concatenate([params["w_ih_emb"], params["w_ih_ctx"]], axis=0).astype(bf16)
    return dict(
        w_init=w_init, b_init=b_init,
        w_enc_att=params["w_enc_att"].astype(bf16),
        b_enc_att=params["b_enc_att"].astype(f32),
        w_full_att=params["w_full_att"].astype(f32),
        b_full_att=params["b_full_att"].astype(f32),
        w_hcat=w_hcat, b_hcat=b_hcat, w_ihcat=w_ihcat,
        w_fc=params["w_fc"].astype(bf16),
        b_fc=params["b_fc"].astype(f32),
    )


def fused_decode(enc_flat, emb_tbd, dec_len, fused, max_dec):
    """Run all timesteps inside a single pallas_call (grid=(1,))."""
    B, P, E = enc_flat.shape
    T = max_dec
    H = fused["w_fc"].shape[0]
    A = fused["w_enc_att"].shape[1]
    V = fused["w_fc"].shape[1]

    operands = [dec_len, enc_flat, emb_tbd,
                fused["w_init"], fused["b_init"],
                fused["w_enc_att"], fused["b_enc_att"],
                fused["w_full_att"], fused["b_full_att"],
                fused["w_hcat"], fused["b_hcat"],
                fused["w_ihcat"],
                fused["w_fc"], fused["b_fc"]]

    in_specs = [_full_spec(x.shape) for x in operands]
    out_specs = (pl.BlockSpec((T, B, V), lambda i: (0, 0, 0)),
                 pl.BlockSpec((T, B, P), lambda i: (0, 0, 0)))

    # VMEM budget from the actual shapes (x2 for pipeline buffers) + scratch +
    # headroom, clamped so the request stays legal on v7x (64 MiB per TC).
    io_bytes = sum(_nbytes(x.shape, x.dtype) for x in operands)
    io_bytes += _nbytes((T, B, V), jnp.float32) + _nbytes((T, B, P), jnp.float32)
    scratch_bytes = _nbytes((B, P, A), jnp.float32) + _nbytes((B, B * P), jnp.float32)
    vmem_limit = int(min(max(2 * io_bytes + scratch_bytes + (4 << 20), 16 << 20), 48 << 20))

    grid_spec = pltpu.PrefetchScalarGridSpec(
        num_scalar_prefetch=0,
        grid=(1,),                       # whole decode loop runs inside the kernel
        in_specs=in_specs,
        out_specs=out_specs,
        scratch_shapes=[pltpu.VMEM((B, P, A), jnp.float32),     # hoisted enc @ W_enc_att
                        pltpu.VMEM((B, B * P), jnp.float32)])   # block-diag context mask

    return pl.pallas_call(
        fused_decoder_kernel,
        out_shape=(jax.ShapeDtypeStruct((T, B, V), jnp.float32),
                   jax.ShapeDtypeStruct((T, B, P), jnp.float32)),
        grid_spec=grid_spec,
        compiler_params=pltpu.CompilerParams(
            dimension_semantics=("arbitrary",),
            vmem_limit_bytes=vmem_limit),
    )(*operands)


def decoder_forward(enc_out, enc_captions, lengths, params):
    """Mirrors Decoder.forward. enc_out: (B, Hs, Ws, E) channel-last."""
    B = enc_out.shape[0]
    E = enc_out.shape[-1]

    enc_flat = enc_out.reshape(B, -1, E)                      # (B, P, E)

    # sort by caption length (descending) -- host-side, like .sort().tolist()
    lengths_np = np.asarray(lengths).reshape(B)
    ind = np.argsort(-lengths_np, kind="stable")
    caption_lengths = lengths_np[ind]
    enc_flat = enc_flat[ind]
    enc_captions = jnp.asarray(enc_captions)[ind]

    decode_lengths = (caption_lengths - 1).tolist()
    max_dec = int(max(decode_lengths))
    dec_len = jnp.asarray(decode_lengths, dtype=jnp.int32).reshape(B, 1)

    # embedding gather (glue), time-major for the resident (T, B, De) slab
    embeddings = params["embedding"][enc_captions]            # (B, Tcap, De)
    emb_tbd = jnp.transpose(embeddings, (1, 0, 2))[:max_dec]  # (T, B, De) f32

    fused = _prepare_fused_params(params)
    preds_tbv, alphas_tbp = fused_decode(enc_flat.astype(jnp.bfloat16),
                                         emb_tbd, dec_len, fused, max_dec)

    predictions = jnp.transpose(preds_tbv, (1, 0, 2))         # (B, max_dec, V)
    alphas = jnp.transpose(alphas_tbp, (1, 0, 2))             # (B, max_dec, P)
    return predictions, alphas, enc_captions, decode_lengths, ind


# ------------------------------ parameter init -------------------------------

def make_params(key, *, num_embedding, embedding_dim, hidden_dim,
                attention_dim, encoder_dim):
    ks = jax.random.split(key, 16)
    u = lambda k, s, lim=0.1: jax.random.uniform(k, s, jnp.float32, -lim, lim)
    V, De, H, A, E = num_embedding, embedding_dim, hidden_dim, attention_dim, encoder_dim
    return {
        # Attention
        "w_enc_att": u(ks[0], (E, A)), "b_enc_att": u(ks[1], (1, A)),
        "w_dec_att": u(ks[2], (H, A)), "b_dec_att": u(ks[3], (1, A)),
        "w_full_att": u(ks[4], (1, A)), "b_full_att": u(ks[5], (1, 1)),
        # Embedding (uniform(-0.1, 0.1) as in init_weights)
        "embedding": u(ks[6], (V, De)),
        # LSTMCell(De + E, H): split input weight for emb / context parts
        "w_ih_emb": u(ks[7], (De, 4 * H)), "w_ih_ctx": u(ks[8], (E, 4 * H)),
        "w_hh": u(ks[9], (H, 4 * H)),
        "b_ih": u(ks[10], (1, 4 * H)), "b_hh": u(ks[11], (1, 4 * H)),
        # init_h / init_c
        "w_init_h": u(ks[12], (E, H)), "b_init_h": jnp.zeros((1, H), jnp.float32),
        "w_init_c": u(ks[13], (E, H)), "b_init_c": jnp.zeros((1, H), jnp.float32),
        # beta gate
        "w_beta": u(ks[14], (H, E)), "b_beta": jnp.zeros((1, E), jnp.float32),
        # fc: weight uniform(-0.1, 0.1), bias zeros (init_weights)
        "w_fc": u(ks[15], (H, V)), "b_fc": jnp.zeros((1, V), jnp.float32),
    }


# ----------------------------------- main -------------------------------------

if __name__ == "__main__":
    # Small but lane/sublane-friendly shapes: B=8 (sublanes), P=8*16=128 pixels,
    # E=H=A=De=128, V=256 (all last dims multiples of 128 for dense stores).
    B, Hs, Ws = 8, 8, 16
    encoder_dim = 128
    hidden_dim = 128
    attention_dim = 128
    embedding_dim = 128
    num_embedding = 256
    max_cap_len = 8

    key = jax.random.PRNGKey(0)
    k_enc, k_cap, k_par = jax.random.split(key, 3)

    enc_out = jax.random.normal(k_enc, (B, Hs, Ws, encoder_dim), jnp.float32)
    enc_captions = jax.random.randint(k_cap, (B, max_cap_len), 0, num_embedding)
    lengths = jnp.array([[6], [8], [5], [8], [7], [4], [8], [3]], dtype=jnp.int32)

    params = make_params(k_par,
                         num_embedding=num_embedding,
                         embedding_dim=embedding_dim,
                         hidden_dim=hidden_dim,
                         attention_dim=attention_dim,
                         encoder_dim=encoder_dim)

    predictions, alphas, caps_sorted, decode_lengths, ind = decoder_forward(
        enc_out, enc_captions, lengths, params)

    jax.block_until_ready(predictions)
    jax.block_until_ready(alphas)
    assert predictions.shape == (B, max(decode_lengths), num_embedding)
    assert alphas.shape == (B, max(decode_lengths), Hs * Ws)
    print("KERNEL_OK")
</pallas_src>

<mosaic_0001>
module attributes {stable_mosaic.version = 11 : i64} {
  func.func @fused_decoder_kernel(%arg0: i32, %arg1: memref<8x1xi32, #tpu.memory_space<vmem>>, %arg2: memref<8x128x128xbf16, #tpu.memory_space<vmem>>, %arg3: memref<7x8x128xf32, #tpu.memory_space<vmem>>, %arg4: memref<128x256xbf16, #tpu.memory_space<vmem>>, %arg5: memref<1x256xf32, #tpu.memory_space<vmem>>, %arg6: memref<128x128xbf16, #tpu.memory_space<vmem>>, %arg7: memref<1x128xf32, #tpu.memory_space<vmem>>, %arg8: memref<1x128xf32, #tpu.memory_space<vmem>>, %arg9: memref<1x1xf32, #tpu.memory_space<vmem>>, %arg10: memref<128x768xbf16, #tpu.memory_space<vmem>>, %arg11: memref<1x768xf32, #tpu.memory_space<vmem>>, %arg12: memref<256x512xbf16, #tpu.memory_space<vmem>>, %arg13: memref<128x256xbf16, #tpu.memory_space<vmem>>, %arg14: memref<1x256xf32, #tpu.memory_space<vmem>>, %arg15: memref<7x8x256xf32, #tpu.memory_space<vmem>>, %arg16: memref<7x8x128xf32, #tpu.memory_space<vmem>>, %arg17: memref<8x128x128xf32, #tpu.memory_space<vmem>>, %arg18: memref<8x1024xf32, #tpu.memory_space<vmem>>) attributes {dimension_semantics = [#tpu.dimension_semantics<arbitrary>], iteration_bounds = array<i64: 1>, scalar_prefetch = 0 : i64, scratch_operands = 2 : i64, tpu.core_type = #tpu.core_type<tc>, window_params = [{pipeline_mode = #tpu.pipeline_mode<synchronous>, transform_indices = @transform_0, window_bounds = array<i64: 8, 1>}, {pipeline_mode = #tpu.pipeline_mode<synchronous>, transform_indices = @transform_1, window_bounds = array<i64: 8, 128, 128>}, {pipeline_mode = #tpu.pipeline_mode<synchronous>, transform_indices = @transform_2, window_bounds = array<i64: 7, 8, 128>}, {pipeline_mode = #tpu.pipeline_mode<synchronous>, transform_indices = @transform_3, window_bounds = array<i64: 128, 256>}, {pipeline_mode = #tpu.pipeline_mode<synchronous>, transform_indices = @transform_4, window_bounds = array<i64: 1, 256>}, {pipeline_mode = #tpu.pipeline_mode<synchronous>, transform_indices = @transform_5, window_bounds = array<i64: 128, 128>}, {pipeline_mode = #tpu.pipeline_mode<synchronous>, transform_indices = @transform_6, window_bounds = array<i64: 1, 128>}, {pipeline_mode = #tpu.pipeline_mode<synchronous>, transform_indices = @transform_7, window_bounds = array<i64: 1, 128>}, {pipeline_mode = #tpu.pipeline_mode<synchronous>, transform_indices = @transform_8, window_bounds = array<i64: 1, 1>}, {pipeline_mode = #tpu.pipeline_mode<synchronous>, transform_indices = @transform_9, window_bounds = array<i64: 128, 768>}, {pipeline_mode = #tpu.pipeline_mode<synchronous>, transform_indices = @transform_10, window_bounds = array<i64: 1, 768>}, {pipeline_mode = #tpu.pipeline_mode<synchronous>, transform_indices = @transform_11, window_bounds = array<i64: 256, 512>}, {pipeline_mode = #tpu.pipeline_mode<synchronous>, transform_indices = @transform_12, window_bounds = array<i64: 128, 256>}, {pipeline_mode = #tpu.pipeline_mode<synchronous>, transform_indices = @transform_13, window_bounds = array<i64: 1, 256>}, {pipeline_mode = #tpu.pipeline_mode<synchronous>, transform_indices = @transform_14, window_bounds = array<i64: 7, 8, 256>}, {pipeline_mode = #tpu.pipeline_mode<synchronous>, transform_indices = @transform_15, window_bounds = array<i64: 7, 8, 128>}]} {
    %c0 = arith.constant 0 : index
    %c0_0 = arith.constant 0 : index
    %c0_1 = arith.constant 0 : index
    %0 = vector.load %arg2[%c0, %c0_0, %c0_1] : memref<8x128x128xbf16, #tpu.memory_space<vmem>>, vector<8x128x128xbf16>
    %1 = vector.shape_cast %0 : vector<8x128x128xbf16> to vector<1024x128xbf16>
    %2 = arith.extf %0 : vector<8x128x128xbf16> to vector<8x128x128xf32>
    %cst = arith.constant dense<0.000000e+00> : vector<8x128xf32>
    %3 = vector.multi_reduction <add>, %2, %cst [1] : vector<8x128x128xf32> to vector<8x128xf32>
    %cst_2 = arith.constant 1.280000e+02 : f32
    %4 = vector.broadcast %cst_2 : f32 to vector<8x128xf32>
    %5 = arith.divf %3, %4 : vector<8x128xf32>
    %6 = arith.truncf %5 : vector<8x128xf32> to vector<8x128xbf16>
    %c0_3 = arith.constant 0 : index
    %c0_4 = arith.constant 0 : index
    %7 = vector.load %arg4[%c0_3, %c0_4] : memref<128x256xbf16, #tpu.memory_space<vmem>>, vector<128x256xbf16>
    %cst_5 = arith.constant dense<0.000000e+00> : vector<8x256xf32>
    %8 = tpu.matmul %6, %7, %cst_5 {dimension_numbers = #tpu.dot_dimension_numbers<[1], [0], [0], [1], [0, 0, 1, 1], [], []>} : vector<8x128xbf16>, vector<128x256xbf16>, vector<8x256xf32> -> vector<8x256xf32>
    %c0_6 = arith.constant 0 : index
    %c0_7 = arith.constant 0 : index
    %9 = vector.load %arg5[%c0_6, %c0_7] : memref<1x256xf32, #tpu.memory_space<vmem>>, vector<1x256xf32>
    %10 = vector.broadcast %9 : vector<1x256xf32> to vector<8x256xf32>
    %11 = arith.addf %8, %10 : vector<8x256xf32>
    %12 = vector.extract_strided_slice %11 {offsets = [0, 0], sizes = [8, 128], strides = [1, 1]} : vector<8x256xf32> to vector<8x128xf32>
    %13 = vector.extract_strided_slice %11 {offsets = [0, 128], sizes = [8, 128], strides = [1, 1]} : vector<8x256xf32> to vector<8x128xf32>
    %c0_8 = arith.constant 0 : index
    %c0_9 = arith.constant 0 : index
    %14 = vector.load %arg6[%c0_8, %c0_9] : memref<128x128xbf16, #tpu.memory_space<vmem>>, vector<128x128xbf16>
    %cst_10 = arith.constant dense<0.000000e+00> : vector<1024x128xf32>
    %15 = tpu.matmul %1, %14, %cst_10 {dimension_numbers = #tpu.dot_dimension_numbers<[1], [0], [0], [1], [0, 0, 1, 1], [], []>} : vector<1024x128xbf16>, vector<128x128xbf16>, vector<1024x128xf32> -> vector<1024x128xf32>
    %c0_11 = arith.constant 0 : index
    %c0_12 = arith.constant 0 : index
    %16 = vector.load %arg7[%c0_11, %c0_12] : memref<1x128xf32, #tpu.memory_space<vmem>>, vector<1x128xf32>
    %17 = vector.broadcast %16 : vector<1x128xf32> to vector<1024x128xf32>
    %18 = arith.addf %15, %17 : vector<1024x128xf32>
    %19 = vector.shape_cast %18 : vector<1024x128xf32> to vector<8x128x128xf32>
    %c0_13 = arith.constant 0 : index
    %c0_14 = arith.constant 0 : index
    %c0_15 = arith.constant 0 : index
    %20 = vector.load %arg17[%c0_13, %c0_14, %c0_15] : memref<8x128x128xf32, #tpu.memory_space<vmem>>, vector<8x128x128xf32>
    tpu.vector_store %arg17[%c0_13, %c0_14, %c0_15], %19 {strides = array<i32>} : memref<8x128x128xf32, #tpu.memory_space<vmem>>, vector<8x128x128xf32>,
    %21 = tpu.iota {dimensions = array<i32: 1>} : vector<8x1024xi32>
    %22 = tpu.iota {dimensions = array<i32: 0>} : vector<8x1024xi32>
    %c128_i32 = arith.constant 128 : i32
    %23 = vector.broadcast %c128_i32 : i32 to vector<8x1024xi32>
    %24 = arith.muli %22, %23 : vector<8x1024xi32>
    %25 = arith.cmpi sge, %21, %24 : vector<8x1024xi32>
    %c128_i32_16 = arith.constant 128 : i32
    %26 = vector.broadcast %c128_i32_16 : i32 to vector<8x1024xi32>
    %27 = arith.addi %24, %26 : vector<8x1024xi32>
    %28 = arith.cmpi slt, %21, %27 : vector<8x1024xi32>
    %29 = arith.andi %25, %28 : vector<8x1024xi1>
    %30 = arith.extui %29 : vector<8x1024xi1> to vector<8x1024xi32>
    %31 = arith.sitofp %30 : vector<8x1024xi32> to vector<8x1024xf32>
    %c0_17 = arith.constant 0 : index
    %c0_18 = arith.constant 0 : index
    %32 = vector.load %arg18[%c0_17, %c0_18] : memref<8x1024xf32, #tpu.memory_space<vmem>>, vector<8x1024xf32>
    tpu.vector_store %arg18[%c0_17, %c0_18], %31 {strides = array<i32>} : memref<8x1024xf32, #tpu.memory_space<vmem>>, vector<8x1024xf32>,
    %c0_i32 = arith.constant 0 : i32
    %c7_i32 = arith.constant 7 : i32
    %33 = arith.addi %c0_i32, %c7_i32 : i32
    %c1_i32 = arith.constant 1 : i32
    %34:2 = scf.for %arg19 = %c0_i32 to %33 step %c1_i32 iter_args(%arg20 = %12, %arg21 = %13) -> (vector<8x128xf32>, vector<8x128xf32>)  : i32 {
      %35 = arith.truncf %arg20 : vector<8x128xf32> to vector<8x128xbf16>
      %c0_20 = arith.constant 0 : index
      %c0_21 = arith.constant 0 : index
      %36 = vector.load %arg10[%c0_20, %c0_21] : memref<128x768xbf16, #tpu.memory_space<vmem>>, vector<128x768xbf16>
      %cst_22 = arith.constant dense<0.000000e+00> : vector<8x768xf32>
      %37 = tpu.matmul %35, %36, %cst_22 {dimension_numbers = #tpu.dot_dimension_numbers<[1], [0], [0], [1], [0, 0, 1, 1], [], []>} : vector<8x128xbf16>, vector<128x768xbf16>, vector<8x768xf32> -> vector<8x768xf32>
      %c0_23 = arith.constant 0 : index
      %c0_24 = arith.constant 0 : index
      %38 = vector.load %arg11[%c0_23, %c0_24] : memref<1x768xf32, #tpu.memory_space<vmem>>, vector<1x768xf32>
      %39 = vector.broadcast %38 : vector<1x768xf32> to vector<8x768xf32>
      %40 = arith.addf %37, %39 : vector<8x768xf32>
      %41 = vector.extract_strided_slice %40 {offsets = [0, 0], sizes = [8, 128], strides = [1, 1]} : vector<8x768xf32> to vector<8x128xf32>
      %42 = vector.extract_strided_slice %40 {offsets = [0, 128], sizes = [8, 128], strides = [1, 1]} : vector<8x768xf32> to vector<8x128xf32>
      %43 = vector.extract_strided_slice %40 {offsets = [0, 256], sizes = [8, 512], strides = [1, 1]} : vector<8x768xf32> to vector<8x512xf32>
      %c0_25 = arith.constant 0 : index
      %c0_26 = arith.constant 0 : index
      %c0_27 = arith.constant 0 : index
      %44 = vector.load %arg17[%c0_25, %c0_26, %c0_27] : memref<8x128x128xf32, #tpu.memory_space<vmem>>, vector<8x128x128xf32>
      %45 = vector.shape_cast %41 : vector<8x128xf32> to vector<8x1x128xf32>
      %46 = vector.broadcast %45 : vector<8x1x128xf32> to vector<8x128x128xf32>
      %47 = arith.addf %44, %46 : vector<8x128x128xf32>
      %cst_28 = arith.constant 0.000000e+00 : f32
      %48 = vector.broadcast %cst_28 : f32 to vector<8x128x128xf32>
      %49 = arith.maximumf %47, %48 : vector<8x128x128xf32>
      %c0_29 = arith.constant 0 : index
      %c0_30 = arith.constant 0 : index
      %50 = vector.load %arg8[%c0_29, %c0_30] : memref<1x128xf32, #tpu.memory_space<vmem>>, vector<1x128xf32>
      %51 = vector.shape_cast %50 : vector<1x128xf32> to vector<1x1x128xf32>
      %52 = vector.broadcast %51 : vector<1x1x128xf32> to vector<8x128x128xf32>
      %53 = arith.mulf %49, %52 : vector<8x128x128xf32>
      %cst_31 = arith.constant dense<0.000000e+00> : vector<8x128xf32>
      %54 = vector.multi_reduction <add>, %53, %cst_31 [2] : vector<8x128x128xf32> to vector<8x128xf32>
      %c0_32 = arith.constant 0 : index
      %c0_33 = arith.constant 0 : index
      %55 = vector.load %arg9[%c0_32, %c0_33] : memref<1x1xf32, #tpu.memory_space<vmem>>, vector<1x1xf32>
      %56 = vector.extract %55[0, 0] : f32 from vector<1x1xf32>
      %57 = vector.broadcast %56 : f32 to vector<8x128xf32>
      %58 = arith.addf %54, %57 : vector<8x128xf32>
      %cst_34 = arith.constant dense<0xFF800000> : vector<8xf32>
      %59 = vector.multi_reduction <maximumf>, %58, %cst_34 [1] : vector<8x128xf32> to vector<8xf32>
      %60 = vector.shape_cast %59 : vector<8xf32> to vector<8x1xf32>
      %61 = vector.broadcast %60 : vector<8x1xf32> to vector<8x128xf32>
      %62 = arith.subf %58, %61 : vector<8x128xf32>
      %63 = math.exp %62 : vector<8x128xf32>
      %cst_35 = arith.constant dense<0.000000e+00> : vector<8xf32>
      %64 = vector.multi_reduction <add>, %63, %cst_35 [1] : vector<8x128xf32> to vector<8xf32>
      %65 = vector.shape_cast %64 : vector<8xf32> to vector<8x1xf32>
      %66 = vector.broadcast %65 : vector<8x1xf32> to vector<8x128xf32>
      %67 = arith.divf %63, %66 : vector<8x128xf32>
      %68 = tpu.concatenate %67, %67, %67, %67, %67, %67, %67, %67 in 1 : vector<8x128xf32>, vector<8x128xf32>, vector<8x128xf32>, vector<8x128xf32>, vector<8x128xf32>, vector<8x128xf32>, vector<8x128xf32>, vector<8x128xf32> -> vector<8x1024xf32>
      %c0_36 = arith.constant 0 : index
      %c0_37 = arith.constant 0 : index
      %69 = vector.load %arg18[%c0_36, %c0_37] : memref<8x1024xf32, #tpu.memory_space<vmem>>, vector<8x1024xf32>
      %70 = arith.mulf %68, %69 : vector<8x1024xf32>
      %71 = arith.truncf %70 : vector<8x1024xf32> to vector<8x1024xbf16>
      %c0_38 = arith.constant 0 : index
      %c0_39 = arith.constant 0 : index
      %c0_40 = arith.constant 0 : index
      %72 = vector.load %arg2[%c0_38, %c0_39, %c0_40] : memref<8x128x128xbf16, #tpu.memory_space<vmem>>, vector<8x128x128xbf16>
      %73 = vector.shape_cast %72 : vector<8x128x128xbf16> to vector<1024x128xbf16>
      %cst_41 = arith.constant dense<0.000000e+00> : vector<8x128xf32>
      %74 = tpu.matmul %71, %73, %cst_41 {dimension_numbers = #tpu.dot_dimension_numbers<[1], [0], [0], [1], [0, 0, 1, 1], [], []>} : vector<8x1024xbf16>, vector<1024x128xbf16>, vector<8x128xf32> -> vector<8x128xf32>
      %75 = arith.negf %42 : vector<8x128xf32>
      %76 = math.exp %75 : vector<8x128xf32>
      %cst_42 = arith.constant 1.000000e+00 : f32
      %77 = vector.broadcast %cst_42 : f32 to vector<8x128xf32>
      %78 = arith.addf %77, %76 : vector<8x128xf32>
      %79 = arith.divf %77, %78 : vector<8x128xf32>
      %80 = arith.mulf %79, %74 : vector<8x128xf32>
      %81 = arith.index_cast %arg19 : i32 to index
      %c0_43 = arith.constant 0 : index
      %c0_44 = arith.constant 0 : index
      %82 = vector.load %arg3[%81, %c0_43, %c0_44] : memref<7x8x128xf32, #tpu.memory_space<vmem>>, vector<1x8x128xf32>
      %83 = vector.shape_cast %82 : vector<1x8x128xf32> to vector<8x128xf32>
      %84 = tpu.concatenate %83, %80 in 1 : vector<8x128xf32>, vector<8x128xf32> -> vector<8x256xf32>
      %85 = arith.truncf %84 : vector<8x256xf32> to vector<8x256xbf16>
      %c0_45 = arith.constant 0 : index
      %c0_46 = arith.constant 0 : index
      %86 = vector.load %arg12[%c0_45, %c0_46] : memref<256x512xbf16, #tpu.memory_space<vmem>>, vector<256x512xbf16>
      %cst_47 = arith.constant dense<0.000000e+00> : vector<8x512xf32>
      %87 = tpu.matmul %85, %86, %cst_47 {dimension_numbers = #tpu.dot_dimension_numbers<[1], [0], [0], [1], [0, 0, 1, 1], [], []>} : vector<8x256xbf16>, vector<256x512xbf16>, vector<8x512xf32> -> vector<8x512xf32>
      %88 = arith.addf %87, %43 : vector<8x512xf32>
      %89 = vector.extract_strided_slice %88 {offsets = [0, 0], sizes = [8, 128], strides = [1, 1]} : vector<8x512xf32> to vector<8x128xf32>
      %90 = arith.negf %89 : vector<8x128xf32>
      %91 = math.exp %90 : vector<8x128xf32>
      %cst_48 = arith.constant 1.000000e+00 : f32
      %92 = vector.broadcast %cst_48 : f32 to vector<8x128xf32>
      %93 = arith.addf %92, %91 : vector<8x128xf32>
      %94 = arith.divf %92, %93 : vector<8x128xf32>
      %95 = vector.extract_strided_slice %88 {offsets = [0, 128], sizes = [8, 128], strides = [1, 1]} : vector<8x512xf32> to vector<8x128xf32>
      %96 = arith.negf %95 : vector<8x128xf32>
      %97 = math.exp %96 : vector<8x128xf32>
      %cst_49 = arith.constant 1.000000e+00 : f32
      %98 = vector.broadcast %cst_49 : f32 to vector<8x128xf32>
      %99 = arith.addf %98, %97 : vector<8x128xf32>
      %100 = arith.divf %98, %99 : vector<8x128xf32>
      %101 = vector.extract_strided_slice %88 {offsets = [0, 256], sizes = [8, 128], strides = [1, 1]} : vector<8x512xf32> to vector<8x128xf32>
      %102 = math.tanh %101 : vector<8x128xf32>
      %103 = vector.extract_strided_slice %88 {offsets = [0, 384], sizes = [8, 128], strides = [1, 1]} : vector<8x512xf32> to vector<8x128xf32>
      %104 = arith.negf %103 : vector<8x128xf32>
      %105 = math.exp %104 : vector<8x128xf32>
      %cst_50 = arith.constant 1.000000e+00 : f32
      %106 = vector.broadcast %cst_50 : f32 to vector<8x128xf32>
      %107 = arith.addf %106, %105 : vector<8x128xf32>
      %108 = arith.divf %106, %107 : vector<8x128xf32>
      %109 = arith.mulf %100, %arg21 : vector<8x128xf32>
      %110 = arith.mulf %94, %102 : vector<8x128xf32>
      %111 = arith.addf %109, %110 : vector<8x128xf32>
      %112 = math.tanh %111 : vector<8x128xf32>
      %113 = arith.mulf %108, %112 : vector<8x128xf32>
      %114 = arith.truncf %113 : vector<8x128xf32> to vector<8x128xbf16>
      %c0_51 = arith.constant 0 : index
      %c0_52 = arith.constant 0 : index
      %115 = vector.load %arg13[%c0_51, %c0_52] : memref<128x256xbf16, #tpu.memory_space<vmem>>, vector<128x256xbf16>
      %cst_53 = arith.constant dense<0.000000e+00> : vector<8x256xf32>
      %116 = tpu.matmul %114, %115, %cst_53 {dimension_numbers = #tpu.dot_dimension_numbers<[1], [0], [0], [1], [0, 0, 1, 1], [], []>} : vector<8x128xbf16>, vector<128x256xbf16>, vector<8x256xf32> -> vector<8x256xf32>
      %c0_54 = arith.constant 0 : index
      %c0_55 = arith.constant 0 : index
      %117 = vector.load %arg14[%c0_54, %c0_55] : memref<1x256xf32, #tpu.memory_space<vmem>>, vector<1x256xf32>
      %118 = vector.broadcast %117 : vector<1x256xf32> to vector<8x256xf32>
      %119 = arith.addf %116, %118 : vector<8x256xf32>
      %c0_56 = arith.constant 0 : index
      %c0_57 = arith.constant 0 : index
      %120 = vector.load %arg1[%c0_56, %c0_57] : memref<8x1xi32, #tpu.memory_space<vmem>>, vector<8x1xi32>
      %121 = vector.broadcast %arg19 : i32 to vector<8x1xi32>
      %122 = arith.cmpi sgt, %120, %121 : vector<8x1xi32>
      %cst_58 = arith.constant 0.000000e+00 : f32
      %123 = vector.shape_cast %122 : vector<8x1xi1> to vector<8x1xi1>
      %124 = vector.broadcast %123 : vector<8x1xi1> to vector<8x256xi1>
      %125 = vector.broadcast %cst_58 : f32 to vector<8x256xf32>
      %126 = arith.select %124, %119, %125 : vector<8x256xi1>, vector<8x256xf32>
      %127 = arith.index_cast %arg19 : i32 to index
      %c0_59 = arith.constant 0 : index
      %c0_60 = arith.constant 0 : index
      %128 = vector.load %arg15[%127, %c0_59, %c0_60] : memref<7x8x256xf32, #tpu.memory_space<vmem>>, vector<1x8x256xf32>
      %129 = vector.shape_cast %128 : vector<1x8x256xf32> to vector<8x256xf32>
      %130 = vector.shape_cast %126 : vector<8x256xf32> to vector<1x8x256xf32>
      tpu.vector_store %arg15[%127, %c0_59, %c0_60], %130 {strides = array<i32>} : memref<7x8x256xf32, #tpu.memory_space<vmem>>, vector<1x8x256xf32>,
      %cst_61 = arith.constant 0.000000e+00 : f32
      %131 = vector.shape_cast %122 : vector<8x1xi1> to vector<8x1xi1>
      %132 = vector.broadcast %131 : vector<8x1xi1> to vector<8x128xi1>
      %133 = vector.broadcast %cst_61 : f32 to vector<8x128xf32>
      %134 = arith.select %132, %67, %133 : vector<8x128xi1>, vector<8x128xf32>
      %135 = arith.index_cast %arg19 : i32 to index
      %c0_62 = arith.constant 0 : index
      %c0_63 = arith.constant 0 : index
      %136 = vector.load %arg16[%135, %c0_62, %c0_63] : memref<7x8x128xf32, #tpu.memory_space<vmem>>, vector<1x8x128xf32>
      %137 = vector.shape_cast %136 : vector<1x8x128xf32> to vector<8x128xf32>
      %138 = vector.shape_cast %134 : vector<8x128xf32> to vector<1x8x128xf32>
      tpu.vector_store %arg16[%135, %c0_62, %c0_63], %138 {strides = array<i32>} : memref<7x8x128xf32, #tpu.memory_space<vmem>>, vector<1x8x128xf32>,
      scf.yield %113, %111 : vector<8x128xf32>, vector<8x128xf32>
    }
    %c7_i32_19 = arith.constant 7 : i32
    return
  }
  func.func @transform_0(%arg0: i32) -> (i32, i32) {
    %c0_i32 = arith.constant 0 : i32
    %c0_i32_0 = arith.constant 0 : i32
    %c0_i32_1 = arith.constant 0 : i32
    return %c0_i32, %c0_i32_0 : i32, i32
  }
  func.func @transform_1(%arg0: i32) -> (i32, i32, i32) {
    %c0_i32 = arith.constant 0 : i32
    %c0_i32_0 = arith.constant 0 : i32
    %c0_i32_1 = arith.constant 0 : i32
    %c0_i32_2 = arith.constant 0 : i32
    return %c0_i32, %c0_i32_0, %c0_i32_1 : i32, i32, i32
  }
  func.func @transform_2(%arg0: i32) -> (i32, i32, i32) {
    %c0_i32 = arith.constant 0 : i32
    %c0_i32_0 = arith.constant 0 : i32
    %c0_i32_1 = arith.constant 0 : i32
    %c0_i32_2 = arith.constant 0 : i32
    return %c0_i32, %c0_i32_0, %c0_i32_1 : i32, i32, i32
  }
  func.func @transform_3(%arg0: i32) -> (i32, i32) {
    %c0_i32 = arith.constant 0 : i32
    %c0_i32_0 = arith.constant 0 : i32
    %c0_i32_1 = arith.constant 0 : i32
    return %c0_i32, %c0_i32_0 : i32, i32
  }
  func.func @transform_4(%arg0: i32) -> (i32, i32) {
    %c0_i32 = arith.constant 0 : i32
    %c0_i32_0 = arith.constant 0 : i32
    %c0_i32_1 = arith.constant 0 : i32
    return %c0_i32, %c0_i32_0 : i32, i32
  }
  func.func @transform_5(%arg0: i32) -> (i32, i32) {
    %c0_i32 = arith.constant 0 : i32
    %c0_i32_0 = arith.constant 0 : i32
    %c0_i32_1 = arith.constant 0 : i32
    return %c0_i32, %c0_i32_0 : i32, i32
  }
  func.func @transform_6(%arg0: i32) -> (i32, i32) {
    %c0_i32 = arith.constant 0 : i32
    %c0_i32_0 = arith.constant 0 : i32
    %c0_i32_1 = arith.constant 0 : i32
    return %c0_i32, %c0_i32_0 : i32, i32
  }
  func.func @transform_7(%arg0: i32) -> (i32, i32) {
    %c0_i32 = arith.constant 0 : i32
    %c0_i32_0 = arith.constant 0 : i32
    %c0_i32_1 = arith.constant 0 : i32
    return %c0_i32, %c0_i32_0 : i32, i32
  }
  func.func @transform_8(%arg0: i32) -> (i32, i32) {
    %c0_i32 = arith.constant 0 : i32
    %c0_i32_0 = arith.constant 0 : i32
    %c0_i32_1 = arith.constant 0 : i32
    return %c0_i32, %c0_i32_0 : i32, i32
  }
  func.func @transform_9(%arg0: i32) -> (i32, i32) {
    %c0_i32 = arith.constant 0 : i32
    %c0_i32_0 = arith.constant 0 : i32
    %c0_i32_1 = arith.constant 0 : i32
    return %c0_i32, %c0_i32_0 : i32, i32
  }
  func.func @transform_10(%arg0: i32) -> (i32, i32) {
    %c0_i32 = arith.constant 0 : i32
    %c0_i32_0 = arith.constant 0 : i32
    %c0_i32_1 = arith.constant 0 : i32
    return %c0_i32, %c0_i32_0 : i32, i32
  }
  func.func @transform_11(%arg0: i32) -> (i32, i32) {
    %c0_i32 = arith.constant 0 : i32
    %c0_i32_0 = arith.constant 0 : i32
    %c0_i32_1 = arith.constant 0 : i32
    return %c0_i32, %c0_i32_0 : i32, i32
  }
  func.func @transform_12(%arg0: i32) -> (i32, i32) {
    %c0_i32 = arith.constant 0 : i32
    %c0_i32_0 = arith.constant 0 : i32
    %c0_i32_1 = arith.constant 0 : i32
    return %c0_i32, %c0_i32_0 : i32, i32
  }
  func.func @transform_13(%arg0: i32) -> (i32, i32) {
    %c0_i32 = arith.constant 0 : i32
    %c0_i32_0 = arith.constant 0 : i32
    %c0_i32_1 = arith.constant 0 : i32
    return %c0_i32, %c0_i32_0 : i32, i32
  }
  func.func @transform_14(%arg0: i32) -> (i32, i32, i32) {
    %c0_i32 = arith.constant 0 : i32
    %c0_i32_0 = arith.constant 0 : i32
    %c0_i32_1 = arith.constant 0 : i32
    %c0_i32_2 = arith.constant 0 : i32
    return %c0_i32, %c0_i32_0, %c0_i32_1 : i32, i32, i32
  }
  func.func @transform_15(%arg0: i32) -> (i32, i32, i32) {
    %c0_i32 = arith.constant 0 : i32
    %c0_i32_0 = arith.constant 0 : i32
    %c0_i32_1 = arith.constant 0 : i32
    %c0_i32_2 = arith.constant 0 : i32
    return %c0_i32, %c0_i32_0, %c0_i32_1 : i32, i32, i32
  }
}

</mosaic_0001>

<llo_original>
// kernel: tpu_custom_call.1
$region0: #{tpu_custom_call.1}
  #allocation0 [shape = 'u32[]', space=smem, size = 0x4, offset = 0x4, fixed_abs, tag = 'smem constant byte address 0x4 - core index']
  #allocation1 [shape = 'u32[144,128]{1,0:T(1,128)}', space=vmem, size = 0x12000, scoped, tag = 'internal scratch']
  #allocation2 [shape = 'f32[8,128,128]{2,1,0:T(8,128)}', space=vmem, size = 0x80000, scoped, tag = 'scratch operand']
  #allocation3 [shape = 'f32[8,1024]{1,0:T(8,128)}', space=vmem, size = 0x8000, scoped, tag = 'scratch operand']
  #allocation4 [shape = 'f32[1,1]{1,0:T(1,128)S(1)}', space=vmem, size = 0x200, scoped, tag = 'scoped memory for tpu_custom_call.1']
  %s0 = inlined_call_operand.vmem [shape: s32[8,1], index: 0, kind: input, shape index: {}]
  %s1 = inlined_call_operand.hbm [shape: bf16[8,128,128], index: 1, kind: input, shape index: {}]
  %s2 = inlined_call_operand.hbm [shape: f32[7,8,128], index: 2, kind: input, shape index: {}]
  %s3 = inlined_call_operand.hbm [shape: bf16[128,256], index: 3, kind: input, shape index: {}]
  %s4 = inlined_call_operand.vmem [shape: f32[1,256], index: 4, kind: input, shape index: {}]
  %s5 = inlined_call_operand.hbm [shape: bf16[128,128], index: 5, kind: input, shape index: {}]
  %s6 = inlined_call_operand.vmem [shape: f32[1,128], index: 6, kind: input, shape index: {}]
  %s7 = inlined_call_operand.vmem [shape: f32[1,128], index: 7, kind: input, shape index: {}]
  %s8 = inlined_call_operand.<no memory space> [shape: f32[1,1], index: 8, kind: input, shape index: {}]
  %s9 = inlined_call_operand.hbm [shape: bf16[128,768], index: 9, kind: input, shape index: {}]
  %s10 = inlined_call_operand.vmem [shape: f32[1,768], index: 10, kind: input, shape index: {}]
  %s11 = inlined_call_operand.hbm [shape: bf16[256,512], index: 11, kind: input, shape index: {}]
  %s12 = inlined_call_operand.hbm [shape: bf16[128,256], index: 12, kind: input, shape index: {}]
  %s13 = inlined_call_operand.vmem [shape: f32[1,256], index: 13, kind: input, shape index: {}]
  %s14 = inlined_call_operand.hbm [shape: f32[7,8,256], index: 14, kind: output, shape index: {0}]
  %s15 = inlined_call_operand.hbm [shape: f32[7,8,128], index: 15, kind: output, shape index: {1}]
  %16 = xla_tuple %s14, %s15
  %s17 = sld [smem:[#allocation0]]
  $region109: #{tpu_custom_call.1} parent=0
    _
  %s19 = ssub.s32 1, %s17
  %s20 = scalar_select 0, %s19, %s17
  %v21 = vstv %s8
  %22 = vst [vmem:[#allocation4] sm:$0x1] %v21
  $region1: #{tpu_custom_call.1} parent=0
    #allocation5 [shape = 'u8[262144]{0}', space=vmem, size = 0x40000, scoped, tag = 'input window, operand 1, single buffered']
    #allocation6 [shape = 's32[1]{0}', space=sflag, size = 0x4, scoped, tag = 'scoped memory for tpu_custom_call.1']
    #allocation7 [shape = 's32[1]{0}', space=sflag, size = 0x4, scoped, tag = 'scoped memory for tpu_custom_call.1']
    #allocation8 [shape = 'u8[28672]{0}', space=vmem, size = 0x7000, scoped, tag = 'input window, operand 2, single buffered']
    #allocation9 [shape = 's32[1]{0}', space=sflag, size = 0x4, scoped, tag = 'scoped memory for tpu_custom_call.1']
    #allocation10 [shape = 'u8[65536]{0}', space=vmem, size = 0x10000, scoped, tag = 'input window, operand 3, single buffered']
    #allocation11 [shape = 'u8[32768]{0}', space=vmem, size = 0x8000, scoped, tag = 'input window, operand 5, single buffered']
    #allocation12 [shape = 's32[1]{0}', space=sflag, size = 0x4, scoped, tag = 'scoped memory for tpu_custom_call.1']
    #allocation13 [shape = 'u8[196608]{0}', space=vmem, size = 0x30000, scoped, tag = 'input window, operand 9, single buffered']
    #allocation14 [shape = 'u8[262144]{0}', space=vmem, size = 0x40000, scoped, tag = 'input window, operand 11, single buffered']
    #allocation15 [shape = 's32[1]{0}', space=sflag, size = 0x4, scoped, tag = 'scoped memory for tpu_custom_call.1']
    #allocation16 [shape = 'u8[65536]{0}', space=vmem, size = 0x10000, scoped, tag = 'input window, operand 12, single buffered']
    #allocation17 [shape = 'u8[57344]{0}', space=vmem, size = 0xe000, scoped, tag = 'output window, operand 0, single buffered']
    #allocation18 [shape = 'u8[28672]{0}', space=vmem, size = 0x7000, scoped, tag = 'output window, operand 1, single buffered']
    #allocation19 [shape = 's32[1]{0}', space=sflag, size = 0x4, scoped, tag = 'scoped memory for tpu_custom_call.1']
    %23 = vsyncpa [#allocation6], 0
    %24 = vsyncpa [#allocation9], 0
    %25 = vsyncpa [#allocation12], 0
    %26 = vsyncpa [#allocation15], 0
    %27 = vsyncpa [#allocation7], 0
    %28 = vsyncpa [#allocation19], 0
    // Predicated region
    $region2: #{tpu_custom_call.1} parent=1 // pred_check
      _
    $region3: #{tpu_custom_call.1} parent=1 // pred_check_branch
      %30 = sbr.rel (0) target = $region5
    $region4: #{tpu_custom_call.1} parent=1 // pred_region
      _
    $region5: #{tpu_custom_call.1} parent=1 // pred_fallthru
      _
    // Predicated region
    $region6: #{tpu_custom_call.1} parent=1 // pred_check
      _
    $region7: #{tpu_custom_call.1} parent=1 // pred_check_branch
      %32 = sbr.rel (0) target = $region9
    $region8: #{tpu_custom_call.1} parent=1 // pred_region
      %s34 = ssub.s32 8192, 8192
      %35 = vsyncadd [#allocation6], %s34
      %s36 = sshll.u32 [#allocation5], 4
      %s37 = int_to_ptr.vmem [resolvable:$true] %s36
      %42 = dma.hbm_to_vmem [thread:$0]  %s1, 8192, %s37, [#allocation6], 64, 64, 4
    $region9: #{tpu_custom_call.1} parent=1 // pred_fallthru
      _
    // Predicated region
    $region10: #{tpu_custom_call.1} parent=1 // pred_check
      _
    $region11: #{tpu_custom_call.1} parent=1 // pred_check_branch
      %44 = sbr.rel (0) target = $region13
    $region12: #{tpu_custom_call.1} parent=1 // pred_region
      %s46 = ssub.s32 896, 896
      %47 = vsyncadd [#allocation9], %s46
      %s48 = sshll.u32 [#allocation8], 4
      %s49 = int_to_ptr.vmem [resolvable:$true] %s48
      %54 = dma.hbm_to_vmem [thread:$0]  %s2, 896, %s49, [#allocation9], 128, 128, 8
    $region13: #{tpu_custom_call.1} parent=1 // pred_fallthru
      _
    // Predicated region
    $region14: #{tpu_custom_call.1} parent=1 // pred_check
      _
    $region15: #{tpu_custom_call.1} parent=1 // pred_check_branch
      %56 = sbr.rel (0) target = $region17
    $region16: #{tpu_custom_call.1} parent=1 // pred_region
      %s58 = ssub.s32 2048, 2048
      %59 = vsyncadd [#allocation9], %s58
      %s60 = sshll.u32 [#allocation10], 4
      %s61 = int_to_ptr.vmem [resolvable:$true] %s60
      %66 = dma.hbm_to_vmem [thread:$0]  %s3, 2048, %s61, [#allocation9], 128, 128, 8
    $region17: #{tpu_custom_call.1} parent=1 // pred_fallthru
      _
    // Predicated region
    $region18: #{tpu_custom_call.1} parent=1 // pred_check
      _
    $region19: #{tpu_custom_call.1} parent=1 // pred_check_branch
      %68 = sbr.rel (0) target = $region21
    $region20: #{tpu_custom_call.1} parent=1 // pred_region
      _
    $region21: #{tpu_custom_call.1} parent=1 // pred_fallthru
      _
    // Predicated region
    $region22: #{tpu_custom_call.1} parent=1 // pred_check
      _
    $region23: #{tpu_custom_call.1} parent=1 // pred_check_branch
      %70 = sbr.rel (0) target = $region25
    $region24: #{tpu_custom_call.1} parent=1 // pred_region
      %s72 = ssub.s32 1024, 1024
      %73 = vsyncadd [#allocation12], %s72
      %s74 = sshll.u32 [#allocation11], 4
      %s75 = int_to_ptr.vmem [resolvable:$true] %s74
      %80 = dma.hbm_to_vmem [thread:$0]  %s5, 1024, %s75, [#allocation12], 64, 64, 4
    $region25: #{tpu_custom_call.1} parent=1 // pred_fallthru
      _
    // Predicated region
    $region26: #{tpu_custom_call.1} parent=1 // pred_check
      _
    $region27: #{tpu_custom_call.1} parent=1 // pred_check_branch
      %82 = sbr.rel (0) target = $region29
    $region28: #{tpu_custom_call.1} parent=1 // pred_region
      _
    $region29: #{tpu_custom_call.1} parent=1 // pred_fallthru
      _
    // Predicated region
    $region30: #{tpu_custom_call.1} parent=1 // pred_check
      _
    $region31: #{tpu_custom_call.1} parent=1 // pred_check_branch
      %84 = sbr.rel (0) target = $region33
    $region32: #{tpu_custom_call.1} parent=1 // pred_region
      _
    $region33: #{tpu_custom_call.1} parent=1 // pred_fallthru
      _
    // Predicated region
    $region34: #{tpu_custom_call.1} parent=1 // pred_check
      _
    $region35: #{tpu_custom_call.1} parent=1 // pred_check_branch
      %86 = sbr.rel (0) target = $region37
    $region36: #{tpu_custom_call.1} parent=1 // pred_region
      _
    $region37: #{tpu_custom_call.1} parent=1 // pred_fallthru
      _
    // Predicated region
    $region38: #{tpu_custom_call.1} parent=1 // pred_check
      _
    $region39: #{tpu_custom_call.1} parent=1 // pred_check_branch
      %88 = sbr.rel (0) target = $region41
    $region40: #{tpu_custom_call.1} parent=1 // pred_region
      %s90 = ssub.s32 6144, 6144
      %91 = vsyncadd [#allocation12], %s90
      %s92 = sshll.u32 [#allocation13], 4
      %s93 = int_to_ptr.vmem [resolvable:$true] %s92
      %98 = dma.hbm_to_vmem [thread:$0]  %s9, 6144, %s93, [#allocation12], 384, 384, 24
    $region41: #{tpu_custom_call.1} parent=1 // pred_fallthru
      _
    // Predicated region
    $region42: #{tpu_custom_call.1} parent=1 // pred_check
      _
    $region43: #{tpu_custom_call.1} parent=1 // pred_check_branch
      %100 = sbr.rel (0) target = $region45
    $region44: #{tpu_custom_call.1} parent=1 // pred_region
      _
    $region45: #{tpu_custom_call.1} parent=1 // pred_fallthru
      _
    // Predicated region
    $region46: #{tpu_custom_call.1} parent=1 // pred_check
      _
    $region47: #{tpu_custom_call.1} parent=1 // pred_check_branch
      %102 = sbr.rel (0) target = $region49
    $region48: #{tpu_custom_call.1} parent=1 // pred_region
      %s104 = ssub.s32 8192, 8192
      %105 = vsyncadd [#allocation15], %s104
      %s106 = sshll.u32 [#allocation14], 4
      %s107 = int_to_ptr.vmem [resolvable:$true] %s106
      %112 = dma.hbm_to_vmem [thread:$0]  %s11, 8192, %s107, [#allocation15], 256, 256, 16
    $region49: #{tpu_custom_call.1} parent=1 // pred_fallthru
      _
    // Predicated region
    $region50: #{tpu_custom_call.1} parent=1 // pred_check
      _
    $region51: #{tpu_custom_call.1} parent=1 // pred_check_branch
      %114 = sbr.rel (0) target = $region53
    $region52: #{tpu_custom_call.1} parent=1 // pred_region
      %s116 = ssub.s32 2048, 2048
      %117 = vsyncadd [#allocation15], %s116
      %s118 = sshll.u32 [#allocation16], 4
      %s119 = int_to_ptr.vmem [resolvable:$true] %s118
      %124 = dma.hbm_to_vmem [thread:$0]  %s12, 2048, %s119, [#allocation15], 128, 128, 8
    $region53: #{tpu_custom_call.1} parent=1 // pred_fallthru
      _
    // Predicated region
    $region54: #{tpu_custom_call.1} parent=1 // pred_check
      _
    $region55: #{tpu_custom_call.1} parent=1 // pred_check_branch
      %126 = sbr.rel (0) target = $region57
    $region56: #{tpu_custom_call.1} parent=1 // pred_region
      _
    $region57: #{tpu_custom_call.1} parent=1 // pred_fallthru
      _
    // Predicated region
    $region58: #{tpu_custom_call.1} parent=1 // pred_check
      _
    $region59: #{tpu_custom_call.1} parent=1 // pred_check_branch
      %128 = sbr.rel (0) target = $region61
    $region60: #{tpu_custom_call.1} parent=1 // pred_region
      %129 = dma.done [#allocation6], 8192
    $region61: #{tpu_custom_call.1} parent=1 // pred_fallthru
      _
    // Predicated region
    $region62: #{tpu_custom_call.1} parent=1 // pred_check
      _
    $region63: #{tpu_custom_call.1} parent=1 // pred_check_branch
      %131 = sbr.rel (0) target = $region65
    $region64: #{tpu_custom_call.1} parent=1 // pred_region
      %132 = dma.done [#allocation9], 896
    $region65: #{tpu_custom_call.1} parent=1 // pred_fallthru
      _
    // Predicated region
    $region66: #{tpu_custom_call.1} parent=1 // pred_check
      _
    $region67: #{tpu_custom_call.1} parent=1 // pred_check_branch
      %134 = sbr.rel (0) target = $region69
    $region68: #{tpu_custom_call.1} parent=1 // pred_region
      %135 = dma.done [#allocation9], 2048
    $region69: #{tpu_custom_call.1} parent=1 // pred_fallthru
      _
    // Predicated region
    $region70: #{tpu_custom_call.1} parent=1 // pred_check
      _
    $region71: #{tpu_custom_call.1} parent=1 // pred_check_branch
      %137 = sbr.rel (0) target = $region73
    $region72: #{tpu_custom_call.1} parent=1 // pred_region
      %138 = dma.done [#allocation12], 1024
    $region73: #{tpu_custom_call.1} parent=1 // pred_fallthru
      _
    // Predicated region
    $region74: #{tpu_custom_call.1} parent=1 // pred_check
      _
    $region75: #{tpu_custom_call.1} parent=1 // pred_check_branch
      %140 = sbr.rel (0) target = $region77
    $region76: #{tpu_custom_call.1} parent=1 // pred_region
      %141 = dma.done [#allocation12], 6144
    $region77: #{tpu_custom_call.1} parent=1 // pred_fallthru
      _
    // Predicated region
    $region78: #{tpu_custom_call.1} parent=1 // pred_check
      _
    $region79: #{tpu_custom_call.1} parent=1 // pred_check_branch
      %143 = sbr.rel (0) target = $region81
    $region80: #{tpu_custom_call.1} parent=1 // pred_region
      %144 = dma.done [#allocation15], 8192
    $region81: #{tpu_custom_call.1} parent=1 // pred_fallthru
      _
    // Predicated region
    $region82: #{tpu_custom_call.1} parent=1 // pred_check
      _
    $region83: #{tpu_custom_call.1} parent=1 // pred_check_branch
      %146 = sbr.rel (0) target = $region85
    $region84: #{tpu_custom_call.1} parent=1 // pred_region
      %147 = dma.done [#allocation15], 2048
    $region85: #{tpu_custom_call.1} parent=1 // pred_fallthru
      _
    %v149 = vld [vmem:[#allocation5] sm:$0xf]
    %v150 = vld [vmem:[#allocation5 + $0x4] sm:$0xf]
    %v151 = vld [vmem:[#allocation5 + $0x8] sm:$0xf]
    %v152 = vld [vmem:[#allocation5 + $0xc] sm:$0xf]
    %v153 = vld [vmem:[#allocation5 + $0x10] sm:$0xf]
    %v154 = vld [vmem:[#allocation5 + $0x14] sm:$0xf]
    %v155 = vld [vmem:[#allocation5 + $0x18] sm:$0xf]
    %v156 = vld [vmem:[#allocation5 + $0x1c] sm:$0xf]
    %v157 = vld [vmem:[#allocation5 + $0x20] sm:$0xf]
    %v158 = vld [vmem:[#allocation5 + $0x24] sm:$0xf]
    %v159 = vld [vmem:[#allocation5 + $0x28] sm:$0xf]
    %v160 = vld [vmem:[#allocation5 + $0x2c] sm:$0xf]
    %v161 = vld [vmem:[#allocation5 + $0x30] sm:$0xf]
    %v162 = vld [vmem:[#allocation5 + $0x34] sm:$0xf]
    %v163 = vld [vmem:[#allocation5 + $0x38] sm:$0xf]
    %v164 = vld [vmem:[#allocation5 + $0x3c] sm:$0xf]
    %v165 = vld [vmem:[#allocation5 + $0x40] sm:$0xf]
    %v166 = vld [vmem:[#allocation5 + $0x44] sm:$0xf]
    %v167 = vld [vmem:[#allocation5 + $0x48] sm:$0xf]
    %v168 = vld [vmem:[#allocation5 + $0x4c] sm:$0xf]
    %v169 = vld [vmem:[#allocation5 + $0x50] sm:$0xf]
    %v170 = vld [vmem:[#allocation5 + $0x54] sm:$0xf]
    %v171 = vld [vmem:[#allocation5 + $0x58] sm:$0xf]
    %v172 = vld [vmem:[#allocation5 + $0x5c] sm:$0xf]
    %v173 = vld [vmem:[#allocation5 + $0x60] sm:$0xf]
    %v174 = vld [vmem:[#allocation5 + $0x64] sm:$0xf]
    %v175 = vld [vmem:[#allocation5 + $0x68] sm:$0xf]
    %v176 = vld [vmem:[#allocation5 + $0x6c] sm:$0xf]
    %v177 = vld [vmem:[#allocation5 + $0x70] sm:$0xf]
    %v178 = vld [vmem:[#allocation5 + $0x74] sm:$0xf]
    %v179 = vld [vmem:[#allocation5 + $0x78] sm:$0xf]
    %v180 = vld [vmem:[#allocation5 + $0x7c] sm:$0xf]
    %v181 = vld [vmem:[#allocation5 + $0x80] sm:$0xf]
    %v182 = vld [vmem:[#allocation5 + $0x84] sm:$0xf]
    %v183 = vld [vmem:[#allocation5 + $0x88] sm:$0xf]
    %v184 = vld [vmem:[#allocation5 + $0x8c] sm:$0xf]
    %v185 = vld [vmem:[#allocation5 + $0x90] sm:$0xf]
    %v186 = vld [vmem:[#allocation5 + $0x94] sm:$0xf]
    %v187 = vld [vmem:[#allocation5 + $0x98] sm:$0xf]
    %v188 = vld [vmem:[#allocation5 + $0x9c] sm:$0xf]
    %v189 = vld [vmem:[#allocation5 + $0xa0] sm:$0xf]
    %v190 = vld [vmem:[#allocation5 + $0xa4] sm:$0xf]
    %v191 = vld [vmem:[#allocation5 + $0xa8] sm:$0xf]
    %v192 = vld [vmem:[#allocation5 + $0xac] sm:$0xf]
    %v193 = vld [vmem:[#allocation5 + $0xb0] sm:$0xf]
    %v194 = vld [vmem:[#allocation5 + $0xb4] sm:$0xf]
    %v195 = vld [vmem:[#allocation5 + $0xb8] sm:$0xf]
    %v196 = vld [vmem:[#allocation5 + $0xbc] sm:$0xf]
    %v197 = vld [vmem:[#allocation5 + $0xc0] sm:$0xf]
    %v198 = vld [vmem:[#allocation5 + $0xc4] sm:$0xf]
    %v199 = vld [vmem:[#allocation5 + $0xc8] sm:$0xf]
    %v200 = vld [vmem:[#allocation5 + $0xcc] sm:$0xf]
    %v201 = vld [vmem:[#allocation5 + $0xd0] sm:$0xf]
    %v202 = vld [vmem:[#allocation5 + $0xd4] sm:$0xf]
    %v203 = vld [vmem:[#allocation5 + $0xd8] sm:$0xf]
    %v204 = vld [vmem:[#allocation5 + $0xdc] sm:$0xf]
    %v205 = vld [vmem:[#allocation5 + $0xe0] sm:$0xf]
    %v206 = vld [vmem:[#allocation5 + $0xe4] sm:$0xf]
    %v207 = vld [vmem:[#allocation5 + $0xe8] sm:$0xf]
    %v208 = vld [vmem:[#allocation5 + $0xec] sm:$0xf]
    %v209 = vld [vmem:[#allocation5 + $0xf0] sm:$0xf]
    %v210 = vld [vmem:[#allocation5 + $0xf4] sm:$0xf]
    %v211 = vld [vmem:[#allocation5 + $0xf8] sm:$0xf]
    %v212 = vld [vmem:[#allocation5 + $0xfc] sm:$0xf]
    %v213 = vld [vmem:[#allocation5 + $0x100] sm:$0xf]
    %v214 = vld [vmem:[#allocation5 + $0x104] sm:$0xf]
    %v215 = vld [vmem:[#allocation5 + $0x108] sm:$0xf]
    %v216 = vld [vmem:[#allocation5 + $0x10c] sm:$0xf]
    %v217 = vld [vmem:[#allocation5 + $0x110] sm:$0xf]
    %v218 = vld [vmem:[#allocation5 + $0x114] sm:$0xf]
    %v219 = vld [vmem:[#allocation5 + $0x118] sm:$0xf]
    %v220 = vld [vmem:[#allocation5 + $0x11c] sm:$0xf]
    %v221 = vld [vmem:[#allocation5 + $0x120] sm:$0xf]
    %v222 = vld [vmem:[#allocation5 + $0x124] sm:$0xf]
    %v223 = vld [vmem:[#allocation5 + $0x128] sm:$0xf]
    %v224 = vld [vmem:[#allocation5 + $0x12c] sm:$0xf]
    %v225 = vld [vmem:[#allocation5 + $0x130] sm:$0xf]
    %v226 = vld [vmem:[#allocation5 + $0x134] sm:$0xf]
    %v227 = vld [vmem:[#allocation5 + $0x138] sm:$0xf]
    %v228 = vld [vmem:[#allocation5 + $0x13c] sm:$0xf]
    %v229 = vld [vmem:[#allocation5 + $0x140] sm:$0xf]
    %v230 = vld [vmem:[#allocation5 + $0x144] sm:$0xf]
    %v231 = vld [vmem:[#allocation5 + $0x148] sm:$0xf]
    %v232 = vld [vmem:[#allocation5 + $0x14c] sm:$0xf]
    %v233 = vld [vmem:[#allocation5 + $0x150] sm:$0xf]
    %v234 = vld [vmem:[#allocation5 + $0x154] sm:$0xf]
    %v235 = vld [vmem:[#allocation5 + $0x158] sm:$0xf]
    %v236 = vld [vmem:[#allocation5 + $0x15c] sm:$0xf]
    %v237 = vld [vmem:[#allocation5 + $0x160] sm:$0xf]
    %v238 = vld [vmem:[#allocation5 + $0x164] sm:$0xf]
    %v239 = vld [vmem:[#allocation5 + $0x168] sm:$0xf]
    %v240 = vld [vmem:[#allocation5 + $0x16c] sm:$0xf]
    %v241 = vld [vmem:[#allocation5 + $0x170] sm:$0xf]
    %v242 = vld [vmem:[#allocation5 + $0x174] sm:$0xf]
    %v243 = vld [vmem:[#allocation5 + $0x178] sm:$0xf]
    %v244 = vld [vmem:[#allocation5 + $0x17c] sm:$0xf]
    %v245 = vld [vmem:[#allocation5 + $0x180] sm:$0xf]
    %v246 = vld [vmem:[#allocation5 + $0x184] sm:$0xf]
    %v247 = vld [vmem:[#allocation5 + $0x188] sm:$0xf]
    %v248 = vld [vmem:[#allocation5 + $0x18c] sm:$0xf]
    %v249 = vld [vmem:[#allocation5 + $0x190] sm:$0xf]
    %v250 = vld [vmem:[#allocation5 + $0x194] sm:$0xf]
    %v251 = vld [vmem:[#allocation5 + $0x198] sm:$0xf]
    %v252 = vld [vmem:[#allocation5 + $0x19c] sm:$0xf]
    %v253 = vld [vmem:[#allocation5 + $0x1a0] sm:$0xf]
    %v254 = vld [vmem:[#allocation5 + $0x1a4] sm:$0xf]
    %v255 = vld [vmem:[#allocation5 + $0x1a8] sm:$0xf]
    %v256 = vld [vmem:[#allocation5 + $0x1ac] sm:$0xf]
    %v257 = vld [vmem:[#allocation5 + $0x1b0] sm:$0xf]
    %v258 = vld [vmem:[#allocation5 + $0x1b4] sm:$0xf]
    %v259 = vld [vmem:[#allocation5 + $0x1b8] sm:$0xf]
    %v260 = vld [vmem:[#allocation5 + $0x1bc] sm:$0xf]
    %v261 = vld [vmem:[#allocation5 + $0x1c0] sm:$0xf]
    %v262 = vld [vmem:[#allocation5 + $0x1c4] sm:$0xf]
    %v263 = vld [vmem:[#allocation5 + $0x1c8] sm:$0xf]
    %v264 = vld [vmem:[#allocation5 + $0x1cc] sm:$0xf]
    %v265 = vld [vmem:[#allocation5 + $0x1d0] sm:$0xf]
    %v266 = vld [vmem:[#allocation5 + $0x1d4] sm:$0xf]
    %v267 = vld [vmem:[#allocation5 + $0x1d8] sm:$0xf]
    %v268 = vld [vmem:[#allocation5 + $0x1dc] sm:$0xf]
    %v269 = vld [vmem:[#allocation5 + $0x1e0] sm:$0xf]
    %v270 = vld [vmem:[#allocation5 + $0x1e4] sm:$0xf]
    %v271 = vld [vmem:[#allocation5 + $0x1e8] sm:$0xf]
    %v272 = vld [vmem:[#allocation5 + $0x1ec] sm:$0xf]
    %v273 = vld [vmem:[#allocation5 + $0x1f0] sm:$0xf]
    %v274 = vld [vmem:[#allocation5 + $0x1f4] sm:$0xf]
    %v275 = vld [vmem:[#allocation5 + $0x1f8] sm:$0xf]
    %v276 = vld [vmem:[#allocation5 + $0x1fc] sm:$0xf]
    %v277 = vunpack.c.l.bf16 %v149
    %v278 = vunpack.c.l.bf16 %v150
    %v279 = vunpack.c.l.bf16 %v151
    %v280 = vunpack.c.l.bf16 %v152
    %v281 = vunpack.c.l.bf16 %v153
    %v282 = vunpack.c.l.bf16 %v154
    %v283 = vunpack.c.l.bf16 %v155
    %v284 = vunpack.c.l.bf16 %v156
    %v285 = vunpack.c.l.bf16 %v157
    %v286 = vunpack.c.l.bf16 %v158
    %v287 = vunpack.c.l.bf16 %v159
    %v288 = vunpack.c.l.bf16 %v160
    %v289 = vunpack.c.l.bf16 %v161
    %v290 = vunpack.c.l.bf16 %v162
    %v291 = vunpack.c.l.bf16 %v163
    %v292 = vunpack.c.l.bf16 %v164
    %v293 = vunpack.c.l.bf16 %v165
    %v294 = vunpack.c.l.bf16 %v166
    %v295 = vunpack.c.l.bf16 %v167
    %v296 = vunpack.c.l.bf16 %v168
    %v297 = vunpack.c.l.bf16 %v169
    %v298 = vunpack.c.l.bf16 %v170
    %v299 = vunpack.c.l.bf16 %v171
    %v300 = vunpack.c.l.bf16 %v172
    %v301 = vunpack.c.l.bf16 %v173
    %v302 = vunpack.c.l.bf16 %v174
    %v303 = vunpack.c.l.bf16 %v175
    %v304 = vunpack.c.l.bf16 %v176
    %v305 = vunpack.c.l.bf16 %v177
    %v306 = vunpack.c.l.bf16 %v178
    %v307 = vunpack.c.l.bf16 %v179
    %v308 = vunpack.c.l.bf16 %v180
    %v309 = vunpack.c.l.bf16 %v181
    %v310 = vunpack.c.l.bf16 %v182
    %v311 = vunpack.c.l.bf16 %v183
    %v312 = vunpack.c.l.bf16 %v184
    %v313 = vunpack.c.l.bf16 %v185
    %v314 = vunpack.c.l.bf16 %v186
    %v315 = vunpack.c.l.bf16 %v187
    %v316 = vunpack.c.l.bf16 %v188
    %v317 = vunpack.c.l.bf16 %v189
    %v318 = vunpack.c.l.bf16 %v190
    %v319 = vunpack.c.l.bf16 %v191
    %v320 = vunpack.c.l.bf16 %v192
    %v321 = vunpack.c.l.bf16 %v193
    %v322 = vunpack.c.l.bf16 %v194
    %v323 = vunpack.c.l.bf16 %v195
    %v324 = vunpack.c.l.bf16 %v196
    %v325 = vunpack.c.l.bf16 %v197
    %v326 = vunpack.c.l.bf16 %v198
    %v327 = vunpack.c.l.bf16 %v199
    %v328 = vunpack.c.l.bf16 %v200
    %v329 = vunpack.c.l.bf16 %v201
    %v330 = vunpack.c.l.bf16 %v202
    %v331 = vunpack.c.l.bf16 %v203
    %v332 = vunpack.c.l.bf16 %v204
    %v333 = vunpack.c.l.bf16 %v205
    %v334 = vunpack.c.l.bf16 %v206
    %v335 = vunpack.c.l.bf16 %v207
    %v336 = vunpack.c.l.bf16 %v208
    %v337 = vunpack.c.l.bf16 %v209
    %v338 = vunpack.c.l.bf16 %v210
    %v339 = vunpack.c.l.bf16 %v211
    %v340 = vunpack.c.l.bf16 %v212
    %v341 = vunpack.c.l.bf16 %v213
    %v342 = vunpack.c.l.bf16 %v214
    %v343 = vunpack.c.l.bf16 %v215
    %v344 = vunpack.c.l.bf16 %v216
    %v345 = vunpack.c.l.bf16 %v217
    %v346 = vunpack.c.l.bf16 %v218
    %v347 = vunpack.c.l.bf16 %v219
    %v348 = vunpack.c.l.bf16 %v220
    %v349 = vunpack.c.l.bf16 %v221
    %v350 = vunpack.c.l.bf16 %v222
    %v351 = vunpack.c.l.bf16 %v223
    %v352 = vunpack.c.l.bf16 %v224
    %v353 = vunpack.c.l.bf16 %v225
    %v354 = vunpack.c.l.bf16 %v226
    %v355 = vunpack.c.l.bf16 %v227
    %v356 = vunpack.c.l.bf16 %v228
    %v357 = vunpack.c.l.bf16 %v229
    %v358 = vunpack.c.l.bf16 %v230
    %v359 = vunpack.c.l.bf16 %v231
    %v360 = vunpack.c.l.bf16 %v232
    %v361 = vunpack.c.l.bf16 %v233
    %v362 = vunpack.c.l.bf16 %v234
    %v363 = vunpack.c.l.bf16 %v235
    %v364 = vunpack.c.l.bf16 %v236
    %v365 = vunpack.c.l.bf16 %v237
    %v366 = vunpack.c.l.bf16 %v238
    %v367 = vunpack.c.l.bf16 %v239
    %v368 = vunpack.c.l.bf16 %v240
    %v369 = vunpack.c.l.bf16 %v241
    %v370 = vunpack.c.l.bf16 %v242
    %v371 = vunpack.c.l.bf16 %v243
    %v372 = vunpack.c.l.bf16 %v244
    %v373 = vunpack.c.l.bf16 %v245
    %v374 = vunpack.c.l.bf16 %v246
    %v375 = vunpack.c.l.bf16 %v247
    %v376 = vunpack.c.l.bf16 %v248
    %v377 = vunpack.c.l.bf16 %v249
    %v378 = vunpack.c.l.bf16 %v250
    %v379 = vunpack.c.l.bf16 %v251
    %v380 = vunpack.c.l.bf16 %v252
    %v381 = vunpack.c.l.bf16 %v253
    %v382 = vunpack.c.l.bf16 %v254
    %v383 = vunpack.c.l.bf16 %v255
    %v384 = vunpack.c.l.bf16 %v256
    %v385 = vunpack.c.l.bf16 %v257
    %v386 = vunpack.c.l.bf16 %v258
    %v387 = vunpack.c.l.bf16 %v259
    %v388 = vunpack.c.l.bf16 %v260
    %v389 = vunpack.c.l.bf16 %v261
    %v390 = vunpack.c.l.bf16 %v262
    %v391 = vunpack.c.l.bf16 %v263
    %v392 = vunpack.c.l.bf16 %v264
    %v393 = vunpack.c.l.bf16 %v265
    %v394 = vunpack.c.l.bf16 %v266
    %v395 = vunpack.c.l.bf16 %v267
    %v396 = vunpack.c.l.bf16 %v268
    %v397 = vunpack.c.l.bf16 %v269
    %v398 = vunpack.c.l.bf16 %v270
    %v399 = vunpack.c.l.bf16 %v271
    %v400 = vunpack.c.l.bf16 %v272
    %v401 = vunpack.c.l.bf16 %v273
    %v402 = vunpack.c.l.bf16 %v274
    %v403 = vunpack.c.l.bf16 %v275
    %v404 = vunpack.c.l.bf16 %v276
    %v405 = vadd.f32 %v277, %v278
    %v406 = vadd.f32 %v405, %v279
    %v407 = vadd.f32 %v406, %v280
    %v408 = vadd.f32 %v407, %v281
    %v409 = vadd.f32 %v408, %v282
    %v410 = vadd.f32 %v409, %v283
    %v411 = vadd.f32 %v410, %v284
    %v412 = vadd.f32 %v411, %v285
    %v413 = vadd.f32 %v412, %v286
    %v414 = vadd.f32 %v413, %v287
    %v415 = vadd.f32 %v414, %v288
    %v416 = vadd.f32 %v415, %v289
    %v417 = vadd.f32 %v416, %v290
    %v418 = vadd.f32 %v417, %v291
    %v419 = vadd.f32 %v418, %v292
    %v420 = vrot.slane %v419, 4
    %v421 = vadd.f32 %v419, %v420
    %v422 = vrot.slane %v421, 2
    %v423 = vadd.f32 %v421, %v422
    %v424 = vrot.slane %v423, 1
    %v425 = vadd.f32 %v423, %v424
    %v426 = vadd.f32 %v293, %v294
    %v427 = vadd.f32 %v426, %v295
    %v428 = vadd.f32 %v427, %v296
    %v429 = vadd.f32 %v428, %v297
    %v430 = vadd.f32 %v429, %v298
    %v431 = vadd.f32 %v430, %v299
    %v432 = vadd.f32 %v431, %v300
    %v433 = vadd.f32 %v432, %v301
    %v434 = vadd.f32 %v433, %v302
    %v435 = vadd.f32 %v434, %v303
    %v436 = vadd.f32 %v435, %v304
    %v437 = vadd.f32 %v436, %v305
    %v438 = vadd.f32 %v437, %v306
    %v439 = vadd.f32 %v438, %v307
    %v440 = vadd.f32 %v439, %v308
    %v441 = vrot.slane %v440, 4
    %v442 = vadd.f32 %v440, %v441
    %v443 = vrot.slane %v442, 2
    %v444 = vadd.f32 %v442, %v443
    %v445 = vrot.slane %v444, 1
    %v446 = vadd.f32 %v444, %v445
    %v447 = vadd.f32 %v309, %v310
    %v448 = vadd.f32 %v447, %v311
    %v449 = vadd.f32 %v448, %v312
    %v450 = vadd.f32 %v449, %v313
    %v451 = vadd.f32 %v450, %v314
    %v452 = vadd.f32 %v451, %v315
    %v453 = vadd.f32 %v452, %v316
    %v454 = vadd.f32 %v453, %v317
    %v455 = vadd.f32 %v454, %v318
    %v456 = vadd.f32 %v455, %v319
    %v457 = vadd.f32 %v456, %v320
    %v458 = vadd.f32 %v457, %v321
    %v459 = vadd.f32 %v458, %v322
    %v460 = vadd.f32 %v459, %v323
    %v461 = vadd.f32 %v460, %v324
    %v462 = vrot.slane %v461, 4
    %v463 = vadd.f32 %v461, %v462
    %v464 = vrot.slane %v463, 2
    %v465 = vadd.f32 %v463, %v464
    %v466 = vrot.slane %v465, 1
    %v467 = vadd.f32 %v465, %v466
    %v468 = vadd.f32 %v325, %v326
    %v469 = vadd.f32 %v468, %v327
    %v470 = vadd.f32 %v469, %v328
    %v471 = vadd.f32 %v470, %v329
    %v472 = vadd.f32 %v471, %v330
    %v473 = vadd.f32 %v472, %v331
    %v474 = vadd.f32 %v473, %v332
    %v475 = vadd.f32 %v474, %v333
    %v476 = vadd.f32 %v475, %v334
    %v477 = vadd.f32 %v476, %v335
    %v478 = vadd.f32 %v477, %v336
    %v479 = vadd.f32 %v478, %v337
    %v480 = vadd.f32 %v479, %v338
    %v481 = vadd.f32 %v480, %v339
    %v482 = vadd.f32 %v481, %v340
    %v483 = vrot.slane %v482, 4
    %v484 = vadd.f32 %v482, %v483
    %v485 = vrot.slane %v484, 2
    %v486 = vadd.f32 %v484, %v485
    %v487 = vrot.slane %v486, 1
    %v488 = vadd.f32 %v486, %v487
    %v489 = vadd.f32 %v341, %v342
    %v490 = vadd.f32 %v489, %v343
    %v491 = vadd.f32 %v490, %v344
    %v492 = vadd.f32 %v491, %v345
    %v493 = vadd.f32 %v492, %v346
    %v494 = vadd.f32 %v493, %v347
    %v495 = vadd.f32 %v494, %v348
    %v496 = vadd.f32 %v495, %v349
    %v497 = vadd.f32 %v496, %v350
    %v498 = vadd.f32 %v497, %v351
    %v499 = vadd.f32 %v498, %v352
    %v500 = vadd.f32 %v499, %v353
    %v501 = vadd.f32 %v500, %v354
    %v502 = vadd.f32 %v501, %v355
    %v503 = vadd.f32 %v502, %v356
    %v504 = vrot.slane %v503, 4
    %v505 = vadd.f32 %v503, %v504
    %v506 = vrot.slane %v505, 2
    %v507 = vadd.f32 %v505, %v506
    %v508 = vrot.slane %v507, 1
    %v509 = vadd.f32 %v507, %v508
    %v510 = vadd.f32 %v357, %v358
    %v511 = vadd.f32 %v510, %v359
    %v512 = vadd.f32 %v511, %v360
    %v513 = vadd.f32 %v512, %v361
    %v514 = vadd.f32 %v513, %v362
    %v515 = vadd.f32 %v514, %v363
    %v516 = vadd.f32 %v515, %v364
    %v517 = vadd.f32 %v516, %v365
    %v518 = vadd.f32 %v517, %v366
    %v519 = vadd.f32 %v518, %v367
    %v520 = vadd.f32 %v519, %v368
    %v521 = vadd.f32 %v520, %v369
    %v522 = vadd.f32 %v521, %v370
    %v523 = vadd.f32 %v522, %v371
    %v524 = vadd.f32 %v523, %v372
    %v525 = vrot.slane %v524, 4
    %v526 = vadd.f32 %v524, %v525
    %v527 = vrot.slane %v526, 2
    %v528 = vadd.f32 %v526, %v527
    %v529 = vrot.slane %v528, 1
    %v530 = vadd.f32 %v528, %v529
    %v531 = vadd.f32 %v373, %v374
    %v532 = vadd.f32 %v531, %v375
    %v533 = vadd.f32 %v532, %v376
    %v534 = vadd.f32 %v533, %v377
    %v535 = vadd.f32 %v534, %v378
    %v536 = vadd.f32 %v535, %v379
    %v537 = vadd.f32 %v536, %v380
    %v538 = vadd.f32 %v537, %v381
    %v539 = vadd.f32 %v538, %v382
    %v540 = vadd.f32 %v539, %v383
    %v541 = vadd.f32 %v540, %v384
    %v542 = vadd.f32 %v541, %v385
    %v543 = vadd.f32 %v542, %v386
    %v544 = vadd.f32 %v543, %v387
    %v545 = vadd.f32 %v544, %v388
    %v546 = vrot.slane %v545, 4
    %v547 = vadd.f32 %v545, %v546
    %v548 = vrot.slane %v547, 2
    %v549 = vadd.f32 %v547, %v548
    %v550 = vrot.slane %v549, 1
    %v551 = vadd.f32 %v549, %v550
    %v552 = vadd.f32 %v389, %v390
    %v553 = vadd.f32 %v552, %v391
    %v554 = vadd.f32 %v553, %v392
    %v555 = vadd.f32 %v554, %v393
    %v556 = vadd.f32 %v555, %v394
    %v557 = vadd.f32 %v556, %v395
    %v558 = vadd.f32 %v557, %v396
    %v559 = vadd.f32 %v558, %v397
    %v560 = vadd.f32 %v559, %v398
    %v561 = vadd.f32 %v560, %v399
    %v562 = vadd.f32 %v561, %v400
    %v563 = vadd.f32 %v562, %v401
    %v564 = vadd.f32 %v563, %v402
    %v565 = vadd.f32 %v564, %v403
    %v566 = vadd.f32 %v565, %v404
    %v567 = vrot.slane %v566, 4
    %v568 = vadd.f32 %v566, %v567
    %v569 = vrot.slane %v568, 2
    %v570 = vadd.f32 %v568, %v569
    %v571 = vrot.slane %v570, 1
    %v572 = vadd.f32 %v570, %v571
    %v573 = vrcp.pop 128.0
    %v574 = vmul.f32 %v425, %v573
    %v575 = vmul.f32 %v446, %v573
    %v576 = vmul.f32 %v467, %v573
    %v577 = vmul.f32 %v488, %v573
    %v578 = vmul.f32 %v509, %v573
    %v579 = vmul.f32 %v530, %v573
    %v580 = vmul.f32 %v551, %v573
    %v581 = vmul.f32 %v572, %v573
    %v582 = vpack.c.bf16 %v574, %v574
    %v583 = vpack.c.bf16 %v575, %v575
    %v584 = vpack.c.bf16 %v576, %v576
    %v585 = vpack.c.bf16 %v577, %v577
    %v586 = vpack.c.bf16 %v578, %v578
    %v587 = vpack.c.bf16 %v579, %v579
    %v588 = vpack.c.bf16 %v580, %v580
    %v589 = vpack.c.bf16 %v581, %v581
    %v590 = vld [vmem:[#allocation10] sm:$0xff]
    %v591 = vld [vmem:[#allocation10 + $0x8] sm:$0xff]
    %v592 = vld [vmem:[#allocation10 + $0x10] sm:$0xff]
    %v593 = vld [vmem:[#allocation10 + $0x18] sm:$0xff]
    %v594 = vld [vmem:[#allocation10 + $0x20] sm:$0xff]
    %v595 = vld [vmem:[#allocation10 + $0x28] sm:$0xff]
    %v596 = vld [vmem:[#allocation10 + $0x30] sm:$0xff]
    %v597 = vld [vmem:[#allocation10 + $0x38] sm:$0xff]
    %v598 = vld [vmem:[#allocation10 + $0x40] sm:$0xff]
    %v599 = vld [vmem:[#allocation10 + $0x48] sm:$0xff]
    %v600 = vld [vmem:[#allocation10 + $0x50] sm:$0xff]
    %v601 = vld [vmem:[#allocation10 + $0x58] sm:$0xff]
    %v602 = vld [vmem:[#allocation10 + $0x60] sm:$0xff]
    %v603 = vld [vmem:[#allocation10 + $0x68] sm:$0xff]
    %v604 = vld [vmem:[#allocation10 + $0x70] sm:$0xff]
    %v605 = vld [vmem:[#allocation10 + $0x78] sm:$0xff]
    %v606 = vld [vmem:[%s4] sm:$0x3]
    %v608 = vlaneseq
    %v609 = vshrl.u32 %v608, 7
    %v610 = vsub.s32 0, %v609
    %v611 = vrot.slane %v606, %v610
    %v612 = vlaneseq
    %v613 = vshrl.u32 %v612, 7
    %v614 = vsub.s32 1, %v613
    %v615 = vrot.slane %v606, %v614
    %v626 = vunpack.c.l.b16 %v582
    %v627 = vunpack.c.l.b16 %v583
    %v628 = vunpack.c.l.b16 %v584
    %v629 = vunpack.c.l.b16 %v585
    %v630 = vunpack.c.l.b16 %v586
    %v631 = vunpack.c.l.b16 %v587
    %v632 = vunpack.c.l.b16 %v588
    %v633 = vunpack.c.l.b16 %v589
    %vm634 = vcmask 1041409
    %v635 = vsel %vm634, %v627, %v626
    %vm636 = vcmask 1042434
    %v637 = vsel %vm636, %v628, %v635
    %vm638 = vcmask 1043459
    %v639 = vsel %vm638, %v629, %v637
    %vm640 = vcmask 1044484
    %v641 = vsel %vm640, %v630, %v639
    %vm642 = vcmask 1045509
    %v643 = vsel %vm642, %v631, %v641
    %vm644 = vcmask 1046534
    %v645 = vsel %vm644, %v632, %v643
    %vm646 = vcmask 1047559
    %v647 = vsel %vm646, %v633, %v645
    %v648 = vpack.c.b16 %v647, %v647
    %v666 = vunpack.c.l.b16 %v590
    %v667 = vunpack.c.h.b16 %v590
    %v668 = vunpack.c.l.b16 %v591
    %v669 = vunpack.c.h.b16 %v591
    %v670 = vunpack.c.l.b16 %v592
    %v671 = vunpack.c.h.b16 %v592
    %v672 = vunpack.c.l.b16 %v593
    %v673 = vunpack.c.h.b16 %v593
    %v674 = vunpack.c.l.b16 %v594
    %v675 = vunpack.c.h.b16 %v594
    %v676 = vunpack.c.l.b16 %v595
    %v677 = vunpack.c.h.b16 %v595
    %v678 = vunpack.c.l.b16 %v596
    %v679 = vunpack.c.h.b16 %v596
    %v680 = vunpack.c.l.b16 %v597
    %v681 = vunpack.c.h.b16 %v597
    %v682 = vunpack.c.l.b16 %v598
    %v683 = vunpack.c.h.b16 %v598
    %v684 = vunpack.c.l.b16 %v599
    %v685 = vunpack.c.h.b16 %v599
    %v686 = vunpack.c.l.b16 %v600
    %v687 = vunpack.c.h.b16 %v600
    %v688 = vunpack.c.l.b16 %v601
    %v689 = vunpack.c.h.b16 %v601
    %v690 = vunpack.c.l.b16 %v602
    %v691 = vunpack.c.h.b16 %v602
    %v692 = vunpack.c.l.b16 %v603
    %v693 = vunpack.c.h.b16 %v603
    %v694 = vunpack.c.l.b16 %v604
    %v695 = vunpack.c.h.b16 %v604
    %v696 = vunpack.c.l.b16 %v605
    %v697 = vunpack.c.h.b16 %v605
    %v698 = vpack.c.b16 %v668, %v666
    %v699 = vpack.c.b16 %v669, %v667
    %v700 = vpack.c.b16 %v672, %v670
    %v701 = vpack.c.b16 %v673, %v671
    %v702 = vpack.c.b16 %v676, %v674
    %v703 = vpack.c.b16 %v677, %v675
    %v704 = vpack.c.b16 %v680, %v678
    %v705 = vpack.c.b16 %v681, %v679
    %v706 = vpack.c.b16 %v684, %v682
    %v707 = vpack.c.b16 %v685, %v683
    %v708 = vpack.c.b16 %v688, %v686
    %v709 = vpack.c.b16 %v689, %v687
    %v710 = vpack.c.b16 %v692, %v690
    %v711 = vpack.c.b16 %v693, %v691
    %v712 = vpack.c.b16 %v696, %v694
    %v713 = vpack.c.b16 %v697, %v695
    %730 = vmatprep.subr.bf16.mxu0 %v699
    %731 = vmatpush1.bf16.msra.mxu0 %v698
    %732 = vmatprep.subr.bf16.mxu0 %v701
    %733 = vmatpush1.bf16.msra.mxu0 %v700
    %734 = vmatprep.subr.bf16.mxu0 %v703
    %735 = vmatpush1.bf16.msra.mxu0 %v702
    %736 = vmatprep.subr.bf16.mxu0 %v705
    %737 = vmatpush1.bf16.msra.mxu0 %v704
    %738 = vmatprep.subr.bf16.mxu0 %v707
    %739 = vmatpush1.bf16.msra.mxu0 %v706
    %740 = vmatprep.subr.bf16.mxu0 %v709
    %741 = vmatpush1.bf16.msra.mxu0 %v708
    %742 = vmatprep.subr.bf16.mxu0 %v711
    %743 = vmatpush1.bf16.msra.mxu0 %v710
    %744 = vmatprep.subr.bf16.mxu0 %v713
    %745 = vmatpush1.bf16.msra.mxu0 %v712
    %746 = vmatprep.subr.bf16.mxu0 0
    %747 = vmatpush1.bf16.msra.mxu0 0
    %748 = vmatprep.subr.bf16.mxu0 0
    %749 = vmatpush1.bf16.msra.mxu0 0
    %750 = vmatprep.subr.bf16.mxu0 0
    %751 = vmatpush1.bf16.msra.mxu0 0
    %752 = vmatprep.subr.bf16.mxu0 0
    %753 = vmatpush1.bf16.msra.mxu0 0
    %754 = vmatprep.subr.bf16.mxu0 0
    %755 = vmatpush1.bf16.msra.mxu0 0
    %756 = vmatprep.subr.bf16.mxu0 0
    %757 = vmatpush1.bf16.msra.mxu0 0
    %758 = vmatprep.subr.bf16.mxu0 0
    %759 = vmatpush1.bf16.msra.mxu0 0
    %760 = vmatprep.subr.bf16.mxu0 0
    %761 = vmatpush1.bf16.msra.mxu0 0
    %762 = vmatprep.mubr.bf16.mxu0 0
    %763 = vmatmul.mubr.bf16.gmra.mrb[0].mxu0 %v648
    %v764 = vpop.f32.mrb[0].mxu0
    %v765 = vadd.f32 %v611, %v764
    %v766 = vpop.f32.mrb[0].mxu0
    %v767 = vadd.f32 %v615, %v766
    %v768 = vpop.f32.mrb[0].mxu0
    %v769 = vpop.f32.mrb[0].mxu0
    %770 = vdwg.mxu0
    %v771 = vld [vmem:[#allocation11] sm:$0xf]
    %v772 = vld [vmem:[#allocation11 + $0x4] sm:$0xf]
    %v773 = vld [vmem:[#allocation11 + $0x8] sm:$0xf]
    %v774 = vld [vmem:[#allocation11 + $0xc] sm:$0xf]
    %v775 = vld [vmem:[#allocation11 + $0x10] sm:$0xf]
    %v776 = vld [vmem:[#allocation11 + $0x14] sm:$0xf]
    %v777 = vld [vmem:[#allocation11 + $0x18] sm:$0xf]
    %v778 = vld [vmem:[#allocation11 + $0x1c] sm:$0xf]
    %v779 = vld [vmem:[#allocation11 + $0x20] sm:$0xf]
    %v780 = vld [vmem:[#allocation11 + $0x24] sm:$0xf]
    %v781 = vld [vmem:[#allocation11 + $0x28] sm:$0xf]
    %v782 = vld [vmem:[#allocation11 + $0x2c] sm:$0xf]
    %v783 = vld [vmem:[#allocation11 + $0x30] sm:$0xf]
    %v784 = vld [vmem:[#allocation11 + $0x34] sm:$0xf]
    %v785 = vld [vmem:[#allocation11 + $0x38] sm:$0xf]
    %v786 = vld [vmem:[#allocation11 + $0x3c] sm:$0xf]
    %v787 = vld [vmem:[%s6] sm:$0x1]
    %v789 = vlaneseq
    %v790 = vshrl.u32 %v789, 7
    %v791 = vsub.s32 0, %v790
    %v792 = vrot.slane %v787, %v791
    %v922 = vunpack.c.l.b16 %v149
    %v923 = vunpack.c.l.b16 %v150
    %v924 = vunpack.c.l.b16 %v151
    %v925 = vunpack.c.l.b16 %v152
    %v926 = vunpack.c.l.b16 %v153
    %v927 = vunpack.c.l.b16 %v154
    %v928 = vunpack.c.l.b16 %v155
    %v929 = vunpack.c.l.b16 %v156
    %v930 = vunpack.c.l.b16 %v157
    %v931 = vunpack.c.l.b16 %v158
    %v932 = vunpack.c.l.b16 %v159
    %v933 = vunpack.c.l.b16 %v160
    %v934 = vunpack.c.l.b16 %v161
    %v935 = vunpack.c.l.b16 %v162
    %v936 = vunpack.c.l.b16 %v163
    %v937 = vunpack.c.l.b16 %v164
    %v938 = vunpack.c.l.b16 %v165
    %v939 = vunpack.c.l.b16 %v166
    %v940 = vunpack.c.l.b16 %v167
    %v941 = vunpack.c.l.b16 %v168
    %v942 = vunpack.c.l.b16 %v169
    %v943 = vunpack.c.l.b16 %v170
    %v944 = vunpack.c.l.b16 %v171
    %v945 = vunpack.c.l.b16 %v172
    %v946 = vunpack.c.l.b16 %v173
    %v947 = vunpack.c.l.b16 %v174
    %v948 = vunpack.c.l.b16 %v175
    %v949 = vunpack.c.l.b16 %v176
    %v950 = vunpack.c.l.b16 %v177
    %v951 = vunpack.c.l.b16 %v178
    %v952 = vunpack.c.l.b16 %v179
    %v953 = vunpack.c.l.b16 %v180
    %v954 = vunpack.c.l.b16 %v181
    %v955 = vunpack.c.l.b16 %v182
    %v956 = vunpack.c.l.b16 %v183
    %v957 = vunpack.c.l.b16 %v184
    %v958 = vunpack.c.l.b16 %v185
    %v959 = vunpack.c.l.b16 %v186
    %v960 = vunpack.c.l.b16 %v187
    %v961 = vunpack.c.l.b16 %v188
    %v962 = vunpack.c.l.b16 %v189
    %v963 = vunpack.c.l.b16 %v190
    %v964 = vunpack.c.l.b16 %v191
    %v965 = vunpack.c.l.b16 %v192
    %v966 = vunpack.c.l.b16 %v193
    %v967 = vunpack.c.l.b16 %v194
    %v968 = vunpack.c.l.b16 %v195
    %v969 = vunpack.c.l.b16 %v196
    %v970 = vunpack.c.l.b16 %v197
    %v971 = vunpack.c.l.b16 %v198
    %v972 = vunpack.c.l.b16 %v199
    %v973 = vunpack.c.l.b16 %v200
    %v974 = vunpack.c.l.b16 %v201
    %v975 = vunpack.c.l.b16 %v202
    %v976 = vunpack.c.l.b16 %v203
    %v977 = vunpack.c.l.b16 %v204
    %v978 = vunpack.c.l.b16 %v205
    %v979 = vunpack.c.l.b16 %v206
    %v980 = vunpack.c.l.b16 %v207
    %v981 = vunpack.c.l.b16 %v208
    %v982 = vunpack.c.l.b16 %v209
    %v983 = vunpack.c.l.b16 %v210
    %v984 = vunpack.c.l.b16 %v211
    %v985 = vunpack.c.l.b16 %v212
    %v986 = vunpack.c.l.b16 %v213
    %v987 = vunpack.c.l.b16 %v214
    %v988 = vunpack.c.l.b16 %v215
    %v989 = vunpack.c.l.b16 %v216
    %v990 = vunpack.c.l.b16 %v217
    %v991 = vunpack.c.l.b16 %v218
    %v992 = vunpack.c.l.b16 %v219
    %v993 = vunpack.c.l.b16 %v220
    %v994 = vunpack.c.l.b16 %v221
    %v995 = vunpack.c.l.b16 %v222
    %v996 = vunpack.c.l.b16 %v223
    %v997 = vunpack.c.l.b16 %v224
    %v998 = vunpack.c.l.b16 %v225
    %v999 = vunpack.c.l.b16 %v226
    %v1000 = vunpack.c.l.b16 %v227
    %v1001 = vunpack.c.l.b16 %v228
    %v1002 = vunpack.c.l.b16 %v229
    %v1003 = vunpack.c.l.b16 %v230
    %v1004 = vunpack.c.l.b16 %v231
    %v1005 = vunpack.c.l.b16 %v232
    %v1006 = vunpack.c.l.b16 %v233
    %v1007 = vunpack.c.l.b16 %v234
    %v1008 = vunpack.c.l.b16 %v235
    %v1009 = vunpack.c.l.b16 %v236
    %v1010 = vunpack.c.l.b16 %v237
    %v1011 = vunpack.c.l.b16 %v238
    %v1012 = vunpack.c.l.b16 %v239
    %v1013 = vunpack.c.l.b16 %v240
    %v1014 = vunpack.c.l.b16 %v241
    %v1015 = vunpack.c.l.b16 %v242
    %v1016 = vunpack.c.l.b16 %v243
    %v1017 = vunpack.c.l.b16 %v244
    %v1018 = vunpack.c.l.b16 %v245
    %v1019 = vunpack.c.l.b16 %v246
    %v1020 = vunpack.c.l.b16 %v247
    %v1021 = vunpack.c.l.b16 %v248
    %v1022 = vunpack.c.l.b16 %v249
    %v1023 = vunpack.c.l.b16 %v250
    %v1024 = vunpack.c.l.b16 %v251
    %v1025 = vunpack.c.l.b16 %v252
    %v1026 = vunpack.c.l.b16 %v253
    %v1027 = vunpack.c.l.b16 %v254
    %v1028 = vunpack.c.l.b16 %v255
    %v1029 = vunpack.c.l.b16 %v256
    %v1030 = vunpack.c.l.b16 %v257
    %v1031 = vunpack.c.l.b16 %v258
    %v1032 = vunpack.c.l.b16 %v259
    %v1033 = vunpack.c.l.b16 %v260
    %v1034 = vunpack.c.l.b16 %v261
    %v1035 = vunpack.c.l.b16 %v262
    %v1036 = vunpack.c.l.b16 %v263
    %v1037 = vunpack.c.l.b16 %v264
    %v1038 = vunpack.c.l.b16 %v265
    %v1039 = vunpack.c.l.b16 %v266
    %v1040 = vunpack.c.l.b16 %v267
    %v1041 = vunpack.c.l.b16 %v268
    %v1042 = vunpack.c.l.b16 %v269
    %v1043 = vunpack.c.l.b16 %v270
    %v1044 = vunpack.c.l.b16 %v271
    %v1045 = vunpack.c.l.b16 %v272
    %v1046 = vunpack.c.l.b16 %v273
    %v1047 = vunpack.c.l.b16 %v274
    %v1048 = vunpack.c.l.b16 %v275
    %v1049 = vunpack.c.l.b16 %v276
    %v1050 = vpack.c.b16 %v923, %v922
    %v1051 = vpack.c.b16 %v925, %v924
    %v1052 = vpack.c.b16 %v927, %v926
    %v1053 = vpack.c.b16 %v929, %v928
    %v1054 = vpack.c.b16 %v931, %v930
    %v1055 = vpack.c.b16 %v933, %v932
    %v1056 = vpack.c.b16 %v935, %v934
    %v1057 = vpack.c.b16 %v937, %v936
    %v1058 = vpack.c.b16 %v939, %v938
    %v1059 = vpack.c.b16 %v941, %v940
    %v1060 = vpack.c.b16 %v943, %v942
    %v1061 = vpack.c.b16 %v945, %v944
    %v1062 = vpack.c.b16 %v947, %v946
    %v1063 = vpack.c.b16 %v949, %v948
    %v1064 = vpack.c.b16 %v951, %v950
    %v1065 = vpack.c.b16 %v953, %v952
    %v1066 = vpack.c.b16 %v955, %v954
    %v1067 = vpack.c.b16 %v957, %v956
    %v1068 = vpack.c.b16 %v959, %v958
    %v1069 = vpack.c.b16 %v961, %v960
    %v1070 = vpack.c.b16 %v963, %v962
    %v1071 = vpack.c.b16 %v965, %v964
    %v1072 = vpack.c.b16 %v967, %v966
    %v1073 = vpack.c.b16 %v969, %v968
    %v1074 = vpack.c.b16 %v971, %v970
    %v1075 = vpack.c.b16 %v973, %v972
    %v1076 = vpack.c.b16 %v975, %v974
    %v1077 = vpack.c.b16 %v977, %v976
    %v1078 = vpack.c.b16 %v979, %v978
    %v1079 = vpack.c.b16 %v981, %v980
    %v1080 = vpack.c.b16 %v983, %v982
    %v1081 = vpack.c.b16 %v985, %v984
    %v1082 = vpack.c.b16 %v987, %v986
    %v1083 = vpack.c.b16 %v989, %v988
    %v1084 = vpack.c.b16 %v991, %v990
    %v1085 = vpack.c.b16 %v993, %v992
    %v1086 = vpack.c.b16 %v995, %v994
    %v1087 = vpack.c.b16 %v997, %v996
    %v1088 = vpack.c.b16 %v999, %v998
    %v1089 = vpack.c.b16 %v1001, %v1000
    %v1090 = vpack.c.b16 %v1003, %v1002
    %v1091 = vpack.c.b16 %v1005, %v1004
    %v1092 = vpack.c.b16 %v1007, %v1006
    %v1093 = vpack.c.b16 %v1009, %v1008
    %v1094 = vpack.c.b16 %v1011, %v1010
    %v1095 = vpack.c.b16 %v1013, %v1012
    %v1096 = vpack.c.b16 %v1015, %v1014
    %v1097 = vpack.c.b16 %v1017, %v1016
    %v1098 = vpack.c.b16 %v1019, %v1018
    %v1099 = vpack.c.b16 %v1021, %v1020
    %v1100 = vpack.c.b16 %v1023, %v1022
    %v1101 = vpack.c.b16 %v1025, %v1024
    %v1102 = vpack.c.b16 %v1027, %v1026
    %v1103 = vpack.c.b16 %v1029, %v1028
    %v1104 = vpack.c.b16 %v1031, %v1030
    %v1105 = vpack.c.b16 %v1033, %v1032
    %v1106 = vpack.c.b16 %v1035, %v1034
    %v1107 = vpack.c.b16 %v1037, %v1036
    %v1108 = vpack.c.b16 %v1039, %v1038
    %v1109 = vpack.c.b16 %v1041, %v1040
    %v1110 = vpack.c.b16 %v1043, %v1042
    %v1111 = vpack.c.b16 %v1045, %v1044
    %v1112 = vpack.c.b16 %v1047, %v1046
    %v1113 = vpack.c.b16 %v1049, %v1048
    %v1194 = vunpack.c.l.b16 %v771
    %v1195 = vunpack.c.l.b16 %v772
    %v1196 = vunpack.c.l.b16 %v773
    %v1197 = vunpack.c.l.b16 %v774
    %v1198 = vunpack.c.l.b16 %v775
    %v1199 = vunpack.c.l.b16 %v776
    %v1200 = vunpack.c.l.b16 %v777
    %v1201 = vunpack.c.l.b16 %v778
    %v1202 = vunpack.c.l.b16 %v779
    %v1203 = vunpack.c.l.b16 %v780
    %v1204 = vunpack.c.l.b16 %v781
    %v1205 = vunpack.c.l.b16 %v782
    %v1206 = vunpack.c.l.b16 %v783
    %v1207 = vunpack.c.l.b16 %v784
    %v1208 = vunpack.c.l.b16 %v785
    %v1209 = vunpack.c.l.b16 %v786
    %v1210 = vpack.c.b16 %v1195, %v1194
    %v1211 = vpack.c.b16 %v1197, %v1196
    %v1212 = vpack.c.b16 %v1199, %v1198
    %v1213 = vpack.c.b16 %v1201, %v1200
    %v1214 = vpack.c.b16 %v1203, %v1202
    %v1215 = vpack.c.b16 %v1205, %v1204
    %v1216 = vpack.c.b16 %v1207, %v1206
    %v1217 = vpack.c.b16 %v1209, %v1208
    %1226 = vmatprep.subr.bf16.mxu0 0
    %1227 = vmatpush1.bf16.msra.mxu0 %v1210
    %1228 = vmatprep.subr.bf16.mxu0 0
    %1229 = vmatpush1.bf16.msra.mxu0 %v1211
    %1230 = vmatprep.subr.bf16.mxu0 0
    %1231 = vmatpush1.bf16.msra.mxu0 %v1212
    %1232 = vmatprep.subr.bf16.mxu0 0
    %1233 = vmatpush1.bf16.msra.mxu0 %v1213
    %1234 = vmatprep.subr.bf16.mxu0 0
    %1235 = vmatpush1.bf16.msra.mxu0 %v1214
    %1236 = vmatprep.subr.bf16.mxu0 0
    %1237 = vmatpush1.bf16.msra.mxu0 %v1215
    %1238 = vmatprep.subr.bf16.mxu0 0
    %1239 = vmatpush1.bf16.msra.mxu0 %v1216
    %1240 = vmatprep.subr.bf16.mxu0 0
    %1241 = vmatpush1.bf16.msra.mxu0 %v1217
    %1242 = vmatprep.subr.bf16.mxu0 0
    %1243 = vmatpush1.bf16.msra.mxu0 0
    %1244 = vmatprep.subr.bf16.mxu0 0
    %1245 = vmatpush1.bf16.msra.mxu0 0
    %1246 = vmatprep.subr.bf16.mxu0 0
    %1247 = vmatpush1.bf16.msra.mxu0 0
    %1248 = vmatprep.subr.bf16.mxu0 0
    %1249 = vmatpush1.bf16.msra.mxu0 0
    %1250 = vmatprep.subr.bf16.mxu0 0
    %1251 = vmatpush1.bf16.msra.mxu0 0
    %1252 = vmatprep.subr.bf16.mxu0 0
    %1253 = vmatpush1.bf16.msra.mxu0 0
    %1254 = vmatprep.subr.bf16.mxu0 0
    %1255 = vmatpush1.bf16.msra.mxu0 0
    %1256 = vmatprep.subr.bf16.mxu0 0
    %1257 = vmatpush1.bf16.msra.mxu0 0
    %1258 = vmatprep.mubr.bf16.mxu0 0
    %1259 = vmatmul.mubr.bf16.gmra.mrb[0].mxu0 %v1050
    %v1260 = vpop.f32.mrb[0].mxu0
    %v1261 = vadd.f32 %v792, %v1260
    %v1262 = vpop.f32.mrb[0].mxu0
    %v1263 = vpop.f32.mrb[0].mxu0
    %v1264 = vadd.f32 %v792, %v1263
    %v1265 = vpop.f32.mrb[0].mxu0
    %1266 = vmatprep.mubr.bf16.mxu0 0
    %1267 = vmatmul.mubr.bf16.gmra.mrb[0].mxu0 %v1051
    %v1268 = vpop.f32.mrb[0].mxu0
    %v1269 = vadd.f32 %v792, %v1268
    %v1270 = vpop.f32.mrb[0].mxu0
    %v1271 = vpop.f32.mrb[0].mxu0
    %v1272 = vadd.f32 %v792, %v1271
    %v1273 = vpop.f32.mrb[0].mxu0
    %1274 = vmatprep.mubr.bf16.mxu0 0
    %1275 = vmatmul.mubr.bf16.gmra.mrb[0].mxu0 %v1052
    %v1276 = vpop.f32.mrb[0].mxu0
    %v1277 = vadd.f32 %v792, %v1276
    %v1278 = vpop.f32.mrb[0].mxu0
    %v1279 = vpop.f32.mrb[0].mxu0
    %v1280 = vadd.f32 %v792, %v1279
    %v1281 = vpop.f32.mrb[0].mxu0
    %1282 = vmatprep.mubr.bf16.mxu0 0
    %1283 = vmatmul.mubr.bf16.gmra.mrb[0].mxu0 %v1053
    %v1284 = vpop.f32.mrb[0].mxu0
    %v1285 = vadd.f32 %v792, %v1284
    %v1286 = vpop.f32.mrb[0].mxu0
    %v1287 = vpop.f32.mrb[0].mxu0
    %v1288 = vadd.f32 %v792, %v1287
    %v1289 = vpop.f32.mrb[0].mxu0
    %1290 = vmatprep.mubr.bf16.mxu0 0
    %1291 = vmatmul.mubr.bf16.gmra.mrb[0].mxu0 %v1054
    %v1292 = vpop.f32.mrb[0].mxu0
    %v1293 = vadd.f32 %v792, %v1292
    %v1294 = vpop.f32.mrb[0].mxu0
    %v1295 = vpop.f32.mrb[0].mxu0
    %v1296 = vadd.f32 %v792, %v1295
    %v1297 = vpop.f32.mrb[0].mxu0
    %1298 = vmatprep.mubr.bf16.mxu0 0
    %1299 = vmatmul.mubr.bf16.gmra.mrb[0].mxu0 %v1055
    %v1300 = vpop.f32.mrb[0].mxu0
    %v1301 = vadd.f32 %v792, %v1300
    %v1302 = vpop.f32.mrb[0].mxu0
    %v1303 = vpop.f32.mrb[0].mxu0
    %v1304 = vadd.f32 %v792, %v1303
    %v1305 = vpop.f32.mrb[0].mxu0
    %1306 = vmatprep.mubr.bf16.mxu0 0
    %1307 = vmatmul.mubr.bf16.gmra.mrb[0].mxu0 %v1056
    %v1308 = vpop.f32.mrb[0].mxu0
    %v1309 = vadd.f32 %v792, %v1308
    %v1310 = vpop.f32.mrb[0].mxu0
    %v1311 = vpop.f32.mrb[0].mxu0
    %v1312 = vadd.f32 %v792, %v1311
    %v1313 = vpop.f32.mrb[0].mxu0
    %1314 = vmatprep.mubr.bf16.mxu0 0
    %1315 = vmatmul.mubr.bf16.gmra.mrb[0].mxu0 %v1057
    %v1316 = vpop.f32.mrb[0].mxu0
    %v1317 = vadd.f32 %v792, %v1316
    %v1318 = vpop.f32.mrb[0].mxu0
    %v1319 = vpop.f32.mrb[0].mxu0
    %v1320 = vadd.f32 %v792, %v1319
    %v1321 = vpop.f32.mrb[0].mxu0
    %1322 = vmatprep.mubr.bf16.mxu0 0
    %1323 = vmatmul.mubr.bf16.gmra.mrb[0].mxu0 %v1058
    %v1324 = vpop.f32.mrb[0].mxu0
    %v1325 = vadd.f32 %v792, %v1324
    %v1326 = vpop.f32.mrb[0].mxu0
    %v1327 = vpop.f32.mrb[0].mxu0
    %v1328 = vadd.f32 %v792, %v1327
    %v1329 = vpop.f32.mrb[0].mxu0
    %1330 = vmatprep.mubr.bf16.mxu0 0
    %1331 = vmatmul.mubr.bf16.gmra.mrb[0].mxu0 %v1059
    %v1332 = vpop.f32.mrb[0].mxu0
    %v1333 = vadd.f32 %v792, %v1332
    %v1334 = vpop.f32.mrb[0].mxu0
    %v1335 = vpop.f32.mrb[0].mxu0
    %v1336 = vadd.f32 %v792, %v1335
    %v1337 = vpop.f32.mrb[0].mxu0
    %1338 = vmatprep.mubr.bf16.mxu0 0
    %1339 = vmatmul.mubr.bf16.gmra.mrb[0].mxu0 %v1060
    %v1340 = vpop.f32.mrb[0].mxu0
    %v1341 = vadd.f32 %v792, %v1340
    %v1342 = vpop.f32.mrb[0].mxu0
    %v1343 = vpop.f32.mrb[0].mxu0
    %v1344 = vadd.f32 %v792, %v1343
    %v1345 = vpop.f32.mrb[0].mxu0
    %1346 = vmatprep.mubr.bf16.mxu0 0
    %1347 = vmatmul.mubr.bf16.gmra.mrb[0].mxu0 %v1061
    %v1348 = vpop.f32.mrb[0].mxu0
    %v1349 = vadd.f32 %v792, %v1348
    %v1350 = vpop.f32.mrb[0].mxu0
    %v1351 = vpop.f32.mrb[0].mxu0
    %v1352 = vadd.f32 %v792, %v1351
    %v1353 = vpop.f32.mrb[0].mxu0
    %1354 = vmatprep.mubr.bf16.mxu0 0
    %1355 = vmatmul.mubr.bf16.gmra.mrb[0].mxu0 %v1062
    %v1356 = vpop.f32.mrb[0].mxu0
    %v1357 = vadd.f32 %v792, %v1356
    %v1358 = vpop.f32.mrb[0].mxu0
    %v1359 = vpop.f32.mrb[0].mxu0
    %v1360 = vadd.f32 %v792, %v1359
    %v1361 = vpop.f32.mrb[0].mxu0
    %1362 = vmatprep.mubr.bf16.mxu0 0
    %1363 = vmatmul.mubr.bf16.gmra.mrb[0].mxu0 %v1063
    %v1364 = vpop.f32.mrb[0].mxu0
    %v1365 = vadd.f32 %v792, %v1364
    %v1366 = vpop.f32.mrb[0].mxu0
    %v1367 = vpop.f32.mrb[0].mxu0
    %v1368 = vadd.f32 %v792, %v1367
    %v1369 = vpop.f32.mrb[0].mxu0
    %1370 = vmatprep.mubr.bf16.mxu0 0
    %1371 = vmatmul.mubr.bf16.gmra.mrb[0].mxu0 %v1064
    %v1372 = vpop.f32.mrb[0].mxu0
    %v1373 = vadd.f32 %v792, %v1372
    %v1374 = vpop.f32.mrb[0].mxu0
    %v1375 = vpop.f32.mrb[0].mxu0
    %v1376 = vadd.f32 %v792, %v1375
    %v1377 = vpop.f32.mrb[0].mxu0
    %1378 = vmatprep.mubr.bf16.mxu0 0
    %1379 = vmatmul.mubr.bf16.gmra.mrb[0].mxu0 %v1065
    %v1380 = vpop.f32.mrb[0].mxu0
    %v1381 = vadd.f32 %v792, %v1380
    %v1382 = vpop.f32.mrb[0].mxu0
    %v1383 = vpop.f32.mrb[0].mxu0
    %v1384 = vadd.f32 %v792, %v1383
    %v1385 = vpop.f32.mrb[0].mxu0
    %1386 = vmatprep.mubr.bf16.mxu0 0
    %1387 = vmatmul.mubr.bf16.gmra.mrb[0].mxu0 %v1066
    %v1388 = vpop.f32.mrb[0].mxu0
    %v1389 = vadd.f32 %v792, %v1388
    %v1390 = vpop.f32.mrb[0].mxu0
    %v1391 = vpop.f32.mrb[0].mxu0
    %v1392 = vadd.f32 %v792, %v1391
    %v1393 = vpop.f32.mrb[0].mxu0
    %1394 = vmatprep.mubr.bf16.mxu0 0
    %1395 = vmatmul.mubr.bf16.gmra.mrb[0].mxu0 %v1067
    %v1396 = vpop.f32.mrb[0].mxu0
    %v1397 = vadd.f32 %v792, %v1396
    %v1398 = vpop.f32.mrb[0].mxu0
    %v1399 = vpop.f32.mrb[0].mxu0
    %v1400 = vadd.f32 %v792, %v1399
    %v1401 = vpop.f32.mrb[0].mxu0
    %1402 = vmatprep.mubr.bf16.mxu0 0
    %1403 = vmatmul.mubr.bf16.gmra.mrb[0].mxu0 %v1068
    %v1404 = vpop.f32.mrb[0].mxu0
    %v1405 = vadd.f32 %v792, %v1404
    %v1406 = vpop.f32.mrb[0].mxu0
    %v1407 = vpop.f32.mrb[0].mxu0
    %v1408 = vadd.f32 %v792, %v1407
    %v1409 = vpop.f32.mrb[0].mxu0
    %1410 = vmatprep.mubr.bf16.mxu0 0
    %1411 = vmatmul.mubr.bf16.gmra.mrb[0].mxu0 %v1069
    %v1412 = vpop.f32.mrb[0].mxu0
    %v1413 = vadd.f32 %v792, %v1412
    %v1414 = vpop.f32.mrb[0].mxu0
    %v1415 = vpop.f32.mrb[0].mxu0
    %v1416 = vadd.f32 %v792, %v1415
    %v1417 = vpop.f32.mrb[0].mxu0
    %1418 = vmatprep.mubr.bf16.mxu0 0
    %1419 = vmatmul.mubr.bf16.gmra.mrb[0].mxu0 %v1070
    %v1420 = vpop.f32.mrb[0].mxu0
    %v1421 = vadd.f32 %v792, %v1420
    %v1422 = vpop.f32.mrb[0].mxu0
    %v1423 = vpop.f32.mrb[0].mxu0
    %v1424 = vadd.f32 %v792, %v1423
    %v1425 = vpop.f32.mrb[0].mxu0
    %1426 = vmatprep.mubr.bf16.mxu0 0
    %1427 = vmatmul.mubr.bf16.gmra.mrb[0].mxu0 %v1071
    %v1428 = vpop.f32.mrb[0].mxu0
    %v1429 = vadd.f32 %v792, %v1428
    %v1430 = vpop.f32.mrb[0].mxu0
    %v1431 = vpop.f32.mrb[0].mxu0
    %v1432 = vadd.f32 %v792, %v1431
    %v1433 = vpop.f32.mrb[0].mxu0
    %1434 = vmatprep.mubr.bf16.mxu0 0
    %1435 = vmatmul.mubr.bf16.gmra.mrb[0].mxu0 %v1072
    %v1436 = vpop.f32.mrb[0].mxu0
    %v1437 = vadd.f32 %v792, %v1436
    %v1438 = vpop.f32.mrb[0].mxu0
    %v1439 = vpop.f32.mrb[0].mxu0
    %v1440 = vadd.f32 %v792, %v1439
    %v1441 = vpop.f32.mrb[0].mxu0
    %1442 = vmatprep.mubr.bf16.mxu0 0
    %1443 = vmatmul.mubr.bf16.gmra.mrb[0].mxu0 %v1073
    %v1444 = vpop.f32.mrb[0].mxu0
    %v1445 = vadd.f32 %v792, %v1444
    %v1446 = vpop.f32.mrb[0].mxu0
    %v1447 = vpop.f32.mrb[0].mxu0
    %v1448 = vadd.f32 %v792, %v1447
    %v1449 = vpop.f32.mrb[0].mxu0
    %1450 = vmatprep.mubr.bf16.mxu0 0
    %1451 = vmatmul.mubr.bf16.gmra.mrb[0].mxu0 %v1074
    %v1452 = vpop.f32.mrb[0].mxu0
    %v1453 = vadd.f32 %v792, %v1452
    %v1454 = vpop.f32.mrb[0].mxu0
    %v1455 = vpop.f32.mrb[0].mxu0
    %v1456 = vadd.f32 %v792, %v1455
    %v1457 = vpop.f32.mrb[0].mxu0
    %1458 = vmatprep.mubr.bf16.mxu0 0
    %1459 = vmatmul.mubr.bf16.gmra.mrb[0].mxu0 %v1075
    %v1460 = vpop.f32.mrb[0].mxu0
    %v1461 = vadd.f32 %v792, %v1460
    %v1462 = vpop.f32.mrb[0].mxu0
    %v1463 = vpop.f32.mrb[0].mxu0
    %v1464 = vadd.f32 %v792, %v1463
    %v1465 = vpop.f32.mrb[0].mxu0
    %1466 = vmatprep.mubr.bf16.mxu0 0
    %1467 = vmatmul.mubr.bf16.gmra.mrb[0].mxu0 %v1076
    %v1468 = vpop.f32.mrb[0].mxu0
    %v1469 = vadd.f32 %v792, %v1468
    %v1470 = vpop.f32.mrb[0].mxu0
    %v1471 = vpop.f32.mrb[0].mxu0
    %v1472 = vadd.f32 %v792, %v1471
    %v1473 = vpop.f32.mrb[0].mxu0
    %1474 = vmatprep.mubr.bf16.mxu0 0
    %1475 = vmatmul.mubr.bf16.gmra.mrb[0].mxu0 %v1077
    %v1476 = vpop.f32.mrb[0].mxu0
    %v1477 = vadd.f32 %v792, %v1476
    %v1478 = vpop.f32.mrb[0].mxu0
    %v1479 = vpop.f32.mrb[0].mxu0
    %v1480 = vadd.f32 %v792, %v1479
    %v1481 = vpop.f32.mrb[0].mxu0
    %1482 = vmatprep.mubr.bf16.mxu0 0
    %1483 = vmatmul.mubr.bf16.gmra.mrb[0].mxu0 %v1078
    %v1484 = vpop.f32.mrb[0].mxu0
    %v1485 = vadd.f32 %v792, %v1484
    %v1486 = vpop.f32.mrb[0].mxu0
    %v1487 = vpop.f32.mrb[0].mxu0
    %v1488 = vadd.f32 %v792, %v1487
    %v1489 = vpop.f32.mrb[0].mxu0
    %1490 = vmatprep.mubr.bf16.mxu0 0
    %1491 = vmatmul.mubr.bf16.gmra.mrb[0].mxu0 %v1079
    %v1492 = vpop.f32.mrb[0].mxu0
    %v1493 = vadd.f32 %v792, %v1492
    %v1494 = vpop.f32.mrb[0].mxu0
    %v1495 = vpop.f32.mrb[0].mxu0
    %v1496 = vadd.f32 %v792, %v1495
    %v1497 = vpop.f32.mrb[0].mxu0
    %1498 = vmatprep.mubr.bf16.mxu0 0
    %1499 = vmatmul.mubr.bf16.gmra.mrb[0].mxu0 %v1080
    %v1500 = vpop.f32.mrb[0].mxu0
    %v1501 = vadd.f32 %v792, %v1500
    %v1502 = vpop.f32.mrb[0].mxu0
    %v1503 = vpop.f32.mrb[0].mxu0
    %v1504 = vadd.f32 %v792, %v1503
    %v1505 = vpop.f32.mrb[0].mxu0
    %1506 = vmatprep.mubr.bf16.mxu0 0
    %1507 = vmatmul.mubr.bf16.gmra.mrb[0].mxu0 %v1081
    %v1508 = vpop.f32.mrb[0].mxu0
    %v1509 = vadd.f32 %v792, %v1508
    %v1510 = vpop.f32.mrb[0].mxu0
    %v1511 = vpop.f32.mrb[0].mxu0
    %v1512 = vadd.f32 %v792, %v1511
    %v1513 = vpop.f32.mrb[0].mxu0
    %1514 = vmatprep.mubr.bf16.mxu0 0
    %1515 = vmatmul.mubr.bf16.gmra.mrb[0].mxu0 %v1082
    %v1516 = vpop.f32.mrb[0].mxu0
    %v1517 = vadd.f32 %v792, %v1516
    %v1518 = vpop.f32.mrb[0].mxu0
    %v1519 = vpop.f32.mrb[0].mxu0
    %v1520 = vadd.f32 %v792, %v1519
    %v1521 = vpop.f32.mrb[0].mxu0
    %1522 = vmatprep.mubr.bf16.mxu0 0
    %1523 = vmatmul.mubr.bf16.gmra.mrb[0].mxu0 %v1083
    %v1524 = vpop.f32.mrb[0].mxu0
    %v1525 = vadd.f32 %v792, %v1524
    %v1526 = vpop.f32.mrb[0].mxu0
    %v1527 = vpop.f32.mrb[0].mxu0
    %v1528 = vadd.f32 %v792, %v1527
    %v1529 = vpop.f32.mrb[0].mxu0
    %1530 = vmatprep.mubr.bf16.mxu0 0
    %1531 = vmatmul.mubr.bf16.gmra.mrb[0].mxu0 %v1084
    %v1532 = vpop.f32.mrb[0].mxu0
    %v1533 = vadd.f32 %v792, %v1532
    %v1534 = vpop.f32.mrb[0].mxu0
    %v1535 = vpop.f32.mrb[0].mxu0
    %v1536 = vadd.f32 %v792, %v1535
    %v1537 = vpop.f32.mrb[0].mxu0
    %1538 = vmatprep.mubr.bf16.mxu0 0
    %1539 = vmatmul.mubr.bf16.gmra.mrb[0].mxu0 %v1085
    %v1540 = vpop.f32.mrb[0].mxu0
    %v1541 = vadd.f32 %v792, %v1540
    %v1542 = vpop.f32.mrb[0].mxu0
    %v1543 = vpop.f32.mrb[0].mxu0
    %v1544 = vadd.f32 %v792, %v1543
    %v1545 = vpop.f32.mrb[0].mxu0
    %1546 = vmatprep.mubr.bf16.mxu0 0
    %1547 = vmatmul.mubr.bf16.gmra.mrb[0].mxu0 %v1086
    %v1548 = vpop.f32.mrb[0].mxu0
    %v1549 = vadd.f32 %v792, %v1548
    %v1550 = vpop.f32.mrb[0].mxu0
    %v1551 = vpop.f32.mrb[0].mxu0
    %v1552 = vadd.f32 %v792, %v1551
    %v1553 = vpop.f32.mrb[0].mxu0
    %1554 = vmatprep.mubr.bf16.mxu0 0
    %1555 = vmatmul.mubr.bf16.gmra.mrb[0].mxu0 %v1087
    %v1556 = vpop.f32.mrb[0].mxu0
    %v1557 = vadd.f32 %v792, %v1556
    %v1558 = vpop.f32.mrb[0].mxu0
    %v1559 = vpop.f32.mrb[0].mxu0
    %v1560 = vadd.f32 %v792, %v1559
    %v1561 = vpop.f32.mrb[0].mxu0
    %1562 = vmatprep.mubr.bf16.mxu0 0
    %1563 = vmatmul.mubr.bf16.gmra.mrb[0].mxu0 %v1088
    %v1564 = vpop.f32.mrb[0].mxu0
    %v1565 = vadd.f32 %v792, %v1564
    %v1566 = vpop.f32.mrb[0].mxu0
    %v1567 = vpop.f32.mrb[0].mxu0
    %v1568 = vadd.f32 %v792, %v1567
    %v1569 = vpop.f32.mrb[0].mxu0
    %1570 = vmatprep.mubr.bf16.mxu0 0
    %1571 = vmatmul.mubr.bf16.gmra.mrb[0].mxu0 %v1089
    %v1572 = vpop.f32.mrb[0].mxu0
    %v1573 = vadd.f32 %v792, %v1572
    %v1574 = vpop.f32.mrb[0].mxu0
    %v1575 = vpop.f32.mrb[0].mxu0
    %v1576 = vadd.f32 %v792, %v1575
    %v1577 = vpop.f32.mrb[0].mxu0
    %1578 = vmatprep.mubr.bf16.mxu0 0
    %1579 = vmatmul.mubr.bf16.gmra.mrb[0].mxu0 %v1090
    %v1580 = vpop.f32.mrb[0].mxu0
    %v1581 = vadd.f32 %v792, %v1580
    %v1582 = vpop.f32.mrb[0].mxu0
    %v1583 = vpop.f32.mrb[0].mxu0
    %v1584 = vadd.f32 %v792, %v1583
    %v1585 = vpop.f32.mrb[0].mxu0
    %1586 = vmatprep.mubr.bf16.mxu0 0
    %1587 = vmatmul.mubr.bf16.gmra.mrb[0].mxu0 %v1091
    %v1588 = vpop.f32.mrb[0].mxu0
    %v1589 = vadd.f32 %v792, %v1588
    %v1590 = vpop.f32.mrb[0].mxu0
    %v1591 = vpop.f32.mrb[0].mxu0
    %v1592 = vadd.f32 %v792, %v1591
    %v1593 = vpop.f32.mrb[0].mxu0
    %1594 = vmatprep.mubr.bf16.mxu0 0
    %1595 = vmatmul.mubr.bf16.gmra.mrb[0].mxu0 %v1092
    %v1596 = vpop.f32.mrb[0].mxu0
    %v1597 = vadd.f32 %v792, %v1596
    %v1598 = vpop.f32.mrb[0].mxu0
    %v1599 = vpop.f32.mrb[0].mxu0
    %v1600 = vadd.f32 %v792, %v1599
    %v1601 = vpop.f32.mrb[0].mxu0
    %1602 = vmatprep.mubr.bf16.mxu0 0
    %1603 = vmatmul.mubr.bf16.gmra.mrb[0].mxu0 %v1093
    %v1604 = vpop.f32.mrb[0].mxu0
    %v1605 = vadd.f32 %v792, %v1604
    %v1606 = vpop.f32.mrb[0].mxu0
    %v1607 = vpop.f32.mrb[0].mxu0
    %v1608 = vadd.f32 %v792, %v1607
    %v1609 = vpop.f32.mrb[0].mxu0
    %1610 = vmatprep.mubr.bf16.mxu0 0
    %1611 = vmatmul.mubr.bf16.gmra.mrb[0].mxu0 %v1094
    %v1612 = vpop.f32.mrb[0].mxu0
    %v1613 = vadd.f32 %v792, %v1612
    %v1614 = vpop.f32.mrb[0].mxu0
    %v1615 = vpop.f32.mrb[0].mxu0
    %v1616 = vadd.f32 %v792, %v1615
    %v1617 = vpop.f32.mrb[0].mxu0
    %1618 = vmatprep.mubr.bf16.mxu0 0
    %1619 = vmatmul.mubr.bf16.gmra.mrb[0].mxu0 %v1095
    %v1620 = vpop.f32.mrb[0].mxu0
    %v1621 = vadd.f32 %v792, %v1620
    %v1622 = vpop.f32.mrb[0].mxu0
    %v1623 = vpop.f32.mrb[0].mxu0
    %v1624 = vadd.f32 %v792, %v1623
    %v1625 = vpop.f32.mrb[0].mxu0
    %1626 = vmatprep.mubr.bf16.mxu0 0
    %1627 = vmatmul.mubr.bf16.gmra.mrb[0].mxu0 %v1096
    %v1628 = vpop.f32.mrb[0].mxu0
    %v1629 = vadd.f32 %v792, %v1628
    %v1630 = vpop.f32.mrb[0].mxu0
    %v1631 = vpop.f32.mrb[0].mxu0
    %v1632 = vadd.f32 %v792, %v1631
    %v1633 = vpop.f32.mrb[0].mxu0
    %1634 = vmatprep.mubr.bf16.mxu0 0
    %1635 = vmatmul.mubr.bf16.gmra.mrb[0].mxu0 %v1097
    %v1636 = vpop.f32.mrb[0].mxu0
    %v1637 = vadd.f32 %v792, %v1636
    %v1638 = vpop.f32.mrb[0].mxu0
    %v1639 = vpop.f32.mrb[0].mxu0
    %v1640 = vadd.f32 %v792, %v1639
    %v1641 = vpop.f32.mrb[0].mxu0
    %1642 = vmatprep.mubr.bf16.mxu0 0
    %1643 = vmatmul.mubr.bf16.gmra.mrb[0].mxu0 %v1098
    %v1644 = vpop.f32.mrb[0].mxu0
    %v1645 = vadd.f32 %v792, %v1644
    %v1646 = vpop.f32.mrb[0].mxu0
    %v1647 = vpop.f32.mrb[0].mxu0
    %v1648 = vadd.f32 %v792, %v1647
    %v1649 = vpop.f32.mrb[0].mxu0
    %1650 = vmatprep.mubr.bf16.mxu0 0
    %1651 = vmatmul.mubr.bf16.gmra.mrb[0].mxu0 %v1099
    %v1652 = vpop.f32.mrb[0].mxu0
    %v1653 = vadd.f32 %v792, %v1652
    %v1654 = vpop.f32.mrb[0].mxu0
    %v1655 = vpop.f32.mrb[0].mxu0
    %v1656 = vadd.f32 %v792, %v1655
    %v1657 = vpop.f32.mrb[0].mxu0
    %1658 = vmatprep.mubr.bf16.mxu0 0
    %1659 = vmatmul.mubr.bf16.gmra.mrb[0].mxu0 %v1100
    %v1660 = vpop.f32.mrb[0].mxu0
    %v1661 = vadd.f32 %v792, %v1660
    %v1662 = vpop.f32.mrb[0].mxu0
    %v1663 = vpop.f32.mrb[0].mxu0
    %v1664 = vadd.f32 %v792, %v1663
    %v1665 = vpop.f32.mrb[0].mxu0
    %1666 = vmatprep.mubr.bf16.mxu0 0
    %1667 = vmatmul.mubr.bf16.gmra.mrb[0].mxu0 %v1101
    %v1668 = vpop.f32.mrb[0].mxu0
    %v1669 = vadd.f32 %v792, %v1668
    %v1670 = vpop.f32.mrb[0].mxu0
    %v1671 = vpop.f32.mrb[0].mxu0
    %v1672 = vadd.f32 %v792, %v1671
    %v1673 = vpop.f32.mrb[0].mxu0
    %1674 = vmatprep.mubr.bf16.mxu0 0
    %1675 = vmatmul.mubr.bf16.gmra.mrb[0].mxu0 %v1102
    %v1676 = vpop.f32.mrb[0].mxu0
    %v1677 = vadd.f32 %v792, %v1676
    %v1678 = vpop.f32.mrb[0].mxu0
    %v1679 = vpop.f32.mrb[0].mxu0
    %v1680 = vadd.f32 %v792, %v1679
    %v1681 = vpop.f32.mrb[0].mxu0
    %1682 = vmatprep.mubr.bf16.mxu0 0
    %1683 = vmatmul.mubr.bf16.gmra.mrb[0].mxu0 %v1103
    %v1684 = vpop.f32.mrb[0].mxu0
    %v1685 = vadd.f32 %v792, %v1684
    %v1686 = vpop.f32.mrb[0].mxu0
    %v1687 = vpop.f32.mrb[0].mxu0
    %v1688 = vadd.f32 %v792, %v1687
    %v1689 = vpop.f32.mrb[0].mxu0
    %1690 = vmatprep.mubr.bf16.mxu0 0
    %1691 = vmatmul.mubr.bf16.gmra.mrb[0].mxu0 %v1104
    %v1692 = vpop.f32.mrb[0].mxu0
    %v1693 = vadd.f32 %v792, %v1692
    %v1694 = vpop.f32.mrb[0].mxu0
    %v1695 = vpop.f32.mrb[0].mxu0
    %v1696 = vadd.f32 %v792, %v1695
    %v1697 = vpop.f32.mrb[0].mxu0
    %1698 = vmatprep.mubr.bf16.mxu0 0
    %1699 = vmatmul.mubr.bf16.gmra.mrb[0].mxu0 %v1105
    %v1700 = vpop.f32.mrb[0].mxu0
    %v1701 = vadd.f32 %v792, %v1700
    %v1702 = vpop.f32.mrb[0].mxu0
    %v1703 = vpop.f32.mrb[0].mxu0
    %v1704 = vadd.f32 %v792, %v1703
    %v1705 = vpop.f32.mrb[0].mxu0
    %1706 = vmatprep.mubr.bf16.mxu0 0
    %1707 = vmatmul.mubr.bf16.gmra.mrb[0].mxu0 %v1106
    %v1708 = vpop.f32.mrb[0].mxu0
    %v1709 = vadd.f32 %v792, %v1708
    %v1710 = vpop.f32.mrb[0].mxu0
    %v1711 = vpop.f32.mrb[0].mxu0
    %v1712 = vadd.f32 %v792, %v1711
    %v1713 = vpop.f32.mrb[0].mxu0
    %1714 = vmatprep.mubr.bf16.mxu0 0
    %1715 = vmatmul.mubr.bf16.gmra.mrb[0].mxu0 %v1107
    %v1716 = vpop.f32.mrb[0].mxu0
    %v1717 = vadd.f32 %v792, %v1716
    %v1718 = vpop.f32.mrb[0].mxu0
    %v1719 = vpop.f32.mrb[0].mxu0
    %v1720 = vadd.f32 %v792, %v1719
    %v1721 = vpop.f32.mrb[0].mxu0
    %1722 = vmatprep.mubr.bf16.mxu0 0
    %1723 = vmatmul.mubr.bf16.gmra.mrb[0].mxu0 %v1108
    %v1724 = vpop.f32.mrb[0].mxu0
    %v1725 = vadd.f32 %v792, %v1724
    %v1726 = vpop.f32.mrb[0].mxu0
    %v1727 = vpop.f32.mrb[0].mxu0
    %v1728 = vadd.f32 %v792, %v1727
    %v1729 = vpop.f32.mrb[0].mxu0
    %1730 = vmatprep.mubr.bf16.mxu0 0
    %1731 = vmatmul.mubr.bf16.gmra.mrb[0].mxu0 %v1109
    %v1732 = vpop.f32.mrb[0].mxu0
    %v1733 = vadd.f32 %v792, %v1732
    %v1734 = vpop.f32.mrb[0].mxu0
    %v1735 = vpop.f32.mrb[0].mxu0
    %v1736 = vadd.f32 %v792, %v1735
    %v1737 = vpop.f32.mrb[0].mxu0
    %1738 = vmatprep.mubr.bf16.mxu0 0
    %1739 = vmatmul.mubr.bf16.gmra.mrb[0].mxu0 %v1110
    %v1740 = vpop.f32.mrb[0].mxu0
    %v1741 = vadd.f32 %v792, %v1740
    %v1742 = vpop.f32.mrb[0].mxu0
    %v1743 = vpop.f32.mrb[0].mxu0
    %v1744 = vadd.f32 %v792, %v1743
    %v1745 = vpop.f32.mrb[0].mxu0
    %1746 = vmatprep.mubr.bf16.mxu0 0
    %1747 = vmatmul.mubr.bf16.gmra.mrb[0].mxu0 %v1111
    %v1748 = vpop.f32.mrb[0].mxu0
    %v1749 = vadd.f32 %v792, %v1748
    %v1750 = vpop.f32.mrb[0].mxu0
    %v1751 = vpop.f32.mrb[0].mxu0
    %v1752 = vadd.f32 %v792, %v1751
    %v1753 = vpop.f32.mrb[0].mxu0
    %1754 = vmatprep.mubr.bf16.mxu0 0
    %1755 = vmatmul.mubr.bf16.gmra.mrb[0].mxu0 %v1112
    %v1756 = vpop.f32.mrb[0].mxu0
    %v1757 = vadd.f32 %v792, %v1756
    %v1758 = vpop.f32.mrb[0].mxu0
    %v1759 = vpop.f32.mrb[0].mxu0
    %v1760 = vadd.f32 %v792, %v1759
    %v1761 = vpop.f32.mrb[0].mxu0
    %1762 = vmatprep.mubr.bf16.mxu0 0
    %1763 = vmatmul.mubr.bf16.gmra.mrb[0].mxu0 %v1113
    %v1764 = vpop.f32.mrb[0].mxu0
    %v1765 = vadd.f32 %v792, %v1764
    %v1766 = vpop.f32.mrb[0].mxu0
    %v1767 = vpop.f32.mrb[0].mxu0
    %v1768 = vadd.f32 %v792, %v1767
    %v1769 = vpop.f32.mrb[0].mxu0
    %1770 = vdwg.mxu0
    %1771 = vst [vmem:[#allocation2] sm:$0xff] %v1261
    %1772 = vst [vmem:[#allocation2 + $0x8] sm:$0xff] %v1264
    %1773 = vst [vmem:[#allocation2 + $0x10] sm:$0xff] %v1269
    %1774 = vst [vmem:[#allocation2 + $0x18] sm:$0xff] %v1272
    %1775 = vst [vmem:[#allocation2 + $0x20] sm:$0xff] %v1277
    %1776 = vst [vmem:[#allocation2 + $0x28] sm:$0xff] %v1280
    %1777 = vst [vmem:[#allocation2 + $0x30] sm:$0xff] %v1285
    %1778 = vst [vmem:[#allocation2 + $0x38] sm:$0xff] %v1288
    %1779 = vst [vmem:[#allocation2 + $0x40] sm:$0xff] %v1293
    %1780 = vst [vmem:[#allocation2 + $0x48] sm:$0xff] %v1296
    %1781 = vst [vmem:[#allocation2 + $0x50] sm:$0xff] %v1301
    %1782 = vst [vmem:[#allocation2 + $0x58] sm:$0xff] %v1304
    %1783 = vst [vmem:[#allocation2 + $0x60] sm:$0xff] %v1309
    %1784 = vst [vmem:[#allocation2 + $0x68] sm:$0xff] %v1312
    %1785 = vst [vmem:[#allocation2 + $0x70] sm:$0xff] %v1317
    %1786 = vst [vmem:[#allocation2 + $0x78] sm:$0xff] %v1320
    %1787 = vst [vmem:[#allocation2 + $0x80] sm:$0xff] %v1325
    %1788 = vst [vmem:[#allocation2 + $0x88] sm:$0xff] %v1328
    %1789 = vst [vmem:[#allocation2 + $0x90] sm:$0xff] %v1333
    %1790 = vst [vmem:[#allocation2 + $0x98] sm:$0xff] %v1336
    %1791 = vst [vmem:[#allocation2 + $0xa0] sm:$0xff] %v1341
    %1792 = vst [vmem:[#allocation2 + $0xa8] sm:$0xff] %v1344
    %1793 = vst [vmem:[#allocation2 + $0xb0] sm:$0xff] %v1349
    %1794 = vst [vmem:[#allocation2 + $0xb8] sm:$0xff] %v1352
    %1795 = vst [vmem:[#allocation2 + $0xc0] sm:$0xff] %v1357
    %1796 = vst [vmem:[#allocation2 + $0xc8] sm:$0xff] %v1360
    %1797 = vst [vmem:[#allocation2 + $0xd0] sm:$0xff] %v1365
    %1798 = vst [vmem:[#allocation2 + $0xd8] sm:$0xff] %v1368
    %1799 = vst [vmem:[#allocation2 + $0xe0] sm:$0xff] %v1373
    %1800 = vst [vmem:[#allocation2 + $0xe8] sm:$0xff] %v1376
    %1801 = vst [vmem:[#allocation2 + $0xf0] sm:$0xff] %v1381
    %1802 = vst [vmem:[#allocation2 + $0xf8] sm:$0xff] %v1384
    %1803 = vst [vmem:[#allocation2 + $0x100] sm:$0xff] %v1389
    %1804 = vst [vmem:[#allocation2 + $0x108] sm:$0xff] %v1392
    %1805 = vst [vmem:[#allocation2 + $0x110] sm:$0xff] %v1397
    %1806 = vst [vmem:[#allocation2 + $0x118] sm:$0xff] %v1400
    %1807 = vst [vmem:[#allocation2 + $0x120] sm:$0xff] %v1405
    %1808 = vst [vmem:[#allocation2 + $0x128] sm:$0xff] %v1408
    %1809 = vst [vmem:[#allocation2 + $0x130] sm:$0xff] %v1413
    %1810 = vst [vmem:[#allocation2 + $0x138] sm:$0xff] %v1416
    %1811 = vst [vmem:[#allocation2 + $0x140] sm:$0xff] %v1421
    %1812 = vst [vmem:[#allocation2 + $0x148] sm:$0xff] %v1424
    %1813 = vst [vmem:[#allocation2 + $0x150] sm:$0xff] %v1429
    %1814 = vst [vmem:[#allocation2 + $0x158] sm:$0xff] %v1432
    %1815 = vst [vmem:[#allocation2 + $0x160] sm:$0xff] %v1437
    %1816 = vst [vmem:[#allocation2 + $0x168] sm:$0xff] %v1440
    %1817 = vst [vmem:[#allocation2 + $0x170] sm:$0xff] %v1445
    %1818 = vst [vmem:[#allocation2 + $0x178] sm:$0xff] %v1448
    %1819 = vst [vmem:[#allocation2 + $0x180] sm:$0xff] %v1453
    %1820 = vst [vmem:[#allocation2 + $0x188] sm:$0xff] %v1456
    %1821 = vst [vmem:[#allocation2 + $0x190] sm:$0xff] %v1461
    %1822 = vst [vmem:[#allocation2 + $0x198] sm:$0xff] %v1464
    %1823 = vst [vmem:[#allocation2 + $0x1a0] sm:$0xff] %v1469
    %1824 = vst [vmem:[#allocation2 + $0x1a8] sm:$0xff] %v1472
    %1825 = vst [vmem:[#allocation2 + $0x1b0] sm:$0xff] %v1477
    %1826 = vst [vmem:[#allocation2 + $0x1b8] sm:$0xff] %v1480
    %1827 = vst [vmem:[#allocation2 + $0x1c0] sm:$0xff] %v1485
    %1828 = vst [vmem:[#allocation2 + $0x1c8] sm:$0xff] %v1488
    %1829 = vst [vmem:[#allocation2 + $0x1d0] sm:$0xff] %v1493
    %1830 = vst [vmem:[#allocation2 + $0x1d8] sm:$0xff] %v1496
    %1831 = vst [vmem:[#allocation2 + $0x1e0] sm:$0xff] %v1501
    %1832 = vst [vmem:[#allocation2 + $0x1e8] sm:$0xff] %v1504
    %1833 = vst [vmem:[#allocation2 + $0x1f0] sm:$0xff] %v1509
    %1834 = vst [vmem:[#allocation2 + $0x1f8] sm:$0xff] %v1512
    %1835 = vst [vmem:[#allocation2 + $0x200] sm:$0xff] %v1517
    %1836 = vst [vmem:[#allocation2 + $0x208] sm:$0xff] %v1520
    %1837 = vst [vmem:[#allocation2 + $0x210] sm:$0xff] %v1525
    %1838 = vst [vmem:[#allocation2 + $0x218] sm:$0xff] %v1528
    %1839 = vst [vmem:[#allocation2 + $0x220] sm:$0xff] %v1533
    %1840 = vst [vmem:[#allocation2 + $0x228] sm:$0xff] %v1536
    %1841 = vst [vmem:[#allocation2 + $0x230] sm:$0xff] %v1541
    %1842 = vst [vmem:[#allocation2 + $0x238] sm:$0xff] %v1544
    %1843 = vst [vmem:[#allocation2 + $0x240] sm:$0xff] %v1549
    %1844 = vst [vmem:[#allocation2 + $0x248] sm:$0xff] %v1552
    %1845 = vst [vmem:[#allocation2 + $0x250] sm:$0xff] %v1557
    %1846 = vst [vmem:[#allocation2 + $0x258] sm:$0xff] %v1560
    %1847 = vst [vmem:[#allocation2 + $0x260] sm:$0xff] %v1565
    %1848 = vst [vmem:[#allocation2 + $0x268] sm:$0xff] %v1568
    %1849 = vst [vmem:[#allocation2 + $0x270] sm:$0xff] %v1573
    %1850 = vst [vmem:[#allocation2 + $0x278] sm:$0xff] %v1576
    %1851 = vst [vmem:[#allocation2 + $0x280] sm:$0xff] %v1581
    %1852 = vst [vmem:[#allocation2 + $0x288] sm:$0xff] %v1584
    %1853 = vst [vmem:[#allocation2 + $0x290] sm:$0xff] %v1589
    %1854 = vst [vmem:[#allocation2 + $0x298] sm:$0xff] %v1592
    %1855 = vst [vmem:[#allocation2 + $0x2a0] sm:$0xff] %v1597
    %1856 = vst [vmem:[#allocation2 + $0x2a8] sm:$0xff] %v1600
    %1857 = vst [vmem:[#allocation2 + $0x2b0] sm:$0xff] %v1605
    %1858 = vst [vmem:[#allocation2 + $0x2b8] sm:$0xff] %v1608
    %1859 = vst [vmem:[#allocation2 + $0x2c0] sm:$0xff] %v1613
    %1860 = vst [vmem:[#allocation2 + $0x2c8] sm:$0xff] %v1616
    %1861 = vst [vmem:[#allocation2 + $0x2d0] sm:$0xff] %v1621
    %1862 = vst [vmem:[#allocation2 + $0x2d8] sm:$0xff] %v1624
    %1863 = vst [vmem:[#allocation2 + $0x2e0] sm:$0xff] %v1629
    %1864 = vst [vmem:[#allocation2 + $0x2e8] sm:$0xff] %v1632
    %1865 = vst [vmem:[#allocation2 + $0x2f0] sm:$0xff] %v1637
    %1866 = vst [vmem:[#allocation2 + $0x2f8] sm:$0xff] %v1640
    %1867 = vst [vmem:[#allocation2 + $0x300] sm:$0xff] %v1645
    %1868 = vst [vmem:[#allocation2 + $0x308] sm:$0xff] %v1648
    %1869 = vst [vmem:[#allocation2 + $0x310] sm:$0xff] %v1653
    %1870 = vst [vmem:[#allocation2 + $0x318] sm:$0xff] %v1656
    %1871 = vst [vmem:[#allocation2 + $0x320] sm:$0xff] %v1661
    %1872 = vst [vmem:[#allocation2 + $0x328] sm:$0xff] %v1664
    %1873 = vst [vmem:[#allocation2 + $0x330] sm:$0xff] %v1669
    %1874 = vst [vmem:[#allocation2 + $0x338] sm:$0xff] %v1672
    %1875 = vst [vmem:[#allocation2 + $0x340] sm:$0xff] %v1677
    %1876 = vst [vmem:[#allocation2 + $0x348] sm:$0xff] %v1680
    %1877 = vst [vmem:[#allocation2 + $0x350] sm:$0xff] %v1685
    %1878 = vst [vmem:[#allocation2 + $0x358] sm:$0xff] %v1688
    %1879 = vst [vmem:[#allocation2 + $0x360] sm:$0xff] %v1693
    %1880 = vst [vmem:[#allocation2 + $0x368] sm:$0xff] %v1696
    %1881 = vst [vmem:[#allocation2 + $0x370] sm:$0xff] %v1701
    %1882 = vst [vmem:[#allocation2 + $0x378] sm:$0xff] %v1704
    %1883 = vst [vmem:[#allocation2 + $0x380] sm:$0xff] %v1709
    %1884 = vst [vmem:[#allocation2 + $0x388] sm:$0xff] %v1712
    %1885 = vst [vmem:[#allocation2 + $0x390] sm:$0xff] %v1717
    %1886 = vst [vmem:[#allocation2 + $0x398] sm:$0xff] %v1720
    %1887 = vst [vmem:[#allocation2 + $0x3a0] sm:$0xff] %v1725
    %1888 = vst [vmem:[#allocation2 + $0x3a8] sm:$0xff] %v1728
    %1889 = vst [vmem:[#allocation2 + $0x3b0] sm:$0xff] %v1733
    %1890 = vst [vmem:[#allocation2 + $0x3b8] sm:$0xff] %v1736
    %1891 = vst [vmem:[#allocation2 + $0x3c0] sm:$0xff] %v1741
    %1892 = vst [vmem:[#allocation2 + $0x3c8] sm:$0xff] %v1744
    %1893 = vst [vmem:[#allocation2 + $0x3d0] sm:$0xff] %v1749
    %1894 = vst [vmem:[#allocation2 + $0x3d8] sm:$0xff] %v1752
    %1895 = vst [vmem:[#allocation2 + $0x3e0] sm:$0xff] %v1757
    %1896 = vst [vmem:[#allocation2 + $0x3e8] sm:$0xff] %v1760
    %1897 = vst [vmem:[#allocation2 + $0x3f0] sm:$0xff] %v1765
    %1898 = vst [vmem:[#allocation2 + $0x3f8] sm:$0xff] %v1768
    %v1899 = vlaneseq
    %v1900 = vand.u32 %v1899, 127
    %v1901 = vadd.s32 %v1900, 128
    %v1902 = vadd.s32 %v1900, 256
    %v1903 = vadd.s32 %v1900, 384
    %v1904 = vadd.s32 %v1900, 512
    %v1905 = vadd.s32 %v1900, 640
    %v1906 = vadd.s32 %v1900, 768
    %v1907 = vadd.s32 %v1900, 896
    %v1908 = vlaneseq
    %v1909 = vshrl.u32 %v1908, 7
    %v1910 = vmul.u32 %v1909, 128
    %vm1911 = vcmp.ge.s32.totalorder %v1900, %v1910
    %vm1912 = vcmp.ge.s32.totalorder %v1901, %v1910
    %vm1913 = vcmp.ge.s32.totalorder %v1902, %v1910
    %vm1914 = vcmp.ge.s32.totalorder %v1903, %v1910
    %vm1915 = vcmp.ge.s32.totalorder %v1904, %v1910
    %vm1916 = vcmp.ge.s32.totalorder %v1905, %v1910
    %vm1917 = vcmp.ge.s32.totalorder %v1906, %v1910
    %vm1918 = vcmp.ge.s32.totalorder %v1907, %v1910
    %v1919 = vadd.s32 %v1910, 128
    %vm1920 = vcmp.lt.s32.totalorder %v1900, %v1919
    %vm1921 = vcmp.lt.s32.totalorder %v1901, %v1919
    %vm1922 = vcmp.lt.s32.totalorder %v1902, %v1919
    %vm1923 = vcmp.lt.s32.totalorder %v1903, %v1919
    %vm1924 = vcmp.lt.s32.totalorder %v1904, %v1919
    %vm1925 = vcmp.lt.s32.totalorder %v1905, %v1919
    %vm1926 = vcmp.lt.s32.totalorder %v1906, %v1919
    %vm1927 = vcmp.lt.s32.totalorder %v1907, %v1919
    %vm1928 = vmand %vm1911, %vm1920
    %vm1929 = vmand %vm1912, %vm1921
    %vm1930 = vmand %vm1913, %vm1922
    %vm1931 = vmand %vm1914, %vm1923
    %vm1932 = vmand %vm1915, %vm1924
    %vm1933 = vmand %vm1916, %vm1925
    %vm1934 = vmand %vm1917, %vm1926
    %vm1935 = vmand %vm1918, %vm1927
    %v1936 = vsel %vm1928, 1, 0
    %v1937 = vsel %vm1929, 1, 0
    %v1938 = vsel %vm1930, 1, 0
    %v1939 = vsel %vm1931, 1, 0
    %v1940 = vsel %vm1932, 1, 0
    %v1941 = vsel %vm1933, 1, 0
    %v1942 = vsel %vm1934, 1, 0
    %v1943 = vsel %vm1935, 1, 0
    %v1944 = vcvt.s32.f32 %v1936
    %v1945 = vcvt.s32.f32 %v1937
    %v1946 = vcvt.s32.f32 %v1938
    %v1947 = vcvt.s32.f32 %v1939
    %v1948 = vcvt.s32.f32 %v1940
    %v1949 = vcvt.s32.f32 %v1941
    %v1950 = vcvt.s32.f32 %v1942
    %v1951 = vcvt.s32.f32 %v1943
    %1952 = vst [vmem:[#allocation3] sm:$0xff] %v1944
    %1953 = vst [vmem:[#allocation3 + $0x8] sm:$0xff] %v1945
    %1954 = vst [vmem:[#allocation3 + $0x10] sm:$0xff] %v1946
    %1955 = vst [vmem:[#allocation3 + $0x18] sm:$0xff] %v1947
    %1956 = vst [vmem:[#allocation3 + $0x20] sm:$0xff] %v1948
    %1957 = vst [vmem:[#allocation3 + $0x28] sm:$0xff] %v1949
    %1958 = vst [vmem:[#allocation3 + $0x30] sm:$0xff] %v1950
    %1959 = vst [vmem:[#allocation3 + $0x38] sm:$0xff] %v1951
    loop: start=0, step=1, limit=7
    $region86: #{tpu_custom_call.1} parent=1 // loop_pre_header
      _
    $region87: #{tpu_custom_call.1} parent=1 // loop_header
      %s1961 = sphi 0, %s1965
      %p1962 = scmp.ge.s32.totalorder %s1961, 7
      %v1966 = vphi %v765, %v8313
      %v1967 = vphi %v767, %v8311
    $region88: #{tpu_custom_call.1} parent=1 // loop_header_branch
      %1964 = sbr.rel (%p1962) target = $region92
    $region89: #{tpu_custom_call.1} parent=1 // loop_body
      %v1968 = vpack.c.bf16 %v1966, %v1966
      %v1969 = vld [vmem:[#allocation13] sm:$0xff]
      %v1970 = vld [vmem:[#allocation13 + $0x8] sm:$0xff]
      %v1971 = vld [vmem:[#allocation13 + $0x10] sm:$0xff]
      %v1972 = vld [vmem:[#allocation13 + $0x18] sm:$0xff]
      %v1973 = vld [vmem:[#allocation13 + $0x20] sm:$0xff]
      %v1974 = vld [vmem:[#allocation13 + $0x28] sm:$0xff]
      %v1975 = vld [vmem:[#allocation13 + $0x30] sm:$0xff]
      %v1976 = vld [vmem:[#allocation13 + $0x38] sm:$0xff]
      %v1977 = vld [vmem:[#allocation13 + $0x40] sm:$0xff]
      %v1978 = vld [vmem:[#allocation13 + $0x48] sm:$0xff]
      %v1979 = vld [vmem:[#allocation13 + $0x50] sm:$0xff]
      %v1980 = vld [vmem:[#allocation13 + $0x58] sm:$0xff]
      %v1981 = vld [vmem:[#allocation13 + $0x60] sm:$0xff]
      %v1982 = vld [vmem:[#allocation13 + $0x68] sm:$0xff]
      %v1983 = vld [vmem:[#allocation13 + $0x70] sm:$0xff]
      %v1984 = vld [vmem:[#allocation13 + $0x78] sm:$0xff]
      %v1985 = vld [vmem:[#allocation13 + $0x80] sm:$0xff]
      %v1986 = vld [vmem:[#allocation13 + $0x88] sm:$0xff]
      %v1987 = vld [vmem:[#allocation13 + $0x90] sm:$0xff]
      %v1988 = vld [vmem:[#allocation13 + $0x98] sm:$0xff]
      %v1989 = vld [vmem:[#allocation13 + $0xa0] sm:$0xff]
      %v1990 = vld [vmem:[#allocation13 + $0xa8] sm:$0xff]
      %v1991 = vld [vmem:[#allocation13 + $0xb0] sm:$0xff]
      %v1992 = vld [vmem:[#allocation13 + $0xb8] sm:$0xff]
      %v1993 = vld [vmem:[#allocation13 + $0xc0] sm:$0xff]
      %v1994 = vld [vmem:[#allocation13 + $0xc8] sm:$0xff]
      %v1995 = vld [vmem:[#allocation13 + $0xd0] sm:$0xff]
      %v1996 = vld [vmem:[#allocation13 + $0xd8] sm:$0xff]
      %v1997 = vld [vmem:[#allocation13 + $0xe0] sm:$0xff]
      %v1998 = vld [vmem:[#allocation13 + $0xe8] sm:$0xff]
      %v1999 = vld [vmem:[#allocation13 + $0xf0] sm:$0xff]
      %v2000 = vld [vmem:[#allocation13 + $0xf8] sm:$0xff]
      %v2001 = vld [vmem:[#allocation13 + $0x100] sm:$0xff]
      %v2002 = vld [vmem:[#allocation13 + $0x108] sm:$0xff]
      %v2003 = vld [vmem:[#allocation13 + $0x110] sm:$0xff]
      %v2004 = vld [vmem:[#allocation13 + $0x118] sm:$0xff]
      %v2005 = vld [vmem:[#allocation13 + $0x120] sm:$0xff]
      %v2006 = vld [vmem:[#allocation13 + $0x128] sm:$0xff]
      %v2007 = vld [vmem:[#allocation13 + $0x130] sm:$0xff]
      %v2008 = vld [vmem:[#allocation13 + $0x138] sm:$0xff]
      %v2009 = vld [vmem:[#allocation13 + $0x140] sm:$0xff]
      %v2010 = vld [vmem:[#allocation13 + $0x148] sm:$0xff]
      %v2011 = vld [vmem:[#allocation13 + $0x150] sm:$0xff]
      %v2012 = vld [vmem:[#allocation13 + $0x158] sm:$0xff]
      %v2013 = vld [vmem:[#allocation13 + $0x160] sm:$0xff]
      %v2014 = vld [vmem:[#allocation13 + $0x168] sm:$0xff]
      %v2015 = vld [vmem:[#allocation13 + $0x170] sm:$0xff]
      %v2016 = vld [vmem:[#allocation13 + $0x178] sm:$0xff]
      %v2017 = vld [vmem:[%s10] sm:$0x3f]
      %v2019 = vlaneseq
      %v2020 = vshrl.u32 %v2019, 7
      %v2021 = vsub.s32 0, %v2020
      %v2022 = vrot.slane %v2017, %v2021
      %v2023 = vlaneseq
      %v2024 = vshrl.u32 %v2023, 7
      %v2025 = vsub.s32 1, %v2024
      %v2026 = vrot.slane %v2017, %v2025
      %v2027 = vlaneseq
      %v2028 = vshrl.u32 %v2027, 7
      %v2029 = vsub.s32 2, %v2028
      %v2030 = vrot.slane %v2017, %v2029
      %v2031 = vlaneseq
      %v2032 = vshrl.u32 %v2031, 7
      %v2033 = vsub.s32 3, %v2032
      %v2034 = vrot.slane %v2017, %v2033
      %v2035 = vlaneseq
      %v2036 = vshrl.u32 %v2035, 7
      %v2037 = vsub.s32 4, %v2036
      %v2038 = vrot.slane %v2017, %v2037
      %v2039 = vlaneseq
      %v2040 = vshrl.u32 %v2039, 7
      %v2041 = vsub.s32 5, %v2040
      %v2042 = vrot.slane %v2017, %v2041
      %v2097 = vunpack.c.l.b16 %v1969
      %v2098 = vunpack.c.h.b16 %v1969
      %v2099 = vunpack.c.l.b16 %v1970
      %v2100 = vunpack.c.h.b16 %v1970
      %v2101 = vunpack.c.l.b16 %v1971
      %v2102 = vunpack.c.h.b16 %v1971
      %v2103 = vunpack.c.l.b16 %v1972
      %v2104 = vunpack.c.h.b16 %v1972
      %v2105 = vunpack.c.l.b16 %v1973
      %v2106 = vunpack.c.h.b16 %v1973
      %v2107 = vunpack.c.l.b16 %v1974
      %v2108 = vunpack.c.h.b16 %v1974
      %v2109 = vunpack.c.l.b16 %v1975
      %v2110 = vunpack.c.h.b16 %v1975
      %v2111 = vunpack.c.l.b16 %v1976
      %v2112 = vunpack.c.h.b16 %v1976
      %v2113 = vunpack.c.l.b16 %v1977
      %v2114 = vunpack.c.h.b16 %v1977
      %v2115 = vunpack.c.l.b16 %v1978
      %v2116 = vunpack.c.h.b16 %v1978
      %v2117 = vunpack.c.l.b16 %v1979
      %v2118 = vunpack.c.h.b16 %v1979
      %v2119 = vunpack.c.l.b16 %v1980
      %v2120 = vunpack.c.h.b16 %v1980
      %v2121 = vunpack.c.l.b16 %v1981
      %v2122 = vunpack.c.h.b16 %v1981
      %v2123 = vunpack.c.l.b16 %v1982
      %v2124 = vunpack.c.h.b16 %v1982
      %v2125 = vunpack.c.l.b16 %v1983
      %v2126 = vunpack.c.h.b16 %v1983
      %v2127 = vunpack.c.l.b16 %v1984
      %v2128 = vunpack.c.h.b16 %v1984
      %v2129 = vunpack.c.l.b16 %v1985
      %v2130 = vunpack.c.h.b16 %v1985
      %v2131 = vunpack.c.l.b16 %v1986
      %v2132 = vunpack.c.h.b16 %v1986
      %v2133 = vunpack.c.l.b16 %v1987
      %v2134 = vunpack.c.h.b16 %v1987
      %v2135 = vunpack.c.l.b16 %v1988
      %v2136 = vunpack.c.h.b16 %v1988
      %v2137 = vunpack.c.l.b16 %v1989
      %v2138 = vunpack.c.h.b16 %v1989
      %v2139 = vunpack.c.l.b16 %v1990
      %v2140 = vunpack.c.h.b16 %v1990
      %v2141 = vunpack.c.l.b16 %v1991
      %v2142 = vunpack.c.h.b16 %v1991
      %v2143 = vunpack.c.l.b16 %v1992
      %v2144 = vunpack.c.h.b16 %v1992
      %v2145 = vunpack.c.l.b16 %v1993
      %v2146 = vunpack.c.h.b16 %v1993
      %v2147 = vunpack.c.l.b16 %v1994
      %v2148 = vunpack.c.h.b16 %v1994
      %v2149 = vunpack.c.l.b16 %v1995
      %v2150 = vunpack.c.h.b16 %v1995
      %v2151 = vunpack.c.l.b16 %v1996
      %v2152 = vunpack.c.h.b16 %v1996
      %v2153 = vunpack.c.l.b16 %v1997
      %v2154 = vunpack.c.h.b16 %v1997
      %v2155 = vunpack.c.l.b16 %v1998
      %v2156 = vunpack.c.h.b16 %v1998
      %v2157 = vunpack.c.l.b16 %v1999
      %v2158 = vunpack.c.h.b16 %v1999
      %v2159 = vunpack.c.l.b16 %v2000
      %v2160 = vunpack.c.h.b16 %v2000
      %v2161 = vunpack.c.l.b16 %v2001
      %v2162 = vunpack.c.h.b16 %v2001
      %v2163 = vunpack.c.l.b16 %v2002
      %v2164 = vunpack.c.h.b16 %v2002
      %v2165 = vunpack.c.l.b16 %v2003
      %v2166 = vunpack.c.h.b16 %v2003
      %v2167 = vunpack.c.l.b16 %v2004
      %v2168 = vunpack.c.h.b16 %v2004
      %v2169 = vunpack.c.l.b16 %v2005
      %v2170 = vunpack.c.h.b16 %v2005
      %v2171 = vunpack.c.l.b16 %v2006
      %v2172 = vunpack.c.h.b16 %v2006
      %v2173 = vunpack.c.l.b16 %v2007
      %v2174 = vunpack.c.h.b16 %v2007
      %v2175 = vunpack.c.l.b16 %v2008
      %v2176 = vunpack.c.h.b16 %v2008
      %v2177 = vunpack.c.l.b16 %v2009
      %v2178 = vunpack.c.h.b16 %v2009
      %v2179 = vunpack.c.l.b16 %v2010
      %v2180 = vunpack.c.h.b16 %v2010
      %v2181 = vunpack.c.l.b16 %v2011
      %v2182 = vunpack.c.h.b16 %v2011
      %v2183 = vunpack.c.l.b16 %v2012
      %v2184 = vunpack.c.h.b16 %v2012
      %v2185 = vunpack.c.l.b16 %v2013
      %v2186 = vunpack.c.h.b16 %v2013
      %v2187 = vunpack.c.l.b16 %v2014
      %v2188 = vunpack.c.h.b16 %v2014
      %v2189 = vunpack.c.l.b16 %v2015
      %v2190 = vunpack.c.h.b16 %v2015
      %v2191 = vunpack.c.l.b16 %v2016
      %v2192 = vunpack.c.h.b16 %v2016
      %v2193 = vpack.c.b16 %v2103, %v2097
      %v2194 = vpack.c.b16 %v2104, %v2098
      %v2195 = vpack.c.b16 %v2105, %v2099
      %v2196 = vpack.c.b16 %v2106, %v2100
      %v2197 = vpack.c.b16 %v2107, %v2101
      %v2198 = vpack.c.b16 %v2108, %v2102
      %v2199 = vpack.c.b16 %v2115, %v2109
      %v2200 = vpack.c.b16 %v2116, %v2110
      %v2201 = vpack.c.b16 %v2117, %v2111
      %v2202 = vpack.c.b16 %v2118, %v2112
      %v2203 = vpack.c.b16 %v2119, %v2113
      %v2204 = vpack.c.b16 %v2120, %v2114
      %v2205 = vpack.c.b16 %v2127, %v2121
      %v2206 = vpack.c.b16 %v2128, %v2122
      %v2207 = vpack.c.b16 %v2129, %v2123
      %v2208 = vpack.c.b16 %v2130, %v2124
      %v2209 = vpack.c.b16 %v2131, %v2125
      %v2210 = vpack.c.b16 %v2132, %v2126
      %v2211 = vpack.c.b16 %v2139, %v2133
      %v2212 = vpack.c.b16 %v2140, %v2134
      %v2213 = vpack.c.b16 %v2141, %v2135
      %v2214 = vpack.c.b16 %v2142, %v2136
      %v2215 = vpack.c.b16 %v2143, %v2137
      %v2216 = vpack.c.b16 %v2144, %v2138
      %v2217 = vpack.c.b16 %v2151, %v2145
      %v2218 = vpack.c.b16 %v2152, %v2146
      %v2219 = vpack.c.b16 %v2153, %v2147
      %v2220 = vpack.c.b16 %v2154, %v2148
      %v2221 = vpack.c.b16 %v2155, %v2149
      %v2222 = vpack.c.b16 %v2156, %v2150
      %v2223 = vpack.c.b16 %v2163, %v2157
      %v2224 = vpack.c.b16 %v2164, %v2158
      %v2225 = vpack.c.b16 %v2165, %v2159
      %v2226 = vpack.c.b16 %v2166, %v2160
      %v2227 = vpack.c.b16 %v2167, %v2161
      %v2228 = vpack.c.b16 %v2168, %v2162
      %v2229 = vpack.c.b16 %v2175, %v2169
      %v2230 = vpack.c.b16 %v2176, %v2170
      %v2231 = vpack.c.b16 %v2177, %v2171
      %v2232 = vpack.c.b16 %v2178, %v2172
      %v2233 = vpack.c.b16 %v2179, %v2173
      %v2234 = vpack.c.b16 %v2180, %v2174
      %v2235 = vpack.c.b16 %v2187, %v2181
      %v2236 = vpack.c.b16 %v2188, %v2182
      %v2237 = vpack.c.b16 %v2189, %v2183
      %v2238 = vpack.c.b16 %v2190, %v2184
      %v2239 = vpack.c.b16 %v2191, %v2185
      %v2240 = vpack.c.b16 %v2192, %v2186
      %2289 = vmatprep.subr.bf16.mxu0 %v2194
      %2290 = vmatpush1.bf16.msra.mxu0 %v2193
      %2291 = vmatprep.subr.bf16.mxu0 %v2200
      %2292 = vmatpush1.bf16.msra.mxu0 %v2199
      %2293 = vmatprep.subr.bf16.mxu0 %v2206
      %2294 = vmatpush1.bf16.msra.mxu0 %v2205
      %2295 = vmatprep.subr.bf16.mxu0 %v2212
      %2296 = vmatpush1.bf16.msra.mxu0 %v2211
      %2297 = vmatprep.subr.bf16.mxu0 %v2218
      %2298 = vmatpush1.bf16.msra.mxu0 %v2217
      %2299 = vmatprep.subr.bf16.mxu0 %v2224
      %2300 = vmatpush1.bf16.msra.mxu0 %v2223
      %2301 = vmatprep.subr.bf16.mxu0 %v2230
      %2302 = vmatpush1.bf16.msra.mxu0 %v2229
      %2303 = vmatprep.subr.bf16.mxu0 %v2236
      %2304 = vmatpush1.bf16.msra.mxu0 %v2235
      %2305 = vmatprep.subr.bf16.mxu0 0
      %2306 = vmatpush1.bf16.msra.mxu0 0
      %2307 = vmatprep.subr.bf16.mxu0 0
      %2308 = vmatpush1.bf16.msra.mxu0 0
      %2309 = vmatprep.subr.bf16.mxu0 0
      %2310 = vmatpush1.bf16.msra.mxu0 0
      %2311 = vmatprep.subr.bf16.mxu0 0
      %2312 = vmatpush1.bf16.msra.mxu0 0
      %2313 = vmatprep.subr.bf16.mxu0 0
      %2314 = vmatpush1.bf16.msra.mxu0 0
      %2315 = vmatprep.subr.bf16.mxu0 0
      %2316 = vmatpush1.bf16.msra.mxu0 0
      %2317 = vmatprep.subr.bf16.mxu0 0
      %2318 = vmatpush1.bf16.msra.mxu0 0
      %2319 = vmatprep.subr.bf16.mxu0 0
      %2320 = vmatpush1.bf16.msra.mxu0 0
      %2321 = vmatprep.mubr.bf16.mxu0 0
      %2322 = vmatmul.mubr.bf16.gmra.mrb[0].mxu0 %v1968
      %v2323 = vpop.f32.mrb[0].mxu0
      %v2324 = vadd.f32 %v2022, %v2323
      %v2325 = vpop.f32.mrb[0].mxu0
      %v2326 = vadd.f32 %v2026, %v2325
      %v2327 = vpop.f32.mrb[0].mxu0
      %v2328 = vpop.f32.mrb[0].mxu0
      %2329 = vdwg.mxu0
      %2330 = vmatprep.subr.bf16.mxu0 %v2196
      %2331 = vmatpush1.bf16.msra.mxu0 %v2195
      %2332 = vmatprep.subr.bf16.mxu0 %v2202
      %2333 = vmatpush1.bf16.msra.mxu0 %v2201
      %2334 = vmatprep.subr.bf16.mxu0 %v2208
      %2335 = vmatpush1.bf16.msra.mxu0 %v2207
      %2336 = vmatprep.subr.bf16.mxu0 %v2214
      %2337 = vmatpush1.bf16.msra.mxu0 %v2213
      %2338 = vmatprep.subr.bf16.mxu0 %v2220
      %2339 = vmatpush1.bf16.msra.mxu0 %v2219
      %2340 = vmatprep.subr.bf16.mxu0 %v2226
      %2341 = vmatpush1.bf16.msra.mxu0 %v2225
      %2342 = vmatprep.subr.bf16.mxu0 %v2232
      %2343 = vmatpush1.bf16.msra.mxu0 %v2231
      %2344 = vmatprep.subr.bf16.mxu0 %v2238
      %2345 = vmatpush1.bf16.msra.mxu0 %v2237
      %2346 = vmatprep.subr.bf16.mxu0 0
      %2347 = vmatpush1.bf16.msra.mxu0 0
      %2348 = vmatprep.subr.bf16.mxu0 0
      %2349 = vmatpush1.bf16.msra.mxu0 0
      %2350 = vmatprep.subr.bf16.mxu0 0
      %2351 = vmatpush1.bf16.msra.mxu0 0
      %2352 = vmatprep.subr.bf16.mxu0 0
      %2353 = vmatpush1.bf16.msra.mxu0 0
      %2354 = vmatprep.subr.bf16.mxu0 0
      %2355 = vmatpush1.bf16.msra.mxu0 0
      %2356 = vmatprep.subr.bf16.mxu0 0
      %2357 = vmatpush1.bf16.msra.mxu0 0
      %2358 = vmatprep.subr.bf16.mxu0 0
      %2359 = vmatpush1.bf16.msra.mxu0 0
      %2360 = vmatprep.subr.bf16.mxu0 0
      %2361 = vmatpush1.bf16.msra.mxu0 0
      %2362 = vmatprep.mubr.bf16.mxu0 0
      %2363 = vmatmul.mubr.bf16.gmra.mrb[0].mxu0 %v1968
      %v2364 = vpop.f32.mrb[0].mxu0
      %v2365 = vadd.f32 %v2030, %v2364
      %v2366 = vpop.f32.mrb[0].mxu0
      %v2367 = vadd.f32 %v2034, %v2366
      %v2368 = vpop.f32.mrb[0].mxu0
      %v2369 = vpop.f32.mrb[0].mxu0
      %2370 = vdwg.mxu0
      %2371 = vmatprep.subr.bf16.mxu0 %v2198
      %2372 = vmatpush1.bf16.msra.mxu0 %v2197
      %2373 = vmatprep.subr.bf16.mxu0 %v2204
      %2374 = vmatpush1.bf16.msra.mxu0 %v2203
      %2375 = vmatprep.subr.bf16.mxu0 %v2210
      %2376 = vmatpush1.bf16.msra.mxu0 %v2209
      %2377 = vmatprep.subr.bf16.mxu0 %v2216
      %2378 = vmatpush1.bf16.msra.mxu0 %v2215
      %2379 = vmatprep.subr.bf16.mxu0 %v2222
      %2380 = vmatpush1.bf16.msra.mxu0 %v2221
      %2381 = vmatprep.subr.bf16.mxu0 %v2228
      %2382 = vmatpush1.bf16.msra.mxu0 %v2227
      %2383 = vmatprep.subr.bf16.mxu0 %v2234
      %2384 = vmatpush1.bf16.msra.mxu0 %v2233
      %2385 = vmatprep.subr.bf16.mxu0 %v2240
      %2386 = vmatpush1.bf16.msra.mxu0 %v2239
      %2387 = vmatprep.subr.bf16.mxu0 0
      %2388 = vmatpush1.bf16.msra.mxu0 0
      %2389 = vmatprep.subr.bf16.mxu0 0
      %2390 = vmatpush1.bf16.msra.mxu0 0
      %2391 = vmatprep.subr.bf16.mxu0 0
      %2392 = vmatpush1.bf16.msra.mxu0 0
      %2393 = vmatprep.subr.bf16.mxu0 0
      %2394 = vmatpush1.bf16.msra.mxu0 0
      %2395 = vmatprep.subr.bf16.mxu0 0
      %2396 = vmatpush1.bf16.msra.mxu0 0
      %2397 = vmatprep.subr.bf16.mxu0 0
      %2398 = vmatpush1.bf16.msra.mxu0 0
      %2399 = vmatprep.subr.bf16.mxu0 0
      %2400 = vmatpush1.bf16.msra.mxu0 0
      %2401 = vmatprep.subr.bf16.mxu0 0
      %2402 = vmatpush1.bf16.msra.mxu0 0
      %2403 = vmatprep.mubr.bf16.mxu0 0
      %2404 = vmatmul.mubr.bf16.gmra.mrb[0].mxu0 %v1968
      %v2405 = vpop.f32.mrb[0].mxu0
      %v2406 = vadd.f32 %v2038, %v2405
      %v2407 = vpop.f32.mrb[0].mxu0
      %v2408 = vadd.f32 %v2042, %v2407
      %v2409 = vpop.f32.mrb[0].mxu0
      %v2410 = vpop.f32.mrb[0].mxu0
      %2411 = vdwg.mxu0
      %v2412 = vld [vmem:[#allocation2] sm:$0xff]
      %v2413 = vld [vmem:[#allocation2 + $0x8] sm:$0xff]
      %v2414 = vld [vmem:[#allocation2 + $0x10] sm:$0xff]
      %v2415 = vld [vmem:[#allocation2 + $0x18] sm:$0xff]
      %v2416 = vld [vmem:[#allocation2 + $0x20] sm:$0xff]
      %v2417 = vld [vmem:[#allocation2 + $0x28] sm:$0xff]
      %v2418 = vld [vmem:[#allocation2 + $0x30] sm:$0xff]
      %v2419 = vld [vmem:[#allocation2 + $0x38] sm:$0xff]
      %v2420 = vld [vmem:[#allocation2 + $0x40] sm:$0xff]
      %v2421 = vld [vmem:[#allocation2 + $0x48] sm:$0xff]
      %v2422 = vld [vmem:[#allocation2 + $0x50] sm:$0xff]
      %v2423 = vld [vmem:[#allocation2 + $0x58] sm:$0xff]
      %v2424 = vld [vmem:[#allocation2 + $0x60] sm:$0xff]
      %v2425 = vld [vmem:[#allocation2 + $0x68] sm:$0xff]
      %v2426 = vld [vmem:[#allocation2 + $0x70] sm:$0xff]
      %v2427 = vld [vmem:[#allocation2 + $0x78] sm:$0xff]
      %v2428 = vld [vmem:[#allocation2 + $0x80] sm:$0xff]
      %v2429 = vld [vmem:[#allocation2 + $0x88] sm:$0xff]
      %v2430 = vld [vmem:[#allocation2 + $0x90] sm:$0xff]
      %v2431 = vld [vmem:[#allocation2 + $0x98] sm:$0xff]
      %v2432 = vld [vmem:[#allocation2 + $0xa0] sm:$0xff]
      %v2433 = vld [vmem:[#allocation2 + $0xa8] sm:$0xff]
      %v2434 = vld [vmem:[#allocation2 + $0xb0] sm:$0xff]
      %v2435 = vld [vmem:[#allocation2 + $0xb8] sm:$0xff]
      %v2436 = vld [vmem:[#allocation2 + $0xc0] sm:$0xff]
      %v2437 = vld [vmem:[#allocation2 + $0xc8] sm:$0xff]
      %v2438 = vld [vmem:[#allocation2 + $0xd0] sm:$0xff]
      %v2439 = vld [vmem:[#allocation2 + $0xd8] sm:$0xff]
      %v2440 = vld [vmem:[#allocation2 + $0xe0] sm:$0xff]
      %v2441 = vld [vmem:[#allocation2 + $0xe8] sm:$0xff]
      %v2442 = vld [vmem:[#allocation2 + $0xf0] sm:$0xff]
      %v2443 = vld [vmem:[#allocation2 + $0xf8] sm:$0xff]
      %v2444 = vld [vmem:[#allocation2 + $0x100] sm:$0xff]
      %v2445 = vld [vmem:[#allocation2 + $0x108] sm:$0xff]
      %v2446 = vld [vmem:[#allocation2 + $0x110] sm:$0xff]
      %v2447 = vld [vmem:[#allocation2 + $0x118] sm:$0xff]
      %v2448 = vld [vmem:[#allocation2 + $0x120] sm:$0xff]
      %v2449 = vld [vmem:[#allocation2 + $0x128] sm:$0xff]
      %v2450 = vld [vmem:[#allocation2 + $0x130] sm:$0xff]
      %v2451 = vld [vmem:[#allocation2 + $0x138] sm:$0xff]
      %v2452 = vld [vmem:[#allocation2 + $0x140] sm:$0xff]
      %v2453 = vld [vmem:[#allocation2 + $0x148] sm:$0xff]
      %v2454 = vld [vmem:[#allocation2 + $0x150] sm:$0xff]
      %v2455 = vld [vmem:[#allocation2 + $0x158] sm:$0xff]
      %v2456 = vld [vmem:[#allocation2 + $0x160] sm:$0xff]
      %v2457 = vld [vmem:[#allocation2 + $0x168] sm:$0xff]
      %v2458 = vld [vmem:[#allocation2 + $0x170] sm:$0xff]
      %v2459 = vld [vmem:[#allocation2 + $0x178] sm:$0xff]
      %v2460 = vld [vmem:[#allocation2 + $0x180] sm:$0xff]
      %v2461 = vld [vmem:[#allocation2 + $0x188] sm:$0xff]
      %v2462 = vld [vmem:[#allocation2 + $0x190] sm:$0xff]
      %v2463 = vld [vmem:[#allocation2 + $0x198] sm:$0xff]
      %v2464 = vld [vmem:[#allocation2 + $0x1a0] sm:$0xff]
      %v2465 = vld [vmem:[#allocation2 + $0x1a8] sm:$0xff]
      %v2466 = vld [vmem:[#allocation2 + $0x1b0] sm:$0xff]
      %v2467 = vld [vmem:[#allocation2 + $0x1b8] sm:$0xff]
      %v2468 = vld [vmem:[#allocation2 + $0x1c0] sm:$0xff]
      %v2469 = vld [vmem:[#allocation2 + $0x1c8] sm:$0xff]
      %v2470 = vld [vmem:[#allocation2 + $0x1d0] sm:$0xff]
      %v2471 = vld [vmem:[#allocation2 + $0x1d8] sm:$0xff]
      %v2472 = vld [vmem:[#allocation2 + $0x1e0] sm:$0xff]
      %v2473 = vld [vmem:[#allocation2 + $0x1e8] sm:$0xff]
      %v2474 = vld [vmem:[#allocation2 + $0x1f0] sm:$0xff]
      %v2475 = vld [vmem:[#allocation2 + $0x1f8] sm:$0xff]
      %v2476 = vld [vmem:[#allocation2 + $0x200] sm:$0xff]
      %v2477 = vld [vmem:[#allocation2 + $0x208] sm:$0xff]
      %v2478 = vld [vmem:[#allocation2 + $0x210] sm:$0xff]
      %v2479 = vld [vmem:[#allocation2 + $0x218] sm:$0xff]
      %v2480 = vld [vmem:[#allocation2 + $0x220] sm:$0xff]
      %v2481 = vld [vmem:[#allocation2 + $0x228] sm:$0xff]
      %v2482 = vld [vmem:[#allocation2 + $0x230] sm:$0xff]
      %v2483 = vld [vmem:[#allocation2 + $0x238] sm:$0xff]
      %v2484 = vld [vmem:[#allocation2 + $0x240] sm:$0xff]
      %v2485 = vld [vmem:[#allocation2 + $0x248] sm:$0xff]
      %v2486 = vld [vmem:[#allocation2 + $0x250] sm:$0xff]
      %v2487 = vld [vmem:[#allocation2 + $0x258] sm:$0xff]
      %v2488 = vld [vmem:[#allocation2 + $0x260] sm:$0xff]
      %v2489 = vld [vmem:[#allocation2 + $0x268] sm:$0xff]
      %v2490 = vld [vmem:[#allocation2 + $0x270] sm:$0xff]
      %v2491 = vld [vmem:[#allocation2 + $0x278] sm:$0xff]
      %v2492 = vld [vmem:[#allocation2 + $0x280] sm:$0xff]
      %v2493 = vld [vmem:[#allocation2 + $0x288] sm:$0xff]
      %v2494 = vld [vmem:[#allocation2 + $0x290] sm:$0xff]
      %v2495 = vld [vmem:[#allocation2 + $0x298] sm:$0xff]
      %v2496 = vld [vmem:[#allocation2 + $0x2a0] sm:$0xff]
      %v2497 = vld [vmem:[#allocation2 + $0x2a8] sm:$0xff]
      %v2498 = vld [vmem:[#allocation2 + $0x2b0] sm:$0xff]
      %v2499 = vld [vmem:[#allocation2 + $0x2b8] sm:$0xff]
      %v2500 = vld [vmem:[#allocation2 + $0x2c0] sm:$0xff]
      %v2501 = vld [vmem:[#allocation2 + $0x2c8] sm:$0xff]
      %v2502 = vld [vmem:[#allocation2 + $0x2d0] sm:$0xff]
      %v2503 = vld [vmem:[#allocation2 + $0x2d8] sm:$0xff]
      %v2504 = vld [vmem:[#allocation2 + $0x2e0] sm:$0xff]
      %v2505 = vld [vmem:[#allocation2 + $0x2e8] sm:$0xff]
      %v2506 = vld [vmem:[#allocation2 + $0x2f0] sm:$0xff]
      %v2507 = vld [vmem:[#allocation2 + $0x2f8] sm:$0xff]
      %v2508 = vld [vmem:[#allocation2 + $0x300] sm:$0xff]
      %v2509 = vld [vmem:[#allocation2 + $0x308] sm:$0xff]
      %v2510 = vld [vmem:[#allocation2 + $0x310] sm:$0xff]
      %v2511 = vld [vmem:[#allocation2 + $0x318] sm:$0xff]
      %v2512 = vld [vmem:[#allocation2 + $0x320] sm:$0xff]
      %v2513 = vld [vmem:[#allocation2 + $0x328] sm:$0xff]
      %v2514 = vld [vmem:[#allocation2 + $0x330] sm:$0xff]
      %v2515 = vld [vmem:[#allocation2 + $0x338] sm:$0xff]
      %v2516 = vld [vmem:[#allocation2 + $0x340] sm:$0xff]
      %v2517 = vld [vmem:[#allocation2 + $0x348] sm:$0xff]
      %v2518 = vld [vmem:[#allocation2 + $0x350] sm:$0xff]
      %v2519 = vld [vmem:[#allocation2 + $0x358] sm:$0xff]
      %v2520 = vld [vmem:[#allocation2 + $0x360] sm:$0xff]
      %v2521 = vld [vmem:[#allocation2 + $0x368] sm:$0xff]
      %v2522 = vld [vmem:[#allocation2 + $0x370] sm:$0xff]
      %v2523 = vld [vmem:[#allocation2 + $0x378] sm:$0xff]
      %v2524 = vld [vmem:[#allocation2 + $0x380] sm:$0xff]
      %v2525 = vld [vmem:[#allocation2 + $0x388] sm:$0xff]
      %v2526 = vld [vmem:[#allocation2 + $0x390] sm:$0xff]
      %v2527 = vld [vmem:[#allocation2 + $0x398] sm:$0xff]
      %v2528 = vld [vmem:[#allocation2 + $0x3a0] sm:$0xff]
      %v2529 = vld [vmem:[#allocation2 + $0x3a8] sm:$0xff]
      %v2530 = vld [vmem:[#allocation2 + $0x3b0] sm:$0xff]
      %v2531 = vld [vmem:[#allocation2 + $0x3b8] sm:$0xff]
      %v2532 = vld [vmem:[#allocation2 + $0x3c0] sm:$0xff]
      %v2533 = vld [vmem:[#allocation2 + $0x3c8] sm:$0xff]
      %v2534 = vld [vmem:[#allocation2 + $0x3d0] sm:$0xff]
      %v2535 = vld [vmem:[#allocation2 + $0x3d8] sm:$0xff]
      %v2536 = vld [vmem:[#allocation2 + $0x3e0] sm:$0xff]
      %v2537 = vld [vmem:[#allocation2 + $0x3e8] sm:$0xff]
      %v2538 = vld [vmem:[#allocation2 + $0x3f0] sm:$0xff]
      %v2539 = vld [vmem:[#allocation2 + $0x3f8] sm:$0xff]
      %v2541 = vcombine.high %v2324, %v2324
      %v2543 = vunpack.c.l.s4 1966171168
      %v2544 = vunpack.c.0.s8 %v2543
      %v2545 = vlaneseq
      %v2546 = vshrl.u32 %v2545, 7
      %v2547 = vsub.s32 %v2544, %v2546
      %v2548 = vrot.slane %v2324, %v2547
      %v2550 = vunpack.c.l.s4 1966171168
      %v2551 = vunpack.c.0.s8 %v2550
      %v2552 = vlaneseq
      %v2553 = vshrl.u32 %v2552, 7
      %v2554 = vsub.s32 %v2551, %v2553
      %v2555 = vrot.slane %v2541, %v2554
      %v2556 = vcombine.high %v2548, %v2548
      %v2557 = vcombine.high %v2555, %v2555
      %v2559 = vunpack.c.l.s4 1966171168
      %v2560 = vunpack.c.0.s8 %v2559
      %v2561 = vlaneseq
      %v2562 = vshrl.u32 %v2561, 7
      %v2563 = vsub.s32 %v2560, %v2562
      %v2564 = vrot.slane %v2548, %v2563
      %v2566 = vunpack.c.l.s4 1966171168
      %v2567 = vunpack.c.0.s8 %v2566
      %v2568 = vlaneseq
      %v2569 = vshrl.u32 %v2568, 7
      %v2570 = vsub.s32 %v2567, %v2569
      %v2571 = vrot.slane %v2555, %v2570
      %v2573 = vunpack.c.l.s4 1966171168
      %v2574 = vunpack.c.0.s8 %v2573
      %v2575 = vlaneseq
      %v2576 = vshrl.u32 %v2575, 7
      %v2577 = vsub.s32 %v2574, %v2576
      %v2578 = vrot.slane %v2556, %v2577
      %v2580 = vunpack.c.l.s4 1966171168
      %v2581 = vunpack.c.0.s8 %v2580
      %v2582 = vlaneseq
      %v2583 = vshrl.u32 %v2582, 7
      %v2584 = vsub.s32 %v2581, %v2583
      %v2585 = vrot.slane %v2557, %v2584
      %v2586 = vcombine.high %v2564, %v2564
      %v2587 = vcombine.high %v2571, %v2571
      %v2588 = vcombine.high %v2578, %v2578
      %v2589 = vcombine.high %v2585, %v2585
      %v2590 = vlaneseq
      %v2591 = vshrl.u32 %v2590, 7
      %v2592 = vsub.s32 0, %v2591
      %v2593 = vrot.slane %v2564, %v2592
      %v2594 = vlaneseq
      %v2595 = vshrl.u32 %v2594, 7
      %v2596 = vsub.s32 0, %v2595
      %v2597 = vrot.slane %v2578, %v2596
      %v2598 = vlaneseq
      %v2599 = vshrl.u32 %v2598, 7
      %v2600 = vsub.s32 0, %v2599
      %v2601 = vrot.slane %v2586, %v2600
      %v2602 = vlaneseq
      %v2603 = vshrl.u32 %v2602, 7
      %v2604 = vsub.s32 0, %v2603
      %v2605 = vrot.slane %v2588, %v2604
      %v2606 = vlaneseq
      %v2607 = vshrl.u32 %v2606, 7
      %v2608 = vsub.s32 0, %v2607
      %v2609 = vrot.slane %v2571, %v2608
      %v2610 = vlaneseq
      %v2611 = vshrl.u32 %v2610, 7
      %v2612 = vsub.s32 0, %v2611
      %v2613 = vrot.slane %v2585, %v2612
      %v2614 = vlaneseq
      %v2615 = vshrl.u32 %v2614, 7
      %v2616 = vsub.s32 0, %v2615
      %v2617 = vrot.slane %v2587, %v2616
      %v2618 = vlaneseq
      %v2619 = vshrl.u32 %v2618, 7
      %v2620 = vsub.s32 0, %v2619
      %v2621 = vrot.slane %v2589, %v2620
      %v2630 = vadd.f32 %v2412, %v2593
      %v2631 = vadd.f32 %v2413, %v2593
      %v2632 = vadd.f32 %v2414, %v2593
      %v2633 = vadd.f32 %v2415, %v2593
      %v2634 = vadd.f32 %v2416, %v2593
      %v2635 = vadd.f32 %v2417, %v2593
      %v2636 = vadd.f32 %v2418, %v2593
      %v2637 = vadd.f32 %v2419, %v2593
      %v2638 = vadd.f32 %v2420, %v2593
      %v2639 = vadd.f32 %v2421, %v2593
      %v2640 = vadd.f32 %v2422, %v2593
      %v2641 = vadd.f32 %v2423, %v2593
      %v2642 = vadd.f32 %v2424, %v2593
      %v2643 = vadd.f32 %v2425, %v2593
      %v2644 = vadd.f32 %v2426, %v2593
      %v2645 = vadd.f32 %v2427, %v2593
      %v2646 = vadd.f32 %v2428, %v2597
      %v2647 = vadd.f32 %v2429, %v2597
      %v2648 = vadd.f32 %v2430, %v2597
      %v2649 = vadd.f32 %v2431, %v2597
      %v2650 = vadd.f32 %v2432, %v2597
      %v2651 = vadd.f32 %v2433, %v2597
      %v2652 = vadd.f32 %v2434, %v2597
      %v2653 = vadd.f32 %v2435, %v2597
      %v2654 = vadd.f32 %v2436, %v2597
      %v2655 = vadd.f32 %v2437, %v2597
      %v2656 = vadd.f32 %v2438, %v2597
      %v2657 = vadd.f32 %v2439, %v2597
      %v2658 = vadd.f32 %v2440, %v2597
      %v2659 = vadd.f32 %v2441, %v2597
      %v2660 = vadd.f32 %v2442, %v2597
      %v2661 = vadd.f32 %v2443, %v2597
      %v2662 = vadd.f32 %v2444, %v2601
      %v2663 = vadd.f32 %v2445, %v2601
      %v2664 = vadd.f32 %v2446, %v2601
      %v2665 = vadd.f32 %v2447, %v2601
      %v2666 = vadd.f32 %v2448, %v2601
      %v2667 = vadd.f32 %v2449, %v2601
      %v2668 = vadd.f32 %v2450, %v2601
      %v2669 = vadd.f32 %v2451, %v2601
      %v2670 = vadd.f32 %v2452, %v2601
      %v2671 = vadd.f32 %v2453, %v2601
      %v2672 = vadd.f32 %v2454, %v2601
      %v2673 = vadd.f32 %v2455, %v2601
      %v2674 = vadd.f32 %v2456, %v2601
      %v2675 = vadd.f32 %v2457, %v2601
      %v2676 = vadd.f32 %v2458, %v2601
      %v2677 = vadd.f32 %v2459, %v2601
      %v2678 = vadd.f32 %v2460, %v2605
      %v2679 = vadd.f32 %v2461, %v2605
      %v2680 = vadd.f32 %v2462, %v2605
      %v2681 = vadd.f32 %v2463, %v2605
      %v2682 = vadd.f32 %v2464, %v2605
      %v2683 = vadd.f32 %v2465, %v2605
      %v2684 = vadd.f32 %v2466, %v2605
      %v2685 = vadd.f32 %v2467, %v2605
      %v2686 = vadd.f32 %v2468, %v2605
      %v2687 = vadd.f32 %v2469, %v2605
      %v2688 = vadd.f32 %v2470, %v2605
      %v2689 = vadd.f32 %v2471, %v2605
      %v2690 = vadd.f32 %v2472, %v2605
      %v2691 = vadd.f32 %v2473, %v2605
      %v2692 = vadd.f32 %v2474, %v2605
      %v2693 = vadd.f32 %v2475, %v2605
      %v2694 = vadd.f32 %v2476, %v2609
      %v2695 = vadd.f32 %v2477, %v2609
      %v2696 = vadd.f32 %v2478, %v2609
      %v2697 = vadd.f32 %v2479, %v2609
      %v2698 = vadd.f32 %v2480, %v2609
      %v2699 = vadd.f32 %v2481, %v2609
      %v2700 = vadd.f32 %v2482, %v2609
      %v2701 = vadd.f32 %v2483, %v2609
      %v2702 = vadd.f32 %v2484, %v2609
      %v2703 = vadd.f32 %v2485, %v2609
      %v2704 = vadd.f32 %v2486, %v2609
      %v2705 = vadd.f32 %v2487, %v2609
      %v2706 = vadd.f32 %v2488, %v2609
      %v2707 = vadd.f32 %v2489, %v2609
      %v2708 = vadd.f32 %v2490, %v2609
      %v2709 = vadd.f32 %v2491, %v2609
      %v2710 = vadd.f32 %v2492, %v2613
      %v2711 = vadd.f32 %v2493, %v2613
      %v2712 = vadd.f32 %v2494, %v2613
      %v2713 = vadd.f32 %v2495, %v2613
      %v2714 = vadd.f32 %v2496, %v2613
      %v2715 = vadd.f32 %v2497, %v2613
      %v2716 = vadd.f32 %v2498, %v2613
      %v2717 = vadd.f32 %v2499, %v2613
      %v2718 = vadd.f32 %v2500, %v2613
      %v2719 = vadd.f32 %v2501, %v2613
      %v2720 = vadd.f32 %v2502, %v2613
      %v2721 = vadd.f32 %v2503, %v2613
      %v2722 = vadd.f32 %v2504, %v2613
      %v2723 = vadd.f32 %v2505, %v2613
      %v2724 = vadd.f32 %v2506, %v2613
      %v2725 = vadd.f32 %v2507, %v2613
      %v2726 = vadd.f32 %v2508, %v2617
      %v2727 = vadd.f32 %v2509, %v2617
      %v2728 = vadd.f32 %v2510, %v2617
      %v2729 = vadd.f32 %v2511, %v2617
      %v2730 = vadd.f32 %v2512, %v2617
      %v2731 = vadd.f32 %v2513, %v2617
      %v2732 = vadd.f32 %v2514, %v2617
      %v2733 = vadd.f32 %v2515, %v2617
      %v2734 = vadd.f32 %v2516, %v2617
      %v2735 = vadd.f32 %v2517, %v2617
      %v2736 = vadd.f32 %v2518, %v2617
      %v2737 = vadd.f32 %v2519, %v2617
      %v2738 = vadd.f32 %v2520, %v2617
      %v2739 = vadd.f32 %v2521, %v2617
      %v2740 = vadd.f32 %v2522, %v2617
      %v2741 = vadd.f32 %v2523, %v2617
      %v2742 = vadd.f32 %v2524, %v2621
      %v2743 = vadd.f32 %v2525, %v2621
      %v2744 = vadd.f32 %v2526, %v2621
      %v2745 = vadd.f32 %v2527, %v2621
      %v2746 = vadd.f32 %v2528, %v2621
      %v2747 = vadd.f32 %v2529, %v2621
      %v2748 = vadd.f32 %v2530, %v2621
      %v2749 = vadd.f32 %v2531, %v2621
      %v2750 = vadd.f32 %v2532, %v2621
      %v2751 = vadd.f32 %v2533, %v2621
      %v2752 = vadd.f32 %v2534, %v2621
      %v2753 = vadd.f32 %v2535, %v2621
      %v2754 = vadd.f32 %v2536, %v2621
      %v2755 = vadd.f32 %v2537, %v2621
      %v2756 = vadd.f32 %v2538, %v2621
      %v2757 = vadd.f32 %v2539, %v2621
      %v2758 = vmax.f32 %v2630, 0.0
      %v2759 = vmax.f32 %v2631, 0.0
      %v2760 = vmax.f32 %v2632, 0.0
      %v2761 = vmax.f32 %v2633, 0.0
      %v2762 = vmax.f32 %v2634, 0.0
      %v2763 = vmax.f32 %v2635, 0.0
      %v2764 = vmax.f32 %v2636, 0.0
      %v2765 = vmax.f32 %v2637, 0.0
      %v2766 = vmax.f32 %v2638, 0.0
      %v2767 = vmax.f32 %v2639, 0.0
      %v2768 = vmax.f32 %v2640, 0.0
      %v2769 = vmax.f32 %v2641, 0.0
      %v2770 = vmax.f32 %v2642, 0.0
      %v2771 = vmax.f32 %v2643, 0.0
      %v2772 = vmax.f32 %v2644, 0.0
      %v2773 = vmax.f32 %v2645, 0.0
      %v2774 = vmax.f32 %v2646, 0.0
      %v2775 = vmax.f32 %v2647, 0.0
      %v2776 = vmax.f32 %v2648, 0.0
      %v2777 = vmax.f32 %v2649, 0.0
      %v2778 = vmax.f32 %v2650, 0.0
      %v2779 = vmax.f32 %v2651, 0.0
      %v2780 = vmax.f32 %v2652, 0.0
      %v2781 = vmax.f32 %v2653, 0.0
      %v2782 = vmax.f32 %v2654, 0.0
      %v2783 = vmax.f32 %v2655, 0.0
      %v2784 = vmax.f32 %v2656, 0.0
      %v2785 = vmax.f32 %v2657, 0.0
      %v2786 = vmax.f32 %v2658, 0.0
      %v2787 = vmax.f32 %v2659, 0.0
      %v2788 = vmax.f32 %v2660, 0.0
      %v2789 = vmax.f32 %v2661, 0.0
      %v2790 = vmax.f32 %v2662, 0.0
      %v2791 = vmax.f32 %v2663, 0.0
      %v2792 = vmax.f32 %v2664, 0.0
      %v2793 = vmax.f32 %v2665, 0.0
      %v2794 = vmax.f32 %v2666, 0.0
      %v2795 = vmax.f32 %v2667, 0.0
      %v2796 = vmax.f32 %v2668, 0.0
      %v2797 = vmax.f32 %v2669, 0.0
      %v2798 = vmax.f32 %v2670, 0.0
      %v2799 = vmax.f32 %v2671, 0.0
      %v2800 = vmax.f32 %v2672, 0.0
      %v2801 = vmax.f32 %v2673, 0.0
      %v2802 = vmax.f32 %v2674, 0.0
      %v2803 = vmax.f32 %v2675, 0.0
      %v2804 = vmax.f32 %v2676, 0.0
      %v2805 = vmax.f32 %v2677, 0.0
      %v2806 = vmax.f32 %v2678, 0.0
      %v2807 = vmax.f32 %v2679, 0.0
      %v2808 = vmax.f32 %v2680, 0.0
      %v2809 = vmax.f32 %v2681, 0.0
      %v2810 = vmax.f32 %v2682, 0.0
      %v2811 = vmax.f32 %v2683, 0.0
      %v2812 = vmax.f32 %v2684, 0.0
      %v2813 = vmax.f32 %v2685, 0.0
      %v2814 = vmax.f32 %v2686, 0.0
      %v2815 = vmax.f32 %v2687, 0.0
      %v2816 = vmax.f32 %v2688, 0.0
      %v2817 = vmax.f32 %v2689, 0.0
      %v2818 = vmax.f32 %v2690, 0.0
      %v2819 = vmax.f32 %v2691, 0.0
      %v2820 = vmax.f32 %v2692, 0.0
      %v2821 = vmax.f32 %v2693, 0.0
      %v2822 = vmax.f32 %v2694, 0.0
      %v2823 = vmax.f32 %v2695, 0.0
      %v2824 = vmax.f32 %v2696, 0.0
      %v2825 = vmax.f32 %v2697, 0.0
      %v2826 = vmax.f32 %v2698, 0.0
      %v2827 = vmax.f32 %v2699, 0.0
      %v2828 = vmax.f32 %v2700, 0.0
      %v2829 = vmax.f32 %v2701, 0.0
      %v2830 = vmax.f32 %v2702, 0.0
      %v2831 = vmax.f32 %v2703, 0.0
      %v2832 = vmax.f32 %v2704, 0.0
      %v2833 = vmax.f32 %v2705, 0.0
      %v2834 = vmax.f32 %v2706, 0.0
      %v2835 = vmax.f32 %v2707, 0.0
      %v2836 = vmax.f32 %v2708, 0.0
      %v2837 = vmax.f32 %v2709, 0.0
      %v2838 = vmax.f32 %v2710, 0.0
      %v2839 = vmax.f32 %v2711, 0.0
      %v2840 = vmax.f32 %v2712, 0.0
      %v2841 = vmax.f32 %v2713, 0.0
      %v2842 = vmax.f32 %v2714, 0.0
      %v2843 = vmax.f32 %v2715, 0.0
      %v2844 = vmax.f32 %v2716, 0.0
      %v2845 = vmax.f32 %v2717, 0.0
      %v2846 = vmax.f32 %v2718, 0.0
      %v2847 = vmax.f32 %v2719, 0.0
      %v2848 = vmax.f32 %v2720, 0.0
      %v2849 = vmax.f32 %v2721, 0.0
      %v2850 = vmax.f32 %v2722, 0.0
      %v2851 = vmax.f32 %v2723, 0.0
      %v2852 = vmax.f32 %v2724, 0.0
      %v2853 = vmax.f32 %v2725, 0.0
      %v2854 = vmax.f32 %v2726, 0.0
      %v2855 = vmax.f32 %v2727, 0.0
      %v2856 = vmax.f32 %v2728, 0.0
      %v2857 = vmax.f32 %v2729, 0.0
      %v2858 = vmax.f32 %v2730, 0.0
      %v2859 = vmax.f32 %v2731, 0.0
      %v2860 = vmax.f32 %v2732, 0.0
      %v2861 = vmax.f32 %v2733, 0.0
      %v2862 = vmax.f32 %v2734, 0.0
      %v2863 = vmax.f32 %v2735, 0.0
      %v2864 = vmax.f32 %v2736, 0.0
      %v2865 = vmax.f32 %v2737, 0.0
      %v2866 = vmax.f32 %v2738, 0.0
      %v2867 = vmax.f32 %v2739, 0.0
      %v2868 = vmax.f32 %v2740, 0.0
      %v2869 = vmax.f32 %v2741, 0.0
      %v2870 = vmax.f32 %v2742, 0.0
      %v2871 = vmax.f32 %v2743, 0.0
      %v2872 = vmax.f32 %v2744, 0.0
      %v2873 = vmax.f32 %v2745, 0.0
      %v2874 = vmax.f32 %v2746, 0.0
      %v2875 = vmax.f32 %v2747, 0.0
      %v2876 = vmax.f32 %v2748, 0.0
      %v2877 = vmax.f32 %v2749, 0.0
      %v2878 = vmax.f32 %v2750, 0.0
      %v2879 = vmax.f32 %v2751, 0.0
      %v2880 = vmax.f32 %v2752, 0.0
      %v2881 = vmax.f32 %v2753, 0.0
      %v2882 = vmax.f32 %v2754, 0.0
      %v2883 = vmax.f32 %v2755, 0.0
      %v2884 = vmax.f32 %v2756, 0.0
      %v2885 = vmax.f32 %v2757, 0.0
      %v2886 = vld [vmem:[%s7] sm:$0x1]
      %v2888 = vlaneseq
      %v2889 = vshrl.u32 %v2888, 7
      %v2890 = vsub.s32 0, %v2889
      %v2891 = vrot.slane %v2886, %v2890
      %v2893 = vmul.f32 %v2758, %v2891
      %v2894 = vmul.f32 %v2759, %v2891
      %v2895 = vmul.f32 %v2760, %v2891
      %v2896 = vmul.f32 %v2761, %v2891
      %v2897 = vmul.f32 %v2762, %v2891
      %v2898 = vmul.f32 %v2763, %v2891
      %v2899 = vmul.f32 %v2764, %v2891
      %v2900 = vmul.f32 %v2765, %v2891
      %v2901 = vmul.f32 %v2766, %v2891
      %v2902 = vmul.f32 %v2767, %v2891
      %v2903 = vmul.f32 %v2768, %v2891
      %v2904 = vmul.f32 %v2769, %v2891
      %v2905 = vmul.f32 %v2770, %v2891
      %v2906 = vmul.f32 %v2771, %v2891
      %v2907 = vmul.f32 %v2772, %v2891
      %v2908 = vmul.f32 %v2773, %v2891
      %v2909 = vmul.f32 %v2774, %v2891
      %v2910 = vmul.f32 %v2775, %v2891
      %v2911 = vmul.f32 %v2776, %v2891
      %v2912 = vmul.f32 %v2777, %v2891
      %v2913 = vmul.f32 %v2778, %v2891
      %v2914 = vmul.f32 %v2779, %v2891
      %v2915 = vmul.f32 %v2780, %v2891
      %v2916 = vmul.f32 %v2781, %v2891
      %v2917 = vmul.f32 %v2782, %v2891
      %v2918 = vmul.f32 %v2783, %v2891
      %v2919 = vmul.f32 %v2784, %v2891
      %v2920 = vmul.f32 %v2785, %v2891
      %v2921 = vmul.f32 %v2786, %v2891
      %v2922 = vmul.f32 %v2787, %v2891
      %v2923 = vmul.f32 %v2788, %v2891
      %v2924 = vmul.f32 %v2789, %v2891
      %v2925 = vmul.f32 %v2790, %v2891
      %v2926 = vmul.f32 %v2791, %v2891
      %v2927 = vmul.f32 %v2792, %v2891
      %v2928 = vmul.f32 %v2793, %v2891
      %v2929 = vmul.f32 %v2794, %v2891
      %v2930 = vmul.f32 %v2795, %v2891
      %v2931 = vmul.f32 %v2796, %v2891
      %v2932 = vmul.f32 %v2797, %v2891
      %v2933 = vmul.f32 %v2798, %v2891
      %v2934 = vmul.f32 %v2799, %v2891
      %v2935 = vmul.f32 %v2800, %v2891
      %v2936 = vmul.f32 %v2801, %v2891
      %v2937 = vmul.f32 %v2802, %v2891
      %v2938 = vmul.f32 %v2803, %v2891
      %v2939 = vmul.f32 %v2804, %v2891
      %v2940 = vmul.f32 %v2805, %v2891
      %v2941 = vmul.f32 %v2806, %v2891
      %v2942 = vmul.f32 %v2807, %v2891
      %v2943 = vmul.f32 %v2808, %v2891
      %v2944 = vmul.f32 %v2809, %v2891
      %v2945 = vmul.f32 %v2810, %v2891
      %v2946 = vmul.f32 %v2811, %v2891
      %v2947 = vmul.f32 %v2812, %v2891
      %v2948 = vmul.f32 %v2813, %v2891
      %v2949 = vmul.f32 %v2814, %v2891
      %v2950 = vmul.f32 %v2815, %v2891
      %v2951 = vmul.f32 %v2816, %v2891
      %v2952 = vmul.f32 %v2817, %v2891
      %v2953 = vmul.f32 %v2818, %v2891
      %v2954 = vmul.f32 %v2819, %v2891
      %v2955 = vmul.f32 %v2820, %v2891
      %v2956 = vmul.f32 %v2821, %v2891
      %v2957 = vmul.f32 %v2822, %v2891
      %v2958 = vmul.f32 %v2823, %v2891
      %v2959 = vmul.f32 %v2824, %v2891
      %v2960 = vmul.f32 %v2825, %v2891
      %v2961 = vmul.f32 %v2826, %v2891
      %v2962 = vmul.f32 %v2827, %v2891
      %v2963 = vmul.f32 %v2828, %v2891
      %v2964 = vmul.f32 %v2829, %v2891
      %v2965 = vmul.f32 %v2830, %v2891
      %v2966 = vmul.f32 %v2831, %v2891
      %v2967 = vmul.f32 %v2832, %v2891
      %v2968 = vmul.f32 %v2833, %v2891
      %v2969 = vmul.f32 %v2834, %v2891
      %v2970 = vmul.f32 %v2835, %v2891
      %v2971 = vmul.f32 %v2836, %v2891
      %v2972 = vmul.f32 %v2837, %v2891
      %v2973 = vmul.f32 %v2838, %v2891
      %v2974 = vmul.f32 %v2839, %v2891
      %v2975 = vmul.f32 %v2840, %v2891
      %v2976 = vmul.f32 %v2841, %v2891
      %v2977 = vmul.f32 %v2842, %v2891
      %v2978 = vmul.f32 %v2843, %v2891
      %v2979 = vmul.f32 %v2844, %v2891
      %v2980 = vmul.f32 %v2845, %v2891
      %v2981 = vmul.f32 %v2846, %v2891
      %v2982 = vmul.f32 %v2847, %v2891
      %v2983 = vmul.f32 %v2848, %v2891
      %v2984 = vmul.f32 %v2849, %v2891
      %v2985 = vmul.f32 %v2850, %v2891
      %v2986 = vmul.f32 %v2851, %v2891
      %v2987 = vmul.f32 %v2852, %v2891
      %v2988 = vmul.f32 %v2853, %v2891
      %v2989 = vmul.f32 %v2854, %v2891
      %v2990 = vmul.f32 %v2855, %v2891
      %v2991 = vmul.f32 %v2856, %v2891
      %v2992 = vmul.f32 %v2857, %v2891
      %v2993 = vmul.f32 %v2858, %v2891
      %v2994 = vmul.f32 %v2859, %v2891
      %v2995 = vmul.f32 %v2860, %v2891
      %v2996 = vmul.f32 %v2861, %v2891
      %v2997 = vmul.f32 %v2862, %v2891
      %v2998 = vmul.f32 %v2863, %v2891
      %v2999 = vmul.f32 %v2864, %v2891
      %v3000 = vmul.f32 %v2865, %v2891
      %v3001 = vmul.f32 %v2866, %v2891
      %v3002 = vmul.f32 %v2867, %v2891
      %v3003 = vmul.f32 %v2868, %v2891
      %v3004 = vmul.f32 %v2869, %v2891
      %v3005 = vmul.f32 %v2870, %v2891
      %v3006 = vmul.f32 %v2871, %v2891
      %v3007 = vmul.f32 %v2872, %v2891
      %v3008 = vmul.f32 %v2873, %v2891
      %v3009 = vmul.f32 %v2874, %v2891
      %v3010 = vmul.f32 %v2875, %v2891
      %v3011 = vmul.f32 %v2876, %v2891
      %v3012 = vmul.f32 %v2877, %v2891
      %v3013 = vmul.f32 %v2878, %v2891
      %v3014 = vmul.f32 %v2879, %v2891
      %v3015 = vmul.f32 %v2880, %v2891
      %v3016 = vmul.f32 %v2881, %v2891
      %v3017 = vmul.f32 %v2882, %v2891
      %v3018 = vmul.f32 %v2883, %v2891
      %v3019 = vmul.f32 %v2884, %v2891
      %v3020 = vmul.f32 %v2885, %v2891
      %3021 = vadd.xlane.f32.xlu0 %v2893
      %v3022 = vpop.xlane.xlu0 %3021
      %3023 = vadd.xlane.f32.xlu0 %v2894
      %v3024 = vpop.xlane.xlu0 %3023
      %3025 = vadd.xlane.f32.xlu0 %v2895
      %v3026 = vpop.xlane.xlu0 %3025
      %3027 = vadd.xlane.f32.xlu0 %v2896
      %v3028 = vpop.xlane.xlu0 %3027
      %3029 = vadd.xlane.f32.xlu0 %v2897
      %v3030 = vpop.xlane.xlu0 %3029
      %3031 = vadd.xlane.f32.xlu0 %v2898
      %v3032 = vpop.xlane.xlu0 %3031
      %3033 = vadd.xlane.f32.xlu0 %v2899
      %v3034 = vpop.xlane.xlu0 %3033
      %3035 = vadd.xlane.f32.xlu0 %v2900
      %v3036 = vpop.xlane.xlu0 %3035
      %3037 = vadd.xlane.f32.xlu0 %v2901
      %v3038 = vpop.xlane.xlu0 %3037
      %3039 = vadd.xlane.f32.xlu0 %v2902
      %v3040 = vpop.xlane.xlu0 %3039
      %3041 = vadd.xlane.f32.xlu0 %v2903
      %v3042 = vpop.xlane.xlu0 %3041
      %3043 = vadd.xlane.f32.xlu0 %v2904
      %v3044 = vpop.xlane.xlu0 %3043
      %3045 = vadd.xlane.f32.xlu0 %v2905
      %v3046 = vpop.xlane.xlu0 %3045
      %3047 = vadd.xlane.f32.xlu0 %v2906
      %v3048 = vpop.xlane.xlu0 %3047
      %3049 = vadd.xlane.f32.xlu0 %v2907
      %v3050 = vpop.xlane.xlu0 %3049
      %3051 = vadd.xlane.f32.xlu0 %v2908
      %v3052 = vpop.xlane.xlu0 %3051
      %3053 = vadd.xlane.f32.xlu0 %v2909
      %v3054 = vpop.xlane.xlu0 %3053
      %3055 = vadd.xlane.f32.xlu0 %v2910
      %v3056 = vpop.xlane.xlu0 %3055
      %3057 = vadd.xlane.f32.xlu0 %v2911
      %v3058 = vpop.xlane.xlu0 %3057
      %3059 = vadd.xlane.f32.xlu0 %v2912
      %v3060 = vpop.xlane.xlu0 %3059
      %3061 = vadd.xlane.f32.xlu0 %v2913
      %v3062 = vpop.xlane.xlu0 %3061
      %3063 = vadd.xlane.f32.xlu0 %v2914
      %v3064 = vpop.xlane.xlu0 %3063
      %3065 = vadd.xlane.f32.xlu0 %v2915
      %v3066 = vpop.xlane.xlu0 %3065
      %3067 = vadd.xlane.f32.xlu0 %v2916
      %v3068 = vpop.xlane.xlu0 %3067
      %3069 = vadd.xlane.f32.xlu0 %v2917
      %v3070 = vpop.xlane.xlu0 %3069
      %3071 = vadd.xlane.f32.xlu0 %v2918
      %v3072 = vpop.xlane.xlu0 %3071
      %3073 = vadd.xlane.f32.xlu0 %v2919
      %v3074 = vpop.xlane.xlu0 %3073
      %3075 = vadd.xlane.f32.xlu0 %v2920
      %v3076 = vpop.xlane.xlu0 %3075
      %3077 = vadd.xlane.f32.xlu0 %v2921
      %v3078 = vpop.xlane.xlu0 %3077
      %3079 = vadd.xlane.f32.xlu0 %v2922
      %v3080 = vpop.xlane.xlu0 %3079
      %3081 = vadd.xlane.f32.xlu0 %v2923
      %v3082 = vpop.xlane.xlu0 %3081
      %3083 = vadd.xlane.f32.xlu0 %v2924
      %v3084 = vpop.xlane.xlu0 %3083
      %3085 = vadd.xlane.f32.xlu0 %v2925
      %v3086 = vpop.xlane.xlu0 %3085
      %3087 = vadd.xlane.f32.xlu0 %v2926
      %v3088 = vpop.xlane.xlu0 %3087
      %3089 = vadd.xlane.f32.xlu0 %v2927
      %v3090 = vpop.xlane.xlu0 %3089
      %3091 = vadd.xlane.f32.xlu0 %v2928
      %v3092 = vpop.xlane.xlu0 %3091
      %3093 = vadd.xlane.f32.xlu0 %v2929
      %v3094 = vpop.xlane.xlu0 %3093
      %3095 = vadd.xlane.f32.xlu0 %v2930
      %v3096 = vpop.xlane.xlu0 %3095
      %3097 = vadd.xlane.f32.xlu0 %v2931
      %v3098 = vpop.xlane.xlu0 %3097
      %3099 = vadd.xlane.f32.xlu0 %v2932
      %v3100 = vpop.xlane.xlu0 %3099
      %3101 = vadd.xlane.f32.xlu0 %v2933
      %v3102 = vpop.xlane.xlu0 %3101
      %3103 = vadd.xlane.f32.xlu0 %v2934
      %v3104 = vpop.xlane.xlu0 %3103
      %3105 = vadd.xlane.f32.xlu0 %v2935
      %v3106 = vpop.xlane.xlu0 %3105
      %3107 = vadd.xlane.f32.xlu0 %v2936
      %v3108 = vpop.xlane.xlu0 %3107
      %3109 = vadd.xlane.f32.xlu0 %v2937
      %v3110 = vpop.xlane.xlu0 %3109
      %3111 = vadd.xlane.f32.xlu0 %v2938
      %v3112 = vpop.xlane.xlu0 %3111
      %3113 = vadd.xlane.f32.xlu0 %v2939
      %v3114 = vpop.xlane.xlu0 %3113
      %3115 = vadd.xlane.f32.xlu0 %v2940
      %v3116 = vpop.xlane.xlu0 %3115
      %3117 = vadd.xlane.f32.xlu0 %v2941
      %v3118 = vpop.xlane.xlu0 %3117
      %3119 = vadd.xlane.f32.xlu0 %v2942
      %v3120 = vpop.xlane.xlu0 %3119
      %3121 = vadd.xlane.f32.xlu0 %v2943
      %v3122 = vpop.xlane.xlu0 %3121
      %3123 = vadd.xlane.f32.xlu0 %v2944
      %v3124 = vpop.xlane.xlu0 %3123
      %3125 = vadd.xlane.f32.xlu0 %v2945
      %v3126 = vpop.xlane.xlu0 %3125
      %3127 = vadd.xlane.f32.xlu0 %v2946
      %v3128 = vpop.xlane.xlu0 %3127
      %3129 = vadd.xlane.f32.xlu0 %v2947
      %v3130 = vpop.xlane.xlu0 %3129
      %3131 = vadd.xlane.f32.xlu0 %v2948
      %v3132 = vpop.xlane.xlu0 %3131
      %3133 = vadd.xlane.f32.xlu0 %v2949
      %v3134 = vpop.xlane.xlu0 %3133
      %3135 = vadd.xlane.f32.xlu0 %v2950
      %v3136 = vpop.xlane.xlu0 %3135
      %3137 = vadd.xlane.f32.xlu0 %v2951
      %v3138 = vpop.xlane.xlu0 %3137
      %3139 = vadd.xlane.f32.xlu0 %v2952
      %v3140 = vpop.xlane.xlu0 %3139
      %3141 = vadd.xlane.f32.xlu0 %v2953
      %v3142 = vpop.xlane.xlu0 %3141
      %3143 = vadd.xlane.f32.xlu0 %v2954
      %v3144 = vpop.xlane.xlu0 %3143
      %3145 = vadd.xlane.f32.xlu0 %v2955
      %v3146 = vpop.xlane.xlu0 %3145
      %3147 = vadd.xlane.f32.xlu0 %v2956
      %v3148 = vpop.xlane.xlu0 %3147
      %3149 = vadd.xlane.f32.xlu0 %v2957
      %v3150 = vpop.xlane.xlu0 %3149
      %3151 = vadd.xlane.f32.xlu0 %v2958
      %v3152 = vpop.xlane.xlu0 %3151
      %3153 = vadd.xlane.f32.xlu0 %v2959
      %v3154 = vpop.xlane.xlu0 %3153
      %3155 = vadd.xlane.f32.xlu0 %v2960
      %v3156 = vpop.xlane.xlu0 %3155
      %3157 = vadd.xlane.f32.xlu0 %v2961
      %v3158 = vpop.xlane.xlu0 %3157
      %3159 = vadd.xlane.f32.xlu0 %v2962
      %v3160 = vpop.xlane.xlu0 %3159
      %3161 = vadd.xlane.f32.xlu0 %v2963
      %v3162 = vpop.xlane.xlu0 %3161
      %3163 = vadd.xlane.f32.xlu0 %v2964
      %v3164 = vpop.xlane.xlu0 %3163
      %3165 = vadd.xlane.f32.xlu0 %v2965
      %v3166 = vpop.xlane.xlu0 %3165
      %3167 = vadd.xlane.f32.xlu0 %v2966
      %v3168 = vpop.xlane.xlu0 %3167
      %3169 = vadd.xlane.f32.xlu0 %v2967
      %v3170 = vpop.xlane.xlu0 %3169
      %3171 = vadd.xlane.f32.xlu0 %v2968
      %v3172 = vpop.xlane.xlu0 %3171
      %3173 = vadd.xlane.f32.xlu0 %v2969
      %v3174 = vpop.xlane.xlu0 %3173
      %3175 = vadd.xlane.f32.xlu0 %v2970
      %v3176 = vpop.xlane.xlu0 %3175
      %3177 = vadd.xlane.f32.xlu0 %v2971
      %v3178 = vpop.xlane.xlu0 %3177
      %3179 = vadd.xlane.f32.xlu0 %v2972
      %v3180 = vpop.xlane.xlu0 %3179
      %3181 = vadd.xlane.f32.xlu0 %v2973
      %v3182 = vpop.xlane.xlu0 %3181
      %3183 = vadd.xlane.f32.xlu0 %v2974
      %v3184 = vpop.xlane.xlu0 %3183
      %3185 = vadd.xlane.f32.xlu0 %v2975
      %v3186 = vpop.xlane.xlu0 %3185
      %3187 = vadd.xlane.f32.xlu0 %v2976
      %v3188 = vpop.xlane.xlu0 %3187
      %3189 = vadd.xlane.f32.xlu0 %v2977
      %v3190 = vpop.xlane.xlu0 %3189
      %3191 = vadd.xlane.f32.xlu0 %v2978
      %v3192 = vpop.xlane.xlu0 %3191
      %3193 = vadd.xlane.f32.xlu0 %v2979
      %v3194 = vpop.xlane.xlu0 %3193
      %3195 = vadd.xlane.f32.xlu0 %v2980
      %v3196 = vpop.xlane.xlu0 %3195
      %3197 = vadd.xlane.f32.xlu0 %v2981
      %v3198 = vpop.xlane.xlu0 %3197
      %3199 = vadd.xlane.f32.xlu0 %v2982
      %v3200 = vpop.xlane.xlu0 %3199
      %3201 = vadd.xlane.f32.xlu0 %v2983
      %v3202 = vpop.xlane.xlu0 %3201
      %3203 = vadd.xlane.f32.xlu0 %v2984
      %v3204 = vpop.xlane.xlu0 %3203
      %3205 = vadd.xlane.f32.xlu0 %v2985
      %v3206 = vpop.xlane.xlu0 %3205
      %3207 = vadd.xlane.f32.xlu0 %v2986
      %v3208 = vpop.xlane.xlu0 %3207
      %3209 = vadd.xlane.f32.xlu0 %v2987
      %v3210 = vpop.xlane.xlu0 %3209
      %3211 = vadd.xlane.f32.xlu0 %v2988
      %v3212 = vpop.xlane.xlu0 %3211
      %3213 = vadd.xlane.f32.xlu0 %v2989
      %v3214 = vpop.xlane.xlu0 %3213
      %3215 = vadd.xlane.f32.xlu0 %v2990
      %v3216 = vpop.xlane.xlu0 %3215
      %3217 = vadd.xlane.f32.xlu0 %v2991
      %v3218 = vpop.xlane.xlu0 %3217
      %3219 = vadd.xlane.f32.xlu0 %v2992
      %v3220 = vpop.xlane.xlu0 %3219
      %3221 = vadd.xlane.f32.xlu0 %v2993
      %v3222 = vpop.xlane.xlu0 %3221
      %3223 = vadd.xlane.f32.xlu0 %v2994
      %v3224 = vpop.xlane.xlu0 %3223
      %3225 = vadd.xlane.f32.xlu0 %v2995
      %v3226 = vpop.xlane.xlu0 %3225
      %3227 = vadd.xlane.f32.xlu0 %v2996
      %v3228 = vpop.xlane.xlu0 %3227
      %3229 = vadd.xlane.f32.xlu0 %v2997
      %v3230 = vpop.xlane.xlu0 %3229
      %3231 = vadd.xlane.f32.xlu0 %v2998
      %v3232 = vpop.xlane.xlu0 %3231
      %3233 = vadd.xlane.f32.xlu0 %v2999
      %v3234 = vpop.xlane.xlu0 %3233
      %3235 = vadd.xlane.f32.xlu0 %v3000
      %v3236 = vpop.xlane.xlu0 %3235
      %3237 = vadd.xlane.f32.xlu0 %v3001
      %v3238 = vpop.xlane.xlu0 %3237
      %3239 = vadd.xlane.f32.xlu0 %v3002
      %v3240 = vpop.xlane.xlu0 %3239
      %3241 = vadd.xlane.f32.xlu0 %v3003
      %v3242 = vpop.xlane.xlu0 %3241
      %3243 = vadd.xlane.f32.xlu0 %v3004
      %v3244 = vpop.xlane.xlu0 %3243
      %3245 = vadd.xlane.f32.xlu0 %v3005
      %v3246 = vpop.xlane.xlu0 %3245
      %3247 = vadd.xlane.f32.xlu0 %v3006
      %v3248 = vpop.xlane.xlu0 %3247
      %3249 = vadd.xlane.f32.xlu0 %v3007
      %v3250 = vpop.xlane.xlu0 %3249
      %3251 = vadd.xlane.f32.xlu0 %v3008
      %v3252 = vpop.xlane.xlu0 %3251
      %3253 = vadd.xlane.f32.xlu0 %v3009
      %v3254 = vpop.xlane.xlu0 %3253
      %3255 = vadd.xlane.f32.xlu0 %v3010
      %v3256 = vpop.xlane.xlu0 %3255
      %3257 = vadd.xlane.f32.xlu0 %v3011
      %v3258 = vpop.xlane.xlu0 %3257
      %3259 = vadd.xlane.f32.xlu0 %v3012
      %v3260 = vpop.xlane.xlu0 %3259
      %3261 = vadd.xlane.f32.xlu0 %v3013
      %v3262 = vpop.xlane.xlu0 %3261
      %3263 = vadd.xlane.f32.xlu0 %v3014
      %v3264 = vpop.xlane.xlu0 %3263
      %3265 = vadd.xlane.f32.xlu0 %v3015
      %v3266 = vpop.xlane.xlu0 %3265
      %3267 = vadd.xlane.f32.xlu0 %v3016
      %v3268 = vpop.xlane.xlu0 %3267
      %3269 = vadd.xlane.f32.xlu0 %v3017
      %v3270 = vpop.xlane.xlu0 %3269
      %3271 = vadd.xlane.f32.xlu0 %v3018
      %v3272 = vpop.xlane.xlu0 %3271
      %3273 = vadd.xlane.f32.xlu0 %v3019
      %v3274 = vpop.xlane.xlu0 %3273
      %3275 = vadd.xlane.f32.xlu0 %v3020
      %v3276 = vpop.xlane.xlu0 %3275
      %v3277 = vld [vmem:[#allocation4] sm:$0x1]
      %s3278 = vtos %v3277
      %v3279 = vstv %s3278
      %v3280 = vadd.f32 %v3022, %v3279
      %v3281 = vadd.f32 %v3024, %v3279
      %v3282 = vadd.f32 %v3026, %v3279
      %v3283 = vadd.f32 %v3028, %v3279
      %v3284 = vadd.f32 %v3030, %v3279
      %v3285 = vadd.f32 %v3032, %v3279
      %v3286 = vadd.f32 %v3034, %v3279
      %v3287 = vadd.f32 %v3036, %v3279
      %v3288 = vadd.f32 %v3038, %v3279
      %v3289 = vadd.f32 %v3040, %v3279
      %v3290 = vadd.f32 %v3042, %v3279
      %v3291 = vadd.f32 %v3044, %v3279
      %v3292 = vadd.f32 %v3046, %v3279
      %v3293 = vadd.f32 %v3048, %v3279
      %v3294 = vadd.f32 %v3050, %v3279
      %v3295 = vadd.f32 %v3052, %v3279
      %v3296 = vadd.f32 %v3054, %v3279
      %v3297 = vadd.f32 %v3056, %v3279
      %v3298 = vadd.f32 %v3058, %v3279
      %v3299 = vadd.f32 %v3060, %v3279
      %v3300 = vadd.f32 %v3062, %v3279
      %v3301 = vadd.f32 %v3064, %v3279
      %v3302 = vadd.f32 %v3066, %v3279
      %v3303 = vadd.f32 %v3068, %v3279
      %v3304 = vadd.f32 %v3070, %v3279
      %v3305 = vadd.f32 %v3072, %v3279
      %v3306 = vadd.f32 %v3074, %v3279
      %v3307 = vadd.f32 %v3076, %v3279
      %v3308 = vadd.f32 %v3078, %v3279
      %v3309 = vadd.f32 %v3080, %v3279
      %v3310 = vadd.f32 %v3082, %v3279
      %v3311 = vadd.f32 %v3084, %v3279
      %v3312 = vadd.f32 %v3086, %v3279
      %v3313 = vadd.f32 %v3088, %v3279
      %v3314 = vadd.f32 %v3090, %v3279
      %v3315 = vadd.f32 %v3092, %v3279
      %v3316 = vadd.f32 %v3094, %v3279
      %v3317 = vadd.f32 %v3096, %v3279
      %v3318 = vadd.f32 %v3098, %v3279
      %v3319 = vadd.f32 %v3100, %v3279
      %v3320 = vadd.f32 %v3102, %v3279
      %v3321 = vadd.f32 %v3104, %v3279
      %v3322 = vadd.f32 %v3106, %v3279
      %v3323 = vadd.f32 %v3108, %v3279
      %v3324 = vadd.f32 %v3110, %v3279
      %v3325 = vadd.f32 %v3112, %v3279
      %v3326 = vadd.f32 %v3114, %v3279
      %v3327 = vadd.f32 %v3116, %v3279
      %v3328 = vadd.f32 %v3118, %v3279
      %v3329 = vadd.f32 %v3120, %v3279
      %v3330 = vadd.f32 %v3122, %v3279
      %v3331 = vadd.f32 %v3124, %v3279
      %v3332 = vadd.f32 %v3126, %v3279
      %v3333 = vadd.f32 %v3128, %v3279
      %v3334 = vadd.f32 %v3130, %v3279
      %v3335 = vadd.f32 %v3132, %v3279
      %v3336 = vadd.f32 %v3134, %v3279
      %v3337 = vadd.f32 %v3136, %v3279
      %v3338 = vadd.f32 %v3138, %v3279
      %v3339 = vadd.f32 %v3140, %v3279
      %v3340 = vadd.f32 %v3142, %v3279
      %v3341 = vadd.f32 %v3144, %v3279
      %v3342 = vadd.f32 %v3146, %v3279
      %v3343 = vadd.f32 %v3148, %v3279
      %v3344 = vadd.f32 %v3150, %v3279
      %v3345 = vadd.f32 %v3152, %v3279
      %v3346 = vadd.f32 %v3154, %v3279
      %v3347 = vadd.f32 %v3156, %v3279
      %v3348 = vadd.f32 %v3158, %v3279
      %v3349 = vadd.f32 %v3160, %v3279
      %v3350 = vadd.f32 %v3162, %v3279
      %v3351 = vadd.f32 %v3164, %v3279
      %v3352 = vadd.f32 %v3166, %v3279
      %v3353 = vadd.f32 %v3168, %v3279
      %v3354 = vadd.f32 %v3170, %v3279
      %v3355 = vadd.f32 %v3172, %v3279
      %v3356 = vadd.f32 %v3174, %v3279
      %v3357 = vadd.f32 %v3176, %v3279
      %v3358 = vadd.f32 %v3178, %v3279
      %v3359 = vadd.f32 %v3180, %v3279
      %v3360 = vadd.f32 %v3182, %v3279
      %v3361 = vadd.f32 %v3184, %v3279
      %v3362 = vadd.f32 %v3186, %v3279
      %v3363 = vadd.f32 %v3188, %v3279
      %v3364 = vadd.f32 %v3190, %v3279
      %v3365 = vadd.f32 %v3192, %v3279
      %v3366 = vadd.f32 %v3194, %v3279
      %v3367 = vadd.f32 %v3196, %v3279
      %v3368 = vadd.f32 %v3198, %v3279
      %v3369 = vadd.f32 %v3200, %v3279
      %v3370 = vadd.f32 %v3202, %v3279
      %v3371 = vadd.f32 %v3204, %v3279
      %v3372 = vadd.f32 %v3206, %v3279
      %v3373 = vadd.f32 %v3208, %v3279
      %v3374 = vadd.f32 %v3210, %v3279
      %v3375 = vadd.f32 %v3212, %v3279
      %v3376 = vadd.f32 %v3214, %v3279
      %v3377 = vadd.f32 %v3216, %v3279
      %v3378 = vadd.f32 %v3218, %v3279
      %v3379 = vadd.f32 %v3220, %v3279
      %v3380 = vadd.f32 %v3222, %v3279
      %v3381 = vadd.f32 %v3224, %v3279
      %v3382 = vadd.f32 %v3226, %v3279
      %v3383 = vadd.f32 %v3228, %v3279
      %v3384 = vadd.f32 %v3230, %v3279
      %v3385 = vadd.f32 %v3232, %v3279
      %v3386 = vadd.f32 %v3234, %v3279
      %v3387 = vadd.f32 %v3236, %v3279
      %v3388 = vadd.f32 %v3238, %v3279
      %v3389 = vadd.f32 %v3240, %v3279
      %v3390 = vadd.f32 %v3242, %v3279
      %v3391 = vadd.f32 %v3244, %v3279
      %v3392 = vadd.f32 %v3246, %v3279
      %v3393 = vadd.f32 %v3248, %v3279
      %v3394 = vadd.f32 %v3250, %v3279
      %v3395 = vadd.f32 %v3252, %v3279
      %v3396 = vadd.f32 %v3254, %v3279
      %v3397 = vadd.f32 %v3256, %v3279
      %v3398 = vadd.f32 %v3258, %v3279
      %v3399 = vadd.f32 %v3260, %v3279
      %v3400 = vadd.f32 %v3262, %v3279
      %v3401 = vadd.f32 %v3264, %v3279
      %v3402 = vadd.f32 %v3266, %v3279
      %v3403 = vadd.f32 %v3268, %v3279
      %v3404 = vadd.f32 %v3270, %v3279
      %v3405 = vadd.f32 %v3272, %v3279
      %v3406 = vadd.f32 %v3274, %v3279
      %v3407 = vadd.f32 %v3276, %v3279
      %v3536 = vlaneseq
      %v3537 = vshrl.u32 %v3536, 7
      %v3538 = vsub.s32 %v1900, %v3537
      %v3539 = vrot.slane %v3280, %v3538
      %v3540 = vadd.s32 %v1900, 4294967288
      %v3541 = vlaneseq
      %v3542 = vshrl.u32 %v3541, 7
      %v3543 = vsub.s32 %v3540, %v3542
      %v3544 = vrot.slane %v3281, %v3543
      %vm3545 = vcmask 130112
      %v3546 = vsel %vm3545, %v3544, %v3539
      %v3547 = vadd.s32 %v1900, 4294967280
      %v3548 = vlaneseq
      %v3549 = vshrl.u32 %v3548, 7
      %v3550 = vsub.s32 %v3547, %v3549
      %v3551 = vrot.slane %v3282, %v3550
      %vm3552 = vcmask 195712
      %v3553 = vsel %vm3552, %v3551, %v3546
      %v3554 = vadd.s32 %v1900, 4294967272
      %v3555 = vlaneseq
      %v3556 = vshrl.u32 %v3555, 7
      %v3557 = vsub.s32 %v3554, %v3556
      %v3558 = vrot.slane %v3283, %v3557
      %vm3559 = vcmask 261312
      %v3560 = vsel %vm3559, %v3558, %v3553
      %v3561 = vadd.s32 %v1900, 4294967264
      %v3562 = vlaneseq
      %v3563 = vshrl.u32 %v3562, 7
      %v3564 = vsub.s32 %v3561, %v3563
      %v3565 = vrot.slane %v3284, %v3564
      %vm3566 = vcmask 326912
      %v3567 = vsel %vm3566, %v3565, %v3560
      %v3568 = vadd.s32 %v1900, 4294967256
      %v3569 = vlaneseq
      %v3570 = vshrl.u32 %v3569, 7
      %v3571 = vsub.s32 %v3568, %v3570
      %v3572 = vrot.slane %v3285, %v3571
      %vm3573 = vcmask 392512
      %v3574 = vsel %vm3573, %v3572, %v3567
      %v3575 = vadd.s32 %v1900, 4294967248
      %v3576 = vlaneseq
      %v3577 = vshrl.u32 %v3576, 7
      %v3578 = vsub.s32 %v3575, %v3577
      %v3579 = vrot.slane %v3286, %v3578
      %vm3580 = vcmask 458112
      %v3581 = vsel %vm3580, %v3579, %v3574
      %v3582 = vadd.s32 %v1900, 4294967240
      %v3583 = vlaneseq
      %v3584 = vshrl.u32 %v3583, 7
      %v3585 = vsub.s32 %v3582, %v3584
      %v3586 = vrot.slane %v3287, %v3585
      %vm3587 = vcmask 523712
      %v3588 = vsel %vm3587, %v3586, %v3581
      %v3589 = vadd.s32 %v1900, 4294967232
      %v3590 = vlaneseq
      %v3591 = vshrl.u32 %v3590, 7
      %v3592 = vsub.s32 %v3589, %v3591
      %v3593 = vrot.slane %v3288, %v3592
      %vm3594 = vcmask 589312
      %v3595 = vsel %vm3594, %v3593, %v3588
      %v3596 = vadd.s32 %v1900, 4294967224
      %v3597 = vlaneseq
      %v3598 = vshrl.u32 %v3597, 7
      %v3599 = vsub.s32 %v3596, %v3598
      %v3600 = vrot.slane %v3289, %v3599
      %vm3601 = vcmask 654912
      %v3602 = vsel %vm3601, %v3600, %v3595
      %v3603 = vadd.s32 %v1900, 4294967216
      %v3604 = vlaneseq
      %v3605 = vshrl.u32 %v3604, 7
      %v3606 = vsub.s32 %v3603, %v3605
      %v3607 = vrot.slane %v3290, %v3606
      %vm3608 = vcmask 720512
      %v3609 = vsel %vm3608, %v3607, %v3602
      %v3610 = vadd.s32 %v1900, 4294967208
      %v3611 = vlaneseq
      %v3612 = vshrl.u32 %v3611, 7
      %v3613 = vsub.s32 %v3610, %v3612
      %v3614 = vrot.slane %v3291, %v3613
      %vm3615 = vcmask 786112
      %v3616 = vsel %vm3615, %v3614, %v3609
      %v3617 = vadd.s32 %v1900, 4294967200
      %v3618 = vlaneseq
      %v3619 = vshrl.u32 %v3618, 7
      %v3620 = vsub.s32 %v3617, %v3619
      %v3621 = vrot.slane %v3292, %v3620
      %vm3622 = vcmask 851712
      %v3623 = vsel %vm3622, %v3621, %v3616
      %v3624 = vadd.s32 %v1900, 4294967192
      %v3625 = vlaneseq
      %v3626 = vshrl.u32 %v3625, 7
      %v3627 = vsub.s32 %v3624, %v3626
      %v3628 = vrot.slane %v3293, %v3627
      %vm3629 = vcmask 917312
      %v3630 = vsel %vm3629, %v3628, %v3623
      %v3631 = vadd.s32 %v1900, 4294967184
      %v3632 = vlaneseq
      %v3633 = vshrl.u32 %v3632, 7
      %v3634 = vsub.s32 %v3631, %v3633
      %v3635 = vrot.slane %v3294, %v3634
      %vm3636 = vcmask 982912
      %v3637 = vsel %vm3636, %v3635, %v3630
      %v3638 = vadd.s32 %v1900, 4294967176
      %v3639 = vlaneseq
      %v3640 = vshrl.u32 %v3639, 7
      %v3641 = vsub.s32 %v3638, %v3640
      %v3642 = vrot.slane %v3295, %v3641
      %vm3643 = vcmask 1048512
      %v3644 = vsel %vm3643, %v3642, %v3637
      %v3645 = vlaneseq
      %v3646 = vshrl.u32 %v3645, 7
      %v3647 = vsub.s32 %v1900, %v3646
      %v3648 = vrot.slane %v3296, %v3647
      %v3649 = vlaneseq
      %v3650 = vshrl.u32 %v3649, 7
      %v3651 = vsub.s32 %v3540, %v3650
      %v3652 = vrot.slane %v3297, %v3651
      %v3653 = vsel %vm3545, %v3652, %v3648
      %v3654 = vlaneseq
      %v3655 = vshrl.u32 %v3654, 7
      %v3656 = vsub.s32 %v3547, %v3655
      %v3657 = vrot.slane %v3298, %v3656
      %v3658 = vsel %vm3552, %v3657, %v3653
      %v3659 = vlaneseq
      %v3660 = vshrl.u32 %v3659, 7
      %v3661 = vsub.s32 %v3554, %v3660
      %v3662 = vrot.slane %v3299, %v3661
      %v3663 = vsel %vm3559, %v3662, %v3658
      %v3664 = vlaneseq
      %v3665 = vshrl.u32 %v3664, 7
      %v3666 = vsub.s32 %v3561, %v3665
      %v3667 = vrot.slane %v3300, %v3666
      %v3668 = vsel %vm3566, %v3667, %v3663
      %v3669 = vlaneseq
      %v3670 = vshrl.u32 %v3669, 7
      %v3671 = vsub.s32 %v3568, %v3670
      %v3672 = vrot.slane %v3301, %v3671
      %v3673 = vsel %vm3573, %v3672, %v3668
      %v3674 = vlaneseq
      %v3675 = vshrl.u32 %v3674, 7
      %v3676 = vsub.s32 %v3575, %v3675
      %v3677 = vrot.slane %v3302, %v3676
      %v3678 = vsel %vm3580, %v3677, %v3673
      %v3679 = vlaneseq
      %v3680 = vshrl.u32 %v3679, 7
      %v3681 = vsub.s32 %v3582, %v3680
      %v3682 = vrot.slane %v3303, %v3681
      %v3683 = vsel %vm3587, %v3682, %v3678
      %v3684 = vlaneseq
      %v3685 = vshrl.u32 %v3684, 7
      %v3686 = vsub.s32 %v3589, %v3685
      %v3687 = vrot.slane %v3304, %v3686
      %v3688 = vsel %vm3594, %v3687, %v3683
      %v3689 = vlaneseq
      %v3690 = vshrl.u32 %v3689, 7
      %v3691 = vsub.s32 %v3596, %v3690
      %v3692 = vrot.slane %v3305, %v3691
      %v3693 = vsel %vm3601, %v3692, %v3688
      %v3694 = vlaneseq
      %v3695 = vshrl.u32 %v3694, 7
      %v3696 = vsub.s32 %v3603, %v3695
      %v3697 = vrot.slane %v3306, %v3696
      %v3698 = vsel %vm3608, %v3697, %v3693
      %v3699 = vlaneseq
      %v3700 = vshrl.u32 %v3699, 7
      %v3701 = vsub.s32 %v3610, %v3700
      %v3702 = vrot.slane %v3307, %v3701
      %v3703 = vsel %vm3615, %v3702, %v3698
      %v3704 = vlaneseq
      %v3705 = vshrl.u32 %v3704, 7
      %v3706 = vsub.s32 %v3617, %v3705
      %v3707 = vrot.slane %v3308, %v3706
      %v3708 = vsel %vm3622, %v3707, %v3703
      %v3709 = vlaneseq
      %v3710 = vshrl.u32 %v3709, 7
      %v3711 = vsub.s32 %v3624, %v3710
      %v3712 = vrot.slane %v3309, %v3711
      %v3713 = vsel %vm3629, %v3712, %v3708
      %v3714 = vlaneseq
      %v3715 = vshrl.u32 %v3714, 7
      %v3716 = vsub.s32 %v3631, %v3715
      %v3717 = vrot.slane %v3310, %v3716
      %v3718 = vsel %vm3636, %v3717, %v3713
      %v3719 = vlaneseq
      %v3720 = vshrl.u32 %v3719, 7
      %v3721 = vsub.s32 %v3638, %v3720
      %v3722 = vrot.slane %v3311, %v3721
      %v3723 = vsel %vm3643, %v3722, %v3718
      %v3724 = vlaneseq
      %v3725 = vshrl.u32 %v3724, 7
      %v3726 = vsub.s32 %v1900, %v3725
      %v3727 = vrot.slane %v3312, %v3726
      %v3728 = vlaneseq
      %v3729 = vshrl.u32 %v3728, 7
      %v3730 = vsub.s32 %v3540, %v3729
      %v3731 = vrot.slane %v3313, %v3730
      %v3732 = vsel %vm3545, %v3731, %v3727
      %v3733 = vlaneseq
      %v3734 = vshrl.u32 %v3733, 7
      %v3735 = vsub.s32 %v3547, %v3734
      %v3736 = vrot.slane %v3314, %v3735
      %v3737 = vsel %vm3552, %v3736, %v3732
      %v3738 = vlaneseq
      %v3739 = vshrl.u32 %v3738, 7
      %v3740 = vsub.s32 %v3554, %v3739
      %v3741 = vrot.slane %v3315, %v3740
      %v3742 = vsel %vm3559, %v3741, %v3737
      %v3743 = vlaneseq
      %v3744 = vshrl.u32 %v3743, 7
      %v3745 = vsub.s32 %v3561, %v3744
      %v3746 = vrot.slane %v3316, %v3745
      %v3747 = vsel %vm3566, %v3746, %v3742
      %v3748 = vlaneseq
      %v3749 = vshrl.u32 %v3748, 7
      %v3750 = vsub.s32 %v3568, %v3749
      %v3751 = vrot.slane %v3317, %v3750
      %v3752 = vsel %vm3573, %v3751, %v3747
      %v3753 = vlaneseq
      %v3754 = vshrl.u32 %v3753, 7
      %v3755 = vsub.s32 %v3575, %v3754
      %v3756 = vrot.slane %v3318, %v3755
      %v3757 = vsel %vm3580, %v3756, %v3752
      %v3758 = vlaneseq
      %v3759 = vshrl.u32 %v3758, 7
      %v3760 = vsub.s32 %v3582, %v3759
      %v3761 = vrot.slane %v3319, %v3760
      %v3762 = vsel %vm3587, %v3761, %v3757
      %v3763 = vlaneseq
      %v3764 = vshrl.u32 %v3763, 7
      %v3765 = vsub.s32 %v3589, %v3764
      %v3766 = vrot.slane %v3320, %v3765
      %v3767 = vsel %vm3594, %v3766, %v3762
      %v3768 = vlaneseq
      %v3769 = vshrl.u32 %v3768, 7
      %v3770 = vsub.s32 %v3596, %v3769
      %v3771 = vrot.slane %v3321, %v3770
      %v3772 = vsel %vm3601, %v3771, %v3767
      %v3773 = vlaneseq
      %v3774 = vshrl.u32 %v3773, 7
      %v3775 = vsub.s32 %v3603, %v3774
      %v3776 = vrot.slane %v3322, %v3775
      %v3777 = vsel %vm3608, %v3776, %v3772
      %v3778 = vlaneseq
      %v3779 = vshrl.u32 %v3778, 7
      %v3780 = vsub.s32 %v3610, %v3779
      %v3781 = vrot.slane %v3323, %v3780
      %v3782 = vsel %vm3615, %v3781, %v3777
      %v3783 = vlaneseq
      %v3784 = vshrl.u32 %v3783, 7
      %v3785 = vsub.s32 %v3617, %v3784
      %v3786 = vrot.slane %v3324, %v3785
      %v3787 = vsel %vm3622, %v3786, %v3782
      %v3788 = vlaneseq
      %v3789 = vshrl.u32 %v3788, 7
      %v3790 = vsub.s32 %v3624, %v3789
      %v3791 = vrot.slane %v3325, %v3790
      %v3792 = vsel %vm3629, %v3791, %v3787
      %v3793 = vlaneseq
      %v3794 = vshrl.u32 %v3793, 7
      %v3795 = vsub.s32 %v3631, %v3794
      %v3796 = vrot.slane %v3326, %v3795
      %v3797 = vsel %vm3636, %v3796, %v3792
      %v3798 = vlaneseq
      %v3799 = vshrl.u32 %v3798, 7
      %v3800 = vsub.s32 %v3638, %v3799
      %v3801 = vrot.slane %v3327, %v3800
      %v3802 = vsel %vm3643, %v3801, %v3797
      %v3803 = vlaneseq
      %v3804 = vshrl.u32 %v3803, 7
      %v3805 = vsub.s32 %v1900, %v3804
      %v3806 = vrot.slane %v3328, %v3805
      %v3807 = vlaneseq
      %v3808 = vshrl.u32 %v3807, 7
      %v3809 = vsub.s32 %v3540, %v3808
      %v3810 = vrot.slane %v3329, %v3809
      %v3811 = vsel %vm3545, %v3810, %v3806
      %v3812 = vlaneseq
      %v3813 = vshrl.u32 %v3812, 7
      %v3814 = vsub.s32 %v3547, %v3813
      %v3815 = vrot.slane %v3330, %v3814
      %v3816 = vsel %vm3552, %v3815, %v3811
      %v3817 = vlaneseq
      %v3818 = vshrl.u32 %v3817, 7
      %v3819 = vsub.s32 %v3554, %v3818
      %v3820 = vrot.slane %v3331, %v3819
      %v3821 = vsel %vm3559, %v3820, %v3816
      %v3822 = vlaneseq
      %v3823 = vshrl.u32 %v3822, 7
      %v3824 = vsub.s32 %v3561, %v3823
      %v3825 = vrot.slane %v3332, %v3824
      %v3826 = vsel %vm3566, %v3825, %v3821
      %v3827 = vlaneseq
      %v3828 = vshrl.u32 %v3827, 7
      %v3829 = vsub.s32 %v3568, %v3828
      %v3830 = vrot.slane %v3333, %v3829
      %v3831 = vsel %vm3573, %v3830, %v3826
      %v3832 = vlaneseq
      %v3833 = vshrl.u32 %v3832, 7
      %v3834 = vsub.s32 %v3575, %v3833
      %v3835 = vrot.slane %v3334, %v3834
      %v3836 = vsel %vm3580, %v3835, %v3831
      %v3837 = vlaneseq
      %v3838 = vshrl.u32 %v3837, 7
      %v3839 = vsub.s32 %v3582, %v3838
      %v3840 = vrot.slane %v3335, %v3839
      %v3841 = vsel %vm3587, %v3840, %v3836
      %v3842 = vlaneseq
      %v3843 = vshrl.u32 %v3842, 7
      %v3844 = vsub.s32 %v3589, %v3843
      %v3845 = vrot.slane %v3336, %v3844
      %v3846 = vsel %vm3594, %v3845, %v3841
      %v3847 = vlaneseq
      %v3848 = vshrl.u32 %v3847, 7
      %v3849 = vsub.s32 %v3596, %v3848
      %v3850 = vrot.slane %v3337, %v3849
      %v3851 = vsel %vm3601, %v3850, %v3846
      %v3852 = vlaneseq
      %v3853 = vshrl.u32 %v3852, 7
      %v3854 = vsub.s32 %v3603, %v3853
      %v3855 = vrot.slane %v3338, %v3854
      %v3856 = vsel %vm3608, %v3855, %v3851
      %v3857 = vlaneseq
      %v3858 = vshrl.u32 %v3857, 7
      %v3859 = vsub.s32 %v3610, %v3858
      %v3860 = vrot.slane %v3339, %v3859
      %v3861 = vsel %vm3615, %v3860, %v3856
      %v3862 = vlaneseq
      %v3863 = vshrl.u32 %v3862, 7
      %v3864 = vsub.s32 %v3617, %v3863
      %v3865 = vrot.slane %v3340, %v3864
      %v3866 = vsel %vm3622, %v3865, %v3861
      %v3867 = vlaneseq
      %v3868 = vshrl.u32 %v3867, 7
      %v3869 = vsub.s32 %v3624, %v3868
      %v3870 = vrot.slane %v3341, %v3869
      %v3871 = vsel %vm3629, %v3870, %v3866
      %v3872 = vlaneseq
      %v3873 = vshrl.u32 %v3872, 7
      %v3874 = vsub.s32 %v3631, %v3873
      %v3875 = vrot.slane %v3342, %v3874
      %v3876 = vsel %vm3636, %v3875, %v3871
      %v3877 = vlaneseq
      %v3878 = vshrl.u32 %v3877, 7
      %v3879 = vsub.s32 %v3638, %v3878
      %v3880 = vrot.slane %v3343, %v3879
      %v3881 = vsel %vm3643, %v3880, %v3876
      %v3882 = vlaneseq
      %v3883 = vshrl.u32 %v3882, 7
      %v3884 = vsub.s32 %v1900, %v3883
      %v3885 = vrot.slane %v3344, %v3884
      %v3886 = vlaneseq
      %v3887 = vshrl.u32 %v3886, 7
      %v3888 = vsub.s32 %v3540, %v3887
      %v3889 = vrot.slane %v3345, %v3888
      %v3890 = vsel %vm3545, %v3889, %v3885
      %v3891 = vlaneseq
      %v3892 = vshrl.u32 %v3891, 7
      %v3893 = vsub.s32 %v3547, %v3892
      %v3894 = vrot.slane %v3346, %v3893
      %v3895 = vsel %vm3552, %v3894, %v3890
      %v3896 = vlaneseq
      %v3897 = vshrl.u32 %v3896, 7
      %v3898 = vsub.s32 %v3554, %v3897
      %v3899 = vrot.slane %v3347, %v3898
      %v3900 = vsel %vm3559, %v3899, %v3895
      %v3901 = vlaneseq
      %v3902 = vshrl.u32 %v3901, 7
      %v3903 = vsub.s32 %v3561, %v3902
      %v3904 = vrot.slane %v3348, %v3903
      %v3905 = vsel %vm3566, %v3904, %v3900
      %v3906 = vlaneseq
      %v3907 = vshrl.u32 %v3906, 7
      %v3908 = vsub.s32 %v3568, %v3907
      %v3909 = vrot.slane %v3349, %v3908
      %v3910 = vsel %vm3573, %v3909, %v3905
      %v3911 = vlaneseq
      %v3912 = vshrl.u32 %v3911, 7
      %v3913 = vsub.s32 %v3575, %v3912
      %v3914 = vrot.slane %v3350, %v3913
      %v3915 = vsel %vm3580, %v3914, %v3910
      %v3916 = vlaneseq
      %v3917 = vshrl.u32 %v3916, 7
      %v3918 = vsub.s32 %v3582, %v3917
      %v3919 = vrot.slane %v3351, %v3918
      %v3920 = vsel %vm3587, %v3919, %v3915
      %v3921 = vlaneseq
      %v3922 = vshrl.u32 %v3921, 7
      %v3923 = vsub.s32 %v3589, %v3922
      %v3924 = vrot.slane %v3352, %v3923
      %v3925 = vsel %vm3594, %v3924, %v3920
      %v3926 = vlaneseq
      %v3927 = vshrl.u32 %v3926, 7
      %v3928 = vsub.s32 %v3596, %v3927
      %v3929 = vrot.slane %v3353, %v3928
      %v3930 = vsel %vm3601, %v3929, %v3925
      %v3931 = vlaneseq
      %v3932 = vshrl.u32 %v3931, 7
      %v3933 = vsub.s32 %v3603, %v3932
      %v3934 = vrot.slane %v3354, %v3933
      %v3935 = vsel %vm3608, %v3934, %v3930
      %v3936 = vlaneseq
      %v3937 = vshrl.u32 %v3936, 7
      %v3938 = vsub.s32 %v3610, %v3937
      %v3939 = vrot.slane %v3355, %v3938
      %v3940 = vsel %vm3615, %v3939, %v3935
      %v3941 = vlaneseq
      %v3942 = vshrl.u32 %v3941, 7
      %v3943 = vsub.s32 %v3617, %v3942
      %v3944 = vrot.slane %v3356, %v3943
      %v3945 = vsel %vm3622, %v3944, %v3940
      %v3946 = vlaneseq
      %v3947 = vshrl.u32 %v3946, 7
      %v3948 = vsub.s32 %v3624, %v3947
      %v3949 = vrot.slane %v3357, %v3948
      %v3950 = vsel %vm3629, %v3949, %v3945
      %v3951 = vlaneseq
      %v3952 = vshrl.u32 %v3951, 7
      %v3953 = vsub.s32 %v3631, %v3952
      %v3954 = vrot.slane %v3358, %v3953
      %v3955 = vsel %vm3636, %v3954, %v3950
      %v3956 = vlaneseq
      %v3957 = vshrl.u32 %v3956, 7
      %v3958 = vsub.s32 %v3638, %v3957
      %v3959 = vrot.slane %v3359, %v3958
      %v3960 = vsel %vm3643, %v3959, %v3955
      %v3961 = vlaneseq
      %v3962 = vshrl.u32 %v3961, 7
      %v3963 = vsub.s32 %v1900, %v3962
      %v3964 = vrot.slane %v3360, %v3963
      %v3965 = vlaneseq
      %v3966 = vshrl.u32 %v3965, 7
      %v3967 = vsub.s32 %v3540, %v3966
      %v3968 = vrot.slane %v3361, %v3967
      %v3969 = vsel %vm3545, %v3968, %v3964
      %v3970 = vlaneseq
      %v3971 = vshrl.u32 %v3970, 7
      %v3972 = vsub.s32 %v3547, %v3971
      %v3973 = vrot.slane %v3362, %v3972
      %v3974 = vsel %vm3552, %v3973, %v3969
      %v3975 = vlaneseq
      %v3976 = vshrl.u32 %v3975, 7
      %v3977 = vsub.s32 %v3554, %v3976
      %v3978 = vrot.slane %v3363, %v3977
      %v3979 = vsel %vm3559, %v3978, %v3974
      %v3980 = vlaneseq
      %v3981 = vshrl.u32 %v3980, 7
      %v3982 = vsub.s32 %v3561, %v3981
      %v3983 = vrot.slane %v3364, %v3982
      %v3984 = vsel %vm3566, %v3983, %v3979
      %v3985 = vlaneseq
      %v3986 = vshrl.u32 %v3985, 7
      %v3987 = vsub.s32 %v3568, %v3986
      %v3988 = vrot.slane %v3365, %v3987
      %v3989 = vsel %vm3573, %v3988, %v3984
      %v3990 = vlaneseq
      %v3991 = vshrl.u32 %v3990, 7
      %v3992 = vsub.s32 %v3575, %v3991
      %v3993 = vrot.slane %v3366, %v3992
      %v3994 = vsel %vm3580, %v3993, %v3989
      %v3995 = vlaneseq
      %v3996 = vshrl.u32 %v3995, 7
      %v3997 = vsub.s32 %v3582, %v3996
      %v3998 = vrot.slane %v3367, %v3997
      %v3999 = vsel %vm3587, %v3998, %v3994
      %v4000 = vlaneseq
      %v4001 = vshrl.u32 %v4000, 7
      %v4002 = vsub.s32 %v3589, %v4001
      %v4003 = vrot.slane %v3368, %v4002
      %v4004 = vsel %vm3594, %v4003, %v3999
      %v4005 = vlaneseq
      %v4006 = vshrl.u32 %v4005, 7
      %v4007 = vsub.s32 %v3596, %v4006
      %v4008 = vrot.slane %v3369, %v4007
      %v4009 = vsel %vm3601, %v4008, %v4004
      %v4010 = vlaneseq
      %v4011 = vshrl.u32 %v4010, 7
      %v4012 = vsub.s32 %v3603, %v4011
      %v4013 = vrot.slane %v3370, %v4012
      %v4014 = vsel %vm3608, %v4013, %v4009
      %v4015 = vlaneseq
      %v4016 = vshrl.u32 %v4015, 7
      %v4017 = vsub.s32 %v3610, %v4016
      %v4018 = vrot.slane %v3371, %v4017
      %v4019 = vsel %vm3615, %v4018, %v4014
      %v4020 = vlaneseq
      %v4021 = vshrl.u32 %v4020, 7
      %v4022 = vsub.s32 %v3617, %v4021
      %v4023 = vrot.slane %v3372, %v4022
      %v4024 = vsel %vm3622, %v4023, %v4019
      %v4025 = vlaneseq
      %v4026 = vshrl.u32 %v4025, 7
      %v4027 = vsub.s32 %v3624, %v4026
      %v4028 = vrot.slane %v3373, %v4027
      %v4029 = vsel %vm3629, %v4028, %v4024
      %v4030 = vlaneseq
      %v4031 = vshrl.u32 %v4030, 7
      %v4032 = vsub.s32 %v3631, %v4031
      %v4033 = vrot.slane %v3374, %v4032
      %v4034 = vsel %vm3636, %v4033, %v4029
      %v4035 = vlaneseq
      %v4036 = vshrl.u32 %v4035, 7
      %v4037 = vsub.s32 %v3638, %v4036
      %v4038 = vrot.slane %v3375, %v4037
      %v4039 = vsel %vm3643, %v4038, %v4034
      %v4040 = vlaneseq
      %v4041 = vshrl.u32 %v4040, 7
      %v4042 = vsub.s32 %v1900, %v4041
      %v4043 = vrot.slane %v3376, %v4042
      %v4044 = vlaneseq
      %v4045 = vshrl.u32 %v4044, 7
      %v4046 = vsub.s32 %v3540, %v4045
      %v4047 = vrot.slane %v3377, %v4046
      %v4048 = vsel %vm3545, %v4047, %v4043
      %v4049 = vlaneseq
      %v4050 = vshrl.u32 %v4049, 7
      %v4051 = vsub.s32 %v3547, %v4050
      %v4052 = vrot.slane %v3378, %v4051
      %v4053 = vsel %vm3552, %v4052, %v4048
      %v4054 = vlaneseq
      %v4055 = vshrl.u32 %v4054, 7
      %v4056 = vsub.s32 %v3554, %v4055
      %v4057 = vrot.slane %v3379, %v4056
      %v4058 = vsel %vm3559, %v4057, %v4053
      %v4059 = vlaneseq
      %v4060 = vshrl.u32 %v4059, 7
      %v4061 = vsub.s32 %v3561, %v4060
      %v4062 = vrot.slane %v3380, %v4061
      %v4063 = vsel %vm3566, %v4062, %v4058
      %v4064 = vlaneseq
      %v4065 = vshrl.u32 %v4064, 7
      %v4066 = vsub.s32 %v3568, %v4065
      %v4067 = vrot.slane %v3381, %v4066
      %v4068 = vsel %vm3573, %v4067, %v4063
      %v4069 = vlaneseq
      %v4070 = vshrl.u32 %v4069, 7
      %v4071 = vsub.s32 %v3575, %v4070
      %v4072 = vrot.slane %v3382, %v4071
      %v4073 = vsel %vm3580, %v4072, %v4068
      %v4074 = vlaneseq
      %v4075 = vshrl.u32 %v4074, 7
      %v4076 = vsub.s32 %v3582, %v4075
      %v4077 = vrot.slane %v3383, %v4076
      %v4078 = vsel %vm3587, %v4077, %v4073
      %v4079 = vlaneseq
      %v4080 = vshrl.u32 %v4079, 7
      %v4081 = vsub.s32 %v3589, %v4080
      %v4082 = vrot.slane %v3384, %v4081
      %v4083 = vsel %vm3594, %v4082, %v4078
      %v4084 = vlaneseq
      %v4085 = vshrl.u32 %v4084, 7
      %v4086 = vsub.s32 %v3596, %v4085
      %v4087 = vrot.slane %v3385, %v4086
      %v4088 = vsel %vm3601, %v4087, %v4083
      %v4089 = vlaneseq
      %v4090 = vshrl.u32 %v4089, 7
      %v4091 = vsub.s32 %v3603, %v4090
      %v4092 = vrot.slane %v3386, %v4091
      %v4093 = vsel %vm3608, %v4092, %v4088
      %v4094 = vlaneseq
      %v4095 = vshrl.u32 %v4094, 7
      %v4096 = vsub.s32 %v3610, %v4095
      %v4097 = vrot.slane %v3387, %v4096
      %v4098 = vsel %vm3615, %v4097, %v4093
      %v4099 = vlaneseq
      %v4100 = vshrl.u32 %v4099, 7
      %v4101 = vsub.s32 %v3617, %v4100
      %v4102 = vrot.slane %v3388, %v4101
      %v4103 = vsel %vm3622, %v4102, %v4098
      %v4104 = vlaneseq
      %v4105 = vshrl.u32 %v4104, 7
      %v4106 = vsub.s32 %v3624, %v4105
      %v4107 = vrot.slane %v3389, %v4106
      %v4108 = vsel %vm3629, %v4107, %v4103
      %v4109 = vlaneseq
      %v4110 = vshrl.u32 %v4109, 7
      %v4111 = vsub.s32 %v3631, %v4110
      %v4112 = vrot.slane %v3390, %v4111
      %v4113 = vsel %vm3636, %v4112, %v4108
      %v4114 = vlaneseq
      %v4115 = vshrl.u32 %v4114, 7
      %v4116 = vsub.s32 %v3638, %v4115
      %v4117 = vrot.slane %v3391, %v4116
      %v4118 = vsel %vm3643, %v4117, %v4113
      %v4119 = vlaneseq
      %v4120 = vshrl.u32 %v4119, 7
      %v4121 = vsub.s32 %v1900, %v4120
      %v4122 = vrot.slane %v3392, %v4121
      %v4123 = vlaneseq
      %v4124 = vshrl.u32 %v4123, 7
      %v4125 = vsub.s32 %v3540, %v4124
      %v4126 = vrot.slane %v3393, %v4125
      %v4127 = vsel %vm3545, %v4126, %v4122
      %v4128 = vlaneseq
      %v4129 = vshrl.u32 %v4128, 7
      %v4130 = vsub.s32 %v3547, %v4129
      %v4131 = vrot.slane %v3394, %v4130
      %v4132 = vsel %vm3552, %v4131, %v4127
      %v4133 = vlaneseq
      %v4134 = vshrl.u32 %v4133, 7
      %v4135 = vsub.s32 %v3554, %v4134
      %v4136 = vrot.slane %v3395, %v4135
      %v4137 = vsel %vm3559, %v4136, %v4132
      %v4138 = vlaneseq
      %v4139 = vshrl.u32 %v4138, 7
      %v4140 = vsub.s32 %v3561, %v4139
      %v4141 = vrot.slane %v3396, %v4140
      %v4142 = vsel %vm3566, %v4141, %v4137
      %v4143 = vlaneseq
      %v4144 = vshrl.u32 %v4143, 7
      %v4145 = vsub.s32 %v3568, %v4144
      %v4146 = vrot.slane %v3397, %v4145
      %v4147 = vsel %vm3573, %v4146, %v4142
      %v4148 = vlaneseq
      %v4149 = vshrl.u32 %v4148, 7
      %v4150 = vsub.s32 %v3575, %v4149
      %v4151 = vrot.slane %v3398, %v4150
      %v4152 = vsel %vm3580, %v4151, %v4147
      %v4153 = vlaneseq
      %v4154 = vshrl.u32 %v4153, 7
      %v4155 = vsub.s32 %v3582, %v4154
      %v4156 = vrot.slane %v3399, %v4155
      %v4157 = vsel %vm3587, %v4156, %v4152
      %v4158 = vlaneseq
      %v4159 = vshrl.u32 %v4158, 7
      %v4160 = vsub.s32 %v3589, %v4159
      %v4161 = vrot.slane %v3400, %v4160
      %v4162 = vsel %vm3594, %v4161, %v4157
      %v4163 = vlaneseq
      %v4164 = vshrl.u32 %v4163, 7
      %v4165 = vsub.s32 %v3596, %v4164
      %v4166 = vrot.slane %v3401, %v4165
      %v4167 = vsel %vm3601, %v4166, %v4162
      %v4168 = vlaneseq
      %v4169 = vshrl.u32 %v4168, 7
      %v4170 = vsub.s32 %v3603, %v4169
      %v4171 = vrot.slane %v3402, %v4170
      %v4172 = vsel %vm3608, %v4171, %v4167
      %v4173 = vlaneseq
      %v4174 = vshrl.u32 %v4173, 7
      %v4175 = vsub.s32 %v3610, %v4174
      %v4176 = vrot.slane %v3403, %v4175
      %v4177 = vsel %vm3615, %v4176, %v4172
      %v4178 = vlaneseq
      %v4179 = vshrl.u32 %v4178, 7
      %v4180 = vsub.s32 %v3617, %v4179
      %v4181 = vrot.slane %v3404, %v4180
      %v4182 = vsel %vm3622, %v4181, %v4177
      %v4183 = vlaneseq
      %v4184 = vshrl.u32 %v4183, 7
      %v4185 = vsub.s32 %v3624, %v4184
      %v4186 = vrot.slane %v3405, %v4185
      %v4187 = vsel %vm3629, %v4186, %v4182
      %v4188 = vlaneseq
      %v4189 = vshrl.u32 %v4188, 7
      %v4190 = vsub.s32 %v3631, %v4189
      %v4191 = vrot.slane %v3406, %v4190
      %v4192 = vsel %vm3636, %v4191, %v4187
      %v4193 = vlaneseq
      %v4194 = vshrl.u32 %v4193, 7
      %v4195 = vsub.s32 %v3638, %v4194
      %v4196 = vrot.slane %v3407, %v4195
      %v4197 = vsel %vm3643, %v4196, %v4192
      %v4198 = vsel %vm634, %v3723, %v3644
      %v4199 = vsel %vm636, %v3802, %v4198
      %v4200 = vsel %vm638, %v3881, %v4199
      %v4201 = vsel %vm640, %v3960, %v4200
      %v4202 = vsel %vm642, %v4039, %v4201
      %v4203 = vsel %vm644, %v4118, %v4202
      %v4204 = vsel %vm646, %v4197, %v4203
      %4206 = vmax.xlane.f32.xlu0 %v4204
      %v4207 = vpop.xlane.xlu0 %4206
      %v4209 = vlaneseq
      %v4210 = vshrl.u32 %v4209, 7
      %v4211 = vsub.s32 0, %v4210
      %v4212 = vrot.slane %v4207, %v4211
      %v4213 = vlaneseq
      %v4214 = vshrl.u32 %v4213, 7
      %v4215 = vsub.s32 1, %v4214
      %v4216 = vrot.slane %v4207, %v4215
      %v4217 = vlaneseq
      %v4218 = vshrl.u32 %v4217, 7
      %v4219 = vsub.s32 2, %v4218
      %v4220 = vrot.slane %v4207, %v4219
      %v4221 = vlaneseq
      %v4222 = vshrl.u32 %v4221, 7
      %v4223 = vsub.s32 3, %v4222
      %v4224 = vrot.slane %v4207, %v4223
      %v4225 = vlaneseq
      %v4226 = vshrl.u32 %v4225, 7
      %v4227 = vsub.s32 4, %v4226
      %v4228 = vrot.slane %v4207, %v4227
      %v4229 = vlaneseq
      %v4230 = vshrl.u32 %v4229, 7
      %v4231 = vsub.s32 5, %v4230
      %v4232 = vrot.slane %v4207, %v4231
      %v4233 = vlaneseq
      %v4234 = vshrl.u32 %v4233, 7
      %v4235 = vsub.s32 6, %v4234
      %v4236 = vrot.slane %v4207, %v4235
      %v4237 = vlaneseq
      %v4238 = vshrl.u32 %v4237, 7
      %v4239 = vsub.s32 7, %v4238
      %v4240 = vrot.slane %v4207, %v4239
      %v4249 = vsub.f32 %v3280, %v4212
      %v4250 = vsub.f32 %v3281, %v4212
      %v4251 = vsub.f32 %v3282, %v4212
      %v4252 = vsub.f32 %v3283, %v4212
      %v4253 = vsub.f32 %v3284, %v4212
      %v4254 = vsub.f32 %v3285, %v4212
      %v4255 = vsub.f32 %v3286, %v4212
      %v4256 = vsub.f32 %v3287, %v4212
      %v4257 = vsub.f32 %v3288, %v4212
      %v4258 = vsub.f32 %v3289, %v4212
      %v4259 = vsub.f32 %v3290, %v4212
      %v4260 = vsub.f32 %v3291, %v4212
      %v4261 = vsub.f32 %v3292, %v4212
      %v4262 = vsub.f32 %v3293, %v4212
      %v4263 = vsub.f32 %v3294, %v4212
      %v4264 = vsub.f32 %v3295, %v4212
      %v4265 = vsub.f32 %v3296, %v4216
      %v4266 = vsub.f32 %v3297, %v4216
      %v4267 = vsub.f32 %v3298, %v4216
      %v4268 = vsub.f32 %v3299, %v4216
      %v4269 = vsub.f32 %v3300, %v4216
      %v4270 = vsub.f32 %v3301, %v4216
      %v4271 = vsub.f32 %v3302, %v4216
      %v4272 = vsub.f32 %v3303, %v4216
      %v4273 = vsub.f32 %v3304, %v4216
      %v4274 = vsub.f32 %v3305, %v4216
      %v4275 = vsub.f32 %v3306, %v4216
      %v4276 = vsub.f32 %v3307, %v4216
      %v4277 = vsub.f32 %v3308, %v4216
      %v4278 = vsub.f32 %v3309, %v4216
      %v4279 = vsub.f32 %v3310, %v4216
      %v4280 = vsub.f32 %v3311, %v4216
      %v4281 = vsub.f32 %v3312, %v4220
      %v4282 = vsub.f32 %v3313, %v4220
      %v4283 = vsub.f32 %v3314, %v4220
      %v4284 = vsub.f32 %v3315, %v4220
      %v4285 = vsub.f32 %v3316, %v4220
      %v4286 = vsub.f32 %v3317, %v4220
      %v4287 = vsub.f32 %v3318, %v4220
      %v4288 = vsub.f32 %v3319, %v4220
      %v4289 = vsub.f32 %v3320, %v4220
      %v4290 = vsub.f32 %v3321, %v4220
      %v4291 = vsub.f32 %v3322, %v4220
      %v4292 = vsub.f32 %v3323, %v4220
      %v4293 = vsub.f32 %v3324, %v4220
      %v4294 = vsub.f32 %v3325, %v4220
      %v4295 = vsub.f32 %v3326, %v4220
      %v4296 = vsub.f32 %v3327, %v4220
      %v4297 = vsub.f32 %v3328, %v4224
      %v4298 = vsub.f32 %v3329, %v4224
      %v4299 = vsub.f32 %v3330, %v4224
      %v4300 = vsub.f32 %v3331, %v4224
      %v4301 = vsub.f32 %v3332, %v4224
      %v4302 = vsub.f32 %v3333, %v4224
      %v4303 = vsub.f32 %v3334, %v4224
      %v4304 = vsub.f32 %v3335, %v4224
      %v4305 = vsub.f32 %v3336, %v4224
      %v4306 = vsub.f32 %v3337, %v4224
      %v4307 = vsub.f32 %v3338, %v4224
      %v4308 = vsub.f32 %v3339, %v4224
      %v4309 = vsub.f32 %v3340, %v4224
      %v4310 = vsub.f32 %v3341, %v4224
      %v4311 = vsub.f32 %v3342, %v4224
      %v4312 = vsub.f32 %v3343, %v4224
      %v4313 = vsub.f32 %v3344, %v4228
      %v4314 = vsub.f32 %v3345, %v4228
      %v4315 = vsub.f32 %v3346, %v4228
      %v4316 = vsub.f32 %v3347, %v4228
      %v4317 = vsub.f32 %v3348, %v4228
      %v4318 = vsub.f32 %v3349, %v4228
      %v4319 = vsub.f32 %v3350, %v4228
      %v4320 = vsub.f32 %v3351, %v4228
      %v4321 = vsub.f32 %v3352, %v4228
      %v4322 = vsub.f32 %v3353, %v4228
      %v4323 = vsub.f32 %v3354, %v4228
      %v4324 = vsub.f32 %v3355, %v4228
      %v4325 = vsub.f32 %v3356, %v4228
      %v4326 = vsub.f32 %v3357, %v4228
      %v4327 = vsub.f32 %v3358, %v4228
      %v4328 = vsub.f32 %v3359, %v4228
      %v4329 = vsub.f32 %v3360, %v4232
      %v4330 = vsub.f32 %v3361, %v4232
      %v4331 = vsub.f32 %v3362, %v4232
      %v4332 = vsub.f32 %v3363, %v4232
      %v4333 = vsub.f32 %v3364, %v4232
      %v4334 = vsub.f32 %v3365, %v4232
      %v4335 = vsub.f32 %v3366, %v4232
      %v4336 = vsub.f32 %v3367, %v4232
      %v4337 = vsub.f32 %v3368, %v4232
      %v4338 = vsub.f32 %v3369, %v4232
      %v4339 = vsub.f32 %v3370, %v4232
      %v4340 = vsub.f32 %v3371, %v4232
      %v4341 = vsub.f32 %v3372, %v4232
      %v4342 = vsub.f32 %v3373, %v4232
      %v4343 = vsub.f32 %v3374, %v4232
      %v4344 = vsub.f32 %v3375, %v4232
      %v4345 = vsub.f32 %v3376, %v4236
      %v4346 = vsub.f32 %v3377, %v4236
      %v4347 = vsub.f32 %v3378, %v4236
      %v4348 = vsub.f32 %v3379, %v4236
      %v4349 = vsub.f32 %v3380, %v4236
      %v4350 = vsub.f32 %v3381, %v4236
      %v4351 = vsub.f32 %v3382, %v4236
      %v4352 = vsub.f32 %v3383, %v4236
      %v4353 = vsub.f32 %v3384, %v4236
      %v4354 = vsub.f32 %v3385, %v4236
      %v4355 = vsub.f32 %v3386, %v4236
      %v4356 = vsub.f32 %v3387, %v4236
      %v4357 = vsub.f32 %v3388, %v4236
      %v4358 = vsub.f32 %v3389, %v4236
      %v4359 = vsub.f32 %v3390, %v4236
      %v4360 = vsub.f32 %v3391, %v4236
      %v4361 = vsub.f32 %v3392, %v4240
      %v4362 = vsub.f32 %v3393, %v4240
      %v4363 = vsub.f32 %v3394, %v4240
      %v4364 = vsub.f32 %v3395, %v4240
      %v4365 = vsub.f32 %v3396, %v4240
      %v4366 = vsub.f32 %v3397, %v4240
      %v4367 = vsub.f32 %v3398, %v4240
      %v4368 = vsub.f32 %v3399, %v4240
      %v4369 = vsub.f32 %v3400, %v4240
      %v4370 = vsub.f32 %v3401, %v4240
      %v4371 = vsub.f32 %v3402, %v4240
      %v4372 = vsub.f32 %v3403, %v4240
      %v4373 = vsub.f32 %v3404, %v4240
      %v4374 = vsub.f32 %v3405, %v4240
      %v4375 = vsub.f32 %v3406, %v4240
      %v4376 = vsub.f32 %v3407, %v4240
      %v4377 = vmul.f32 %v4249, 1.442695
      %v4378 = vpow.pop %v4377
      %v4379 = vmul.f32 %v4250, 1.442695
      %v4380 = vpow.pop %v4379
      %v4381 = vmul.f32 %v4251, 1.442695
      %v4382 = vpow.pop %v4381
      %v4383 = vmul.f32 %v4252, 1.442695
      %v4384 = vpow.pop %v4383
      %v4385 = vmul.f32 %v4253, 1.442695
      %v4386 = vpow.pop %v4385
      %v4387 = vmul.f32 %v4254, 1.442695
      %v4388 = vpow.pop %v4387
      %v4389 = vmul.f32 %v4255, 1.442695
      %v4390 = vpow.pop %v4389
      %v4391 = vmul.f32 %v4256, 1.442695
      %v4392 = vpow.pop %v4391
      %v4393 = vmul.f32 %v4257, 1.442695
      %v4394 = vpow.pop %v4393
      %v4395 = vmul.f32 %v4258, 1.442695
      %v4396 = vpow.pop %v4395
      %v4397 = vmul.f32 %v4259, 1.442695
      %v4398 = vpow.pop %v4397
      %v4399 = vmul.f32 %v4260, 1.442695
      %v4400 = vpow.pop %v4399
      %v4401 = vmul.f32 %v4261, 1.442695
      %v4402 = vpow.pop %v4401
      %v4403 = vmul.f32 %v4262, 1.442695
      %v4404 = vpow.pop %v4403
      %v4405 = vmul.f32 %v4263, 1.442695
      %v4406 = vpow.pop %v4405
      %v4407 = vmul.f32 %v4264, 1.442695
      %v4408 = vpow.pop %v4407
      %v4409 = vmul.f32 %v4265, 1.442695
      %v4410 = vpow.pop %v4409
      %v4411 = vmul.f32 %v4266, 1.442695
      %v4412 = vpow.pop %v4411
      %v4413 = vmul.f32 %v4267, 1.442695
      %v4414 = vpow.pop %v4413
      %v4415 = vmul.f32 %v4268, 1.442695
      %v4416 = vpow.pop %v4415
      %v4417 = vmul.f32 %v4269, 1.442695
      %v4418 = vpow.pop %v4417
      %v4419 = vmul.f32 %v4270, 1.442695
      %v4420 = vpow.pop %v4419
      %v4421 = vmul.f32 %v4271, 1.442695
      %v4422 = vpow.pop %v4421
      %v4423 = vmul.f32 %v4272, 1.442695
      %v4424 = vpow.pop %v4423
      %v4425 = vmul.f32 %v4273, 1.442695
      %v4426 = vpow.pop %v4425
      %v4427 = vmul.f32 %v4274, 1.442695
      %v4428 = vpow.pop %v4427
      %v4429 = vmul.f32 %v4275, 1.442695
      %v4430 = vpow.pop %v4429
      %v4431 = vmul.f32 %v4276, 1.442695
      %v4432 = vpow.pop %v4431
      %v4433 = vmul.f32 %v4277, 1.442695
      %v4434 = vpow.pop %v4433
      %v4435 = vmul.f32 %v4278, 1.442695
      %v4436 = vpow.pop %v4435
      %v4437 = vmul.f32 %v4279, 1.442695
      %v4438 = vpow.pop %v4437
      %v4439 = vmul.f32 %v4280, 1.442695
      %v4440 = vpow.pop %v4439
      %v4441 = vmul.f32 %v4281, 1.442695
      %v4442 = vpow.pop %v4441
      %v4443 = vmul.f32 %v4282, 1.442695
      %v4444 = vpow.pop %v4443
      %v4445 = vmul.f32 %v4283, 1.442695
      %v4446 = vpow.pop %v4445
      %v4447 = vmul.f32 %v4284, 1.442695
      %v4448 = vpow.pop %v4447
      %v4449 = vmul.f32 %v4285, 1.442695
      %v4450 = vpow.pop %v4449
      %v4451 = vmul.f32 %v4286, 1.442695
      %v4452 = vpow.pop %v4451
      %v4453 = vmul.f32 %v4287, 1.442695
      %v4454 = vpow.pop %v4453
      %v4455 = vmul.f32 %v4288, 1.442695
      %v4456 = vpow.pop %v4455
      %v4457 = vmul.f32 %v4289, 1.442695
      %v4458 = vpow.pop %v4457
      %v4459 = vmul.f32 %v4290, 1.442695
      %v4460 = vpow.pop %v4459
      %v4461 = vmul.f32 %v4291, 1.442695
      %v4462 = vpow.pop %v4461
      %v4463 = vmul.f32 %v4292, 1.442695
      %v4464 = vpow.pop %v4463
      %v4465 = vmul.f32 %v4293, 1.442695
      %v4466 = vpow.pop %v4465
      %v4467 = vmul.f32 %v4294, 1.442695
      %v4468 = vpow.pop %v4467
      %v4469 = vmul.f32 %v4295, 1.442695
      %v4470 = vpow.pop %v4469
      %v4471 = vmul.f32 %v4296, 1.442695
      %v4472 = vpow.pop %v4471
      %v4473 = vmul.f32 %v4297, 1.442695
      %v4474 = vpow.pop %v4473
      %v4475 = vmul.f32 %v4298, 1.442695
      %v4476 = vpow.pop %v4475
      %v4477 = vmul.f32 %v4299, 1.442695
      %v4478 = vpow.pop %v4477
      %v4479 = vmul.f32 %v4300, 1.442695
      %v4480 = vpow.pop %v4479
      %v4481 = vmul.f32 %v4301, 1.442695
      %v4482 = vpow.pop %v4481
      %v4483 = vmul.f32 %v4302, 1.442695
      %v4484 = vpow.pop %v4483
      %v4485 = vmul.f32 %v4303, 1.442695
      %v4486 = vpow.pop %v4485
      %v4487 = vmul.f32 %v4304, 1.442695
      %v4488 = vpow.pop %v4487
      %v4489 = vmul.f32 %v4305, 1.442695
      %v4490 = vpow.pop %v4489
      %v4491 = vmul.f32 %v4306, 1.442695
      %v4492 = vpow.pop %v4491
      %v4493 = vmul.f32 %v4307, 1.442695
      %v4494 = vpow.pop %v4493
      %v4495 = vmul.f32 %v4308, 1.442695
      %v4496 = vpow.pop %v4495
      %v4497 = vmul.f32 %v4309, 1.442695
      %v4498 = vpow.pop %v4497
      %v4499 = vmul.f32 %v4310, 1.442695
      %v4500 = vpow.pop %v4499
      %v4501 = vmul.f32 %v4311, 1.442695
      %v4502 = vpow.pop %v4501
      %v4503 = vmul.f32 %v4312, 1.442695
      %v4504 = vpow.pop %v4503
      %v4505 = vmul.f32 %v4313, 1.442695
      %v4506 = vpow.pop %v4505
      %v4507 = vmul.f32 %v4314, 1.442695
      %v4508 = vpow.pop %v4507
      %v4509 = vmul.f32 %v4315, 1.442695
      %v4510 = vpow.pop %v4509
      %v4511 = vmul.f32 %v4316, 1.442695
      %v4512 = vpow.pop %v4511
      %v4513 = vmul.f32 %v4317, 1.442695
      %v4514 = vpow.pop %v4513
      %v4515 = vmul.f32 %v4318, 1.442695
      %v4516 = vpow.pop %v4515
      %v4517 = vmul.f32 %v4319, 1.442695
      %v4518 = vpow.pop %v4517
      %v4519 = vmul.f32 %v4320, 1.442695
      %v4520 = vpow.pop %v4519
      %v4521 = vmul.f32 %v4321, 1.442695
      %v4522 = vpow.pop %v4521
      %v4523 = vmul.f32 %v4322, 1.442695
      %v4524 = vpow.pop %v4523
      %v4525 = vmul.f32 %v4323, 1.442695
      %v4526 = vpow.pop %v4525
      %v4527 = vmul.f32 %v4324, 1.442695
      %v4528 = vpow.pop %v4527
      %v4529 = vmul.f32 %v4325, 1.442695
      %v4530 = vpow.pop %v4529
      %v4531 = vmul.f32 %v4326, 1.442695
      %v4532 = vpow.pop %v4531
      %v4533 = vmul.f32 %v4327, 1.442695
      %v4534 = vpow.pop %v4533
      %v4535 = vmul.f32 %v4328, 1.442695
      %v4536 = vpow.pop %v4535
      %v4537 = vmul.f32 %v4329, 1.442695
      %v4538 = vpow.pop %v4537
      %v4539 = vmul.f32 %v4330, 1.442695
      %v4540 = vpow.pop %v4539
      %v4541 = vmul.f32 %v4331, 1.442695
      %v4542 = vpow.pop %v4541
      %v4543 = vmul.f32 %v4332, 1.442695
      %v4544 = vpow.pop %v4543
      %v4545 = vmul.f32 %v4333, 1.442695
      %v4546 = vpow.pop %v4545
      %v4547 = vmul.f32 %v4334, 1.442695
      %v4548 = vpow.pop %v4547
      %v4549 = vmul.f32 %v4335, 1.442695
      %v4550 = vpow.pop %v4549
      %v4551 = vmul.f32 %v4336, 1.442695
      %v4552 = vpow.pop %v4551
      %v4553 = vmul.f32 %v4337, 1.442695
      %v4554 = vpow.pop %v4553
      %v4555 = vmul.f32 %v4338, 1.442695
      %v4556 = vpow.pop %v4555
      %v4557 = vmul.f32 %v4339, 1.442695
      %v4558 = vpow.pop %v4557
      %v4559 = vmul.f32 %v4340, 1.442695
      %v4560 = vpow.pop %v4559
      %v4561 = vmul.f32 %v4341, 1.442695
      %v4562 = vpow.pop %v4561
      %v4563 = vmul.f32 %v4342, 1.442695
      %v4564 = vpow.pop %v4563
      %v4565 = vmul.f32 %v4343, 1.442695
      %v4566 = vpow.pop %v4565
      %v4567 = vmul.f32 %v4344, 1.442695
      %v4568 = vpow.pop %v4567
      %v4569 = vmul.f32 %v4345, 1.442695
      %v4570 = vpow.pop %v4569
      %v4571 = vmul.f32 %v4346, 1.442695
      %v4572 = vpow.pop %v4571
      %v4573 = vmul.f32 %v4347, 1.442695
      %v4574 = vpow.pop %v4573
      %v4575 = vmul.f32 %v4348, 1.442695
      %v4576 = vpow.pop %v4575
      %v4577 = vmul.f32 %v4349, 1.442695
      %v4578 = vpow.pop %v4577
      %v4579 = vmul.f32 %v4350, 1.442695
      %v4580 = vpow.pop %v4579
      %v4581 = vmul.f32 %v4351, 1.442695
      %v4582 = vpow.pop %v4581
      %v4583 = vmul.f32 %v4352, 1.442695
      %v4584 = vpow.pop %v4583
      %v4585 = vmul.f32 %v4353, 1.442695
      %v4586 = vpow.pop %v4585
      %v4587 = vmul.f32 %v4354, 1.442695
      %v4588 = vpow.pop %v4587
      %v4589 = vmul.f32 %v4355, 1.442695
      %v4590 = vpow.pop %v4589
      %v4591 = vmul.f32 %v4356, 1.442695
      %v4592 = vpow.pop %v4591
      %v4593 = vmul.f32 %v4357, 1.442695
      %v4594 = vpow.pop %v4593
      %v4595 = vmul.f32 %v4358, 1.442695
      %v4596 = vpow.pop %v4595
      %v4597 = vmul.f32 %v4359, 1.442695
      %v4598 = vpow.pop %v4597
      %v4599 = vmul.f32 %v4360, 1.442695
      %v4600 = vpow.pop %v4599
      %v4601 = vmul.f32 %v4361, 1.442695
      %v4602 = vpow.pop %v4601
      %v4603 = vmul.f32 %v4362, 1.442695
      %v4604 = vpow.pop %v4603
      %v4605 = vmul.f32 %v4363, 1.442695
      %v4606 = vpow.pop %v4605
      %v4607 = vmul.f32 %v4364, 1.442695
      %v4608 = vpow.pop %v4607
      %v4609 = vmul.f32 %v4365, 1.442695
      %v4610 = vpow.pop %v4609
      %v4611 = vmul.f32 %v4366, 1.442695
      %v4612 = vpow.pop %v4611
      %v4613 = vmul.f32 %v4367, 1.442695
      %v4614 = vpow.pop %v4613
      %v4615 = vmul.f32 %v4368, 1.442695
      %v4616 = vpow.pop %v4615
      %v4617 = vmul.f32 %v4369, 1.442695
      %v4618 = vpow.pop %v4617
      %v4619 = vmul.f32 %v4370, 1.442695
      %v4620 = vpow.pop %v4619
      %v4621 = vmul.f32 %v4371, 1.442695
      %v4622 = vpow.pop %v4621
      %v4623 = vmul.f32 %v4372, 1.442695
      %v4624 = vpow.pop %v4623
      %v4625 = vmul.f32 %v4373, 1.442695
      %v4626 = vpow.pop %v4625
      %v4627 = vmul.f32 %v4374, 1.442695
      %v4628 = vpow.pop %v4627
      %v4629 = vmul.f32 %v4375, 1.442695
      %v4630 = vpow.pop %v4629
      %v4631 = vmul.f32 %v4376, 1.442695
      %v4632 = vpow.pop %v4631
      %4761 = vset.pattern.permute.xlu0 0
      %4762 = vperm.xlu0 %4761, %v4378
      %v4763 = vpop.permute.xlu0 %4762
      %4764 = vset.pattern.permute.xlu0 0
      %4765 = vperm.xlu0 %4764, %v4380
      %v4766 = vpop.permute.xlu0 %4765
      %4767 = vset.pattern.permute.xlu0 0
      %4768 = vperm.xlu0 %4767, %v4382
      %v4769 = vpop.permute.xlu0 %4768
      %4770 = vset.pattern.permute.xlu0 0
      %4771 = vperm.xlu0 %4770, %v4384
      %v4772 = vpop.permute.xlu0 %4771
      %4773 = vset.pattern.permute.xlu0 0
      %4774 = vperm.xlu0 %4773, %v4386
      %v4775 = vpop.permute.xlu0 %4774
      %4776 = vset.pattern.permute.xlu0 0
      %4777 = vperm.xlu0 %4776, %v4388
      %v4778 = vpop.permute.xlu0 %4777
      %4779 = vset.pattern.permute.xlu0 0
      %4780 = vperm.xlu0 %4779, %v4390
      %v4781 = vpop.permute.xlu0 %4780
      %4782 = vset.pattern.permute.xlu0 0
      %4783 = vperm.xlu0 %4782, %v4392
      %v4784 = vpop.permute.xlu0 %4783
      %4785 = vset.pattern.permute.xlu0 0
      %4786 = vperm.xlu0 %4785, %v4394
      %v4787 = vpop.permute.xlu0 %4786
      %4788 = vset.pattern.permute.xlu0 0
      %4789 = vperm.xlu0 %4788, %v4396
      %v4790 = vpop.permute.xlu0 %4789
      %4791 = vset.pattern.permute.xlu0 0
      %4792 = vperm.xlu0 %4791, %v4398
      %v4793 = vpop.permute.xlu0 %4792
      %4794 = vset.pattern.permute.xlu0 0
      %4795 = vperm.xlu0 %4794, %v4400
      %v4796 = vpop.permute.xlu0 %4795
      %4797 = vset.pattern.permute.xlu0 0
      %4798 = vperm.xlu0 %4797, %v4402
      %v4799 = vpop.permute.xlu0 %4798
      %4800 = vset.pattern.permute.xlu0 0
      %4801 = vperm.xlu0 %4800, %v4404
      %v4802 = vpop.permute.xlu0 %4801
      %4803 = vset.pattern.permute.xlu0 0
      %4804 = vperm.xlu0 %4803, %v4406
      %v4805 = vpop.permute.xlu0 %4804
      %4806 = vset.pattern.permute.xlu0 0
      %4807 = vperm.xlu0 %4806, %v4408
      %v4808 = vpop.permute.xlu0 %4807
      %4809 = vset.pattern.permute.xlu0 0
      %4810 = vperm.xlu0 %4809, %v4410
      %v4811 = vpop.permute.xlu0 %4810
      %4812 = vset.pattern.permute.xlu0 0
      %4813 = vperm.xlu0 %4812, %v4412
      %v4814 = vpop.permute.xlu0 %4813
      %4815 = vset.pattern.permute.xlu0 0
      %4816 = vperm.xlu0 %4815, %v4414
      %v4817 = vpop.permute.xlu0 %4816
      %4818 = vset.pattern.permute.xlu0 0
      %4819 = vperm.xlu0 %4818, %v4416
      %v4820 = vpop.permute.xlu0 %4819
      %4821 = vset.pattern.permute.xlu0 0
      %4822 = vperm.xlu0 %4821, %v4418
      %v4823 = vpop.permute.xlu0 %4822
      %4824 = vset.pattern.permute.xlu0 0
      %4825 = vperm.xlu0 %4824, %v4420
      %v4826 = vpop.permute.xlu0 %4825
      %4827 = vset.pattern.permute.xlu0 0
      %4828 = vperm.xlu0 %4827, %v4422
      %v4829 = vpop.permute.xlu0 %4828
      %4830 = vset.pattern.permute.xlu0 0
      %4831 = vperm.xlu0 %4830, %v4424
      %v4832 = vpop.permute.xlu0 %4831
      %4833 = vset.pattern.permute.xlu0 0
      %4834 = vperm.xlu0 %4833, %v4426
      %v4835 = vpop.permute.xlu0 %4834
      %4836 = vset.pattern.permute.xlu0 0
      %4837 = vperm.xlu0 %4836, %v4428
      %v4838 = vpop.permute.xlu0 %4837
      %4839 = vset.pattern.permute.xlu0 0
      %4840 = vperm.xlu0 %4839, %v4430
      %v4841 = vpop.permute.xlu0 %4840
      %4842 = vset.pattern.permute.xlu0 0
      %4843 = vperm.xlu0 %4842, %v4432
      %v4844 = vpop.permute.xlu0 %4843
      %4845 = vset.pattern.permute.xlu0 0
      %4846 = vperm.xlu0 %4845, %v4434
      %v4847 = vpop.permute.xlu0 %4846
      %4848 = vset.pattern.permute.xlu0 0
      %4849 = vperm.xlu0 %4848, %v4436
      %v4850 = vpop.permute.xlu0 %4849
      %4851 = vset.pattern.permute.xlu0 0
      %4852 = vperm.xlu0 %4851, %v4438
      %v4853 = vpop.permute.xlu0 %4852
      %4854 = vset.pattern.permute.xlu0 0
      %4855 = vperm.xlu0 %4854, %v4440
      %v4856 = vpop.permute.xlu0 %4855
      %4857 = vset.pattern.permute.xlu0 0
      %4858 = vperm.xlu0 %4857, %v4442
      %v4859 = vpop.permute.xlu0 %4858
      %4860 = vset.pattern.permute.xlu0 0
      %4861 = vperm.xlu0 %4860, %v4444
      %v4862 = vpop.permute.xlu0 %4861
      %4863 = vset.pattern.permute.xlu0 0
      %4864 = vperm.xlu0 %4863, %v4446
      %v4865 = vpop.permute.xlu0 %4864
      %4866 = vset.pattern.permute.xlu0 0
      %4867 = vperm.xlu0 %4866, %v4448
      %v4868 = vpop.permute.xlu0 %4867
      %4869 = vset.pattern.permute.xlu0 0
      %4870 = vperm.xlu0 %4869, %v4450
      %v4871 = vpop.permute.xlu0 %4870
      %4872 = vset.pattern.permute.xlu0 0
      %4873 = vperm.xlu0 %4872, %v4452
      %v4874 = vpop.permute.xlu0 %4873
      %4875 = vset.pattern.permute.xlu0 0
      %4876 = vperm.xlu0 %4875, %v4454
      %v4877 = vpop.permute.xlu0 %4876
      %4878 = vset.pattern.permute.xlu0 0
      %4879 = vperm.xlu0 %4878, %v4456
      %v4880 = vpop.permute.xlu0 %4879
      %4881 = vset.pattern.permute.xlu0 0
      %4882 = vperm.xlu0 %4881, %v4458
      %v4883 = vpop.permute.xlu0 %4882
      %4884 = vset.pattern.permute.xlu0 0
      %4885 = vperm.xlu0 %4884, %v4460
      %v4886 = vpop.permute.xlu0 %4885
      %4887 = vset.pattern.permute.xlu0 0
      %4888 = vperm.xlu0 %4887, %v4462
      %v4889 = vpop.permute.xlu0 %4888
      %4890 = vset.pattern.permute.xlu0 0
      %4891 = vperm.xlu0 %4890, %v4464
      %v4892 = vpop.permute.xlu0 %4891
      %4893 = vset.pattern.permute.xlu0 0
      %4894 = vperm.xlu0 %4893, %v4466
      %v4895 = vpop.permute.xlu0 %4894
      %4896 = vset.pattern.permute.xlu0 0
      %4897 = vperm.xlu0 %4896, %v4468
      %v4898 = vpop.permute.xlu0 %4897
      %4899 = vset.pattern.permute.xlu0 0
      %4900 = vperm.xlu0 %4899, %v4470
      %v4901 = vpop.permute.xlu0 %4900
      %4902 = vset.pattern.permute.xlu0 0
      %4903 = vperm.xlu0 %4902, %v4472
      %v4904 = vpop.permute.xlu0 %4903
      %4905 = vset.pattern.permute.xlu0 0
      %4906 = vperm.xlu0 %4905, %v4474
      %v4907 = vpop.permute.xlu0 %4906
      %4908 = vset.pattern.permute.xlu0 0
      %4909 = vperm.xlu0 %4908, %v4476
      %v4910 = vpop.permute.xlu0 %4909
      %4911 = vset.pattern.permute.xlu0 0
      %4912 = vperm.xlu0 %4911, %v4478
      %v4913 = vpop.permute.xlu0 %4912
      %4914 = vset.pattern.permute.xlu0 0
      %4915 = vperm.xlu0 %4914, %v4480
      %v4916 = vpop.permute.xlu0 %4915
      %4917 = vset.pattern.permute.xlu0 0
      %4918 = vperm.xlu0 %4917, %v4482
      %v4919 = vpop.permute.xlu0 %4918
      %4920 = vset.pattern.permute.xlu0 0
      %4921 = vperm.xlu0 %4920, %v4484
      %v4922 = vpop.permute.xlu0 %4921
      %4923 = vset.pattern.permute.xlu0 0
      %4924 = vperm.xlu0 %4923, %v4486
      %v4925 = vpop.permute.xlu0 %4924
      %4926 = vset.pattern.permute.xlu0 0
      %4927 = vperm.xlu0 %4926, %v4488
      %v4928 = vpop.permute.xlu0 %4927
      %4929 = vset.pattern.permute.xlu0 0
      %4930 = vperm.xlu0 %4929, %v4490
      %v4931 = vpop.permute.xlu0 %4930
      %4932 = vset.pattern.permute.xlu0 0
      %4933 = vperm.xlu0 %4932, %v4492
      %v4934 = vpop.permute.xlu0 %4933
      %4935 = vset.pattern.permute.xlu0 0
      %4936 = vperm.xlu0 %4935, %v4494
      %v4937 = vpop.permute.xlu0 %4936
      %4938 = vset.pattern.permute.xlu0 0
      %4939 = vperm.xlu0 %4938, %v4496
      %v4940 = vpop.permute.xlu0 %4939
      %4941 = vset.pattern.permute.xlu0 0
      %4942 = vperm.xlu0 %4941, %v4498
      %v4943 = vpop.permute.xlu0 %4942
      %4944 = vset.pattern.permute.xlu0 0
      %4945 = vperm.xlu0 %4944, %v4500
      %v4946 = vpop.permute.xlu0 %4945
      %4947 = vset.pattern.permute.xlu0 0
      %4948 = vperm.xlu0 %4947, %v4502
      %v4949 = vpop.permute.xlu0 %4948
      %4950 = vset.pattern.permute.xlu0 0
      %4951 = vperm.xlu0 %4950, %v4504
      %v4952 = vpop.permute.xlu0 %4951
      %4953 = vset.pattern.permute.xlu0 0
      %4954 = vperm.xlu0 %4953, %v4506
      %v4955 = vpop.permute.xlu0 %4954
      %4956 = vset.pattern.permute.xlu0 0
      %4957 = vperm.xlu0 %4956, %v4508
      %v4958 = vpop.permute.xlu0 %4957
      %4959 = vset.pattern.permute.xlu0 0
      %4960 = vperm.xlu0 %4959, %v4510
      %v4961 = vpop.permute.xlu0 %4960
      %4962 = vset.pattern.permute.xlu0 0
      %4963 = vperm.xlu0 %4962, %v4512
      %v4964 = vpop.permute.xlu0 %4963
      %4965 = vset.pattern.permute.xlu0 0
      %4966 = vperm.xlu0 %4965, %v4514
      %v4967 = vpop.permute.xlu0 %4966
      %4968 = vset.pattern.permute.xlu0 0
      %4969 = vperm.xlu0 %4968, %v4516
      %v4970 = vpop.permute.xlu0 %4969
      %4971 = vset.pattern.permute.xlu0 0
      %4972 = vperm.xlu0 %4971, %v4518
      %v4973 = vpop.permute.xlu0 %4972
      %4974 = vset.pattern.permute.xlu0 0
      %4975 = vperm.xlu0 %4974, %v4520
      %v4976 = vpop.permute.xlu0 %4975
      %4977 = vset.pattern.permute.xlu0 0
      %4978 = vperm.xlu0 %4977, %v4522
      %v4979 = vpop.permute.xlu0 %4978
      %4980 = vset.pattern.permute.xlu0 0
      %4981 = vperm.xlu0 %4980, %v4524
      %v4982 = vpop.permute.xlu0 %4981
      %4983 = vset.pattern.permute.xlu0 0
      %4984 = vperm.xlu0 %4983, %v4526
      %v4985 = vpop.permute.xlu0 %4984
      %4986 = vset.pattern.permute.xlu0 0
      %4987 = vperm.xlu0 %4986, %v4528
      %v4988 = vpop.permute.xlu0 %4987
      %4989 = vset.pattern.permute.xlu0 0
      %4990 = vperm.xlu0 %4989, %v4530
      %v4991 = vpop.permute.xlu0 %4990
      %4992 = vset.pattern.permute.xlu0 0
      %4993 = vperm.xlu0 %4992, %v4532
      %v4994 = vpop.permute.xlu0 %4993
      %4995 = vset.pattern.permute.xlu0 0
      %4996 = vperm.xlu0 %4995, %v4534
      %v4997 = vpop.permute.xlu0 %4996
      %4998 = vset.pattern.permute.xlu0 0
      %4999 = vperm.xlu0 %4998, %v4536
      %v5000 = vpop.permute.xlu0 %4999
      %5001 = vset.pattern.permute.xlu0 0
      %5002 = vperm.xlu0 %5001, %v4538
      %v5003 = vpop.permute.xlu0 %5002
      %5004 = vset.pattern.permute.xlu0 0
      %5005 = vperm.xlu0 %5004, %v4540
      %v5006 = vpop.permute.xlu0 %5005
      %5007 = vset.pattern.permute.xlu0 0
      %5008 = vperm.xlu0 %5007, %v4542
      %v5009 = vpop.permute.xlu0 %5008
      %5010 = vset.pattern.permute.xlu0 0
      %5011 = vperm.xlu0 %5010, %v4544
      %v5012 = vpop.permute.xlu0 %5011
      %5013 = vset.pattern.permute.xlu0 0
      %5014 = vperm.xlu0 %5013, %v4546
      %v5015 = vpop.permute.xlu0 %5014
      %5016 = vset.pattern.permute.xlu0 0
      %5017 = vperm.xlu0 %5016, %v4548
      %v5018 = vpop.permute.xlu0 %5017
      %5019 = vset.pattern.permute.xlu0 0
      %5020 = vperm.xlu0 %5019, %v4550
      %v5021 = vpop.permute.xlu0 %5020
      %5022 = vset.pattern.permute.xlu0 0
      %5023 = vperm.xlu0 %5022, %v4552
      %v5024 = vpop.permute.xlu0 %5023
      %5025 = vset.pattern.permute.xlu0 0
      %5026 = vperm.xlu0 %5025, %v4554
      %v5027 = vpop.permute.xlu0 %5026
      %5028 = vset.pattern.permute.xlu0 0
      %5029 = vperm.xlu0 %5028, %v4556
      %v5030 = vpop.permute.xlu0 %5029
      %5031 = vset.pattern.permute.xlu0 0
      %5032 = vperm.xlu0 %5031, %v4558
      %v5033 = vpop.permute.xlu0 %5032
      %5034 = vset.pattern.permute.xlu0 0
      %5035 = vperm.xlu0 %5034, %v4560
      %v5036 = vpop.permute.xlu0 %5035
      %5037 = vset.pattern.permute.xlu0 0
      %5038 = vperm.xlu0 %5037, %v4562
      %v5039 = vpop.permute.xlu0 %5038
      %5040 = vset.pattern.permute.xlu0 0
      %5041 = vperm.xlu0 %5040, %v4564
      %v5042 = vpop.permute.xlu0 %5041
      %5043 = vset.pattern.permute.xlu0 0
      %5044 = vperm.xlu0 %5043, %v4566
      %v5045 = vpop.permute.xlu0 %5044
      %5046 = vset.pattern.permute.xlu0 0
      %5047 = vperm.xlu0 %5046, %v4568
      %v5048 = vpop.permute.xlu0 %5047
      %5049 = vset.pattern.permute.xlu0 0
      %5050 = vperm.xlu0 %5049, %v4570
      %v5051 = vpop.permute.xlu0 %5050
      %5052 = vset.pattern.permute.xlu0 0
      %5053 = vperm.xlu0 %5052, %v4572
      %v5054 = vpop.permute.xlu0 %5053
      %5055 = vset.pattern.permute.xlu0 0
      %5056 = vperm.xlu0 %5055, %v4574
      %v5057 = vpop.permute.xlu0 %5056
      %5058 = vset.pattern.permute.xlu0 0
      %5059 = vperm.xlu0 %5058, %v4576
      %v5060 = vpop.permute.xlu0 %5059
      %5061 = vset.pattern.permute.xlu0 0
      %5062 = vperm.xlu0 %5061, %v4578
      %v5063 = vpop.permute.xlu0 %5062
      %5064 = vset.pattern.permute.xlu0 0
      %5065 = vperm.xlu0 %5064, %v4580
      %v5066 = vpop.permute.xlu0 %5065
      %5067 = vset.pattern.permute.xlu0 0
      %5068 = vperm.xlu0 %5067, %v4582
      %v5069 = vpop.permute.xlu0 %5068
      %5070 = vset.pattern.permute.xlu0 0
      %5071 = vperm.xlu0 %5070, %v4584
      %v5072 = vpop.permute.xlu0 %5071
      %5073 = vset.pattern.permute.xlu0 0
      %5074 = vperm.xlu0 %5073, %v4586
      %v5075 = vpop.permute.xlu0 %5074
      %5076 = vset.pattern.permute.xlu0 0
      %5077 = vperm.xlu0 %5076, %v4588
      %v5078 = vpop.permute.xlu0 %5077
      %5079 = vset.pattern.permute.xlu0 0
      %5080 = vperm.xlu0 %5079, %v4590
      %v5081 = vpop.permute.xlu0 %5080
      %5082 = vset.pattern.permute.xlu0 0
      %5083 = vperm.xlu0 %5082, %v4592
      %v5084 = vpop.permute.xlu0 %5083
      %5085 = vset.pattern.permute.xlu0 0
      %5086 = vperm.xlu0 %5085, %v4594
      %v5087 = vpop.permute.xlu0 %5086
      %5088 = vset.pattern.permute.xlu0 0
      %5089 = vperm.xlu0 %5088, %v4596
      %v5090 = vpop.permute.xlu0 %5089
      %5091 = vset.pattern.permute.xlu0 0
      %5092 = vperm.xlu0 %5091, %v4598
      %v5093 = vpop.permute.xlu0 %5092
      %5094 = vset.pattern.permute.xlu0 0
      %5095 = vperm.xlu0 %5094, %v4600
      %v5096 = vpop.permute.xlu0 %5095
      %5097 = vset.pattern.permute.xlu0 0
      %5098 = vperm.xlu0 %5097, %v4602
      %v5099 = vpop.permute.xlu0 %5098
      %5100 = vset.pattern.permute.xlu0 0
      %5101 = vperm.xlu0 %5100, %v4604
      %v5102 = vpop.permute.xlu0 %5101
      %5103 = vset.pattern.permute.xlu0 0
      %5104 = vperm.xlu0 %5103, %v4606
      %v5105 = vpop.permute.xlu0 %5104
      %5106 = vset.pattern.permute.xlu0 0
      %5107 = vperm.xlu0 %5106, %v4608
      %v5108 = vpop.permute.xlu0 %5107
      %5109 = vset.pattern.permute.xlu0 0
      %5110 = vperm.xlu0 %5109, %v4610
      %v5111 = vpop.permute.xlu0 %5110
      %5112 = vset.pattern.permute.xlu0 0
      %5113 = vperm.xlu0 %5112, %v4612
      %v5114 = vpop.permute.xlu0 %5113
      %5115 = vset.pattern.permute.xlu0 0
      %5116 = vperm.xlu0 %5115, %v4614
      %v5117 = vpop.permute.xlu0 %5116
      %5118 = vset.pattern.permute.xlu0 0
      %5119 = vperm.xlu0 %5118, %v4616
      %v5120 = vpop.permute.xlu0 %5119
      %5121 = vset.pattern.permute.xlu0 0
      %5122 = vperm.xlu0 %5121, %v4618
      %v5123 = vpop.permute.xlu0 %5122
      %5124 = vset.pattern.permute.xlu0 0
      %5125 = vperm.xlu0 %5124, %v4620
      %v5126 = vpop.permute.xlu0 %5125
      %5127 = vset.pattern.permute.xlu0 0
      %5128 = vperm.xlu0 %5127, %v4622
      %v5129 = vpop.permute.xlu0 %5128
      %5130 = vset.pattern.permute.xlu0 0
      %5131 = vperm.xlu0 %5130, %v4624
      %v5132 = vpop.permute.xlu0 %5131
      %5133 = vset.pattern.permute.xlu0 0
      %5134 = vperm.xlu0 %5133, %v4626
      %v5135 = vpop.permute.xlu0 %5134
      %5136 = vset.pattern.permute.xlu0 0
      %5137 = vperm.xlu0 %5136, %v4628
      %v5138 = vpop.permute.xlu0 %5137
      %5139 = vset.pattern.permute.xlu0 0
      %5140 = vperm.xlu0 %5139, %v4630
      %v5141 = vpop.permute.xlu0 %5140
      %5142 = vset.pattern.permute.xlu0 0
      %5143 = vperm.xlu0 %5142, %v4632
      %v5144 = vpop.permute.xlu0 %5143
      %v5145 = vlaneseq
      %v5146 = vshrl.u32 %v5145, 7
      %v5147 = vsub.s32 %v1900, %v5146
      %v5148 = vrot.slane %v4763, %v5147
      %v5149 = vlaneseq
      %v5150 = vshrl.u32 %v5149, 7
      %v5151 = vsub.s32 %v3540, %v5150
      %v5152 = vrot.slane %v4766, %v5151
      %v5153 = vsel %vm3545, %v5152, %v5148
      %v5154 = vlaneseq
      %v5155 = vshrl.u32 %v5154, 7
      %v5156 = vsub.s32 %v3547, %v5155
      %v5157 = vrot.slane %v4769, %v5156
      %v5158 = vsel %vm3552, %v5157, %v5153
      %v5159 = vlaneseq
      %v5160 = vshrl.u32 %v5159, 7
      %v5161 = vsub.s32 %v3554, %v5160
      %v5162 = vrot.slane %v4772, %v5161
      %v5163 = vsel %vm3559, %v5162, %v5158
      %v5164 = vlaneseq
      %v5165 = vshrl.u32 %v5164, 7
      %v5166 = vsub.s32 %v3561, %v5165
      %v5167 = vrot.slane %v4775, %v5166
      %v5168 = vsel %vm3566, %v5167, %v5163
      %v5169 = vlaneseq
      %v5170 = vshrl.u32 %v5169, 7
      %v5171 = vsub.s32 %v3568, %v5170
      %v5172 = vrot.slane %v4778, %v5171
      %v5173 = vsel %vm3573, %v5172, %v5168
      %v5174 = vlaneseq
      %v5175 = vshrl.u32 %v5174, 7
      %v5176 = vsub.s32 %v3575, %v5175
      %v5177 = vrot.slane %v4781, %v5176
      %v5178 = vsel %vm3580, %v5177, %v5173
      %v5179 = vlaneseq
      %v5180 = vshrl.u32 %v5179, 7
      %v5181 = vsub.s32 %v3582, %v5180
      %v5182 = vrot.slane %v4784, %v5181
      %v5183 = vsel %vm3587, %v5182, %v5178
      %v5184 = vlaneseq
      %v5185 = vshrl.u32 %v5184, 7
      %v5186 = vsub.s32 %v3589, %v5185
      %v5187 = vrot.slane %v4787, %v5186
      %v5188 = vsel %vm3594, %v5187, %v5183
      %v5189 = vlaneseq
      %v5190 = vshrl.u32 %v5189, 7
      %v5191 = vsub.s32 %v3596, %v5190
      %v5192 = vrot.slane %v4790, %v5191
      %v5193 = vsel %vm3601, %v5192, %v5188
      %v5194 = vlaneseq
      %v5195 = vshrl.u32 %v5194, 7
      %v5196 = vsub.s32 %v3603, %v5195
      %v5197 = vrot.slane %v4793, %v5196
      %v5198 = vsel %vm3608, %v5197, %v5193
      %v5199 = vlaneseq
      %v5200 = vshrl.u32 %v5199, 7
      %v5201 = vsub.s32 %v3610, %v5200
      %v5202 = vrot.slane %v4796, %v5201
      %v5203 = vsel %vm3615, %v5202, %v5198
      %v5204 = vlaneseq
      %v5205 = vshrl.u32 %v5204, 7
      %v5206 = vsub.s32 %v3617, %v5205
      %v5207 = vrot.slane %v4799, %v5206
      %v5208 = vsel %vm3622, %v5207, %v5203
      %v5209 = vlaneseq
      %v5210 = vshrl.u32 %v5209, 7
      %v5211 = vsub.s32 %v3624, %v5210
      %v5212 = vrot.slane %v4802, %v5211
      %v5213 = vsel %vm3629, %v5212, %v5208
      %v5214 = vlaneseq
      %v5215 = vshrl.u32 %v5214, 7
      %v5216 = vsub.s32 %v3631, %v5215
      %v5217 = vrot.slane %v4805, %v5216
      %v5218 = vsel %vm3636, %v5217, %v5213
      %v5219 = vlaneseq
      %v5220 = vshrl.u32 %v5219, 7
      %v5221 = vsub.s32 %v3638, %v5220
      %v5222 = vrot.slane %v4808, %v5221
      %v5223 = vsel %vm3643, %v5222, %v5218
      %v5224 = vlaneseq
      %v5225 = vshrl.u32 %v5224, 7
      %v5226 = vsub.s32 %v1900, %v5225
      %v5227 = vrot.slane %v4811, %v5226
      %v5228 = vlaneseq
      %v5229 = vshrl.u32 %v5228, 7
      %v5230 = vsub.s32 %v3540, %v5229
      %v5231 = vrot.slane %v4814, %v5230
      %v5232 = vsel %vm3545, %v5231, %v5227
      %v5233 = vlaneseq
      %v5234 = vshrl.u32 %v5233, 7
      %v5235 = vsub.s32 %v3547, %v5234
      %v5236 = vrot.slane %v4817, %v5235
      %v5237 = vsel %vm3552, %v5236, %v5232
      %v5238 = vlaneseq
      %v5239 = vshrl.u32 %v5238, 7
      %v5240 = vsub.s32 %v3554, %v5239
      %v5241 = vrot.slane %v4820, %v5240
      %v5242 = vsel %vm3559, %v5241, %v5237
      %v5243 = vlaneseq
      %v5244 = vshrl.u32 %v5243, 7
      %v5245 = vsub.s32 %v3561, %v5244
      %v5246 = vrot.slane %v4823, %v5245
      %v5247 = vsel %vm3566, %v5246, %v5242
      %v5248 = vlaneseq
      %v5249 = vshrl.u32 %v5248, 7
      %v5250 = vsub.s32 %v3568, %v5249
      %v5251 = vrot.slane %v4826, %v5250
      %v5252 = vsel %vm3573, %v5251, %v5247
      %v5253 = vlaneseq
      %v5254 = vshrl.u32 %v5253, 7
      %v5255 = vsub.s32 %v3575, %v5254
      %v5256 = vrot.slane %v4829, %v5255
      %v5257 = vsel %vm3580, %v5256, %v5252
      %v5258 = vlaneseq
      %v5259 = vshrl.u32 %v5258, 7
      %v5260 = vsub.s32 %v3582, %v5259
      %v5261 = vrot.slane %v4832, %v5260
      %v5262 = vsel %vm3587, %v5261, %v5257
      %v5263 = vlaneseq
      %v5264 = vshrl.u32 %v5263, 7
      %v5265 = vsub.s32 %v3589, %v5264
      %v5266 = vrot.slane %v4835, %v5265
      %v5267 = vsel %vm3594, %v5266, %v5262
      %v5268 = vlaneseq
      %v5269 = vshrl.u32 %v5268, 7
      %v5270 = vsub.s32 %v3596, %v5269
      %v5271 = vrot.slane %v4838, %v5270
      %v5272 = vsel %vm3601, %v5271, %v5267
      %v5273 = vlaneseq
      %v5274 = vshrl.u32 %v5273, 7
      %v5275 = vsub.s32 %v3603, %v5274
      %v5276 = vrot.slane %v4841, %v5275
      %v5277 = vsel %vm3608, %v5276, %v5272
      %v5278 = vlaneseq
      %v5279 = vshrl.u32 %v5278, 7
      %v5280 = vsub.s32 %v3610, %v5279
      %v5281 = vrot.slane %v4844, %v5280
      %v5282 = vsel %vm3615, %v5281, %v5277
      %v5283 = vlaneseq
      %v5284 = vshrl.u32 %v5283, 7
      %v5285 = vsub.s32 %v3617, %v5284
      %v5286 = vrot.slane %v4847, %v5285
      %v5287 = vsel %vm3622, %v5286, %v5282
      %v5288 = vlaneseq
      %v5289 = vshrl.u32 %v5288, 7
      %v5290 = vsub.s32 %v3624, %v5289
      %v5291 = vrot.slane %v4850, %v5290
      %v5292 = vsel %vm3629, %v5291, %v5287
      %v5293 = vlaneseq
      %v5294 = vshrl.u32 %v5293, 7
      %v5295 = vsub.s32 %v3631, %v5294
      %v5296 = vrot.slane %v4853, %v5295
      %v5297 = vsel %vm3636, %v5296, %v5292
      %v5298 = vlaneseq
      %v5299 = vshrl.u32 %v5298, 7
      %v5300 = vsub.s32 %v3638, %v5299
      %v5301 = vrot.slane %v4856, %v5300
      %v5302 = vsel %vm3643, %v5301, %v5297
      %v5303 = vlaneseq
      %v5304 = vshrl.u32 %v5303, 7
      %v5305 = vsub.s32 %v1900, %v5304
      %v5306 = vrot.slane %v4859, %v5305
      %v5307 = vlaneseq
      %v5308 = vshrl.u32 %v5307, 7
      %v5309 = vsub.s32 %v3540, %v5308
      %v5310 = vrot.slane %v4862, %v5309
      %v5311 = vsel %vm3545, %v5310, %v5306
      %v5312 = vlaneseq
      %v5313 = vshrl.u32 %v5312, 7
      %v5314 = vsub.s32 %v3547, %v5313
      %v5315 = vrot.slane %v4865, %v5314
      %v5316 = vsel %vm3552, %v5315, %v5311
      %v5317 = vlaneseq
      %v5318 = vshrl.u32 %v5317, 7
      %v5319 = vsub.s32 %v3554, %v5318
      %v5320 = vrot.slane %v4868, %v5319
      %v5321 = vsel %vm3559, %v5320, %v5316
      %v5322 = vlaneseq
      %v5323 = vshrl.u32 %v5322, 7
      %v5324 = vsub.s32 %v3561, %v5323
      %v5325 = vrot.slane %v4871, %v5324
      %v5326 = vsel %vm3566, %v5325, %v5321
      %v5327 = vlaneseq
      %v5328 = vshrl.u32 %v5327, 7
      %v5329 = vsub.s32 %v3568, %v5328
      %v5330 = vrot.slane %v4874, %v5329
      %v5331 = vsel %vm3573, %v5330, %v5326
      %v5332 = vlaneseq
      %v5333 = vshrl.u32 %v5332, 7
      %v5334 = vsub.s32 %v3575, %v5333
      %v5335 = vrot.slane %v4877, %v5334
      %v5336 = vsel %vm3580, %v5335, %v5331
      %v5337 = vlaneseq
      %v5338 = vshrl.u32 %v5337, 7
      %v5339 = vsub.s32 %v3582, %v5338
      %v5340 = vrot.slane %v4880, %v5339
      %v5341 = vsel %vm3587, %v5340, %v5336
      %v5342 = vlaneseq
      %v5343 = vshrl.u32 %v5342, 7
      %v5344 = vsub.s32 %v3589, %v5343
      %v5345 = vrot.slane %v4883, %v5344
      %v5346 = vsel %vm3594, %v5345, %v5341
      %v5347 = vlaneseq
      %v5348 = vshrl.u32 %v5347, 7
      %v5349 = vsub.s32 %v3596, %v5348
      %v5350 = vrot.slane %v4886, %v5349
      %v5351 = vsel %vm3601, %v5350, %v5346
      %v5352 = vlaneseq
      %v5353 = vshrl.u32 %v5352, 7
      %v5354 = vsub.s32 %v3603, %v5353
      %v5355 = vrot.slane %v4889, %v5354
      %v5356 = vsel %vm3608, %v5355, %v5351
      %v5357 = vlaneseq
      %v5358 = vshrl.u32 %v5357, 7
      %v5359 = vsub.s32 %v3610, %v5358
      %v5360 = vrot.slane %v4892, %v5359
      %v5361 = vsel %vm3615, %v5360, %v5356
      %v5362 = vlaneseq
      %v5363 = vshrl.u32 %v5362, 7
      %v5364 = vsub.s32 %v3617, %v5363
      %v5365 = vrot.slane %v4895, %v5364
      %v5366 = vsel %vm3622, %v5365, %v5361
      %v5367 = vlaneseq
      %v5368 = vshrl.u32 %v5367, 7
      %v5369 = vsub.s32 %v3624, %v5368
      %v5370 = vrot.slane %v4898, %v5369
      %v5371 = vsel %vm3629, %v5370, %v5366
      %v5372 = vlaneseq
      %v5373 = vshrl.u32 %v5372, 7
      %v5374 = vsub.s32 %v3631, %v5373
      %v5375 = vrot.slane %v4901, %v5374
      %v5376 = vsel %vm3636, %v5375, %v5371
      %v5377 = vlaneseq
      %v5378 = vshrl.u32 %v5377, 7
      %v5379 = vsub.s32 %v3638, %v5378
      %v5380 = vrot.slane %v4904, %v5379
      %v5381 = vsel %vm3643, %v5380, %v5376
      %v5382 = vlaneseq
      %v5383 = vshrl.u32 %v5382, 7
      %v5384 = vsub.s32 %v1900, %v5383
      %v5385 = vrot.slane %v4907, %v5384
      %v5386 = vlaneseq
      %v5387 = vshrl.u32 %v5386, 7
      %v5388 = vsub.s32 %v3540, %v5387
      %v5389 = vrot.slane %v4910, %v5388
      %v5390 = vsel %vm3545, %v5389, %v5385
      %v5391 = vlaneseq
      %v5392 = vshrl.u32 %v5391, 7
      %v5393 = vsub.s32 %v3547, %v5392
      %v5394 = vrot.slane %v4913, %v5393
      %v5395 = vsel %vm3552, %v5394, %v5390
      %v5396 = vlaneseq
      %v5397 = vshrl.u32 %v5396, 7
      %v5398 = vsub.s32 %v3554, %v5397
      %v5399 = vrot.slane %v4916, %v5398
      %v5400 = vsel %vm3559, %v5399, %v5395
      %v5401 = vlaneseq
      %v5402 = vshrl.u32 %v5401, 7
      %v5403 = vsub.s32 %v3561, %v5402
      %v5404 = vrot.slane %v4919, %v5403
      %v5405 = vsel %vm3566, %v5404, %v5400
      %v5406 = vlaneseq
      %v5407 = vshrl.u32 %v5406, 7
      %v5408 = vsub.s32 %v3568, %v5407
      %v5409 = vrot.slane %v4922, %v5408
      %v5410 = vsel %vm3573, %v5409, %v5405
      %v5411 = vlaneseq
      %v5412 = vshrl.u32 %v5411, 7
      %v5413 = vsub.s32 %v3575, %v5412
      %v5414 = vrot.slane %v4925, %v5413
      %v5415 = vsel %vm3580, %v5414, %v5410
      %v5416 = vlaneseq
      %v5417 = vshrl.u32 %v5416, 7
      %v5418 = vsub.s32 %v3582, %v5417
      %v5419 = vrot.slane %v4928, %v5418
      %v5420 = vsel %vm3587, %v5419, %v5415
      %v5421 = vlaneseq
      %v5422 = vshrl.u32 %v5421, 7
      %v5423 = vsub.s32 %v3589, %v5422
      %v5424 = vrot.slane %v4931, %v5423
      %v5425 = vsel %vm3594, %v5424, %v5420
      %v5426 = vlaneseq
      %v5427 = vshrl.u32 %v5426, 7
      %v5428 = vsub.s32 %v3596, %v5427
      %v5429 = vrot.slane %v4934, %v5428
      %v5430 = vsel %vm3601, %v5429, %v5425
      %v5431 = vlaneseq
      %v5432 = vshrl.u32 %v5431, 7
      %v5433 = vsub.s32 %v3603, %v5432
      %v5434 = vrot.slane %v4937, %v5433
      %v5435 = vsel %vm3608, %v5434, %v5430
      %v5436 = vlaneseq
      %v5437 = vshrl.u32 %v5436, 7
      %v5438 = vsub.s32 %v3610, %v5437
      %v5439 = vrot.slane %v4940, %v5438
      %v5440 = vsel %vm3615, %v5439, %v5435
      %v5441 = vlaneseq
      %v5442 = vshrl.u32 %v5441, 7
      %v5443 = vsub.s32 %v3617, %v5442
      %v5444 = vrot.slane %v4943, %v5443
      %v5445 = vsel %vm3622, %v5444, %v5440
      %v5446 = vlaneseq
      %v5447 = vshrl.u32 %v5446, 7
      %v5448 = vsub.s32 %v3624, %v5447
      %v5449 = vrot.slane %v4946, %v5448
      %v5450 = vsel %vm3629, %v5449, %v5445
      %v5451 = vlaneseq
      %v5452 = vshrl.u32 %v5451, 7
      %v5453 = vsub.s32 %v3631, %v5452
      %v5454 = vrot.slane %v4949, %v5453
      %v5455 = vsel %vm3636, %v5454, %v5450
      %v5456 = vlaneseq
      %v5457 = vshrl.u32 %v5456, 7
      %v5458 = vsub.s32 %v3638, %v5457
      %v5459 = vrot.slane %v4952, %v5458
      %v5460 = vsel %vm3643, %v5459, %v5455
      %v5461 = vlaneseq
      %v5462 = vshrl.u32 %v5461, 7
      %v5463 = vsub.s32 %v1900, %v5462
      %v5464 = vrot.slane %v4955, %v5463
      %v5465 = vlaneseq
      %v5466 = vshrl.u32 %v5465, 7
      %v5467 = vsub.s32 %v3540, %v5466
      %v5468 = vrot.slane %v4958, %v5467
      %v5469 = vsel %vm3545, %v5468, %v5464
      %v5470 = vlaneseq
      %v5471 = vshrl.u32 %v5470, 7
      %v5472 = vsub.s32 %v3547, %v5471
      %v5473 = vrot.slane %v4961, %v5472
      %v5474 = vsel %vm3552, %v5473, %v5469
      %v5475 = vlaneseq
      %v5476 = vshrl.u32 %v5475, 7
      %v5477 = vsub.s32 %v3554, %v5476
      %v5478 = vrot.slane %v4964, %v5477
      %v5479 = vsel %vm3559, %v5478, %v5474
      %v5480 = vlaneseq
      %v5481 = vshrl.u32 %v5480, 7
      %v5482 = vsub.s32 %v3561, %v5481
      %v5483 = vrot.slane %v4967, %v5482
      %v5484 = vsel %vm3566, %v5483, %v5479
      %v5485 = vlaneseq
      %v5486 = vshrl.u32 %v5485, 7
      %v5487 = vsub.s32 %v3568, %v5486
      %v5488 = vrot.slane %v4970, %v5487
      %v5489 = vsel %vm3573, %v5488, %v5484
      %v5490 = vlaneseq
      %v5491 = vshrl.u32 %v5490, 7
      %v5492 = vsub.s32 %v3575, %v5491
      %v5493 = vrot.slane %v4973, %v5492
      %v5494 = vsel %vm3580, %v5493, %v5489
      %v5495 = vlaneseq
      %v5496 = vshrl.u32 %v5495, 7
      %v5497 = vsub.s32 %v3582, %v5496
      %v5498 = vrot.slane %v4976, %v5497
      %v5499 = vsel %vm3587, %v5498, %v5494
      %v5500 = vlaneseq
      %v5501 = vshrl.u32 %v5500, 7
      %v5502 = vsub.s32 %v3589, %v5501
      %v5503 = vrot.slane %v4979, %v5502
      %v5504 = vsel %vm3594, %v5503, %v5499
      %v5505 = vlaneseq
      %v5506 = vshrl.u32 %v5505, 7
      %v5507 = vsub.s32 %v3596, %v5506
      %v5508 = vrot.slane %v4982, %v5507
      %v5509 = vsel %vm3601, %v5508, %v5504
      %v5510 = vlaneseq
      %v5511 = vshrl.u32 %v5510, 7
      %v5512 = vsub.s32 %v3603, %v5511
      %v5513 = vrot.slane %v4985, %v5512
      %v5514 = vsel %vm3608, %v5513, %v5509
      %v5515 = vlaneseq
      %v5516 = vshrl.u32 %v5515, 7
      %v5517 = vsub.s32 %v3610, %v5516
      %v5518 = vrot.slane %v4988, %v5517
      %v5519 = vsel %vm3615, %v5518, %v5514
      %v5520 = vlaneseq
      %v5521 = vshrl.u32 %v5520, 7
      %v5522 = vsub.s32 %v3617, %v5521
      %v5523 = vrot.slane %v4991, %v5522
      %v5524 = vsel %vm3622, %v5523, %v5519
      %v5525 = vlaneseq
      %v5526 = vshrl.u32 %v5525, 7
      %v5527 = vsub.s32 %v3624, %v5526
      %v5528 = vrot.slane %v4994, %v5527
      %v5529 = vsel %vm3629, %v5528, %v5524
      %v5530 = vlaneseq
      %v5531 = vshrl.u32 %v5530, 7
      %v5532 = vsub.s32 %v3631, %v5531
      %v5533 = vrot.slane %v4997, %v5532
      %v5534 = vsel %vm3636, %v5533, %v5529
      %v5535 = vlaneseq
      %v5536 = vshrl.u32 %v5535, 7
      %v5537 = vsub.s32 %v3638, %v5536
      %v5538 = vrot.slane %v5000, %v5537
      %v5539 = vsel %vm3643, %v5538, %v5534
      %v5540 = vlaneseq
      %v5541 = vshrl.u32 %v5540, 7
      %v5542 = vsub.s32 %v1900, %v5541
      %v5543 = vrot.slane %v5003, %v5542
      %v5544 = vlaneseq
      %v5545 = vshrl.u32 %v5544, 7
      %v5546 = vsub.s32 %v3540, %v5545
      %v5547 = vrot.slane %v5006, %v5546
      %v5548 = vsel %vm3545, %v5547, %v5543
      %v5549 = vlaneseq
      %v5550 = vshrl.u32 %v5549, 7
      %v5551 = vsub.s32 %v3547, %v5550
      %v5552 = vrot.slane %v5009, %v5551
      %v5553 = vsel %vm3552, %v5552, %v5548
      %v5554 = vlaneseq
      %v5555 = vshrl.u32 %v5554, 7
      %v5556 = vsub.s32 %v3554, %v5555
      %v5557 = vrot.slane %v5012, %v5556
      %v5558 = vsel %vm3559, %v5557, %v5553
      %v5559 = vlaneseq
      %v5560 = vshrl.u32 %v5559, 7
      %v5561 = vsub.s32 %v3561, %v5560
      %v5562 = vrot.slane %v5015, %v5561
      %v5563 = vsel %vm3566, %v5562, %v5558
      %v5564 = vlaneseq
      %v5565 = vshrl.u32 %v5564, 7
      %v5566 = vsub.s32 %v3568, %v5565
      %v5567 = vrot.slane %v5018, %v5566
      %v5568 = vsel %vm3573, %v5567, %v5563
      %v5569 = vlaneseq
      %v5570 = vshrl.u32 %v5569, 7
      %v5571 = vsub.s32 %v3575, %v5570
      %v5572 = vrot.slane %v5021, %v5571
      %v5573 = vsel %vm3580, %v5572, %v5568
      %v5574 = vlaneseq
      %v5575 = vshrl.u32 %v5574, 7
      %v5576 = vsub.s32 %v3582, %v5575
      %v5577 = vrot.slane %v5024, %v5576
      %v5578 = vsel %vm3587, %v5577, %v5573
      %v5579 = vlaneseq
      %v5580 = vshrl.u32 %v5579, 7
      %v5581 = vsub.s32 %v3589, %v5580
      %v5582 = vrot.slane %v5027, %v5581
      %v5583 = vsel %vm3594, %v5582, %v5578
      %v5584 = vlaneseq
      %v5585 = vshrl.u32 %v5584, 7
      %v5586 = vsub.s32 %v3596, %v5585
      %v5587 = vrot.slane %v5030, %v5586
      %v5588 = vsel %vm3601, %v5587, %v5583
      %v5589 = vlaneseq
      %v5590 = vshrl.u32 %v5589, 7
      %v5591 = vsub.s32 %v3603, %v5590
      %v5592 = vrot.slane %v5033, %v5591
      %v5593 = vsel %vm3608, %v5592, %v5588
      %v5594 = vlaneseq
      %v5595 = vshrl.u32 %v5594, 7
      %v5596 = vsub.s32 %v3610, %v5595
      %v5597 = vrot.slane %v5036, %v5596
      %v5598 = vsel %vm3615, %v5597, %v5593
      %v5599 = vlaneseq
      %v5600 = vshrl.u32 %v5599, 7
      %v5601 = vsub.s32 %v3617, %v5600
      %v5602 = vrot.slane %v5039, %v5601
      %v5603 = vsel %vm3622, %v5602, %v5598
      %v5604 = vlaneseq
      %v5605 = vshrl.u32 %v5604, 7
      %v5606 = vsub.s32 %v3624, %v5605
      %v5607 = vrot.slane %v5042, %v5606
      %v5608 = vsel %vm3629, %v5607, %v5603
      %v5609 = vlaneseq
      %v5610 = vshrl.u32 %v5609, 7
      %v5611 = vsub.s32 %v3631, %v5610
      %v5612 = vrot.slane %v5045, %v5611
      %v5613 = vsel %vm3636, %v5612, %v5608
      %v5614 = vlaneseq
      %v5615 = vshrl.u32 %v5614, 7
      %v5616 = vsub.s32 %v3638, %v5615
      %v5617 = vrot.slane %v5048, %v5616
      %v5618 = vsel %vm3643, %v5617, %v5613
      %v5619 = vlaneseq
      %v5620 = vshrl.u32 %v5619, 7
      %v5621 = vsub.s32 %v1900, %v5620
      %v5622 = vrot.slane %v5051, %v5621
      %v5623 = vlaneseq
      %v5624 = vshrl.u32 %v5623, 7
      %v5625 = vsub.s32 %v3540, %v5624
      %v5626 = vrot.slane %v5054, %v5625
      %v5627 = vsel %vm3545, %v5626, %v5622
      %v5628 = vlaneseq
      %v5629 = vshrl.u32 %v5628, 7
      %v5630 = vsub.s32 %v3547, %v5629
      %v5631 = vrot.slane %v5057, %v5630
      %v5632 = vsel %vm3552, %v5631, %v5627
      %v5633 = vlaneseq
      %v5634 = vshrl.u32 %v5633, 7
      %v5635 = vsub.s32 %v3554, %v5634
      %v5636 = vrot.slane %v5060, %v5635
      %v5637 = vsel %vm3559, %v5636, %v5632
      %v5638 = vlaneseq
      %v5639 = vshrl.u32 %v5638, 7
      %v5640 = vsub.s32 %v3561, %v5639
      %v5641 = vrot.slane %v5063, %v5640
      %v5642 = vsel %vm3566, %v5641, %v5637
      %v5643 = vlaneseq
      %v5644 = vshrl.u32 %v5643, 7
      %v5645 = vsub.s32 %v3568, %v5644
      %v5646 = vrot.slane %v5066, %v5645
      %v5647 = vsel %vm3573, %v5646, %v5642
      %v5648 = vlaneseq
      %v5649 = vshrl.u32 %v5648, 7
      %v5650 = vsub.s32 %v3575, %v5649
      %v5651 = vrot.slane %v5069, %v5650
      %v5652 = vsel %vm3580, %v5651, %v5647
      %v5653 = vlaneseq
      %v5654 = vshrl.u32 %v5653, 7
      %v5655 = vsub.s32 %v3582, %v5654
      %v5656 = vrot.slane %v5072, %v5655
      %v5657 = vsel %vm3587, %v5656, %v5652
      %v5658 = vlaneseq
      %v5659 = vshrl.u32 %v5658, 7
      %v5660 = vsub.s32 %v3589, %v5659
      %v5661 = vrot.slane %v5075, %v5660
      %v5662 = vsel %vm3594, %v5661, %v5657
      %v5663 = vlaneseq
      %v5664 = vshrl.u32 %v5663, 7
      %v5665 = vsub.s32 %v3596, %v5664
      %v5666 = vrot.slane %v5078, %v5665
      %v5667 = vsel %vm3601, %v5666, %v5662
      %v5668 = vlaneseq
      %v5669 = vshrl.u32 %v5668, 7
      %v5670 = vsub.s32 %v3603, %v5669
      %v5671 = vrot.slane %v5081, %v5670
      %v5672 = vsel %vm3608, %v5671, %v5667
      %v5673 = vlaneseq
      %v5674 = vshrl.u32 %v5673, 7
      %v5675 = vsub.s32 %v3610, %v5674
      %v5676 = vrot.slane %v5084, %v5675
      %v5677 = vsel %vm3615, %v5676, %v5672
      %v5678 = vlaneseq
      %v5679 = vshrl.u32 %v5678, 7
      %v5680 = vsub.s32 %v3617, %v5679
      %v5681 = vrot.slane %v5087, %v5680
      %v5682 = vsel %vm3622, %v5681, %v5677
      %v5683 = vlaneseq
      %v5684 = vshrl.u32 %v5683, 7
      %v5685 = vsub.s32 %v3624, %v5684
      %v5686 = vrot.slane %v5090, %v5685
      %v5687 = vsel %vm3629, %v5686, %v5682
      %v5688 = vlaneseq
      %v5689 = vshrl.u32 %v5688, 7
      %v5690 = vsub.s32 %v3631, %v5689
      %v5691 = vrot.slane %v5093, %v5690
      %v5692 = vsel %vm3636, %v5691, %v5687
      %v5693 = vlaneseq
      %v5694 = vshrl.u32 %v5693, 7
      %v5695 = vsub.s32 %v3638, %v5694
      %v5696 = vrot.slane %v5096, %v5695
      %v5697 = vsel %vm3643, %v5696, %v5692
      %v5698 = vlaneseq
      %v5699 = vshrl.u32 %v5698, 7
      %v5700 = vsub.s32 %v1900, %v5699
      %v5701 = vrot.slane %v5099, %v5700
      %v5702 = vlaneseq
      %v5703 = vshrl.u32 %v5702, 7
      %v5704 = vsub.s32 %v3540, %v5703
      %v5705 = vrot.slane %v5102, %v5704
      %v5706 = vsel %vm3545, %v5705, %v5701
      %v5707 = vlaneseq
      %v5708 = vshrl.u32 %v5707, 7
      %v5709 = vsub.s32 %v3547, %v5708
      %v5710 = vrot.slane %v5105, %v5709
      %v5711 = vsel %vm3552, %v5710, %v5706
      %v5712 = vlaneseq
      %v5713 = vshrl.u32 %v5712, 7
      %v5714 = vsub.s32 %v3554, %v5713
      %v5715 = vrot.slane %v5108, %v5714
      %v5716 = vsel %vm3559, %v5715, %v5711
      %v5717 = vlaneseq
      %v5718 = vshrl.u32 %v5717, 7
      %v5719 = vsub.s32 %v3561, %v5718
      %v5720 = vrot.slane %v5111, %v5719
      %v5721 = vsel %vm3566, %v5720, %v5716
      %v5722 = vlaneseq
      %v5723 = vshrl.u32 %v5722, 7
      %v5724 = vsub.s32 %v3568, %v5723
      %v5725 = vrot.slane %v5114, %v5724
      %v5726 = vsel %vm3573, %v5725, %v5721
      %v5727 = vlaneseq
      %v5728 = vshrl.u32 %v5727, 7
      %v5729 = vsub.s32 %v3575, %v5728
      %v5730 = vrot.slane %v5117, %v5729
      %v5731 = vsel %vm3580, %v5730, %v5726
      %v5732 = vlaneseq
      %v5733 = vshrl.u32 %v5732, 7
      %v5734 = vsub.s32 %v3582, %v5733
      %v5735 = vrot.slane %v5120, %v5734
      %v5736 = vsel %vm3587, %v5735, %v5731
      %v5737 = vlaneseq
      %v5738 = vshrl.u32 %v5737, 7
      %v5739 = vsub.s32 %v3589, %v5738
      %v5740 = vrot.slane %v5123, %v5739
      %v5741 = vsel %vm3594, %v5740, %v5736
      %v5742 = vlaneseq
      %v5743 = vshrl.u32 %v5742, 7
      %v5744 = vsub.s32 %v3596, %v5743
      %v5745 = vrot.slane %v5126, %v5744
      %v5746 = vsel %vm3601, %v5745, %v5741
      %v5747 = vlaneseq
      %v5748 = vshrl.u32 %v5747, 7
      %v5749 = vsub.s32 %v3603, %v5748
      %v5750 = vrot.slane %v5129, %v5749
      %v5751 = vsel %vm3608, %v5750, %v5746
      %v5752 = vlaneseq
      %v5753 = vshrl.u32 %v5752, 7
      %v5754 = vsub.s32 %v3610, %v5753
      %v5755 = vrot.slane %v5132, %v5754
      %v5756 = vsel %vm3615, %v5755, %v5751
      %v5757 = vlaneseq
      %v5758 = vshrl.u32 %v5757, 7
      %v5759 = vsub.s32 %v3617, %v5758
      %v5760 = vrot.slane %v5135, %v5759
      %v5761 = vsel %vm3622, %v5760, %v5756
      %v5762 = vlaneseq
      %v5763 = vshrl.u32 %v5762, 7
      %v5764 = vsub.s32 %v3624, %v5763
      %v5765 = vrot.slane %v5138, %v5764
      %v5766 = vsel %vm3629, %v5765, %v5761
      %v5767 = vlaneseq
      %v5768 = vshrl.u32 %v5767, 7
      %v5769 = vsub.s32 %v3631, %v5768
      %v5770 = vrot.slane %v5141, %v5769
      %v5771 = vsel %vm3636, %v5770, %v5766
      %v5772 = vlaneseq
      %v5773 = vshrl.u32 %v5772, 7
      %v5774 = vsub.s32 %v3638, %v5773
      %v5775 = vrot.slane %v5144, %v5774
      %v5776 = vsel %vm3643, %v5775, %v5771
      %v5777 = vsel %vm634, %v5302, %v5223
      %v5778 = vsel %vm636, %v5381, %v5777
      %v5779 = vsel %vm638, %v5460, %v5778
      %v5780 = vsel %vm640, %v5539, %v5779
      %v5781 = vsel %vm642, %v5618, %v5780
      %v5782 = vsel %vm644, %v5697, %v5781
      %v5783 = vsel %vm646, %v5776, %v5782
      %5785 = vadd.xlane.f32.xlu0 %v5783
      %v5786 = vpop.xlane.xlu0 %5785
      %v5788 = vlaneseq
      %v5789 = vshrl.u32 %v5788, 7
      %v5790 = vsub.s32 0, %v5789
      %v5791 = vrot.slane %v5786, %v5790
      %v5792 = vlaneseq
      %v5793 = vshrl.u32 %v5792, 7
      %v5794 = vsub.s32 1, %v5793
      %v5795 = vrot.slane %v5786, %v5794
      %v5796 = vlaneseq
      %v5797 = vshrl.u32 %v5796, 7
      %v5798 = vsub.s32 2, %v5797
      %v5799 = vrot.slane %v5786, %v5798
      %v5800 = vlaneseq
      %v5801 = vshrl.u32 %v5800, 7
      %v5802 = vsub.s32 3, %v5801
      %v5803 = vrot.slane %v5786, %v5802
      %v5804 = vlaneseq
      %v5805 = vshrl.u32 %v5804, 7
      %v5806 = vsub.s32 4, %v5805
      %v5807 = vrot.slane %v5786, %v5806
      %v5808 = vlaneseq
      %v5809 = vshrl.u32 %v5808, 7
      %v5810 = vsub.s32 5, %v5809
      %v5811 = vrot.slane %v5786, %v5810
      %v5812 = vlaneseq
      %v5813 = vshrl.u32 %v5812, 7
      %v5814 = vsub.s32 6, %v5813
      %v5815 = vrot.slane %v5786, %v5814
      %v5816 = vlaneseq
      %v5817 = vshrl.u32 %v5816, 7
      %v5818 = vsub.s32 7, %v5817
      %v5819 = vrot.slane %v5786, %v5818
      %v5828 = vrcp.pop %v5791
      %v5829 = vmul.f32 %v4378, %v5828
      %v5830 = vmul.f32 %v4380, %v5828
      %v5831 = vmul.f32 %v4382, %v5828
      %v5832 = vmul.f32 %v4384, %v5828
      %v5833 = vmul.f32 %v4386, %v5828
      %v5834 = vmul.f32 %v4388, %v5828
      %v5835 = vmul.f32 %v4390, %v5828
      %v5836 = vmul.f32 %v4392, %v5828
      %v5837 = vmul.f32 %v4394, %v5828
      %v5838 = vmul.f32 %v4396, %v5828
      %v5839 = vmul.f32 %v4398, %v5828
      %v5840 = vmul.f32 %v4400, %v5828
      %v5841 = vmul.f32 %v4402, %v5828
      %v5842 = vmul.f32 %v4404, %v5828
      %v5843 = vmul.f32 %v4406, %v5828
      %v5844 = vmul.f32 %v4408, %v5828
      %v5845 = vrcp.pop %v5795
      %v5846 = vmul.f32 %v4410, %v5845
      %v5847 = vmul.f32 %v4412, %v5845
      %v5848 = vmul.f32 %v4414, %v5845
      %v5849 = vmul.f32 %v4416, %v5845
      %v5850 = vmul.f32 %v4418, %v5845
      %v5851 = vmul.f32 %v4420, %v5845
      %v5852 = vmul.f32 %v4422, %v5845
      %v5853 = vmul.f32 %v4424, %v5845
      %v5854 = vmul.f32 %v4426, %v5845
      %v5855 = vmul.f32 %v4428, %v5845
      %v5856 = vmul.f32 %v4430, %v5845
      %v5857 = vmul.f32 %v4432, %v5845
      %v5858 = vmul.f32 %v4434, %v5845
      %v5859 = vmul.f32 %v4436, %v5845
      %v5860 = vmul.f32 %v4438, %v5845
      %v5861 = vmul.f32 %v4440, %v5845
      %v5862 = vrcp.pop %v5799
      %v5863 = vmul.f32 %v4442, %v5862
      %v5864 = vmul.f32 %v4444, %v5862
      %v5865 = vmul.f32 %v4446, %v5862
      %v5866 = vmul.f32 %v4448, %v5862
      %v5867 = vmul.f32 %v4450, %v5862
      %v5868 = vmul.f32 %v4452, %v5862
      %v5869 = vmul.f32 %v4454, %v5862
      %v5870 = vmul.f32 %v4456, %v5862
      %v5871 = vmul.f32 %v4458, %v5862
      %v5872 = vmul.f32 %v4460, %v5862
      %v5873 = vmul.f32 %v4462, %v5862
      %v5874 = vmul.f32 %v4464, %v5862
      %v5875 = vmul.f32 %v4466, %v5862
      %v5876 = vmul.f32 %v4468, %v5862
      %v5877 = vmul.f32 %v4470, %v5862
      %v5878 = vmul.f32 %v4472, %v5862
      %v5879 = vrcp.pop %v5803
      %v5880 = vmul.f32 %v4474, %v5879
      %v5881 = vmul.f32 %v4476, %v5879
      %v5882 = vmul.f32 %v4478, %v5879
      %v5883 = vmul.f32 %v4480, %v5879
      %v5884 = vmul.f32 %v4482, %v5879
      %v5885 = vmul.f32 %v4484, %v5879
      %v5886 = vmul.f32 %v4486, %v5879
      %v5887 = vmul.f32 %v4488, %v5879
      %v5888 = vmul.f32 %v4490, %v5879
      %v5889 = vmul.f32 %v4492, %v5879
      %v5890 = vmul.f32 %v4494, %v5879
      %v5891 = vmul.f32 %v4496, %v5879
      %v5892 = vmul.f32 %v4498, %v5879
      %v5893 = vmul.f32 %v4500, %v5879
      %v5894 = vmul.f32 %v4502, %v5879
      %v5895 = vmul.f32 %v4504, %v5879
      %v5896 = vrcp.pop %v5807
      %v5897 = vmul.f32 %v4506, %v5896
      %v5898 = vmul.f32 %v4508, %v5896
      %v5899 = vmul.f32 %v4510, %v5896
      %v5900 = vmul.f32 %v4512, %v5896
      %v5901 = vmul.f32 %v4514, %v5896
      %v5902 = vmul.f32 %v4516, %v5896
      %v5903 = vmul.f32 %v4518, %v5896
      %v5904 = vmul.f32 %v4520, %v5896
      %v5905 = vmul.f32 %v4522, %v5896
      %v5906 = vmul.f32 %v4524, %v5896
      %v5907 = vmul.f32 %v4526, %v5896
      %v5908 = vmul.f32 %v4528, %v5896
      %v5909 = vmul.f32 %v4530, %v5896
      %v5910 = vmul.f32 %v4532, %v5896
      %v5911 = vmul.f32 %v4534, %v5896
      %v5912 = vmul.f32 %v4536, %v5896
      %v5913 = vrcp.pop %v5811
      %v5914 = vmul.f32 %v4538, %v5913
      %v5915 = vmul.f32 %v4540, %v5913
      %v5916 = vmul.f32 %v4542, %v5913
      %v5917 = vmul.f32 %v4544, %v5913
      %v5918 = vmul.f32 %v4546, %v5913
      %v5919 = vmul.f32 %v4548, %v5913
      %v5920 = vmul.f32 %v4550, %v5913
      %v5921 = vmul.f32 %v4552, %v5913
      %v5922 = vmul.f32 %v4554, %v5913
      %v5923 = vmul.f32 %v4556, %v5913
      %v5924 = vmul.f32 %v4558, %v5913
      %v5925 = vmul.f32 %v4560, %v5913
      %v5926 = vmul.f32 %v4562, %v5913
      %v5927 = vmul.f32 %v4564, %v5913
      %v5928 = vmul.f32 %v4566, %v5913
      %v5929 = vmul.f32 %v4568, %v5913
      %v5930 = vrcp.pop %v5815
      %v5931 = vmul.f32 %v4570, %v5930
      %v5932 = vmul.f32 %v4572, %v5930
      %v5933 = vmul.f32 %v4574, %v5930
      %v5934 = vmul.f32 %v4576, %v5930
      %v5935 = vmul.f32 %v4578, %v5930
      %v5936 = vmul.f32 %v4580, %v5930
      %v5937 = vmul.f32 %v4582, %v5930
      %v5938 = vmul.f32 %v4584, %v5930
      %v5939 = vmul.f32 %v4586, %v5930
      %v5940 = vmul.f32 %v4588, %v5930
      %v5941 = vmul.f32 %v4590, %v5930
      %v5942 = vmul.f32 %v4592, %v5930
      %v5943 = vmul.f32 %v4594, %v5930
      %v5944 = vmul.f32 %v4596, %v5930
      %v5945 = vmul.f32 %v4598, %v5930
      %v5946 = vmul.f32 %v4600, %v5930
      %v5947 = vrcp.pop %v5819
      %v5948 = vmul.f32 %v4602, %v5947
      %v5949 = vmul.f32 %v4604, %v5947
      %v5950 = vmul.f32 %v4606, %v5947
      %v5951 = vmul.f32 %v4608, %v5947
      %v5952 = vmul.f32 %v4610, %v5947
      %v5953 = vmul.f32 %v4612, %v5947
      %v5954 = vmul.f32 %v4614, %v5947
      %v5955 = vmul.f32 %v4616, %v5947
      %v5956 = vmul.f32 %v4618, %v5947
      %v5957 = vmul.f32 %v4620, %v5947
      %v5958 = vmul.f32 %v4622, %v5947
      %v5959 = vmul.f32 %v4624, %v5947
      %v5960 = vmul.f32 %v4626, %v5947
      %v5961 = vmul.f32 %v4628, %v5947
      %v5962 = vmul.f32 %v4630, %v5947
      %v5963 = vmul.f32 %v4632, %v5947
      %6092 = vset.pattern.permute.xlu0 0
      %6093 = vperm.xlu0 %6092, %v5829
      %v6094 = vpop.permute.xlu0 %6093
      %6095 = vset.pattern.permute.xlu0 0
      %6096 = vperm.xlu0 %6095, %v5830
      %v6097 = vpop.permute.xlu0 %6096
      %6098 = vset.pattern.permute.xlu0 0
      %6099 = vperm.xlu0 %6098, %v5831
      %v6100 = vpop.permute.xlu0 %6099
      %6101 = vset.pattern.permute.xlu0 0
      %6102 = vperm.xlu0 %6101, %v5832
      %v6103 = vpop.permute.xlu0 %6102
      %6104 = vset.pattern.permute.xlu0 0
      %6105 = vperm.xlu0 %6104, %v5833
      %v6106 = vpop.permute.xlu0 %6105
      %6107 = vset.pattern.permute.xlu0 0
      %6108 = vperm.xlu0 %6107, %v5834
      %v6109 = vpop.permute.xlu0 %6108
      %6110 = vset.pattern.permute.xlu0 0
      %6111 = vperm.xlu0 %6110, %v5835
      %v6112 = vpop.permute.xlu0 %6111
      %6113 = vset.pattern.permute.xlu0 0
      %6114 = vperm.xlu0 %6113, %v5836
      %v6115 = vpop.permute.xlu0 %6114
      %6116 = vset.pattern.permute.xlu0 0
      %6117 = vperm.xlu0 %6116, %v5837
      %v6118 = vpop.permute.xlu0 %6117
      %6119 = vset.pattern.permute.xlu0 0
      %6120 = vperm.xlu0 %6119, %v5838
      %v6121 = vpop.permute.xlu0 %6120
      %6122 = vset.pattern.permute.xlu0 0
      %6123 = vperm.xlu0 %6122, %v5839
      %v6124 = vpop.permute.xlu0 %6123
      %6125 = vset.pattern.permute.xlu0 0
      %6126 = vperm.xlu0 %6125, %v5840
      %v6127 = vpop.permute.xlu0 %6126
      %6128 = vset.pattern.permute.xlu0 0
      %6129 = vperm.xlu0 %6128, %v5841
      %v6130 = vpop.permute.xlu0 %6129
      %6131 = vset.pattern.permute.xlu0 0
      %6132 = vperm.xlu0 %6131, %v5842
      %v6133 = vpop.permute.xlu0 %6132
      %6134 = vset.pattern.permute.xlu0 0
      %6135 = vperm.xlu0 %6134, %v5843
      %v6136 = vpop.permute.xlu0 %6135
      %6137 = vset.pattern.permute.xlu0 0
      %6138 = vperm.xlu0 %6137, %v5844
      %v6139 = vpop.permute.xlu0 %6138
      %6140 = vset.pattern.permute.xlu0 0
      %6141 = vperm.xlu0 %6140, %v5846
      %v6142 = vpop.permute.xlu0 %6141
      %6143 = vset.pattern.permute.xlu0 0
      %6144 = vperm.xlu0 %6143, %v5847
      %v6145 = vpop.permute.xlu0 %6144
      %6146 = vset.pattern.permute.xlu0 0
      %6147 = vperm.xlu0 %6146, %v5848
      %v6148 = vpop.permute.xlu0 %6147
      %6149 = vset.pattern.permute.xlu0 0
      %6150 = vperm.xlu0 %6149, %v5849
      %v6151 = vpop.permute.xlu0 %6150
      %6152 = vset.pattern.permute.xlu0 0
      %6153 = vperm.xlu0 %6152, %v5850
      %v6154 = vpop.permute.xlu0 %6153
      %6155 = vset.pattern.permute.xlu0 0
      %6156 = vperm.xlu0 %6155, %v5851
      %v6157 = vpop.permute.xlu0 %6156
      %6158 = vset.pattern.permute.xlu0 0
      %6159 = vperm.xlu0 %6158, %v5852
      %v6160 = vpop.permute.xlu0 %6159
      %6161 = vset.pattern.permute.xlu0 0
      %6162 = vperm.xlu0 %6161, %v5853
      %v6163 = vpop.permute.xlu0 %6162
      %6164 = vset.pattern.permute.xlu0 0
      %6165 = vperm.xlu0 %6164, %v5854
      %v6166 = vpop.permute.xlu0 %6165
      %6167 = vset.pattern.permute.xlu0 0
      %6168 = vperm.xlu0 %6167, %v5855
      %v6169 = vpop.permute.xlu0 %6168
      %6170 = vset.pattern.permute.xlu0 0
      %6171 = vperm.xlu0 %6170, %v5856
      %v6172 = vpop.permute.xlu0 %6171
      %6173 = vset.pattern.permute.xlu0 0
      %6174 = vperm.xlu0 %6173, %v5857
      %v6175 = vpop.permute.xlu0 %6174
      %6176 = vset.pattern.permute.xlu0 0
      %6177 = vperm.xlu0 %6176, %v5858
      %v6178 = vpop.permute.xlu0 %6177
      %6179 = vset.pattern.permute.xlu0 0
      %6180 = vperm.xlu0 %6179, %v5859
      %v6181 = vpop.permute.xlu0 %6180
      %6182 = vset.pattern.permute.xlu0 0
      %6183 = vperm.xlu0 %6182, %v5860
      %v6184 = vpop.permute.xlu0 %6183
      %6185 = vset.pattern.permute.xlu0 0
      %6186 = vperm.xlu0 %6185, %v5861
      %v6187 = vpop.permute.xlu0 %6186
      %6188 = vset.pattern.permute.xlu0 0
      %6189 = vperm.xlu0 %6188, %v5863
      %v6190 = vpop.permute.xlu0 %6189
      %6191 = vset.pattern.permute.xlu0 0
      %6192 = vperm.xlu0 %6191, %v5864
      %v6193 = vpop.permute.xlu0 %6192
      %6194 = vset.pattern.permute.xlu0 0
      %6195 = vperm.xlu0 %6194, %v5865
      %v6196 = vpop.permute.xlu0 %6195
      %6197 = vset.pattern.permute.xlu0 0
      %6198 = vperm.xlu0 %6197, %v5866
      %v6199 = vpop.permute.xlu0 %6198
      %6200 = vset.pattern.permute.xlu0 0
      %6201 = vperm.xlu0 %6200, %v5867
      %v6202 = vpop.permute.xlu0 %6201
      %6203 = vset.pattern.permute.xlu0 0
      %6204 = vperm.xlu0 %6203, %v5868
      %v6205 = vpop.permute.xlu0 %6204
      %6206 = vset.pattern.permute.xlu0 0
      %6207 = vperm.xlu0 %6206, %v5869
      %v6208 = vpop.permute.xlu0 %6207
      %6209 = vset.pattern.permute.xlu0 0
      %6210 = vperm.xlu0 %6209, %v5870
      %v6211 = vpop.permute.xlu0 %6210
      %6212 = vset.pattern.permute.xlu0 0
      %6213 = vperm.xlu0 %6212, %v5871
      %v6214 = vpop.permute.xlu0 %6213
      %6215 = vset.pattern.permute.xlu0 0
      %6216 = vperm.xlu0 %6215, %v5872
      %v6217 = vpop.permute.xlu0 %6216
      %6218 = vset.pattern.permute.xlu0 0
      %6219 = vperm.xlu0 %6218, %v5873
      %v6220 = vpop.permute.xlu0 %6219
      %6221 = vset.pattern.permute.xlu0 0
      %6222 = vperm.xlu0 %6221, %v5874
      %v6223 = vpop.permute.xlu0 %6222
      %6224 = vset.pattern.permute.xlu0 0
      %6225 = vperm.xlu0 %6224, %v5875
      %v6226 = vpop.permute.xlu0 %6225
      %6227 = vset.pattern.permute.xlu0 0
      %6228 = vperm.xlu0 %6227, %v5876
      %v6229 = vpop.permute.xlu0 %6228
      %6230 = vset.pattern.permute.xlu0 0
      %6231 = vperm.xlu0 %6230, %v5877
      %v6232 = vpop.permute.xlu0 %6231
      %6233 = vset.pattern.permute.xlu0 0
      %6234 = vperm.xlu0 %6233, %v5878
      %v6235 = vpop.permute.xlu0 %6234
      %6236 = vset.pattern.permute.xlu0 0
      %6237 = vperm.xlu0 %6236, %v5880
      %v6238 = vpop.permute.xlu0 %6237
      %6239 = vset.pattern.permute.xlu0 0
      %6240 = vperm.xlu0 %6239, %v5881
      %v6241 = vpop.permute.xlu0 %6240
      %6242 = vset.pattern.permute.xlu0 0
      %6243 = vperm.xlu0 %6242, %v5882
      %v6244 = vpop.permute.xlu0 %6243
      %6245 = vset.pattern.permute.xlu0 0
      %6246 = vperm.xlu0 %6245, %v5883
      %v6247 = vpop.permute.xlu0 %6246
      %6248 = vset.pattern.permute.xlu0 0
      %6249 = vperm.xlu0 %6248, %v5884
      %v6250 = vpop.permute.xlu0 %6249
      %6251 = vset.pattern.permute.xlu0 0
      %6252 = vperm.xlu0 %6251, %v5885
      %v6253 = vpop.permute.xlu0 %6252
      %6254 = vset.pattern.permute.xlu0 0
      %6255 = vperm.xlu0 %6254, %v5886
      %v6256 = vpop.permute.xlu0 %6255
      %6257 = vset.pattern.permute.xlu0 0
      %6258 = vperm.xlu0 %6257, %v5887
      %v6259 = vpop.permute.xlu0 %6258
      %6260 = vset.pattern.permute.xlu0 0
      %6261 = vperm.xlu0 %6260, %v5888
      %v6262 = vpop.permute.xlu0 %6261
      %6263 = vset.pattern.permute.xlu0 0
      %6264 = vperm.xlu0 %6263, %v5889
      %v6265 = vpop.permute.xlu0 %6264
      %6266 = vset.pattern.permute.xlu0 0
      %6267 = vperm.xlu0 %6266, %v5890
      %v6268 = vpop.permute.xlu0 %6267
      %6269 = vset.pattern.permute.xlu0 0
      %6270 = vperm.xlu0 %6269, %v5891
      %v6271 = vpop.permute.xlu0 %6270
      %6272 = vset.pattern.permute.xlu0 0
      %6273 = vperm.xlu0 %6272, %v5892
      %v6274 = vpop.permute.xlu0 %6273
      %6275 = vset.pattern.permute.xlu0 0
      %6276 = vperm.xlu0 %6275, %v5893
      %v6277 = vpop.permute.xlu0 %6276
      %6278 = vset.pattern.permute.xlu0 0
      %6279 = vperm.xlu0 %6278, %v5894
      %v6280 = vpop.permute.xlu0 %6279
      %6281 = vset.pattern.permute.xlu0 0
      %6282 = vperm.xlu0 %6281, %v5895
      %v6283 = vpop.permute.xlu0 %6282
      %6284 = vset.pattern.permute.xlu0 0
      %6285 = vperm.xlu0 %6284, %v5897
      %v6286 = vpop.permute.xlu0 %6285
      %6287 = vset.pattern.permute.xlu0 0
      %6288 = vperm.xlu0 %6287, %v5898
      %v6289 = vpop.permute.xlu0 %6288
      %6290 = vset.pattern.permute.xlu0 0
      %6291 = vperm.xlu0 %6290, %v5899
      %v6292 = vpop.permute.xlu0 %6291
      %6293 = vset.pattern.permute.xlu0 0
      %6294 = vperm.xlu0 %6293, %v5900
      %v6295 = vpop.permute.xlu0 %6294
      %6296 = vset.pattern.permute.xlu0 0
      %6297 = vperm.xlu0 %6296, %v5901
      %v6298 = vpop.permute.xlu0 %6297
      %6299 = vset.pattern.permute.xlu0 0
      %6300 = vperm.xlu0 %6299, %v5902
      %v6301 = vpop.permute.xlu0 %6300
      %6302 = vset.pattern.permute.xlu0 0
      %6303 = vperm.xlu0 %6302, %v5903
      %v6304 = vpop.permute.xlu0 %6303
      %6305 = vset.pattern.permute.xlu0 0
      %6306 = vperm.xlu0 %6305, %v5904
      %v6307 = vpop.permute.xlu0 %6306
      %6308 = vset.pattern.permute.xlu0 0
      %6309 = vperm.xlu0 %6308, %v5905
      %v6310 = vpop.permute.xlu0 %6309
      %6311 = vset.pattern.permute.xlu0 0
      %6312 = vperm.xlu0 %6311, %v5906
      %v6313 = vpop.permute.xlu0 %6312
      %6314 = vset.pattern.permute.xlu0 0
      %6315 = vperm.xlu0 %6314, %v5907
      %v6316 = vpop.permute.xlu0 %6315
      %6317 = vset.pattern.permute.xlu0 0
      %6318 = vperm.xlu0 %6317, %v5908
      %v6319 = vpop.permute.xlu0 %6318
      %6320 = vset.pattern.permute.xlu0 0
      %6321 = vperm.xlu0 %6320, %v5909
      %v6322 = vpop.permute.xlu0 %6321
      %6323 = vset.pattern.permute.xlu0 0
      %6324 = vperm.xlu0 %6323, %v5910
      %v6325 = vpop.permute.xlu0 %6324
      %6326 = vset.pattern.permute.xlu0 0
      %6327 = vperm.xlu0 %6326, %v5911
      %v6328 = vpop.permute.xlu0 %6327
      %6329 = vset.pattern.permute.xlu0 0
      %6330 = vperm.xlu0 %6329, %v5912
      %v6331 = vpop.permute.xlu0 %6330
      %6332 = vset.pattern.permute.xlu0 0
      %6333 = vperm.xlu0 %6332, %v5914
      %v6334 = vpop.permute.xlu0 %6333
      %6335 = vset.pattern.permute.xlu0 0
      %6336 = vperm.xlu0 %6335, %v5915
      %v6337 = vpop.permute.xlu0 %6336
      %6338 = vset.pattern.permute.xlu0 0
      %6339 = vperm.xlu0 %6338, %v5916
      %v6340 = vpop.permute.xlu0 %6339
      %6341 = vset.pattern.permute.xlu0 0
      %6342 = vperm.xlu0 %6341, %v5917
      %v6343 = vpop.permute.xlu0 %6342
      %6344 = vset.pattern.permute.xlu0 0
      %6345 = vperm.xlu0 %6344, %v5918
      %v6346 = vpop.permute.xlu0 %6345
      %6347 = vset.pattern.permute.xlu0 0
      %6348 = vperm.xlu0 %6347, %v5919
      %v6349 = vpop.permute.xlu0 %6348
      %6350 = vset.pattern.permute.xlu0 0
      %6351 = vperm.xlu0 %6350, %v5920
      %v6352 = vpop.permute.xlu0 %6351
      %6353 = vset.pattern.permute.xlu0 0
      %6354 = vperm.xlu0 %6353, %v5921
      %v6355 = vpop.permute.xlu0 %6354
      %6356 = vset.pattern.permute.xlu0 0
      %6357 = vperm.xlu0 %6356, %v5922
      %v6358 = vpop.permute.xlu0 %6357
      %6359 = vset.pattern.permute.xlu0 0
      %6360 = vperm.xlu0 %6359, %v5923
      %v6361 = vpop.permute.xlu0 %6360
      %6362 = vset.pattern.permute.xlu0 0
      %6363 = vperm.xlu0 %6362, %v5924
      %v6364 = vpop.permute.xlu0 %6363
      %6365 = vset.pattern.permute.xlu0 0
      %6366 = vperm.xlu0 %6365, %v5925
      %v6367 = vpop.permute.xlu0 %6366
      %6368 = vset.pattern.permute.xlu0 0
      %6369 = vperm.xlu0 %6368, %v5926
      %v6370 = vpop.permute.xlu0 %6369
      %6371 = vset.pattern.permute.xlu0 0
      %6372 = vperm.xlu0 %6371, %v5927
      %v6373 = vpop.permute.xlu0 %6372
      %6374 = vset.pattern.permute.xlu0 0
      %6375 = vperm.xlu0 %6374, %v5928
      %v6376 = vpop.permute.xlu0 %6375
      %6377 = vset.pattern.permute.xlu0 0
      %6378 = vperm.xlu0 %6377, %v5929
      %v6379 = vpop.permute.xlu0 %6378
      %6380 = vset.pattern.permute.xlu0 0
      %6381 = vperm.xlu0 %6380, %v5931
      %v6382 = vpop.permute.xlu0 %6381
      %6383 = vset.pattern.permute.xlu0 0
      %6384 = vperm.xlu0 %6383, %v5932
      %v6385 = vpop.permute.xlu0 %6384
      %6386 = vset.pattern.permute.xlu0 0
      %6387 = vperm.xlu0 %6386, %v5933
      %v6388 = vpop.permute.xlu0 %6387
      %6389 = vset.pattern.permute.xlu0 0
      %6390 = vperm.xlu0 %6389, %v5934
      %v6391 = vpop.permute.xlu0 %6390
      %6392 = vset.pattern.permute.xlu0 0
      %6393 = vperm.xlu0 %6392, %v5935
      %v6394 = vpop.permute.xlu0 %6393
      %6395 = vset.pattern.permute.xlu0 0
      %6396 = vperm.xlu0 %6395, %v5936
      %v6397 = vpop.permute.xlu0 %6396
      %6398 = vset.pattern.permute.xlu0 0
      %6399 = vperm.xlu0 %6398, %v5937
      %v6400 = vpop.permute.xlu0 %6399
      %6401 = vset.pattern.permute.xlu0 0
      %6402 = vperm.xlu0 %6401, %v5938
      %v6403 = vpop.permute.xlu0 %6402
      %6404 = vset.pattern.permute.xlu0 0
      %6405 = vperm.xlu0 %6404, %v5939
      %v6406 = vpop.permute.xlu0 %6405
      %6407 = vset.pattern.permute.xlu0 0
      %6408 = vperm.xlu0 %6407, %v5940
      %v6409 = vpop.permute.xlu0 %6408
      %6410 = vset.pattern.permute.xlu0 0
      %6411 = vperm.xlu0 %6410, %v5941
      %v6412 = vpop.permute.xlu0 %6411
      %6413 = vset.pattern.permute.xlu0 0
      %6414 = vperm.xlu0 %6413, %v5942
      %v6415 = vpop.permute.xlu0 %6414
      %6416 = vset.pattern.permute.xlu0 0
      %6417 = vperm.xlu0 %6416, %v5943
      %v6418 = vpop.permute.xlu0 %6417
      %6419 = vset.pattern.permute.xlu0 0
      %6420 = vperm.xlu0 %6419, %v5944
      %v6421 = vpop.permute.xlu0 %6420
      %6422 = vset.pattern.permute.xlu0 0
      %6423 = vperm.xlu0 %6422, %v5945
      %v6424 = vpop.permute.xlu0 %6423
      %6425 = vset.pattern.permute.xlu0 0
      %6426 = vperm.xlu0 %6425, %v5946
      %v6427 = vpop.permute.xlu0 %6426
      %6428 = vset.pattern.permute.xlu0 0
      %6429 = vperm.xlu0 %6428, %v5948
      %v6430 = vpop.permute.xlu0 %6429
      %6431 = vset.pattern.permute.xlu0 0
      %6432 = vperm.xlu0 %6431, %v5949
      %v6433 = vpop.permute.xlu0 %6432
      %6434 = vset.pattern.permute.xlu0 0
      %6435 = vperm.xlu0 %6434, %v5950
      %v6436 = vpop.permute.xlu0 %6435
      %6437 = vset.pattern.permute.xlu0 0
      %6438 = vperm.xlu0 %6437, %v5951
      %v6439 = vpop.permute.xlu0 %6438
      %6440 = vset.pattern.permute.xlu0 0
      %6441 = vperm.xlu0 %6440, %v5952
      %v6442 = vpop.permute.xlu0 %6441
      %6443 = vset.pattern.permute.xlu0 0
      %6444 = vperm.xlu0 %6443, %v5953
      %v6445 = vpop.permute.xlu0 %6444
      %6446 = vset.pattern.permute.xlu0 0
      %6447 = vperm.xlu0 %6446, %v5954
      %v6448 = vpop.permute.xlu0 %6447
      %6449 = vset.pattern.permute.xlu0 0
      %6450 = vperm.xlu0 %6449, %v5955
      %v6451 = vpop.permute.xlu0 %6450
      %6452 = vset.pattern.permute.xlu0 0
      %6453 = vperm.xlu0 %6452, %v5956
      %v6454 = vpop.permute.xlu0 %6453
      %6455 = vset.pattern.permute.xlu0 0
      %6456 = vperm.xlu0 %6455, %v5957
      %v6457 = vpop.permute.xlu0 %6456
      %6458 = vset.pattern.permute.xlu0 0
      %6459 = vperm.xlu0 %6458, %v5958
      %v6460 = vpop.permute.xlu0 %6459
      %6461 = vset.pattern.permute.xlu0 0
      %6462 = vperm.xlu0 %6461, %v5959
      %v6463 = vpop.permute.xlu0 %6462
      %6464 = vset.pattern.permute.xlu0 0
      %6465 = vperm.xlu0 %6464, %v5960
      %v6466 = vpop.permute.xlu0 %6465
      %6467 = vset.pattern.permute.xlu0 0
      %6468 = vperm.xlu0 %6467, %v5961
      %v6469 = vpop.permute.xlu0 %6468
      %6470 = vset.pattern.permute.xlu0 0
      %6471 = vperm.xlu0 %6470, %v5962
      %v6472 = vpop.permute.xlu0 %6471
      %6473 = vset.pattern.permute.xlu0 0
      %6474 = vperm.xlu0 %6473, %v5963
      %v6475 = vpop.permute.xlu0 %6474
      %v6476 = vlaneseq
      %v6477 = vshrl.u32 %v6476, 7
      %v6478 = vsub.s32 %v1900, %v6477
      %v6479 = vrot.slane %v6094, %v6478
      %v6480 = vlaneseq
      %v6481 = vshrl.u32 %v6480, 7
      %v6482 = vsub.s32 %v3540, %v6481
      %v6483 = vrot.slane %v6097, %v6482
      %v6484 = vsel %vm3545, %v6483, %v6479
      %v6485 = vlaneseq
      %v6486 = vshrl.u32 %v6485, 7
      %v6487 = vsub.s32 %v3547, %v6486
      %v6488 = vrot.slane %v6100, %v6487
      %v6489 = vsel %vm3552, %v6488, %v6484
      %v6490 = vlaneseq
      %v6491 = vshrl.u32 %v6490, 7
      %v6492 = vsub.s32 %v3554, %v6491
      %v6493 = vrot.slane %v6103, %v6492
      %v6494 = vsel %vm3559, %v6493, %v6489
      %v6495 = vlaneseq
      %v6496 = vshrl.u32 %v6495, 7
      %v6497 = vsub.s32 %v3561, %v6496
      %v6498 = vrot.slane %v6106, %v6497
      %v6499 = vsel %vm3566, %v6498, %v6494
      %v6500 = vlaneseq
      %v6501 = vshrl.u32 %v6500, 7
      %v6502 = vsub.s32 %v3568, %v6501
      %v6503 = vrot.slane %v6109, %v6502
      %v6504 = vsel %vm3573, %v6503, %v6499
      %v6505 = vlaneseq
      %v6506 = vshrl.u32 %v6505, 7
      %v6507 = vsub.s32 %v3575, %v6506
      %v6508 = vrot.slane %v6112, %v6507
      %v6509 = vsel %vm3580, %v6508, %v6504
      %v6510 = vlaneseq
      %v6511 = vshrl.u32 %v6510, 7
      %v6512 = vsub.s32 %v3582, %v6511
      %v6513 = vrot.slane %v6115, %v6512
      %v6514 = vsel %vm3587, %v6513, %v6509
      %v6515 = vlaneseq
      %v6516 = vshrl.u32 %v6515, 7
      %v6517 = vsub.s32 %v3589, %v6516
      %v6518 = vrot.slane %v6118, %v6517
      %v6519 = vsel %vm3594, %v6518, %v6514
      %v6520 = vlaneseq
      %v6521 = vshrl.u32 %v6520, 7
      %v6522 = vsub.s32 %v3596, %v6521
      %v6523 = vrot.slane %v6121, %v6522
      %v6524 = vsel %vm3601, %v6523, %v6519
      %v6525 = vlaneseq
      %v6526 = vshrl.u32 %v6525, 7
      %v6527 = vsub.s32 %v3603, %v6526
      %v6528 = vrot.slane %v6124, %v6527
      %v6529 = vsel %vm3608, %v6528, %v6524
      %v6530 = vlaneseq
      %v6531 = vshrl.u32 %v6530, 7
      %v6532 = vsub.s32 %v3610, %v6531
      %v6533 = vrot.slane %v6127, %v6532
      %v6534 = vsel %vm3615, %v6533, %v6529
      %v6535 = vlaneseq
      %v6536 = vshrl.u32 %v6535, 7
      %v6537 = vsub.s32 %v3617, %v6536
      %v6538 = vrot.slane %v6130, %v6537
      %v6539 = vsel %vm3622, %v6538, %v6534
      %v6540 = vlaneseq
      %v6541 = vshrl.u32 %v6540, 7
      %v6542 = vsub.s32 %v3624, %v6541
      %v6543 = vrot.slane %v6133, %v6542
      %v6544 = vsel %vm3629, %v6543, %v6539
      %v6545 = vlaneseq
      %v6546 = vshrl.u32 %v6545, 7
      %v6547 = vsub.s32 %v3631, %v6546
      %v6548 = vrot.slane %v6136, %v6547
      %v6549 = vsel %vm3636, %v6548, %v6544
      %v6550 = vlaneseq
      %v6551 = vshrl.u32 %v6550, 7
      %v6552 = vsub.s32 %v3638, %v6551
      %v6553 = vrot.slane %v6139, %v6552
      %v6554 = vsel %vm3643, %v6553, %v6549
      %v6555 = vlaneseq
      %v6556 = vshrl.u32 %v6555, 7
      %v6557 = vsub.s32 %v1900, %v6556
      %v6558 = vrot.slane %v6142, %v6557
      %v6559 = vlaneseq
      %v6560 = vshrl.u32 %v6559, 7
      %v6561 = vsub.s32 %v3540, %v6560
      %v6562 = vrot.slane %v6145, %v6561
      %v6563 = vsel %vm3545, %v6562, %v6558
      %v6564 = vlaneseq
      %v6565 = vshrl.u32 %v6564, 7
      %v6566 = vsub.s32 %v3547, %v6565
      %v6567 = vrot.slane %v6148, %v6566
      %v6568 = vsel %vm3552, %v6567, %v6563
      %v6569 = vlaneseq
      %v6570 = vshrl.u32 %v6569, 7
      %v6571 = vsub.s32 %v3554, %v6570
      %v6572 = vrot.slane %v6151, %v6571
      %v6573 = vsel %vm3559, %v6572, %v6568
      %v6574 = vlaneseq
      %v6575 = vshrl.u32 %v6574, 7
      %v6576 = vsub.s32 %v3561, %v6575
      %v6577 = vrot.slane %v6154, %v6576
      %v6578 = vsel %vm3566, %v6577, %v6573
      %v6579 = vlaneseq
      %v6580 = vshrl.u32 %v6579, 7
      %v6581 = vsub.s32 %v3568, %v6580
      %v6582 = vrot.slane %v6157, %v6581
      %v6583 = vsel %vm3573, %v6582, %v6578
      %v6584 = vlaneseq
      %v6585 = vshrl.u32 %v6584, 7
      %v6586 = vsub.s32 %v3575, %v6585
      %v6587 = vrot.slane %v6160, %v6586
      %v6588 = vsel %vm3580, %v6587, %v6583
      %v6589 = vlaneseq
      %v6590 = vshrl.u32 %v6589, 7
      %v6591 = vsub.s32 %v3582, %v6590
      %v6592 = vrot.slane %v6163, %v6591
      %v6593 = vsel %vm3587, %v6592, %v6588
      %v6594 = vlaneseq
      %v6595 = vshrl.u32 %v6594, 7
      %v6596 = vsub.s32 %v3589, %v6595
      %v6597 = vrot.slane %v6166, %v6596
      %v6598 = vsel %vm3594, %v6597, %v6593
      %v6599 = vlaneseq
      %v6600 = vshrl.u32 %v6599, 7
      %v6601 = vsub.s32 %v3596, %v6600
      %v6602 = vrot.slane %v6169, %v6601
      %v6603 = vsel %vm3601, %v6602, %v6598
      %v6604 = vlaneseq
      %v6605 = vshrl.u32 %v6604, 7
      %v6606 = vsub.s32 %v3603, %v6605
      %v6607 = vrot.slane %v6172, %v6606
      %v6608 = vsel %vm3608, %v6607, %v6603
      %v6609 = vlaneseq
      %v6610 = vshrl.u32 %v6609, 7
      %v6611 = vsub.s32 %v3610, %v6610
      %v6612 = vrot.slane %v6175, %v6611
      %v6613 = vsel %vm3615, %v6612, %v6608
      %v6614 = vlaneseq
      %v6615 = vshrl.u32 %v6614, 7
      %v6616 = vsub.s32 %v3617, %v6615
      %v6617 = vrot.slane %v6178, %v6616
      %v6618 = vsel %vm3622, %v6617, %v6613
      %v6619 = vlaneseq
      %v6620 = vshrl.u32 %v6619, 7
      %v6621 = vsub.s32 %v3624, %v6620
      %v6622 = vrot.slane %v6181, %v6621
      %v6623 = vsel %vm3629, %v6622, %v6618
      %v6624 = vlaneseq
      %v6625 = vshrl.u32 %v6624, 7
      %v6626 = vsub.s32 %v3631, %v6625
      %v6627 = vrot.slane %v6184, %v6626
      %v6628 = vsel %vm3636, %v6627, %v6623
      %v6629 = vlaneseq
      %v6630 = vshrl.u32 %v6629, 7
      %v6631 = vsub.s32 %v3638, %v6630
      %v6632 = vrot.slane %v6187, %v6631
      %v6633 = vsel %vm3643, %v6632, %v6628
      %v6634 = vlaneseq
      %v6635 = vshrl.u32 %v6634, 7
      %v6636 = vsub.s32 %v1900, %v6635
      %v6637 = vrot.slane %v6190, %v6636
      %v6638 = vlaneseq
      %v6639 = vshrl.u32 %v6638, 7
      %v6640 = vsub.s32 %v3540, %v6639
      %v6641 = vrot.slane %v6193, %v6640
      %v6642 = vsel %vm3545, %v6641, %v6637
      %v6643 = vlaneseq
      %v6644 = vshrl.u32 %v6643, 7
      %v6645 = vsub.s32 %v3547, %v6644
      %v6646 = vrot.slane %v6196, %v6645
      %v6647 = vsel %vm3552, %v6646, %v6642
      %v6648 = vlaneseq
      %v6649 = vshrl.u32 %v6648, 7
      %v6650 = vsub.s32 %v3554, %v6649
      %v6651 = vrot.slane %v6199, %v6650
      %v6652 = vsel %vm3559, %v6651, %v6647
      %v6653 = vlaneseq
      %v6654 = vshrl.u32 %v6653, 7
      %v6655 = vsub.s32 %v3561, %v6654
      %v6656 = vrot.slane %v6202, %v6655
      %v6657 = vsel %vm3566, %v6656, %v6652
      %v6658 = vlaneseq
      %v6659 = vshrl.u32 %v6658, 7
      %v6660 = vsub.s32 %v3568, %v6659
      %v6661 = vrot.slane %v6205, %v6660
      %v6662 = vsel %vm3573, %v6661, %v6657
      %v6663 = vlaneseq
      %v6664 = vshrl.u32 %v6663, 7
      %v6665 = vsub.s32 %v3575, %v6664
      %v6666 = vrot.slane %v6208, %v6665
      %v6667 = vsel %vm3580, %v6666, %v6662
      %v6668 = vlaneseq
      %v6669 = vshrl.u32 %v6668, 7
      %v6670 = vsub.s32 %v3582, %v6669
      %v6671 = vrot.slane %v6211, %v6670
      %v6672 = vsel %vm3587, %v6671, %v6667
      %v6673 = vlaneseq
      %v6674 = vshrl.u32 %v6673, 7
      %v6675 = vsub.s32 %v3589, %v6674
      %v6676 = vrot.slane %v6214, %v6675
      %v6677 = vsel %vm3594, %v6676, %v6672
      %v6678 = vlaneseq
      %v6679 = vshrl.u32 %v6678, 7
      %v6680 = vsub.s32 %v3596, %v6679
      %v6681 = vrot.slane %v6217, %v6680
      %v6682 = vsel %vm3601, %v6681, %v6677
      %v6683 = vlaneseq
      %v6684 = vshrl.u32 %v6683, 7
      %v6685 = vsub.s32 %v3603, %v6684
      %v6686 = vrot.slane %v6220, %v6685
      %v6687 = vsel %vm3608, %v6686, %v6682
      %v6688 = vlaneseq
      %v6689 = vshrl.u32 %v6688, 7
      %v6690 = vsub.s32 %v3610, %v6689
      %v6691 = vrot.slane %v6223, %v6690
      %v6692 = vsel %vm3615, %v6691, %v6687
      %v6693 = vlaneseq
      %v6694 = vshrl.u32 %v6693, 7
      %v6695 = vsub.s32 %v3617, %v6694
      %v6696 = vrot.slane %v6226, %v6695
      %v6697 = vsel %vm3622, %v6696, %v6692
      %v6698 = vlaneseq
      %v6699 = vshrl.u32 %v6698, 7
      %v6700 = vsub.s32 %v3624, %v6699
      %v6701 = vrot.slane %v6229, %v6700
      %v6702 = vsel %vm3629, %v6701, %v6697
      %v6703 = vlaneseq
      %v6704 = vshrl.u32 %v6703, 7
      %v6705 = vsub.s32 %v3631, %v6704
      %v6706 = vrot.slane %v6232, %v6705
      %v6707 = vsel %vm3636, %v6706, %v6702
      %v6708 = vlaneseq
      %v6709 = vshrl.u32 %v6708, 7
      %v6710 = vsub.s32 %v3638, %v6709
      %v6711 = vrot.slane %v6235, %v6710
      %v6712 = vsel %vm3643, %v6711, %v6707
      %v6713 = vlaneseq
      %v6714 = vshrl.u32 %v6713, 7
      %v6715 = vsub.s32 %v1900, %v6714
      %v6716 = vrot.slane %v6238, %v6715
      %v6717 = vlaneseq
      %v6718 = vshrl.u32 %v6717, 7
      %v6719 = vsub.s32 %v3540, %v6718
      %v6720 = vrot.slane %v6241, %v6719
      %v6721 = vsel %vm3545, %v6720, %v6716
      %v6722 = vlaneseq
      %v6723 = vshrl.u32 %v6722, 7
      %v6724 = vsub.s32 %v3547, %v6723
      %v6725 = vrot.slane %v6244, %v6724
      %v6726 = vsel %vm3552, %v6725, %v6721
      %v6727 = vlaneseq
      %v6728 = vshrl.u32 %v6727, 7
      %v6729 = vsub.s32 %v3554, %v6728
      %v6730 = vrot.slane %v6247, %v6729
      %v6731 = vsel %vm3559, %v6730, %v6726
      %v6732 = vlaneseq
      %v6733 = vshrl.u32 %v6732, 7
      %v6734 = vsub.s32 %v3561, %v6733
      %v6735 = vrot.slane %v6250, %v6734
      %v6736 = vsel %vm3566, %v6735, %v6731
      %v6737 = vlaneseq
      %v6738 = vshrl.u32 %v6737, 7
      %v6739 = vsub.s32 %v3568, %v6738
      %v6740 = vrot.slane %v6253, %v6739
      %v6741 = vsel %vm3573, %v6740, %v6736
      %v6742 = vlaneseq
      %v6743 = vshrl.u32 %v6742, 7
      %v6744 = vsub.s32 %v3575, %v6743
      %v6745 = vrot.slane %v6256, %v6744
      %v6746 = vsel %vm3580, %v6745, %v6741
      %v6747 = vlaneseq
      %v6748 = vshrl.u32 %v6747, 7
      %v6749 = vsub.s32 %v3582, %v6748
      %v6750 = vrot.slane %v6259, %v6749
      %v6751 = vsel %vm3587, %v6750, %v6746
      %v6752 = vlaneseq
      %v6753 = vshrl.u32 %v6752, 7
      %v6754 = vsub.s32 %v3589, %v6753
      %v6755 = vrot.slane %v6262, %v6754
      %v6756 = vsel %vm3594, %v6755, %v6751
      %v6757 = vlaneseq
      %v6758 = vshrl.u32 %v6757, 7
      %v6759 = vsub.s32 %v3596, %v6758
      %v6760 = vrot.slane %v6265, %v6759
      %v6761 = vsel %vm3601, %v6760, %v6756
      %v6762 = vlaneseq
      %v6763 = vshrl.u32 %v6762, 7
      %v6764 = vsub.s32 %v3603, %v6763
      %v6765 = vrot.slane %v6268, %v6764
      %v6766 = vsel %vm3608, %v6765, %v6761
      %v6767 = vlaneseq
      %v6768 = vshrl.u32 %v6767, 7
      %v6769 = vsub.s32 %v3610, %v6768
      %v6770 = vrot.slane %v6271, %v6769
      %v6771 = vsel %vm3615, %v6770, %v6766
      %v6772 = vlaneseq
      %v6773 = vshrl.u32 %v6772, 7
      %v6774 = vsub.s32 %v3617, %v6773
      %v6775 = vrot.slane %v6274, %v6774
      %v6776 = vsel %vm3622, %v6775, %v6771
      %v6777 = vlaneseq
      %v6778 = vshrl.u32 %v6777, 7
      %v6779 = vsub.s32 %v3624, %v6778
      %v6780 = vrot.slane %v6277, %v6779
      %v6781 = vsel %vm3629, %v6780, %v6776
      %v6782 = vlaneseq
      %v6783 = vshrl.u32 %v6782, 7
      %v6784 = vsub.s32 %v3631, %v6783
      %v6785 = vrot.slane %v6280, %v6784
      %v6786 = vsel %vm3636, %v6785, %v6781
      %v6787 = vlaneseq
      %v6788 = vshrl.u32 %v6787, 7
      %v6789 = vsub.s32 %v3638, %v6788
      %v6790 = vrot.slane %v6283, %v6789
      %v6791 = vsel %vm3643, %v6790, %v6786
      %v6792 = vlaneseq
      %v6793 = vshrl.u32 %v6792, 7
      %v6794 = vsub.s32 %v1900, %v6793
      %v6795 = vrot.slane %v6286, %v6794
      %v6796 = vlaneseq
      %v6797 = vshrl.u32 %v6796, 7
      %v6798 = vsub.s32 %v3540, %v6797
      %v6799 = vrot.slane %v6289, %v6798
      %v6800 = vsel %vm3545, %v6799, %v6795
      %v6801 = vlaneseq
      %v6802 = vshrl.u32 %v6801, 7
      %v6803 = vsub.s32 %v3547, %v6802
      %v6804 = vrot.slane %v6292, %v6803
      %v6805 = vsel %vm3552, %v6804, %v6800
      %v6806 = vlaneseq
      %v6807 = vshrl.u32 %v6806, 7
      %v6808 = vsub.s32 %v3554, %v6807
      %v6809 = vrot.slane %v6295, %v6808
      %v6810 = vsel %vm3559, %v6809, %v6805
      %v6811 = vlaneseq
      %v6812 = vshrl.u32 %v6811, 7
      %v6813 = vsub.s32 %v3561, %v6812
      %v6814 = vrot.slane %v6298, %v6813
      %v6815 = vsel %vm3566, %v6814, %v6810
      %v6816 = vlaneseq
      %v6817 = vshrl.u32 %v6816, 7
      %v6818 = vsub.s32 %v3568, %v6817
      %v6819 = vrot.slane %v6301, %v6818
      %v6820 = vsel %vm3573, %v6819, %v6815
      %v6821 = vlaneseq
      %v6822 = vshrl.u32 %v6821, 7
      %v6823 = vsub.s32 %v3575, %v6822
      %v6824 = vrot.slane %v6304, %v6823
      %v6825 = vsel %vm3580, %v6824, %v6820
      %v6826 = vlaneseq
      %v6827 = vshrl.u32 %v6826, 7
      %v6828 = vsub.s32 %v3582, %v6827
      %v6829 = vrot.slane %v6307, %v6828
      %v6830 = vsel %vm3587, %v6829, %v6825
      %v6831 = vlaneseq
      %v6832 = vshrl.u32 %v6831, 7
      %v6833 = vsub.s32 %v3589, %v6832
      %v6834 = vrot.slane %v6310, %v6833
      %v6835 = vsel %vm3594, %v6834, %v6830
      %v6836 = vlaneseq
      %v6837 = vshrl.u32 %v6836, 7
      %v6838 = vsub.s32 %v3596, %v6837
      %v6839 = vrot.slane %v6313, %v6838
      %v6840 = vsel %vm3601, %v6839, %v6835
      %v6841 = vlaneseq
      %v6842 = vshrl.u32 %v6841, 7
      %v6843 = vsub.s32 %v3603, %v6842
      %v6844 = vrot.slane %v6316, %v6843
      %v6845 = vsel %vm3608, %v6844, %v6840
      %v6846 = vlaneseq
      %v6847 = vshrl.u32 %v6846, 7
      %v6848 = vsub.s32 %v3610, %v6847
      %v6849 = vrot.slane %v6319, %v6848
      %v6850 = vsel %vm3615, %v6849, %v6845
      %v6851 = vlaneseq
      %v6852 = vshrl.u32 %v6851, 7
      %v6853 = vsub.s32 %v3617, %v6852
      %v6854 = vrot.slane %v6322, %v6853
      %v6855 = vsel %vm3622, %v6854, %v6850
      %v6856 = vlaneseq
      %v6857 = vshrl.u32 %v6856, 7
      %v6858 = vsub.s32 %v3624, %v6857
      %v6859 = vrot.slane %v6325, %v6858
      %v6860 = vsel %vm3629, %v6859, %v6855
      %v6861 = vlaneseq
      %v6862 = vshrl.u32 %v6861, 7
      %v6863 = vsub.s32 %v3631, %v6862
      %v6864 = vrot.slane %v6328, %v6863
      %v6865 = vsel %vm3636, %v6864, %v6860
      %v6866 = vlaneseq
      %v6867 = vshrl.u32 %v6866, 7
      %v6868 = vsub.s32 %v3638, %v6867
      %v6869 = vrot.slane %v6331, %v6868
      %v6870 = vsel %vm3643, %v6869, %v6865
      %v6871 = vlaneseq
      %v6872 = vshrl.u32 %v6871, 7
      %v6873 = vsub.s32 %v1900, %v6872
      %v6874 = vrot.slane %v6334, %v6873
      %v6875 = vlaneseq
      %v6876 = vshrl.u32 %v6875, 7
      %v6877 = vsub.s32 %v3540, %v6876
      %v6878 = vrot.slane %v6337, %v6877
      %v6879 = vsel %vm3545, %v6878, %v6874
      %v6880 = vlaneseq
      %v6881 = vshrl.u32 %v6880, 7
      %v6882 = vsub.s32 %v3547, %v6881
      %v6883 = vrot.slane %v6340, %v6882
      %v6884 = vsel %vm3552, %v6883, %v6879
      %v6885 = vlaneseq
      %v6886 = vshrl.u32 %v6885, 7
      %v6887 = vsub.s32 %v3554, %v6886
      %v6888 = vrot.slane %v6343, %v6887
      %v6889 = vsel %vm3559, %v6888, %v6884
      %v6890 = vlaneseq
      %v6891 = vshrl.u32 %v6890, 7
      %v6892 = vsub.s32 %v3561, %v6891
      %v6893 = vrot.slane %v6346, %v6892
      %v6894 = vsel %vm3566, %v6893, %v6889
      %v6895 = vlaneseq
      %v6896 = vshrl.u32 %v6895, 7
      %v6897 = vsub.s32 %v3568, %v6896
      %v6898 = vrot.slane %v6349, %v6897
      %v6899 = vsel %vm3573, %v6898, %v6894
      %v6900 = vlaneseq
      %v6901 = vshrl.u32 %v6900, 7
      %v6902 = vsub.s32 %v3575, %v6901
      %v6903 = vrot.slane %v6352, %v6902
      %v6904 = vsel %vm3580, %v6903, %v6899
      %v6905 = vlaneseq
      %v6906 = vshrl.u32 %v6905, 7
      %v6907 = vsub.s32 %v3582, %v6906
      %v6908 = vrot.slane %v6355, %v6907
      %v6909 = vsel %vm3587, %v6908, %v6904
      %v6910 = vlaneseq
      %v6911 = vshrl.u32 %v6910, 7
      %v6912 = vsub.s32 %v3589, %v6911
      %v6913 = vrot.slane %v6358, %v6912
      %v6914 = vsel %vm3594, %v6913, %v6909
      %v6915 = vlaneseq
      %v6916 = vshrl.u32 %v6915, 7
      %v6917 = vsub.s32 %v3596, %v6916
      %v6918 = vrot.slane %v6361, %v6917
      %v6919 = vsel %vm3601, %v6918, %v6914
      %v6920 = vlaneseq
      %v6921 = vshrl.u32 %v6920, 7
      %v6922 = vsub.s32 %v3603, %v6921
      %v6923 = vrot.slane %v6364, %v6922
      %v6924 = vsel %vm3608, %v6923, %v6919
      %v6925 = vlaneseq
      %v6926 = vshrl.u32 %v6925, 7
      %v6927 = vsub.s32 %v3610, %v6926
      %v6928 = vrot.slane %v6367, %v6927
      %v6929 = vsel %vm3615, %v6928, %v6924
      %v6930 = vlaneseq
      %v6931 = vshrl.u32 %v6930, 7
      %v6932 = vsub.s32 %v3617, %v6931
      %v6933 = vrot.slane %v6370, %v6932
      %v6934 = vsel %vm3622, %v6933, %v6929
      %v6935 = vlaneseq
      %v6936 = vshrl.u32 %v6935, 7
      %v6937 = vsub.s32 %v3624, %v6936
      %v6938 = vrot.slane %v6373, %v6937
      %v6939 = vsel %vm3629, %v6938, %v6934
      %v6940 = vlaneseq
      %v6941 = vshrl.u32 %v6940, 7
      %v6942 = vsub.s32 %v3631, %v6941
      %v6943 = vrot.slane %v6376, %v6942
      %v6944 = vsel %vm3636, %v6943, %v6939
      %v6945 = vlaneseq
      %v6946 = vshrl.u32 %v6945, 7
      %v6947 = vsub.s32 %v3638, %v6946
      %v6948 = vrot.slane %v6379, %v6947
      %v6949 = vsel %vm3643, %v6948, %v6944
      %v6950 = vlaneseq
      %v6951 = vshrl.u32 %v6950, 7
      %v6952 = vsub.s32 %v1900, %v6951
      %v6953 = vrot.slane %v6382, %v6952
      %v6954 = vlaneseq
      %v6955 = vshrl.u32 %v6954, 7
      %v6956 = vsub.s32 %v3540, %v6955
      %v6957 = vrot.slane %v6385, %v6956
      %v6958 = vsel %vm3545, %v6957, %v6953
      %v6959 = vlaneseq
      %v6960 = vshrl.u32 %v6959, 7
      %v6961 = vsub.s32 %v3547, %v6960
      %v6962 = vrot.slane %v6388, %v6961
      %v6963 = vsel %vm3552, %v6962, %v6958
      %v6964 = vlaneseq
      %v6965 = vshrl.u32 %v6964, 7
      %v6966 = vsub.s32 %v3554, %v6965
      %v6967 = vrot.slane %v6391, %v6966
      %v6968 = vsel %vm3559, %v6967, %v6963
      %v6969 = vlaneseq
      %v6970 = vshrl.u32 %v6969, 7
      %v6971 = vsub.s32 %v3561, %v6970
      %v6972 = vrot.slane %v6394, %v6971
      %v6973 = vsel %vm3566, %v6972, %v6968
      %v6974 = vlaneseq
      %v6975 = vshrl.u32 %v6974, 7
      %v6976 = vsub.s32 %v3568, %v6975
      %v6977 = vrot.slane %v6397, %v6976
      %v6978 = vsel %vm3573, %v6977, %v6973
      %v6979 = vlaneseq
      %v6980 = vshrl.u32 %v6979, 7
      %v6981 = vsub.s32 %v3575, %v6980
      %v6982 = vrot.slane %v6400, %v6981
      %v6983 = vsel %vm3580, %v6982, %v6978
      %v6984 = vlaneseq
      %v6985 = vshrl.u32 %v6984, 7
      %v6986 = vsub.s32 %v3582, %v6985
      %v6987 = vrot.slane %v6403, %v6986
      %v6988 = vsel %vm3587, %v6987, %v6983
      %v6989 = vlaneseq
      %v6990 = vshrl.u32 %v6989, 7
      %v6991 = vsub.s32 %v3589, %v6990
      %v6992 = vrot.slane %v6406, %v6991
      %v6993 = vsel %vm3594, %v6992, %v6988
      %v6994 = vlaneseq
      %v6995 = vshrl.u32 %v6994, 7
      %v6996 = vsub.s32 %v3596, %v6995
      %v6997 = vrot.slane %v6409, %v6996
      %v6998 = vsel %vm3601, %v6997, %v6993
      %v6999 = vlaneseq
      %v7000 = vshrl.u32 %v6999, 7
      %v7001 = vsub.s32 %v3603, %v7000
      %v7002 = vrot.slane %v6412, %v7001
      %v7003 = vsel %vm3608, %v7002, %v6998
      %v7004 = vlaneseq
      %v7005 = vshrl.u32 %v7004, 7
      %v7006 = vsub.s32 %v3610, %v7005
      %v7007 = vrot.slane %v6415, %v7006
      %v7008 = vsel %vm3615, %v7007, %v7003
      %v7009 = vlaneseq
      %v7010 = vshrl.u32 %v7009, 7
      %v7011 = vsub.s32 %v3617, %v7010
      %v7012 = vrot.slane %v6418, %v7011
      %v7013 = vsel %vm3622, %v7012, %v7008
      %v7014 = vlaneseq
      %v7015 = vshrl.u32 %v7014, 7
      %v7016 = vsub.s32 %v3624, %v7015
      %v7017 = vrot.slane %v6421, %v7016
      %v7018 = vsel %vm3629, %v7017, %v7013
      %v7019 = vlaneseq
      %v7020 = vshrl.u32 %v7019, 7
      %v7021 = vsub.s32 %v3631, %v7020
      %v7022 = vrot.slane %v6424, %v7021
      %v7023 = vsel %vm3636, %v7022, %v7018
      %v7024 = vlaneseq
      %v7025 = vshrl.u32 %v7024, 7
      %v7026 = vsub.s32 %v3638, %v7025
      %v7027 = vrot.slane %v6427, %v7026
      %v7028 = vsel %vm3643, %v7027, %v7023
      %v7029 = vlaneseq
      %v7030 = vshrl.u32 %v7029, 7
      %v7031 = vsub.s32 %v1900, %v7030
      %v7032 = vrot.slane %v6430, %v7031
      %v7033 = vlaneseq
      %v7034 = vshrl.u32 %v7033, 7
      %v7035 = vsub.s32 %v3540, %v7034
      %v7036 = vrot.slane %v6433, %v7035
      %v7037 = vsel %vm3545, %v7036, %v7032
      %v7038 = vlaneseq
      %v7039 = vshrl.u32 %v7038, 7
      %v7040 = vsub.s32 %v3547, %v7039
      %v7041 = vrot.slane %v6436, %v7040
      %v7042 = vsel %vm3552, %v7041, %v7037
      %v7043 = vlaneseq
      %v7044 = vshrl.u32 %v7043, 7
      %v7045 = vsub.s32 %v3554, %v7044
      %v7046 = vrot.slane %v6439, %v7045
      %v7047 = vsel %vm3559, %v7046, %v7042
      %v7048 = vlaneseq
      %v7049 = vshrl.u32 %v7048, 7
      %v7050 = vsub.s32 %v3561, %v7049
      %v7051 = vrot.slane %v6442, %v7050
      %v7052 = vsel %vm3566, %v7051, %v7047
      %v7053 = vlaneseq
      %v7054 = vshrl.u32 %v7053, 7
      %v7055 = vsub.s32 %v3568, %v7054
      %v7056 = vrot.slane %v6445, %v7055
      %v7057 = vsel %vm3573, %v7056, %v7052
      %v7058 = vlaneseq
      %v7059 = vshrl.u32 %v7058, 7
      %v7060 = vsub.s32 %v3575, %v7059
      %v7061 = vrot.slane %v6448, %v7060
      %v7062 = vsel %vm3580, %v7061, %v7057
      %v7063 = vlaneseq
      %v7064 = vshrl.u32 %v7063, 7
      %v7065 = vsub.s32 %v3582, %v7064
      %v7066 = vrot.slane %v6451, %v7065
      %v7067 = vsel %vm3587, %v7066, %v7062
      %v7068 = vlaneseq
      %v7069 = vshrl.u32 %v7068, 7
      %v7070 = vsub.s32 %v3589, %v7069
      %v7071 = vrot.slane %v6454, %v7070
      %v7072 = vsel %vm3594, %v7071, %v7067
      %v7073 = vlaneseq
      %v7074 = vshrl.u32 %v7073, 7
      %v7075 = vsub.s32 %v3596, %v7074
      %v7076 = vrot.slane %v6457, %v7075
      %v7077 = vsel %vm3601, %v7076, %v7072
      %v7078 = vlaneseq
      %v7079 = vshrl.u32 %v7078, 7
      %v7080 = vsub.s32 %v3603, %v7079
      %v7081 = vrot.slane %v6460, %v7080
      %v7082 = vsel %vm3608, %v7081, %v7077
      %v7083 = vlaneseq
      %v7084 = vshrl.u32 %v7083, 7
      %v7085 = vsub.s32 %v3610, %v7084
      %v7086 = vrot.slane %v6463, %v7085
      %v7087 = vsel %vm3615, %v7086, %v7082
      %v7088 = vlaneseq
      %v7089 = vshrl.u32 %v7088, 7
      %v7090 = vsub.s32 %v3617, %v7089
      %v7091 = vrot.slane %v6466, %v7090
      %v7092 = vsel %vm3622, %v7091, %v7087
      %v7093 = vlaneseq
      %v7094 = vshrl.u32 %v7093, 7
      %v7095 = vsub.s32 %v3624, %v7094
      %v7096 = vrot.slane %v6469, %v7095
      %v7097 = vsel %vm3629, %v7096, %v7092
      %v7098 = vlaneseq
      %v7099 = vshrl.u32 %v7098, 7
      %v7100 = vsub.s32 %v3631, %v7099
      %v7101 = vrot.slane %v6472, %v7100
      %v7102 = vsel %vm3636, %v7101, %v7097
      %v7103 = vlaneseq
      %v7104 = vshrl.u32 %v7103, 7
      %v7105 = vsub.s32 %v3638, %v7104
      %v7106 = vrot.slane %v6475, %v7105
      %v7107 = vsel %vm3643, %v7106, %v7102
      %v7108 = vsel %vm634, %v6633, %v6554
      %v7109 = vsel %vm636, %v6712, %v7108
      %v7110 = vsel %vm638, %v6791, %v7109
      %v7111 = vsel %vm640, %v6870, %v7110
      %v7112 = vsel %vm642, %v6949, %v7111
      %v7113 = vsel %vm644, %v7028, %v7112
      %v7114 = vsel %vm646, %v7107, %v7113
      %v7116 = vld [vmem:[#allocation3] sm:$0xff]
      %v7117 = vld [vmem:[#allocation3 + $0x8] sm:$0xff]
      %v7118 = vld [vmem:[#allocation3 + $0x10] sm:$0xff]
      %v7119 = vld [vmem:[#allocation3 + $0x18] sm:$0xff]
      %v7120 = vld [vmem:[#allocation3 + $0x20] sm:$0xff]
      %v7121 = vld [vmem:[#allocation3 + $0x28] sm:$0xff]
      %v7122 = vld [vmem:[#allocation3 + $0x30] sm:$0xff]
      %v7123 = vld [vmem:[#allocation3 + $0x38] sm:$0xff]
      %v7124 = vmul.f32 %v7114, %v7116
      %v7125 = vmul.f32 %v7114, %v7117
      %v7126 = vmul.f32 %v7114, %v7118
      %v7127 = vmul.f32 %v7114, %v7119
      %v7128 = vmul.f32 %v7114, %v7120
      %v7129 = vmul.f32 %v7114, %v7121
      %v7130 = vmul.f32 %v7114, %v7122
      %v7131 = vmul.f32 %v7114, %v7123
      %v7132 = vpack.c.bf16 %v7124, %v7124
      %v7133 = vpack.c.bf16 %v7125, %v7125
      %v7134 = vpack.c.bf16 %v7126, %v7126
      %v7135 = vpack.c.bf16 %v7127, %v7127
      %v7136 = vpack.c.bf16 %v7128, %v7128
      %v7137 = vpack.c.bf16 %v7129, %v7129
      %v7138 = vpack.c.bf16 %v7130, %v7130
      %v7139 = vpack.c.bf16 %v7131, %v7131
      %v7140 = vld [vmem:[#allocation5] sm:$0xf]
      %v7141 = vld [vmem:[#allocation5 + $0x4] sm:$0xf]
      %v7142 = vld [vmem:[#allocation5 + $0x8] sm:$0xf]
      %v7143 = vld [vmem:[#allocation5 + $0xc] sm:$0xf]
      %v7144 = vld [vmem:[#allocation5 + $0x10] sm:$0xf]
      %v7145 = vld [vmem:[#allocation5 + $0x14] sm:$0xf]
      %v7146 = vld [vmem:[#allocation5 + $0x18] sm:$0xf]
      %v7147 = vld [vmem:[#allocation5 + $0x1c] sm:$0xf]
      %v7148 = vld [vmem:[#allocation5 + $0x20] sm:$0xf]
      %v7149 = vld [vmem:[#allocation5 + $0x24] sm:$0xf]
      %v7150 = vld [vmem:[#allocation5 + $0x28] sm:$0xf]
      %v7151 = vld [vmem:[#allocation5 + $0x2c] sm:$0xf]
      %v7152 = vld [vmem:[#allocation5 + $0x30] sm:$0xf]
      %v7153 = vld [vmem:[#allocation5 + $0x34] sm:$0xf]
      %v7154 = vld [vmem:[#allocation5 + $0x38] sm:$0xf]
      %v7155 = vld [vmem:[#allocation5 + $0x3c] sm:$0xf]
      %v7156 = vld [vmem:[#allocation5 + $0x40] sm:$0xf]
      %v7157 = vld [vmem:[#allocation5 + $0x44] sm:$0xf]
      %v7158 = vld [vmem:[#allocation5 + $0x48] sm:$0xf]
      %v7159 = vld [vmem:[#allocation5 + $0x4c] sm:$0xf]
      %v7160 = vld [vmem:[#allocation5 + $0x50] sm:$0xf]
      %v7161 = vld [vmem:[#allocation5 + $0x54] sm:$0xf]
      %v7162 = vld [vmem:[#allocation5 + $0x58] sm:$0xf]
      %v7163 = vld [vmem:[#allocation5 + $0x5c] sm:$0xf]
      %v7164 = vld [vmem:[#allocation5 + $0x60] sm:$0xf]
      %v7165 = vld [vmem:[#allocation5 + $0x64] sm:$0xf]
      %v7166 = vld [vmem:[#allocation5 + $0x68] sm:$0xf]
      %v7167 = vld [vmem:[#allocation5 + $0x6c] sm:$0xf]
      %v7168 = vld [vmem:[#allocation5 + $0x70] sm:$0xf]
      %v7169 = vld [vmem:[#allocation5 + $0x74] sm:$0xf]
      %v7170 = vld [vmem:[#allocation5 + $0x78] sm:$0xf]
      %v7171 = vld [vmem:[#allocation5 + $0x7c] sm:$0xf]
      %v7172 = vld [vmem:[#allocation5 + $0x80] sm:$0xf]
      %v7173 = vld [vmem:[#allocation5 + $0x84] sm:$0xf]
      %v7174 = vld [vmem:[#allocation5 + $0x88] sm:$0xf]
      %v7175 = vld [vmem:[#allocation5 + $0x8c] sm:$0xf]
      %v7176 = vld [vmem:[#allocation5 + $0x90] sm:$0xf]
      %v7177 = vld [vmem:[#allocation5 + $0x94] sm:$0xf]
      %v7178 = vld [vmem:[#allocation5 + $0x98] sm:$0xf]
      %v7179 = vld [vmem:[#allocation5 + $0x9c] sm:$0xf]
      %v7180 = vld [vmem:[#allocation5 + $0xa0] sm:$0xf]
      %v7181 = vld [vmem:[#allocation5 + $0xa4] sm:$0xf]
      %v7182 = vld [vmem:[#allocation5 + $0xa8] sm:$0xf]
      %v7183 = vld [vmem:[#allocation5 + $0xac] sm:$0xf]
      %v7184 = vld [vmem:[#allocation5 + $0xb0] sm:$0xf]
      %v7185 = vld [vmem:[#allocation5 + $0xb4] sm:$0xf]
      %v7186 = vld [vmem:[#allocation5 + $0xb8] sm:$0xf]
      %v7187 = vld [vmem:[#allocation5 + $0xbc] sm:$0xf]
      %v7188 = vld [vmem:[#allocation5 + $0xc0] sm:$0xf]
      %v7189 = vld [vmem:[#allocation5 + $0xc4] sm:$0xf]
      %v7190 = vld [vmem:[#allocation5 + $0xc8] sm:$0xf]
      %v7191 = vld [vmem:[#allocation5 + $0xcc] sm:$0xf]
      %v7192 = vld [vmem:[#allocation5 + $0xd0] sm:$0xf]
      %v7193 = vld [vmem:[#allocation5 + $0xd4] sm:$0xf]
      %v7194 = vld [vmem:[#allocation5 + $0xd8] sm:$0xf]
      %v7195 = vld [vmem:[#allocation5 + $0xdc] sm:$0xf]
      %v7196 = vld [vmem:[#allocation5 + $0xe0] sm:$0xf]
      %v7197 = vld [vmem:[#allocation5 + $0xe4] sm:$0xf]
      %v7198 = vld [vmem:[#allocation5 + $0xe8] sm:$0xf]
      %v7199 = vld [vmem:[#allocation5 + $0xec] sm:$0xf]
      %v7200 = vld [vmem:[#allocation5 + $0xf0] sm:$0xf]
      %v7201 = vld [vmem:[#allocation5 + $0xf4] sm:$0xf]
      %v7202 = vld [vmem:[#allocation5 + $0xf8] sm:$0xf]
      %v7203 = vld [vmem:[#allocation5 + $0xfc] sm:$0xf]
      %v7204 = vld [vmem:[#allocation5 + $0x100] sm:$0xf]
      %v7205 = vld [vmem:[#allocation5 + $0x104] sm:$0xf]
      %v7206 = vld [vmem:[#allocation5 + $0x108] sm:$0xf]
      %v7207 = vld [vmem:[#allocation5 + $0x10c] sm:$0xf]
      %v7208 = vld [vmem:[#allocation5 + $0x110] sm:$0xf]
      %v7209 = vld [vmem:[#allocation5 + $0x114] sm:$0xf]
      %v7210 = vld [vmem:[#allocation5 + $0x118] sm:$0xf]
      %v7211 = vld [vmem:[#allocation5 + $0x11c] sm:$0xf]
      %v7212 = vld [vmem:[#allocation5 + $0x120] sm:$0xf]
      %v7213 = vld [vmem:[#allocation5 + $0x124] sm:$0xf]
      %v7214 = vld [vmem:[#allocation5 + $0x128] sm:$0xf]
      %v7215 = vld [vmem:[#allocation5 + $0x12c] sm:$0xf]
      %v7216 = vld [vmem:[#allocation5 + $0x130] sm:$0xf]
      %v7217 = vld [vmem:[#allocation5 + $0x134] sm:$0xf]
      %v7218 = vld [vmem:[#allocation5 + $0x138] sm:$0xf]
      %v7219 = vld [vmem:[#allocation5 + $0x13c] sm:$0xf]
      %v7220 = vld [vmem:[#allocation5 + $0x140] sm:$0xf]
      %v7221 = vld [vmem:[#allocation5 + $0x144] sm:$0xf]
      %v7222 = vld [vmem:[#allocation5 + $0x148] sm:$0xf]
      %v7223 = vld [vmem:[#allocation5 + $0x14c] sm:$0xf]
      %v7224 = vld [vmem:[#allocation5 + $0x150] sm:$0xf]
      %v7225 = vld [vmem:[#allocation5 + $0x154] sm:$0xf]
      %v7226 = vld [vmem:[#allocation5 + $0x158] sm:$0xf]
      %v7227 = vld [vmem:[#allocation5 + $0x15c] sm:$0xf]
      %v7228 = vld [vmem:[#allocation5 + $0x160] sm:$0xf]
      %v7229 = vld [vmem:[#allocation5 + $0x164] sm:$0xf]
      %v7230 = vld [vmem:[#allocation5 + $0x168] sm:$0xf]
      %v7231 = vld [vmem:[#allocation5 + $0x16c] sm:$0xf]
      %v7232 = vld [vmem:[#allocation5 + $0x170] sm:$0xf]
      %v7233 = vld [vmem:[#allocation5 + $0x174] sm:$0xf]
      %v7234 = vld [vmem:[#allocation5 + $0x178] sm:$0xf]
      %v7235 = vld [vmem:[#allocation5 + $0x17c] sm:$0xf]
      %v7236 = vld [vmem:[#allocation5 + $0x180] sm:$0xf]
      %v7237 = vld [vmem:[#allocation5 + $0x184] sm:$0xf]
      %v7238 = vld [vmem:[#allocation5 + $0x188] sm:$0xf]
      %v7239 = vld [vmem:[#allocation5 + $0x18c] sm:$0xf]
      %v7240 = vld [vmem:[#allocation5 + $0x190] sm:$0xf]
      %v7241 = vld [vmem:[#allocation5 + $0x194] sm:$0xf]
      %v7242 = vld [vmem:[#allocation5 + $0x198] sm:$0xf]
      %v7243 = vld [vmem:[#allocation5 + $0x19c] sm:$0xf]
      %v7244 = vld [vmem:[#allocation5 + $0x1a0] sm:$0xf]
      %v7245 = vld [vmem:[#allocation5 + $0x1a4] sm:$0xf]
      %v7246 = vld [vmem:[#allocation5 + $0x1a8] sm:$0xf]
      %v7247 = vld [vmem:[#allocation5 + $0x1ac] sm:$0xf]
      %v7248 = vld [vmem:[#allocation5 + $0x1b0] sm:$0xf]
      %v7249 = vld [vmem:[#allocation5 + $0x1b4] sm:$0xf]
      %v7250 = vld [vmem:[#allocation5 + $0x1b8] sm:$0xf]
      %v7251 = vld [vmem:[#allocation5 + $0x1bc] sm:$0xf]
      %v7252 = vld [vmem:[#allocation5 + $0x1c0] sm:$0xf]
      %v7253 = vld [vmem:[#allocation5 + $0x1c4] sm:$0xf]
      %v7254 = vld [vmem:[#allocation5 + $0x1c8] sm:$0xf]
      %v7255 = vld [vmem:[#allocation5 + $0x1cc] sm:$0xf]
      %v7256 = vld [vmem:[#allocation5 + $0x1d0] sm:$0xf]
      %v7257 = vld [vmem:[#allocation5 + $0x1d4] sm:$0xf]
      %v7258 = vld [vmem:[#allocation5 + $0x1d8] sm:$0xf]
      %v7259 = vld [vmem:[#allocation5 + $0x1dc] sm:$0xf]
      %v7260 = vld [vmem:[#allocation5 + $0x1e0] sm:$0xf]
      %v7261 = vld [vmem:[#allocation5 + $0x1e4] sm:$0xf]
      %v7262 = vld [vmem:[#allocation5 + $0x1e8] sm:$0xf]
      %v7263 = vld [vmem:[#allocation5 + $0x1ec] sm:$0xf]
      %v7264 = vld [vmem:[#allocation5 + $0x1f0] sm:$0xf]
      %v7265 = vld [vmem:[#allocation5 + $0x1f4] sm:$0xf]
      %v7266 = vld [vmem:[#allocation5 + $0x1f8] sm:$0xf]
      %v7267 = vld [vmem:[#allocation5 + $0x1fc] sm:$0xf]
      %v7396 = vunpack.c.l.b16 %v7140
      %v7397 = vunpack.c.l.b16 %v7141
      %v7398 = vunpack.c.l.b16 %v7142
      %v7399 = vunpack.c.l.b16 %v7143
      %v7400 = vunpack.c.l.b16 %v7144
      %v7401 = vunpack.c.l.b16 %v7145
      %v7402 = vunpack.c.l.b16 %v7146
      %v7403 = vunpack.c.l.b16 %v7147
      %v7404 = vunpack.c.l.b16 %v7148
      %v7405 = vunpack.c.l.b16 %v7149
      %v7406 = vunpack.c.l.b16 %v7150
      %v7407 = vunpack.c.l.b16 %v7151
      %v7408 = vunpack.c.l.b16 %v7152
      %v7409 = vunpack.c.l.b16 %v7153
      %v7410 = vunpack.c.l.b16 %v7154
      %v7411 = vunpack.c.l.b16 %v7155
      %v7412 = vunpack.c.l.b16 %v7156
      %v7413 = vunpack.c.l.b16 %v7157
      %v7414 = vunpack.c.l.b16 %v7158
      %v7415 = vunpack.c.l.b16 %v7159
      %v7416 = vunpack.c.l.b16 %v7160
      %v7417 = vunpack.c.l.b16 %v7161
      %v7418 = vunpack.c.l.b16 %v7162
      %v7419 = vunpack.c.l.b16 %v7163
      %v7420 = vunpack.c.l.b16 %v7164
      %v7421 = vunpack.c.l.b16 %v7165
      %v7422 = vunpack.c.l.b16 %v7166
      %v7423 = vunpack.c.l.b16 %v7167
      %v7424 = vunpack.c.l.b16 %v7168
      %v7425 = vunpack.c.l.b16 %v7169
      %v7426 = vunpack.c.l.b16 %v7170
      %v7427 = vunpack.c.l.b16 %v7171
      %v7428 = vunpack.c.l.b16 %v7172
      %v7429 = vunpack.c.l.b16 %v7173
      %v7430 = vunpack.c.l.b16 %v7174
      %v7431 = vunpack.c.l.b16 %v7175
      %v7432 = vunpack.c.l.b16 %v7176
      %v7433 = vunpack.c.l.b16 %v7177
      %v7434 = vunpack.c.l.b16 %v7178
      %v7435 = vunpack.c.l.b16 %v7179
      %v7436 = vunpack.c.l.b16 %v7180
      %v7437 = vunpack.c.l.b16 %v7181
      %v7438 = vunpack.c.l.b16 %v7182
      %v7439 = vunpack.c.l.b16 %v7183
      %v7440 = vunpack.c.l.b16 %v7184
      %v7441 = vunpack.c.l.b16 %v7185
      %v7442 = vunpack.c.l.b16 %v7186
      %v7443 = vunpack.c.l.b16 %v7187
      %v7444 = vunpack.c.l.b16 %v7188
      %v7445 = vunpack.c.l.b16 %v7189
      %v7446 = vunpack.c.l.b16 %v7190
      %v7447 = vunpack.c.l.b16 %v7191
      %v7448 = vunpack.c.l.b16 %v7192
      %v7449 = vunpack.c.l.b16 %v7193
      %v7450 = vunpack.c.l.b16 %v7194
      %v7451 = vunpack.c.l.b16 %v7195
      %v7452 = vunpack.c.l.b16 %v7196
      %v7453 = vunpack.c.l.b16 %v7197
      %v7454 = vunpack.c.l.b16 %v7198
      %v7455 = vunpack.c.l.b16 %v7199
      %v7456 = vunpack.c.l.b16 %v7200
      %v7457 = vunpack.c.l.b16 %v7201
      %v7458 = vunpack.c.l.b16 %v7202
      %v7459 = vunpack.c.l.b16 %v7203
      %v7460 = vunpack.c.l.b16 %v7204
      %v7461 = vunpack.c.l.b16 %v7205
      %v7462 = vunpack.c.l.b16 %v7206
      %v7463 = vunpack.c.l.b16 %v7207
      %v7464 = vunpack.c.l.b16 %v7208
      %v7465 = vunpack.c.l.b16 %v7209
      %v7466 = vunpack.c.l.b16 %v7210
      %v7467 = vunpack.c.l.b16 %v7211
      %v7468 = vunpack.c.l.b16 %v7212
      %v7469 = vunpack.c.l.b16 %v7213
      %v7470 = vunpack.c.l.b16 %v7214
      %v7471 = vunpack.c.l.b16 %v7215
      %v7472 = vunpack.c.l.b16 %v7216
      %v7473 = vunpack.c.l.b16 %v7217
      %v7474 = vunpack.c.l.b16 %v7218
      %v7475 = vunpack.c.l.b16 %v7219
      %v7476 = vunpack.c.l.b16 %v7220
      %v7477 = vunpack.c.l.b16 %v7221
      %v7478 = vunpack.c.l.b16 %v7222
      %v7479 = vunpack.c.l.b16 %v7223
      %v7480 = vunpack.c.l.b16 %v7224
      %v7481 = vunpack.c.l.b16 %v7225
      %v7482 = vunpack.c.l.b16 %v7226
      %v7483 = vunpack.c.l.b16 %v7227
      %v7484 = vunpack.c.l.b16 %v7228
      %v7485 = vunpack.c.l.b16 %v7229
      %v7486 = vunpack.c.l.b16 %v7230
      %v7487 = vunpack.c.l.b16 %v7231
      %v7488 = vunpack.c.l.b16 %v7232
      %v7489 = vunpack.c.l.b16 %v7233
      %v7490 = vunpack.c.l.b16 %v7234
      %v7491 = vunpack.c.l.b16 %v7235
      %v7492 = vunpack.c.l.b16 %v7236
      %v7493 = vunpack.c.l.b16 %v7237
      %v7494 = vunpack.c.l.b16 %v7238
      %v7495 = vunpack.c.l.b16 %v7239
      %v7496 = vunpack.c.l.b16 %v7240
      %v7497 = vunpack.c.l.b16 %v7241
      %v7498 = vunpack.c.l.b16 %v7242
      %v7499 = vunpack.c.l.b16 %v7243
      %v7500 = vunpack.c.l.b16 %v7244
      %v7501 = vunpack.c.l.b16 %v7245
      %v7502 = vunpack.c.l.b16 %v7246
      %v7503 = vunpack.c.l.b16 %v7247
      %v7504 = vunpack.c.l.b16 %v7248
      %v7505 = vunpack.c.l.b16 %v7249
      %v7506 = vunpack.c.l.b16 %v7250
      %v7507 = vunpack.c.l.b16 %v7251
      %v7508 = vunpack.c.l.b16 %v7252
      %v7509 = vunpack.c.l.b16 %v7253
      %v7510 = vunpack.c.l.b16 %v7254
      %v7511 = vunpack.c.l.b16 %v7255
      %v7512 = vunpack.c.l.b16 %v7256
      %v7513 = vunpack.c.l.b16 %v7257
      %v7514 = vunpack.c.l.b16 %v7258
      %v7515 = vunpack.c.l.b16 %v7259
      %v7516 = vunpack.c.l.b16 %v7260
      %v7517 = vunpack.c.l.b16 %v7261
      %v7518 = vunpack.c.l.b16 %v7262
      %v7519 = vunpack.c.l.b16 %v7263
      %v7520 = vunpack.c.l.b16 %v7264
      %v7521 = vunpack.c.l.b16 %v7265
      %v7522 = vunpack.c.l.b16 %v7266
      %v7523 = vunpack.c.l.b16 %v7267
      %v7524 = vpack.c.b16 %v7397, %v7396
      %v7525 = vpack.c.b16 %v7399, %v7398
      %v7526 = vpack.c.b16 %v7401, %v7400
      %v7527 = vpack.c.b16 %v7403, %v7402
      %v7528 = vpack.c.b16 %v7405, %v7404
      %v7529 = vpack.c.b16 %v7407, %v7406
      %v7530 = vpack.c.b16 %v7409, %v7408
      %v7531 = vpack.c.b16 %v7411, %v7410
      %v7532 = vpack.c.b16 %v7413, %v7412
      %v7533 = vpack.c.b16 %v7415, %v7414
      %v7534 = vpack.c.b16 %v7417, %v7416
      %v7535 = vpack.c.b16 %v7419, %v7418
      %v7536 = vpack.c.b16 %v7421, %v7420
      %v7537 = vpack.c.b16 %v7423, %v7422
      %v7538 = vpack.c.b16 %v7425, %v7424
      %v7539 = vpack.c.b16 %v7427, %v7426
      %v7540 = vpack.c.b16 %v7429, %v7428
      %v7541 = vpack.c.b16 %v7431, %v7430
      %v7542 = vpack.c.b16 %v7433, %v7432
      %v7543 = vpack.c.b16 %v7435, %v7434
      %v7544 = vpack.c.b16 %v7437, %v7436
      %v7545 = vpack.c.b16 %v7439, %v7438
      %v7546 = vpack.c.b16 %v7441, %v7440
      %v7547 = vpack.c.b16 %v7443, %v7442
      %v7548 = vpack.c.b16 %v7445, %v7444
      %v7549 = vpack.c.b16 %v7447, %v7446
      %v7550 = vpack.c.b16 %v7449, %v7448
      %v7551 = vpack.c.b16 %v7451, %v7450
      %v7552 = vpack.c.b16 %v7453, %v7452
      %v7553 = vpack.c.b16 %v7455, %v7454
      %v7554 = vpack.c.b16 %v7457, %v7456
      %v7555 = vpack.c.b16 %v7459, %v7458
      %v7556 = vpack.c.b16 %v7461, %v7460
      %v7557 = vpack.c.b16 %v7463, %v7462
      %v7558 = vpack.c.b16 %v7465, %v7464
      %v7559 = vpack.c.b16 %v7467, %v7466
      %v7560 = vpack.c.b16 %v7469, %v7468
      %v7561 = vpack.c.b16 %v7471, %v7470
      %v7562 = vpack.c.b16 %v7473, %v7472
      %v7563 = vpack.c.b16 %v7475, %v7474
      %v7564 = vpack.c.b16 %v7477, %v7476
      %v7565 = vpack.c.b16 %v7479, %v7478
      %v7566 = vpack.c.b16 %v7481, %v7480
      %v7567 = vpack.c.b16 %v7483, %v7482
      %v7568 = vpack.c.b16 %v7485, %v7484
      %v7569 = vpack.c.b16 %v7487, %v7486
      %v7570 = vpack.c.b16 %v7489, %v7488
      %v7571 = vpack.c.b16 %v7491, %v7490
      %v7572 = vpack.c.b16 %v7493, %v7492
      %v7573 = vpack.c.b16 %v7495, %v7494
      %v7574 = vpack.c.b16 %v7497, %v7496
      %v7575 = vpack.c.b16 %v7499, %v7498
      %v7576 = vpack.c.b16 %v7501, %v7500
      %v7577 = vpack.c.b16 %v7503, %v7502
      %v7578 = vpack.c.b16 %v7505, %v7504
      %v7579 = vpack.c.b16 %v7507, %v7506
      %v7580 = vpack.c.b16 %v7509, %v7508
      %v7581 = vpack.c.b16 %v7511, %v7510
      %v7582 = vpack.c.b16 %v7513, %v7512
      %v7583 = vpack.c.b16 %v7515, %v7514
      %v7584 = vpack.c.b16 %v7517, %v7516
      %v7585 = vpack.c.b16 %v7519, %v7518
      %v7586 = vpack.c.b16 %v7521, %v7520
      %v7587 = vpack.c.b16 %v7523, %v7522
      %7652 = vmatprep.subr.bf16.mxu0 0
      %7653 = vmatpush1.bf16.msra.mxu0 %v7524
      %7654 = vmatprep.subr.bf16.mxu0 0
      %7655 = vmatpush1.bf16.msra.mxu0 %v7525
      %7656 = vmatprep.subr.bf16.mxu0 0
      %7657 = vmatpush1.bf16.msra.mxu0 %v7526
      %7658 = vmatprep.subr.bf16.mxu0 0
      %7659 = vmatpush1.bf16.msra.mxu0 %v7527
      %7660 = vmatprep.subr.bf16.mxu0 0
      %7661 = vmatpush1.bf16.msra.mxu0 %v7528
      %7662 = vmatprep.subr.bf16.mxu0 0
      %7663 = vmatpush1.bf16.msra.mxu0 %v7529
      %7664 = vmatprep.subr.bf16.mxu0 0
      %7665 = vmatpush1.bf16.msra.mxu0 %v7530
      %7666 = vmatprep.subr.bf16.mxu0 0
      %7667 = vmatpush1.bf16.msra.mxu0 %v7531
      %7668 = vmatprep.subr.bf16.mxu0 0
      %7669 = vmatpush1.bf16.msra.mxu0 %v7532
      %7670 = vmatprep.subr.bf16.mxu0 0
      %7671 = vmatpush1.bf16.msra.mxu0 %v7533
      %7672 = vmatprep.subr.bf16.mxu0 0
      %7673 = vmatpush1.bf16.msra.mxu0 %v7534
      %7674 = vmatprep.subr.bf16.mxu0 0
      %7675 = vmatpush1.bf16.msra.mxu0 %v7535
      %7676 = vmatprep.subr.bf16.mxu0 0
      %7677 = vmatpush1.bf16.msra.mxu0 %v7536
      %7678 = vmatprep.subr.bf16.mxu0 0
      %7679 = vmatpush1.bf16.msra.mxu0 %v7537
      %7680 = vmatprep.subr.bf16.mxu0 0
      %7681 = vmatpush1.bf16.msra.mxu0 %v7538
      %7682 = vmatprep.subr.bf16.mxu0 0
      %7683 = vmatpush1.bf16.msra.mxu0 %v7539
      %7684 = vmatprep.mubr.bf16.mxu0 %v7133
      %7685 = vmatmul.mubr.bf16.gmra.mrb[0].mxu0 %v7132
      %v7686 = vpop.f32.mrb[0].mxu0
      %v7687 = vadd.f32 0.0, %v7686
      %v7688 = vpop.f32.mrb[0].mxu0
      %v7689 = vpop.f32.mrb[0].mxu0
      %v7690 = vpop.f32.mrb[0].mxu0
      %7691 = vdwg.mxu0
      %7692 = vmatprep.subr.bf16.mxu0 0
      %7693 = vmatpush1.bf16.msra.mxu0 %v7540
      %7694 = vmatprep.subr.bf16.mxu0 0
      %7695 = vmatpush1.bf16.msra.mxu0 %v7541
      %7696 = vmatprep.subr.bf16.mxu0 0
      %7697 = vmatpush1.bf16.msra.mxu0 %v7542
      %7698 = vmatprep.subr.bf16.mxu0 0
      %7699 = vmatpush1.bf16.msra.mxu0 %v7543
      %7700 = vmatprep.subr.bf16.mxu0 0
      %7701 = vmatpush1.bf16.msra.mxu0 %v7544
      %7702 = vmatprep.subr.bf16.mxu0 0
      %7703 = vmatpush1.bf16.msra.mxu0 %v7545
      %7704 = vmatprep.subr.bf16.mxu0 0
      %7705 = vmatpush1.bf16.msra.mxu0 %v7546
      %7706 = vmatprep.subr.bf16.mxu0 0
      %7707 = vmatpush1.bf16.msra.mxu0 %v7547
      %7708 = vmatprep.subr.bf16.mxu0 0
      %7709 = vmatpush1.bf16.msra.mxu0 %v7548
      %7710 = vmatprep.subr.bf16.mxu0 0
      %7711 = vmatpush1.bf16.msra.mxu0 %v7549
      %7712 = vmatprep.subr.bf16.mxu0 0
      %7713 = vmatpush1.bf16.msra.mxu0 %v7550
      %7714 = vmatprep.subr.bf16.mxu0 0
      %7715 = vmatpush1.bf16.msra.mxu0 %v7551
      %7716 = vmatprep.subr.bf16.mxu0 0
      %7717 = vmatpush1.bf16.msra.mxu0 %v7552
      %7718 = vmatprep.subr.bf16.mxu0 0
      %7719 = vmatpush1.bf16.msra.mxu0 %v7553
      %7720 = vmatprep.subr.bf16.mxu0 0
      %7721 = vmatpush1.bf16.msra.mxu0 %v7554
      %7722 = vmatprep.subr.bf16.mxu0 0
      %7723 = vmatpush1.bf16.msra.mxu0 %v7555
      %7724 = vmatprep.mubr.bf16.mxu0 %v7135
      %7725 = vmatmul.mubr.bf16.gmra.mrb[0].mxu0 %v7134
      %v7726 = vpop.f32.mrb[0].mxu0
      %v7727 = vadd.f32 %v7687, %v7726
      %v7728 = vpop.f32.mrb[0].mxu0
      %v7729 = vpop.f32.mrb[0].mxu0
      %v7730 = vpop.f32.mrb[0].mxu0
      %7731 = vdwg.mxu0
      %7732 = vmatprep.subr.bf16.mxu0 0
      %7733 = vmatpush1.bf16.msra.mxu0 %v7556
      %7734 = vmatprep.subr.bf16.mxu0 0
      %7735 = vmatpush1.bf16.msra.mxu0 %v7557
      %7736 = vmatprep.subr.bf16.mxu0 0
      %7737 = vmatpush1.bf16.msra.mxu0 %v7558
      %7738 = vmatprep.subr.bf16.mxu0 0
      %7739 = vmatpush1.bf16.msra.mxu0 %v7559
      %7740 = vmatprep.subr.bf16.mxu0 0
      %7741 = vmatpush1.bf16.msra.mxu0 %v7560
      %7742 = vmatprep.subr.bf16.mxu0 0
      %7743 = vmatpush1.bf16.msra.mxu0 %v7561
      %7744 = vmatprep.subr.bf16.mxu0 0
      %7745 = vmatpush1.bf16.msra.mxu0 %v7562
      %7746 = vmatprep.subr.bf16.mxu0 0
      %7747 = vmatpush1.bf16.msra.mxu0 %v7563
      %7748 = vmatprep.subr.bf16.mxu0 0
      %7749 = vmatpush1.bf16.msra.mxu0 %v7564
      %7750 = vmatprep.subr.bf16.mxu0 0
      %7751 = vmatpush1.bf16.msra.mxu0 %v7565
      %7752 = vmatprep.subr.bf16.mxu0 0
      %7753 = vmatpush1.bf16.msra.mxu0 %v7566
      %7754 = vmatprep.subr.bf16.mxu0 0
      %7755 = vmatpush1.bf16.msra.mxu0 %v7567
      %7756 = vmatprep.subr.bf16.mxu0 0
      %7757 = vmatpush1.bf16.msra.mxu0 %v7568
      %7758 = vmatprep.subr.bf16.mxu0 0
      %7759 = vmatpush1.bf16.msra.mxu0 %v7569
      %7760 = vmatprep.subr.bf16.mxu0 0
      %7761 = vmatpush1.bf16.msra.mxu0 %v7570
      %7762 = vmatprep.subr.bf16.mxu0 0
      %7763 = vmatpush1.bf16.msra.mxu0 %v7571
      %7764 = vmatprep.mubr.bf16.mxu0 %v7137
      %7765 = vmatmul.mubr.bf16.gmra.mrb[0].mxu0 %v7136
      %v7766 = vpop.f32.mrb[0].mxu0
      %v7767 = vadd.f32 %v7727, %v7766
      %v7768 = vpop.f32.mrb[0].mxu0
      %v7769 = vpop.f32.mrb[0].mxu0
      %v7770 = vpop.f32.mrb[0].mxu0
      %7771 = vdwg.mxu0
      %7772 = vmatprep.subr.bf16.mxu0 0
      %7773 = vmatpush1.bf16.msra.mxu0 %v7572
      %7774 = vmatprep.subr.bf16.mxu0 0
      %7775 = vmatpush1.bf16.msra.mxu0 %v7573
      %7776 = vmatprep.subr.bf16.mxu0 0
      %7777 = vmatpush1.bf16.msra.mxu0 %v7574
      %7778 = vmatprep.subr.bf16.mxu0 0
      %7779 = vmatpush1.bf16.msra.mxu0 %v7575
      %7780 = vmatprep.subr.bf16.mxu0 0
      %7781 = vmatpush1.bf16.msra.mxu0 %v7576
      %7782 = vmatprep.subr.bf16.mxu0 0
      %7783 = vmatpush1.bf16.msra.mxu0 %v7577
      %7784 = vmatprep.subr.bf16.mxu0 0
      %7785 = vmatpush1.bf16.msra.mxu0 %v7578
      %7786 = vmatprep.subr.bf16.mxu0 0
      %7787 = vmatpush1.bf16.msra.mxu0 %v7579
      %7788 = vmatprep.subr.bf16.mxu0 0
      %7789 = vmatpush1.bf16.msra.mxu0 %v7580
      %7790 = vmatprep.subr.bf16.mxu0 0
      %7791 = vmatpush1.bf16.msra.mxu0 %v7581
      %7792 = vmatprep.subr.bf16.mxu0 0
      %7793 = vmatpush1.bf16.msra.mxu0 %v7582
      %7794 = vmatprep.subr.bf16.mxu0 0
      %7795 = vmatpush1.bf16.msra.mxu0 %v7583
      %7796 = vmatprep.subr.bf16.mxu0 0
      %7797 = vmatpush1.bf16.msra.mxu0 %v7584
      %7798 = vmatprep.subr.bf16.mxu0 0
      %7799 = vmatpush1.bf16.msra.mxu0 %v7585
      %7800 = vmatprep.subr.bf16.mxu0 0
      %7801 = vmatpush1.bf16.msra.mxu0 %v7586
      %7802 = vmatprep.subr.bf16.mxu0 0
      %7803 = vmatpush1.bf16.msra.mxu0 %v7587
      %7804 = vmatprep.mubr.bf16.mxu0 %v7139
      %7805 = vmatmul.mubr.bf16.gmra.mrb[0].mxu0 %v7138
      %v7806 = vpop.f32.mrb[0].mxu0
      %v7807 = vadd.f32 %v7767, %v7806
      %v7808 = vpop.f32.mrb[0].mxu0
      %v7809 = vpop.f32.mrb[0].mxu0
      %v7810 = vpop.f32.mrb[0].mxu0
      %7811 = vdwg.mxu0
      %v7812 = vxor.u32 %v2326, 2147483648
      %v7813 = vmul.f32 %v7812, 1.442695
      %v7814 = vpow.pop %v7813
      %v7815 = vadd.f32 %v7814, 1.0
      %v7816 = vrcp.pop %v7815
      %v7817 = vmul.f32 1.0, %v7816
      %v7818 = vmul.f32 %v7817, %v7807
      %s7819 = smul.u32 %s1961, 8
      %s7820 = scalar_lea.vmem [#allocation8], %s7819
      %v7821 = vld [vmem:[%s7820] sm:$0xff]
      %v7822 = vpack.c.bf16 %v7821, %v7821
      %v7823 = vpack.c.bf16 %v7818, %v7818
      %v7824 = vld [vmem:[#allocation14] sm:$0xff]
      %v7825 = vld [vmem:[#allocation14 + $0x8] sm:$0xff]
      %v7826 = vld [vmem:[#allocation14 + $0x10] sm:$0xff]
      %v7827 = vld [vmem:[#allocation14 + $0x18] sm:$0xff]
      %v7828 = vld [vmem:[#allocation14 + $0x20] sm:$0xff]
      %v7829 = vld [vmem:[#allocation14 + $0x28] sm:$0xff]
      %v7830 = vld [vmem:[#allocation14 + $0x30] sm:$0xff]
      %v7831 = vld [vmem:[#allocation14 + $0x38] sm:$0xff]
      %v7832 = vld [vmem:[#allocation14 + $0x40] sm:$0xff]
      %v7833 = vld [vmem:[#allocation14 + $0x48] sm:$0xff]
      %v7834 = vld [vmem:[#allocation14 + $0x50] sm:$0xff]
      %v7835 = vld [vmem:[#allocation14 + $0x58] sm:$0xff]
      %v7836 = vld [vmem:[#allocation14 + $0x60] sm:$0xff]
      %v7837 = vld [vmem:[#allocation14 + $0x68] sm:$0xff]
      %v7838 = vld [vmem:[#allocation14 + $0x70] sm:$0xff]
      %v7839 = vld [vmem:[#allocation14 + $0x78] sm:$0xff]
      %v7840 = vld [vmem:[#allocation14 + $0x80] sm:$0xff]
      %v7841 = vld [vmem:[#allocation14 + $0x88] sm:$0xff]
      %v7842 = vld [vmem:[#allocation14 + $0x90] sm:$0xff]
      %v7843 = vld [vmem:[#allocation14 + $0x98] sm:$0xff]
      %v7844 = vld [vmem:[#allocation14 + $0xa0] sm:$0xff]
      %v7845 = vld [vmem:[#allocation14 + $0xa8] sm:$0xff]
      %v7846 = vld [vmem:[#allocation14 + $0xb0] sm:$0xff]
      %v7847 = vld [vmem:[#allocation14 + $0xb8] sm:$0xff]
      %v7848 = vld [vmem:[#allocation14 + $0xc0] sm:$0xff]
      %v7849 = vld [vmem:[#allocation14 + $0xc8] sm:$0xff]
      %v7850 = vld [vmem:[#allocation14 + $0xd0] sm:$0xff]
      %v7851 = vld [vmem:[#allocation14 + $0xd8] sm:$0xff]
      %v7852 = vld [vmem:[#allocation14 + $0xe0] sm:$0xff]
      %v7853 = vld [vmem:[#allocation14 + $0xe8] sm:$0xff]
      %v7854 = vld [vmem:[#allocation14 + $0xf0] sm:$0xff]
      %v7855 = vld [vmem:[#allocation14 + $0xf8] sm:$0xff]
      %v7856 = vld [vmem:[#allocation14 + $0x100] sm:$0xff]
      %v7857 = vld [vmem:[#allocation14 + $0x108] sm:$0xff]
      %v7858 = vld [vmem:[#allocation14 + $0x110] sm:$0xff]
      %v7859 = vld [vmem:[#allocation14 + $0x118] sm:$0xff]
      %v7860 = vld [vmem:[#allocation14 + $0x120] sm:$0xff]
      %v7861 = vld [vmem:[#allocation14 + $0x128] sm:$0xff]
      %v7862 = vld [vmem:[#allocation14 + $0x130] sm:$0xff]
      %v7863 = vld [vmem:[#allocation14 + $0x138] sm:$0xff]
      %v7864 = vld [vmem:[#allocation14 + $0x140] sm:$0xff]
      %v7865 = vld [vmem:[#allocation14 + $0x148] sm:$0xff]
      %v7866 = vld [vmem:[#allocation14 + $0x150] sm:$0xff]
      %v7867 = vld [vmem:[#allocation14 + $0x158] sm:$0xff]
      %v7868 = vld [vmem:[#allocation14 + $0x160] sm:$0xff]
      %v7869 = vld [vmem:[#allocation14 + $0x168] sm:$0xff]
      %v7870 = vld [vmem:[#allocation14 + $0x170] sm:$0xff]
      %v7871 = vld [vmem:[#allocation14 + $0x178] sm:$0xff]
      %v7872 = vld [vmem:[#allocation14 + $0x180] sm:$0xff]
      %v7873 = vld [vmem:[#allocation14 + $0x188] sm:$0xff]
      %v7874 = vld [vmem:[#allocation14 + $0x190] sm:$0xff]
      %v7875 = vld [vmem:[#allocation14 + $0x198] sm:$0xff]
      %v7876 = vld [vmem:[#allocation14 + $0x1a0] sm:$0xff]
      %v7877 = vld [vmem:[#allocation14 + $0x1a8] sm:$0xff]
      %v7878 = vld [vmem:[#allocation14 + $0x1b0] sm:$0xff]
      %v7879 = vld [vmem:[#allocation14 + $0x1b8] sm:$0xff]
      %v7880 = vld [vmem:[#allocation14 + $0x1c0] sm:$0xff]
      %v7881 = vld [vmem:[#allocation14 + $0x1c8] sm:$0xff]
      %v7882 = vld [vmem:[#allocation14 + $0x1d0] sm:$0xff]
      %v7883 = vld [vmem:[#allocation14 + $0x1d8] sm:$0xff]
      %v7884 = vld [vmem:[#allocation14 + $0x1e0] sm:$0xff]
      %v7885 = vld [vmem:[#allocation14 + $0x1e8] sm:$0xff]
      %v7886 = vld [vmem:[#allocation14 + $0x1f0] sm:$0xff]
      %v7887 = vld [vmem:[#allocation14 + $0x1f8] sm:$0xff]
      %v7952 = vunpack.c.l.b16 %v7824
      %v7953 = vunpack.c.h.b16 %v7824
      %v7954 = vunpack.c.l.b16 %v7825
      %v7955 = vunpack.c.h.b16 %v7825
      %v7956 = vunpack.c.l.b16 %v7826
      %v7957 = vunpack.c.h.b16 %v7826
      %v7958 = vunpack.c.l.b16 %v7827
      %v7959 = vunpack.c.h.b16 %v7827
      %v7960 = vunpack.c.l.b16 %v7828
      %v7961 = vunpack.c.h.b16 %v7828
      %v7962 = vunpack.c.l.b16 %v7829
      %v7963 = vunpack.c.h.b16 %v7829
      %v7964 = vunpack.c.l.b16 %v7830
      %v7965 = vunpack.c.h.b16 %v7830
      %v7966 = vunpack.c.l.b16 %v7831
      %v7967 = vunpack.c.h.b16 %v7831
      %v7968 = vunpack.c.l.b16 %v7832
      %v7969 = vunpack.c.h.b16 %v7832
      %v7970 = vunpack.c.l.b16 %v7833
      %v7971 = vunpack.c.h.b16 %v7833
      %v7972 = vunpack.c.l.b16 %v7834
      %v7973 = vunpack.c.h.b16 %v7834
      %v7974 = vunpack.c.l.b16 %v7835
      %v7975 = vunpack.c.h.b16 %v7835
      %v7976 = vunpack.c.l.b16 %v7836
      %v7977 = vunpack.c.h.b16 %v7836
      %v7978 = vunpack.c.l.b16 %v7837
      %v7979 = vunpack.c.h.b16 %v7837
      %v7980 = vunpack.c.l.b16 %v7838
      %v7981 = vunpack.c.h.b16 %v7838
      %v7982 = vunpack.c.l.b16 %v7839
      %v7983 = vunpack.c.h.b16 %v7839
      %v7984 = vunpack.c.l.b16 %v7840
      %v7985 = vunpack.c.h.b16 %v7840
      %v7986 = vunpack.c.l.b16 %v7841
      %v7987 = vunpack.c.h.b16 %v7841
      %v7988 = vunpack.c.l.b16 %v7842
      %v7989 = vunpack.c.h.b16 %v7842
      %v7990 = vunpack.c.l.b16 %v7843
      %v7991 = vunpack.c.h.b16 %v7843
      %v7992 = vunpack.c.l.b16 %v7844
      %v7993 = vunpack.c.h.b16 %v7844
      %v7994 = vunpack.c.l.b16 %v7845
      %v7995 = vunpack.c.h.b16 %v7845
      %v7996 = vunpack.c.l.b16 %v7846
      %v7997 = vunpack.c.h.b16 %v7846
      %v7998 = vunpack.c.l.b16 %v7847
      %v7999 = vunpack.c.h.b16 %v7847
      %v8000 = vunpack.c.l.b16 %v7848
      %v8001 = vunpack.c.h.b16 %v7848
      %v8002 = vunpack.c.l.b16 %v7849
      %v8003 = vunpack.c.h.b16 %v7849
      %v8004 = vunpack.c.l.b16 %v7850
      %v8005 = vunpack.c.h.b16 %v7850
      %v8006 = vunpack.c.l.b16 %v7851
      %v8007 = vunpack.c.h.b16 %v7851
      %v8008 = vunpack.c.l.b16 %v7852
      %v8009 = vunpack.c.h.b16 %v7852
      %v8010 = vunpack.c.l.b16 %v7853
      %v8011 = vunpack.c.h.b16 %v7853
      %v8012 = vunpack.c.l.b16 %v7854
      %v8013 = vunpack.c.h.b16 %v7854
      %v8014 = vunpack.c.l.b16 %v7855
      %v8015 = vunpack.c.h.b16 %v7855
      %v8016 = vunpack.c.l.b16 %v7856
      %v8017 = vunpack.c.h.b16 %v7856
      %v8018 = vunpack.c.l.b16 %v7857
      %v8019 = vunpack.c.h.b16 %v7857
      %v8020 = vunpack.c.l.b16 %v7858
      %v8021 = vunpack.c.h.b16 %v7858
      %v8022 = vunpack.c.l.b16 %v7859
      %v8023 = vunpack.c.h.b16 %v7859
      %v8024 = vunpack.c.l.b16 %v7860
      %v8025 = vunpack.c.h.b16 %v7860
      %v8026 = vunpack.c.l.b16 %v7861
      %v8027 = vunpack.c.h.b16 %v7861
      %v8028 = vunpack.c.l.b16 %v7862
      %v8029 = vunpack.c.h.b16 %v7862
      %v8030 = vunpack.c.l.b16 %v7863
      %v8031 = vunpack.c.h.b16 %v7863
      %v8032 = vunpack.c.l.b16 %v7864
      %v8033 = vunpack.c.h.b16 %v7864
      %v8034 = vunpack.c.l.b16 %v7865
      %v8035 = vunpack.c.h.b16 %v7865
      %v8036 = vunpack.c.l.b16 %v7866
      %v8037 = vunpack.c.h.b16 %v7866
      %v8038 = vunpack.c.l.b16 %v7867
      %v8039 = vunpack.c.h.b16 %v7867
      %v8040 = vunpack.c.l.b16 %v7868
      %v8041 = vunpack.c.h.b16 %v7868
      %v8042 = vunpack.c.l.b16 %v7869
      %v8043 = vunpack.c.h.b16 %v7869
      %v8044 = vunpack.c.l.b16 %v7870
      %v8045 = vunpack.c.h.b16 %v7870
      %v8046 = vunpack.c.l.b16 %v7871
      %v8047 = vunpack.c.h.b16 %v7871
      %v8048 = vunpack.c.l.b16 %v7872
      %v8049 = vunpack.c.h.b16 %v7872
      %v8050 = vunpack.c.l.b16 %v7873
      %v8051 = vunpack.c.h.b16 %v7873
      %v8052 = vunpack.c.l.b16 %v7874
      %v8053 = vunpack.c.h.b16 %v7874
      %v8054 = vunpack.c.l.b16 %v7875
      %v8055 = vunpack.c.h.b16 %v7875
      %v8056 = vunpack.c.l.b16 %v7876
      %v8057 = vunpack.c.h.b16 %v7876
      %v8058 = vunpack.c.l.b16 %v7877
      %v8059 = vunpack.c.h.b16 %v7877
      %v8060 = vunpack.c.l.b16 %v7878
      %v8061 = vunpack.c.h.b16 %v7878
      %v8062 = vunpack.c.l.b16 %v7879
      %v8063 = vunpack.c.h.b16 %v7879
      %v8064 = vunpack.c.l.b16 %v7880
      %v8065 = vunpack.c.h.b16 %v7880
      %v8066 = vunpack.c.l.b16 %v7881
      %v8067 = vunpack.c.h.b16 %v7881
      %v8068 = vunpack.c.l.b16 %v7882
      %v8069 = vunpack.c.h.b16 %v7882
      %v8070 = vunpack.c.l.b16 %v7883
      %v8071 = vunpack.c.h.b16 %v7883
      %v8072 = vunpack.c.l.b16 %v7884
      %v8073 = vunpack.c.h.b16 %v7884
      %v8074 = vunpack.c.l.b16 %v7885
      %v8075 = vunpack.c.h.b16 %v7885
      %v8076 = vunpack.c.l.b16 %v7886
      %v8077 = vunpack.c.h.b16 %v7886
      %v8078 = vunpack.c.l.b16 %v7887
      %v8079 = vunpack.c.h.b16 %v7887
      %v8080 = vpack.c.b16 %v7956, %v7952
      %v8081 = vpack.c.b16 %v7957, %v7953
      %v8082 = vpack.c.b16 %v7958, %v7954
      %v8083 = vpack.c.b16 %v7959, %v7955
      %v8084 = vpack.c.b16 %v7964, %v7960
      %v8085 = vpack.c.b16 %v7965, %v7961
      %v8086 = vpack.c.b16 %v7966, %v7962
      %v8087 = vpack.c.b16 %v7967, %v7963
      %v8088 = vpack.c.b16 %v7972, %v7968
      %v8089 = vpack.c.b16 %v7973, %v7969
      %v8090 = vpack.c.b16 %v7974, %v7970
      %v8091 = vpack.c.b16 %v7975, %v7971
      %v8092 = vpack.c.b16 %v7980, %v7976
      %v8093 = vpack.c.b16 %v7981, %v7977
      %v8094 = vpack.c.b16 %v7982, %v7978
      %v8095 = vpack.c.b16 %v7983, %v7979
      %v8096 = vpack.c.b16 %v7988, %v7984
      %v8097 = vpack.c.b16 %v7989, %v7985
      %v8098 = vpack.c.b16 %v7990, %v7986
      %v8099 = vpack.c.b16 %v7991, %v7987
      %v8100 = vpack.c.b16 %v7996, %v7992
      %v8101 = vpack.c.b16 %v7997, %v7993
      %v8102 = vpack.c.b16 %v7998, %v7994
      %v8103 = vpack.c.b16 %v7999, %v7995
      %v8104 = vpack.c.b16 %v8004, %v8000
      %v8105 = vpack.c.b16 %v8005, %v8001
      %v8106 = vpack.c.b16 %v8006, %v8002
      %v8107 = vpack.c.b16 %v8007, %v8003
      %v8108 = vpack.c.b16 %v8012, %v8008
      %v8109 = vpack.c.b16 %v8013, %v8009
      %v8110 = vpack.c.b16 %v8014, %v8010
      %v8111 = vpack.c.b16 %v8015, %v8011
      %v8112 = vpack.c.b16 %v8020, %v8016
      %v8113 = vpack.c.b16 %v8021, %v8017
      %v8114 = vpack.c.b16 %v8022, %v8018
      %v8115 = vpack.c.b16 %v8023, %v8019
      %v8116 = vpack.c.b16 %v8028, %v8024
      %v8117 = vpack.c.b16 %v8029, %v8025
      %v8118 = vpack.c.b16 %v8030, %v8026
      %v8119 = vpack.c.b16 %v8031, %v8027
      %v8120 = vpack.c.b16 %v8036, %v8032
      %v8121 = vpack.c.b16 %v8037, %v8033
      %v8122 = vpack.c.b16 %v8038, %v8034
      %v8123 = vpack.c.b16 %v8039, %v8035
      %v8124 = vpack.c.b16 %v8044, %v8040
      %v8125 = vpack.c.b16 %v8045, %v8041
      %v8126 = vpack.c.b16 %v8046, %v8042
      %v8127 = vpack.c.b16 %v8047, %v8043
      %v8128 = vpack.c.b16 %v8052, %v8048
      %v8129 = vpack.c.b16 %v8053, %v8049
      %v8130 = vpack.c.b16 %v8054, %v8050
      %v8131 = vpack.c.b16 %v8055, %v8051
      %v8132 = vpack.c.b16 %v8060, %v8056
      %v8133 = vpack.c.b16 %v8061, %v8057
      %v8134 = vpack.c.b16 %v8062, %v8058
      %v8135 = vpack.c.b16 %v8063, %v8059
      %v8136 = vpack.c.b16 %v8068, %v8064
      %v8137 = vpack.c.b16 %v8069, %v8065
      %v8138 = vpack.c.b16 %v8070, %v8066
      %v8139 = vpack.c.b16 %v8071, %v8067
      %v8140 = vpack.c.b16 %v8076, %v8072
      %v8141 = vpack.c.b16 %v8077, %v8073
      %v8142 = vpack.c.b16 %v8078, %v8074
      %v8143 = vpack.c.b16 %v8079, %v8075
      %8208 = vmatprep.subr.bf16.mxu0 %v8081
      %8209 = vmatpush1.bf16.msra.mxu0 %v8080
      %8210 = vmatprep.subr.bf16.mxu0 %v8085
      %8211 = vmatpush1.bf16.msra.mxu0 %v8084
      %8212 = vmatprep.subr.bf16.mxu0 %v8089
      %8213 = vmatpush1.bf16.msra.mxu0 %v8088
      %8214 = vmatprep.subr.bf16.mxu0 %v8093
      %8215 = vmatpush1.bf16.msra.mxu0 %v8092
      %8216 = vmatprep.subr.bf16.mxu0 %v8097
      %8217 = vmatpush1.bf16.msra.mxu0 %v8096
      %8218 = vmatprep.subr.bf16.mxu0 %v8101
      %8219 = vmatpush1.bf16.msra.mxu0 %v8100
      %8220 = vmatprep.subr.bf16.mxu0 %v8105
      %8221 = vmatpush1.bf16.msra.mxu0 %v8104
      %8222 = vmatprep.subr.bf16.mxu0 %v8109
      %8223 = vmatpush1.bf16.msra.mxu0 %v8108
      %8224 = vmatprep.subr.bf16.mxu0 %v8113
      %8225 = vmatpush1.bf16.msra.mxu0 %v8112
      %8226 = vmatprep.subr.bf16.mxu0 %v8117
      %8227 = vmatpush1.bf16.msra.mxu0 %v8116
      %8228 = vmatprep.subr.bf16.mxu0 %v8121
      %8229 = vmatpush1.bf16.msra.mxu0 %v8120
      %8230 = vmatprep.subr.bf16.mxu0 %v8125
      %8231 = vmatpush1.bf16.msra.mxu0 %v8124
      %8232 = vmatprep.subr.bf16.mxu0 %v8129
      %8233 = vmatpush1.bf16.msra.mxu0 %v8128
      %8234 = vmatprep.subr.bf16.mxu0 %v8133
      %8235 = vmatpush1.bf16.msra.mxu0 %v8132
      %8236 = vmatprep.subr.bf16.mxu0 %v8137
      %8237 = vmatpush1.bf16.msra.mxu0 %v8136
      %8238 = vmatprep.subr.bf16.mxu0 %v8141
      %8239 = vmatpush1.bf16.msra.mxu0 %v8140
      %8240 = vmatprep.mubr.bf16.mxu0 %v7823
      %8241 = vmatmul.mubr.bf16.gmra.mrb[0].mxu0 %v7822
      %v8242 = vpop.f32.mrb[0].mxu0
      %v8243 = vadd.f32 %v2365, %v8242
      %v8244 = vpop.f32.mrb[0].mxu0
      %v8245 = vadd.f32 %v2367, %v8244
      %v8246 = vpop.f32.mrb[0].mxu0
      %v8247 = vpop.f32.mrb[0].mxu0
      %8248 = vdwg.mxu0
      %8249 = vmatprep.subr.bf16.mxu0 %v8083
      %8250 = vmatpush1.bf16.msra.mxu0 %v8082
      %8251 = vmatprep.subr.bf16.mxu0 %v8087
      %8252 = vmatpush1.bf16.msra.mxu0 %v8086
      %8253 = vmatprep.subr.bf16.mxu0 %v8091
      %8254 = vmatpush1.bf16.msra.mxu0 %v8090
      %8255 = vmatprep.subr.bf16.mxu0 %v8095
      %8256 = vmatpush1.bf16.msra.mxu0 %v8094
      %8257 = vmatprep.subr.bf16.mxu0 %v8099
      %8258 = vmatpush1.bf16.msra.mxu0 %v8098
      %8259 = vmatprep.subr.bf16.mxu0 %v8103
      %8260 = vmatpush1.bf16.msra.mxu0 %v8102
      %8261 = vmatprep.subr.bf16.mxu0 %v8107
      %8262 = vmatpush1.bf16.msra.mxu0 %v8106
      %8263 = vmatprep.subr.bf16.mxu0 %v8111
      %8264 = vmatpush1.bf16.msra.mxu0 %v8110
      %8265 = vmatprep.subr.bf16.mxu0 %v8115
      %8266 = vmatpush1.bf16.msra.mxu0 %v8114
      %8267 = vmatprep.subr.bf16.mxu0 %v8119
      %8268 = vmatpush1.bf16.msra.mxu0 %v8118
      %8269 = vmatprep.subr.bf16.mxu0 %v8123
      %8270 = vmatpush1.bf16.msra.mxu0 %v8122
      %8271 = vmatprep.subr.bf16.mxu0 %v8127
      %8272 = vmatpush1.bf16.msra.mxu0 %v8126
      %8273 = vmatprep.subr.bf16.mxu0 %v8131
      %8274 = vmatpush1.bf16.msra.mxu0 %v8130
      %8275 = vmatprep.subr.bf16.mxu0 %v8135
      %8276 = vmatpush1.bf16.msra.mxu0 %v8134
      %8277 = vmatprep.subr.bf16.mxu0 %v8139
      %8278 = vmatpush1.bf16.msra.mxu0 %v8138
      %8279 = vmatprep.subr.bf16.mxu0 %v8143
      %8280 = vmatpush1.bf16.msra.mxu0 %v8142
      %8281 = vmatprep.mubr.bf16.mxu0 %v7823
      %8282 = vmatmul.mubr.bf16.gmra.mrb[0].mxu0 %v7822
      %v8283 = vpop.f32.mrb[0].mxu0
      %v8284 = vadd.f32 %v2406, %v8283
      %v8285 = vpop.f32.mrb[0].mxu0
      %v8286 = vadd.f32 %v2408, %v8285
      %v8287 = vpop.f32.mrb[0].mxu0
      %v8288 = vpop.f32.mrb[0].mxu0
      %8289 = vdwg.mxu0
      %v8290 = vxor.u32 %v8243, 2147483648
      %v8291 = vmul.f32 %v8290, 1.442695
      %v8292 = vpow.pop %v8291
      %v8293 = vadd.f32 %v8292, 1.0
      %v8294 = vrcp.pop %v8293
      %v8295 = vmul.f32 1.0, %v8294
      %v8296 = vxor.u32 %v8245, 2147483648
      %v8297 = vmul.f32 %v8296, 1.442695
      %v8298 = vpow.pop %v8297
      %v8299 = vadd.f32 %v8298, 1.0
      %v8300 = vrcp.pop %v8299
      %v8301 = vmul.f32 1.0, %v8300
      %v8302 = vtanh.pop %v8284
      %v8303 = vxor.u32 %v8286, 2147483648
      %v8304 = vmul.f32 %v8303, 1.442695
      %v8305 = vpow.pop %v8304
      %v8306 = vadd.f32 %v8305, 1.0
      %v8307 = vrcp.pop %v8306
      %v8308 = vmul.f32 1.0, %v8307
      %v8309 = vmul.f32 %v8301, %v1967
      %v8310 = vmul.f32 %v8295, %v8302
      %v8311 = vadd.f32 %v8309, %v8310
      %v8312 = vtanh.pop %v8311
      %v8313 = vmul.f32 %v8308, %v8312
      %v8314 = vpack.c.bf16 %v8313, %v8313
      %v8315 = vld [vmem:[#allocation16] sm:$0xff]
      %v8316 = vld [vmem:[#allocation16 + $0x8] sm:$0xff]
      %v8317 = vld [vmem:[#allocation16 + $0x10] sm:$0xff]
      %v8318 = vld [vmem:[#allocation16 + $0x18] sm:$0xff]
      %v8319 = vld [vmem:[#allocation16 + $0x20] sm:$0xff]
      %v8320 = vld [vmem:[#allocation16 + $0x28] sm:$0xff]
      %v8321 = vld [vmem:[#allocation16 + $0x30] sm:$0xff]
      %v8322 = vld [vmem:[#allocation16 + $0x38] sm:$0xff]
      %v8323 = vld [vmem:[#allocation16 + $0x40] sm:$0xff]
      %v8324 = vld [vmem:[#allocation16 + $0x48] sm:$0xff]
      %v8325 = vld [vmem:[#allocation16 + $0x50] sm:$0xff]
      %v8326 = vld [vmem:[#allocation16 + $0x58] sm:$0xff]
      %v8327 = vld [vmem:[#allocation16 + $0x60] sm:$0xff]
      %v8328 = vld [vmem:[#allocation16 + $0x68] sm:$0xff]
      %v8329 = vld [vmem:[#allocation16 + $0x70] sm:$0xff]
      %v8330 = vld [vmem:[#allocation16 + $0x78] sm:$0xff]
      %v8331 = vld [vmem:[%s13] sm:$0x3]
      %v8333 = vlaneseq
      %v8334 = vshrl.u32 %v8333, 7
      %v8335 = vsub.s32 0, %v8334
      %v8336 = vrot.slane %v8331, %v8335
      %v8337 = vlaneseq
      %v8338 = vshrl.u32 %v8337, 7
      %v8339 = vsub.s32 1, %v8338
      %v8340 = vrot.slane %v8331, %v8339
      %v8359 = vunpack.c.l.b16 %v8315
      %v8360 = vunpack.c.h.b16 %v8315
      %v8361 = vunpack.c.l.b16 %v8316
      %v8362 = vunpack.c.h.b16 %v8316
      %v8363 = vunpack.c.l.b16 %v8317
      %v8364 = vunpack.c.h.b16 %v8317
      %v8365 = vunpack.c.l.b16 %v8318
      %v8366 = vunpack.c.h.b16 %v8318
      %v8367 = vunpack.c.l.b16 %v8319
      %v8368 = vunpack.c.h.b16 %v8319
      %v8369 = vunpack.c.l.b16 %v8320
      %v8370 = vunpack.c.h.b16 %v8320
      %v8371 = vunpack.c.l.b16 %v8321
      %v8372 = vunpack.c.h.b16 %v8321
      %v8373 = vunpack.c.l.b16 %v8322
      %v8374 = vunpack.c.h.b16 %v8322
      %v8375 = vunpack.c.l.b16 %v8323
      %v8376 = vunpack.c.h.b16 %v8323
      %v8377 = vunpack.c.l.b16 %v8324
      %v8378 = vunpack.c.h.b16 %v8324
      %v8379 = vunpack.c.l.b16 %v8325
      %v8380 = vunpack.c.h.b16 %v8325
      %v8381 = vunpack.c.l.b16 %v8326
      %v8382 = vunpack.c.h.b16 %v8326
      %v8383 = vunpack.c.l.b16 %v8327
      %v8384 = vunpack.c.h.b16 %v8327
      %v8385 = vunpack.c.l.b16 %v8328
      %v8386 = vunpack.c.h.b16 %v8328
      %v8387 = vunpack.c.l.b16 %v8329
      %v8388 = vunpack.c.h.b16 %v8329
      %v8389 = vunpack.c.l.b16 %v8330
      %v8390 = vunpack.c.h.b16 %v8330
      %v8391 = vpack.c.b16 %v8361, %v8359
      %v8392 = vpack.c.b16 %v8362, %v8360
      %v8393 = vpack.c.b16 %v8365, %v8363
      %v8394 = vpack.c.b16 %v8366, %v8364
      %v8395 = vpack.c.b16 %v8369, %v8367
      %v8396 = vpack.c.b16 %v8370, %v8368
      %v8397 = vpack.c.b16 %v8373, %v8371
      %v8398 = vpack.c.b16 %v8374, %v8372
      %v8399 = vpack.c.b16 %v8377, %v8375
      %v8400 = vpack.c.b16 %v8378, %v8376
      %v8401 = vpack.c.b16 %v8381, %v8379
      %v8402 = vpack.c.b16 %v8382, %v8380
      %v8403 = vpack.c.b16 %v8385, %v8383
      %v8404 = vpack.c.b16 %v8386, %v8384
      %v8405 = vpack.c.b16 %v8389, %v8387
      %v8406 = vpack.c.b16 %v8390, %v8388
      %8423 = vmatprep.subr.bf16.mxu0 %v8392
      %8424 = vmatpush1.bf16.msra.mxu0 %v8391
      %8425 = vmatprep.subr.bf16.mxu0 %v8394
      %8426 = vmatpush1.bf16.msra.mxu0 %v8393
      %8427 = vmatprep.subr.bf16.mxu0 %v8396
      %8428 = vmatpush1.bf16.msra.mxu0 %v8395
      %8429 = vmatprep.subr.bf16.mxu0 %v8398
      %8430 = vmatpush1.bf16.msra.mxu0 %v8397
      %8431 = vmatprep.subr.bf16.mxu0 %v8400
      %8432 = vmatpush1.bf16.msra.mxu0 %v8399
      %8433 = vmatprep.subr.bf16.mxu0 %v8402
      %8434 = vmatpush1.bf16.msra.mxu0 %v8401
      %8435 = vmatprep.subr.bf16.mxu0 %v8404
      %8436 = vmatpush1.bf16.msra.mxu0 %v8403
      %8437 = vmatprep.subr.bf16.mxu0 %v8406
      %8438 = vmatpush1.bf16.msra.mxu0 %v8405
      %8439 = vmatprep.subr.bf16.mxu0 0
      %8440 = vmatpush1.bf16.msra.mxu0 0
      %8441 = vmatprep.subr.bf16.mxu0 0
      %8442 = vmatpush1.bf16.msra.mxu0 0
      %8443 = vmatprep.subr.bf16.mxu0 0
      %8444 = vmatpush1.bf16.msra.mxu0 0
      %8445 = vmatprep.subr.bf16.mxu0 0
      %8446 = vmatpush1.bf16.msra.mxu0 0
      %8447 = vmatprep.subr.bf16.mxu0 0
      %8448 = vmatpush1.bf16.msra.mxu0 0
      %8449 = vmatprep.subr.bf16.mxu0 0
      %8450 = vmatpush1.bf16.msra.mxu0 0
      %8451 = vmatprep.subr.bf16.mxu0 0
      %8452 = vmatpush1.bf16.msra.mxu0 0
      %8453 = vmatprep.subr.bf16.mxu0 0
      %8454 = vmatpush1.bf16.msra.mxu0 0
      %8455 = vmatprep.mubr.bf16.mxu0 0
      %8456 = vmatmul.mubr.bf16.gmra.mrb[0].mxu0 %v8314
      %v8457 = vpop.f32.mrb[0].mxu0
      %v8458 = vadd.f32 %v8336, %v8457
      %v8459 = vpop.f32.mrb[0].mxu0
      %v8460 = vadd.f32 %v8340, %v8459
      %v8461 = vpop.f32.mrb[0].mxu0
      %v8462 = vpop.f32.mrb[0].mxu0
      %8463 = vdwg.mxu0
      %v8464 = vld [vmem:[%s0] sm:$0xff]
      %v8465 = vstv %s1961
      %vm8466 = vcmp.gt.s32.totalorder %v8464, %v8465
      %v8467 = vsel %vm8466, 1, 0
      %8468 = vset.pattern.permute.xlu0 0
      %8469 = vperm.xlu0 %8468, %v8467
      %v8470 = vpop.permute.xlu0 %8469
      %vm8471 = vcmp.eq.s32.totalorder %v8470, 1
      %v8472 = vsel %vm8471, %v8458, 0.0
      %v8473 = vsel %vm8471, %v8460, 0.0
      %s8474 = smul.u32 %s1961, 2
      %s8475 = smul.addr %s8474, 8
      %s8476 = scalar_lea.vmem [#allocation17], %s8475
      %8477 = vst [vmem:[%s8476] sm:$0xff] %v8472
      %8478 = vst [vmem:[%s8476 + $0x8] sm:$0xff] %v8473
      %v8479 = vsel %vm8471, %v7114, 0.0
      %s8480 = scalar_lea.vmem [#allocation18], %s7819
      %8481 = vst [vmem:[%s8480] sm:$0xff] %v8479
    $region90: #{tpu_custom_call.1} parent=1 // loop_footer
      %s1965 = sadd.s32 1, %s1961
    $region91: #{tpu_custom_call.1} parent=1 // loop_footer_branch
      %1960 = sbr.rel target = $region87
    $region92: #{tpu_custom_call.1} parent=1 // loop_exit
      _
    // Predicated region
    $region93: #{tpu_custom_call.1} parent=1 // pred_check
      _
    $region94: #{tpu_custom_call.1} parent=1 // pred_check_branch
      %8483 = sbr.rel (0) target = $region96
    $region95: #{tpu_custom_call.1} parent=1 // pred_region
      %s8485 = ssub.s32 1792, 1792
      %8486 = vsyncadd [#allocation7], %s8485
      %s8487 = sshll.u32 [#allocation17], 4
      %s8488 = int_to_ptr.vmem [resolvable:$true] %s8487
      %8493 = dma.vmem_to_hbm [thread:$0]  %s8488, 1792, %s14, [#allocation7], 256, 256, 16
    $region96: #{tpu_custom_call.1} parent=1 // pred_fallthru
      _
    // Predicated region
    $region97: #{tpu_custom_call.1} parent=1 // pred_check
      _
    $region98: #{tpu_custom_call.1} parent=1 // pred_check_branch
      %8495 = sbr.rel (0) target = $region100
    $region99: #{tpu_custom_call.1} parent=1 // pred_region
      %s8497 = ssub.s32 896, 896
      %8498 = vsyncadd [#allocation19], %s8497
      %s8499 = sshll.u32 [#allocation18], 4
      %s8500 = int_to_ptr.vmem [resolvable:$true] %s8499
      %8505 = dma.vmem_to_hbm [thread:$0]  %s8500, 896, %s15, [#allocation19], 128, 128, 8
    $region100: #{tpu_custom_call.1} parent=1 // pred_fallthru
      _
    // Predicated region
    $region101: #{tpu_custom_call.1} parent=1 // pred_check
      _
    $region102: #{tpu_custom_call.1} parent=1 // pred_check_branch
      %8507 = sbr.rel (0) target = $region104
    $region103: #{tpu_custom_call.1} parent=1 // pred_region
      %8508 = dma.done [#allocation7], 1792
    $region104: #{tpu_custom_call.1} parent=1 // pred_fallthru
      _
    // Predicated region
    $region105: #{tpu_custom_call.1} parent=1 // pred_check
      _
    $region106: #{tpu_custom_call.1} parent=1 // pred_check_branch
      %8510 = sbr.rel (0) target = $region108
    $region107: #{tpu_custom_call.1} parent=1 // pred_region
      %8511 = dma.done [#allocation19], 896
    $region108: #{tpu_custom_call.1} parent=1 // pred_fallthru
      _
    %8512 = vsyncpa [#allocation6], 1
    %8513 = vsyncpa [#allocation9], 1
    %8514 = vsyncpa [#allocation12], 1
    %8515 = vsyncpa [#allocation15], 1
    %8516 = vsyncpa [#allocation7], 1
    %8517 = vsyncpa [#allocation19], 1

</llo_original>
